<compile_context>
chip_gen: v7x
topology: tpu7x:2x2x1
jax: 0.10.0
libtpu: 0.0.40
codegen_flags: <defaults>
</compile_context>

<pallas_src>
import numpy as np

import jax
import jax.numpy as jnp
from jax import lax
from jax.experimental import pallas as pl
from jax.experimental.pallas import tpu as pltpu


# ----------------------------------------------------------------------------
# The single fused kernel: 4 chained lane-dense matmuls + bias + activation
# ----------------------------------------------------------------------------
def _fused_autoencoder_kernel(x_ref, w1_ref, b1_ref, w2_ref, b2_ref,
                              w3_ref, b3_ref, w4_ref, b4_ref, o_ref):
    """x_ref : (B, 3072) bf16   flattened NCHW input image
       wN_ref: (Kin, Kout) bf16 dense conv/convT embedding
       bN_ref: (1, Kout) f32    bias pre-tiled per spatial position
       o_ref : (B, 3072) f32    flattened NCHW output image"""

    def layer(h, w_ref, b_ref, act):
        y = jnp.dot(h, w_ref[...], preferred_element_type=jnp.float32)
        y = y + b_ref[...]                       # (1, Kout) broadcast over M=B
        if act == "relu":
            y = jnp.maximum(y, 0.0)
        else:                                    # "sigmoid"
            y = jax.nn.sigmoid(y)
        return y

    h = layer(x_ref[...], w1_ref, b1_ref, "relu").astype(jnp.bfloat16)
    h = layer(h, w2_ref, b2_ref, "relu").astype(jnp.bfloat16)
    h = layer(h, w3_ref, b3_ref, "relu").astype(jnp.bfloat16)
    o_ref[...] = layer(h, w4_ref, b4_ref, "sigmoid")


# ----------------------------------------------------------------------------
# Host-side (one-time) embedding of Conv2d / ConvTranspose2d into dense GEMMs
# ----------------------------------------------------------------------------
def _embed_conv(w, b, hin, win, stride, pad, in_layout):
    """Conv2d weight (Cout, Cin, k, k) -> dense (Kin, Kout) matrix mapping a
    flattened input vector (layout `in_layout`) to an NHWC-flattened output."""
    cout, cin, k, _ = w.shape
    hout = (hin + 2 * pad - k) // stride + 1
    wout = (win + 2 * pad - k) // stride + 1
    kin, kout = hin * win * cin, hout * wout * cout
    W = np.zeros((kin, kout), np.float32)
    wt = np.asarray(w, np.float32)
    ci_idx = np.arange(cin)
    for oy in range(hout):
        for ox in range(wout):
            out_base = (oy * wout + ox) * cout
            for ky in range(k):
                iy = oy * stride - pad + ky
                if not (0 <= iy < hin):
                    continue
                for kx in range(k):
                    ix = ox * stride - pad + kx
                    if not (0 <= ix < win):
                        continue
                    if in_layout == "nchw":
                        rows = ci_idx * (hin * win) + iy * win + ix
                    else:                                   # nhwc
                        rows = (iy * win + ix) * cin + ci_idx
                    # (cout, cin) -> (cin, cout); each (row, col) hit once.
                    W[rows, out_base:out_base + cout] = wt[:, :, ky, kx].T
    b_row = np.tile(np.asarray(b, np.float32), hout * wout).reshape(1, kout)
    return W, b_row, (hout, wout, cout)


def _embed_convT(w, b, hin, win, stride, pad, out_layout):
    """ConvTranspose2d weight (Cin, Cout, k, k) -> dense (Kin, Kout) matrix
    mapping an NHWC-flattened input to a flattened output (layout
    `out_layout`).  Uses the scatter relation oy = iy*stride - pad + ky."""
    cin, cout, k, _ = w.shape
    hout = (hin - 1) * stride - 2 * pad + k
    wout = (win - 1) * stride - 2 * pad + k
    kin, kout = hin * win * cin, hout * wout * cout
    W = np.zeros((kin, kout), np.float32)
    wt = np.asarray(w, np.float32)
    ci_idx = np.arange(cin)
    co_idx = np.arange(cout)
    for iy in range(hin):
        for ix in range(win):
            rows = (iy * win + ix) * cin + ci_idx
            for ky in range(k):
                oy = iy * stride - pad + ky
                if not (0 <= oy < hout):
                    continue
                for kx in range(k):
                    ox = ix * stride - pad + kx
                    if not (0 <= ox < wout):
                        continue
                    if out_layout == "nchw":
                        cols = co_idx * (hout * wout) + oy * wout + ox
                    else:                                   # nhwc
                        cols = (oy * wout + ox) * cout + co_idx
                    W[rows[:, None], cols[None, :]] = wt[:, :, ky, kx]  # (cin,cout)
    if out_layout == "nchw":
        b_row = np.repeat(np.asarray(b, np.float32), hout * wout).reshape(1, kout)
    else:
        b_row = np.tile(np.asarray(b, np.float32), hout * wout).reshape(1, kout)
    return W, b_row, (hout, wout, cout)


# ----------------------------------------------------------------------------
# Parameter init (PyTorch-default-like uniform bounds), raw + packed forms
# ----------------------------------------------------------------------------
def _init_conv(key, c_out, c_in, k):
    fan_in = c_in * k * k
    bound = 1.0 / (fan_in ** 0.5)
    kw, kb = jax.random.split(key)
    w = jax.random.uniform(kw, (c_out, c_in, k, k), jnp.float32, -bound, bound)
    b = jax.random.uniform(kb, (c_out,), jnp.float32, -bound, bound)
    return w, b


def _init_convT(key, c_in, c_out, k):
    fan_in = c_out * k * k  # PyTorch uses weight.size(1)*k*k for ConvTranspose
    bound = 1.0 / (fan_in ** 0.5)
    kw, kb = jax.random.split(key)
    w = jax.random.uniform(kw, (c_in, c_out, k, k), jnp.float32, -bound, bound)
    b = jax.random.uniform(kb, (c_out,), jnp.float32, -bound, bound)
    return w, b


def pack_params(raw, height=32, width=32):
    """Build the four dense layer embeddings (bf16) + pre-tiled f32 bias rows."""
    assert height % 8 == 0 and width % 8 == 0
    we1, be1 = raw["enc1"]
    we2, be2 = raw["enc2"]
    wd1, bd1 = raw["dec1"]
    wd2, bd2 = raw["dec2"]
    # x: NCHW-flat -> h1: NHWC-flat -> h2: NHWC-flat -> h3: NHWC-flat -> y: NCHW-flat
    W1, B1, (h1, w1, _) = _embed_conv(we1, be1, height, width, stride=4, pad=2, in_layout="nchw")
    W2, B2, (h2, w2, _) = _embed_conv(we2, be2, h1, w1, stride=2, pad=1, in_layout="nhwc")
    W3, B3, (h3, w3, _) = _embed_convT(wd1, bd1, h2, w2, stride=2, pad=1, out_layout="nhwc")
    W4, B4, (h4, w4, c4) = _embed_convT(wd2, bd2, h3, w3, stride=4, pad=2, out_layout="nchw")
    assert (h4, w4, c4) == (height, width, 3)
    to_w = lambda a: jnp.asarray(a, jnp.bfloat16)
    to_b = lambda a: jnp.asarray(a, jnp.float32)
    return {
        "W1": to_w(W1), "b1": to_b(B1),
        "W2": to_w(W2), "b2": to_b(B2),
        "W3": to_w(W3), "b3": to_b(B3),
        "W4": to_w(W4), "b4": to_b(B4),
    }


def make_params(seed=0):
    keys = jax.random.split(jax.random.PRNGKey(seed), 4)
    raw = {
        "enc1": _init_conv(keys[0], 8, 3, 8),     # Conv2d(3, 8, k=8, s=4, p=2)
        "enc2": _init_conv(keys[1], 32, 8, 4),    # Conv2d(8, 32, k=4, s=2, p=1)
        "dec1": _init_convT(keys[2], 32, 8, 4),   # ConvTranspose2d(32, 8, k=4, s=2, p=1)
        "dec2": _init_convT(keys[3], 8, 3, 8),    # ConvTranspose2d(8, 3, k=8, s=4, p=2)
    }
    return pack_params(raw, 32, 32), raw


# ----------------------------------------------------------------------------
# Full forward: NCHW in / NCHW out, single pallas_call, no grid
# ----------------------------------------------------------------------------
@jax.jit
def conv_autoencoder_forward(params, x_nchw):
    B, C, H, W = x_nchw.shape
    x2d = x_nchw.reshape(B, C * H * W).astype(jnp.bfloat16)   # free reshape + cast

    w1, b1 = params["W1"], params["b1"]
    w2, b2 = params["W2"], params["b2"]
    w3, b3 = params["W3"], params["b3"]
    w4, b4 = params["W4"], params["b4"]
    n_out = w4.shape[1]

    flops = 2 * B * (w1.shape[0] * w1.shape[1] + w2.shape[0] * w2.shape[1]
                     + w3.shape[0] * w3.shape[1] + w4.shape[0] * w4.shape[1])
    bytes_accessed = int(sum(a.size * a.dtype.itemsize
                             for a in (x2d, w1, b1, w2, b2, w3, b3, w4, b4))
                         + B * n_out * 4)

    vmem_spec = pl.BlockSpec(memory_space=pltpu.MemorySpace.VMEM)
    out = pl.pallas_call(
        _fused_autoencoder_kernel,
        out_shape=jax.ShapeDtypeStruct((B, n_out), jnp.float32),
        in_specs=[vmem_spec] * 9,
        out_specs=vmem_spec,
        compiler_params=pltpu.CompilerParams(vmem_limit_bytes=32 * 1024 * 1024),
        cost_estimate=pl.CostEstimate(flops=flops,
                                      transcendentals=B * n_out,
                                      bytes_accessed=bytes_accessed),
    )(x2d, w1, b1, w2, b2, w3, b3, w4, b4)

    return out.reshape(B, 3, H, W)                           # free reshape


# ----------------------------------------------------------------------------
# Reference (pure XLA) for a numerical sanity check
# ----------------------------------------------------------------------------
def _ref_forward(raw, x):
    def conv(x, w, b, s, p):
        y = lax.conv_general_dilated(x, w, (s, s), [(p, p), (p, p)],
                                     dimension_numbers=("NCHW", "OIHW", "NCHW"))
        return y + b.reshape(1, -1, 1, 1)

    def convT(x, w_ct, b, s, p):
        k = w_ct.shape[-1]
        w_conv = jnp.flip(w_ct, axis=(2, 3)).transpose(1, 0, 2, 3)
        y = lax.conv_general_dilated(
            x, w_conv, (1, 1), [(k - 1 - p,) * 2, (k - 1 - p,) * 2],
            lhs_dilation=(s, s),
            dimension_numbers=("NCHW", "OIHW", "NCHW"))
        return y + b.reshape(1, -1, 1, 1)

    h = jax.nn.relu(conv(x, *raw["enc1"], 4, 2))
    h = jax.nn.relu(conv(h, *raw["enc2"], 2, 1))
    h = jax.nn.relu(convT(h, *raw["dec1"], 2, 1))
    h = jax.nn.sigmoid(convT(h, *raw["dec2"], 4, 2))
    return h


if __name__ == "__main__":
    x = jax.random.normal(jax.random.PRNGKey(0), (2, 3, 32, 32), jnp.float32)  # NCHW
    packed, raw = make_params(seed=0)

    out = jax.block_until_ready(conv_autoencoder_forward(packed, x))
    assert out.shape == (2, 3, 32, 32), out.shape

    ref = jax.block_until_ready(_ref_forward(raw, x))
    # bf16 MXU operands / bf16 embedded weights vs f32 XLA reference
    err = float(jnp.max(jnp.abs(out - ref)))
    assert jnp.allclose(out, ref, atol=2e-2, rtol=2e-2), err

    print("KERNEL_OK")
</pallas_src>

<mosaic_0001>
module attributes {stable_mosaic.version = 11 : i64} {
  func.func @_fused_autoencoder_kernel(%arg0: memref<2x3072xbf16, #tpu.memory_space<vmem>>, %arg1: memref<3072x512xbf16, #tpu.memory_space<vmem>>, %arg2: memref<1x512xf32, #tpu.memory_space<vmem>>, %arg3: memref<512x512xbf16, #tpu.memory_space<vmem>>, %arg4: memref<1x512xf32, #tpu.memory_space<vmem>>, %arg5: memref<512x512xbf16, #tpu.memory_space<vmem>>, %arg6: memref<1x512xf32, #tpu.memory_space<vmem>>, %arg7: memref<512x3072xbf16, #tpu.memory_space<vmem>>, %arg8: memref<1x3072xf32, #tpu.memory_space<vmem>>, %arg9: memref<2x3072xf32, #tpu.memory_space<vmem>>) attributes {dimension_semantics = [], scalar_prefetch = 0 : i64, scratch_operands = 0 : i64, tpu.core_type = #tpu.core_type<tc>} {
    %c0 = arith.constant 0 : index
    %c0_0 = arith.constant 0 : index
    %0 = vector.load %arg0[%c0, %c0_0] : memref<2x3072xbf16, #tpu.memory_space<vmem>>, vector<2x3072xbf16>
    %c0_1 = arith.constant 0 : index
    %c0_2 = arith.constant 0 : index
    %1 = vector.load %arg1[%c0_1, %c0_2] : memref<3072x512xbf16, #tpu.memory_space<vmem>>, vector<3072x512xbf16>
    %cst = arith.constant dense<0.000000e+00> : vector<2x512xf32>
    %2 = tpu.matmul %0, %1, %cst {dimension_numbers = #tpu.dot_dimension_numbers<[1], [0], [0], [1], [0, 0, 1, 1], [], []>} : vector<2x3072xbf16>, vector<3072x512xbf16>, vector<2x512xf32> -> vector<2x512xf32>
    %c0_3 = arith.constant 0 : index
    %c0_4 = arith.constant 0 : index
    %3 = vector.load %arg2[%c0_3, %c0_4] : memref<1x512xf32, #tpu.memory_space<vmem>>, vector<1x512xf32>
    %4 = vector.broadcast %3 : vector<1x512xf32> to vector<2x512xf32>
    %5 = arith.addf %2, %4 : vector<2x512xf32>
    %cst_5 = arith.constant 0.000000e+00 : f32
    %6 = vector.broadcast %cst_5 : f32 to vector<2x512xf32>
    %7 = arith.maximumf %5, %6 : vector<2x512xf32>
    %8 = arith.truncf %7 : vector<2x512xf32> to vector<2x512xbf16>
    %c0_6 = arith.constant 0 : index
    %c0_7 = arith.constant 0 : index
    %9 = vector.load %arg3[%c0_6, %c0_7] : memref<512x512xbf16, #tpu.memory_space<vmem>>, vector<512x512xbf16>
    %cst_8 = arith.constant dense<0.000000e+00> : vector<2x512xf32>
    %10 = tpu.matmul %8, %9, %cst_8 {dimension_numbers = #tpu.dot_dimension_numbers<[1], [0], [0], [1], [0, 0, 1, 1], [], []>} : vector<2x512xbf16>, vector<512x512xbf16>, vector<2x512xf32> -> vector<2x512xf32>
    %c0_9 = arith.constant 0 : index
    %c0_10 = arith.constant 0 : index
    %11 = vector.load %arg4[%c0_9, %c0_10] : memref<1x512xf32, #tpu.memory_space<vmem>>, vector<1x512xf32>
    %12 = vector.broadcast %11 : vector<1x512xf32> to vector<2x512xf32>
    %13 = arith.addf %10, %12 : vector<2x512xf32>
    %cst_11 = arith.constant 0.000000e+00 : f32
    %14 = vector.broadcast %cst_11 : f32 to vector<2x512xf32>
    %15 = arith.maximumf %13, %14 : vector<2x512xf32>
    %16 = arith.truncf %15 : vector<2x512xf32> to vector<2x512xbf16>
    %c0_12 = arith.constant 0 : index
    %c0_13 = arith.constant 0 : index
    %17 = vector.load %arg5[%c0_12, %c0_13] : memref<512x512xbf16, #tpu.memory_space<vmem>>, vector<512x512xbf16>
    %cst_14 = arith.constant dense<0.000000e+00> : vector<2x512xf32>
    %18 = tpu.matmul %16, %17, %cst_14 {dimension_numbers = #tpu.dot_dimension_numbers<[1], [0], [0], [1], [0, 0, 1, 1], [], []>} : vector<2x512xbf16>, vector<512x512xbf16>, vector<2x512xf32> -> vector<2x512xf32>
    %c0_15 = arith.constant 0 : index
    %c0_16 = arith.constant 0 : index
    %19 = vector.load %arg6[%c0_15, %c0_16] : memref<1x512xf32, #tpu.memory_space<vmem>>, vector<1x512xf32>
    %20 = vector.broadcast %19 : vector<1x512xf32> to vector<2x512xf32>
    %21 = arith.addf %18, %20 : vector<2x512xf32>
    %cst_17 = arith.constant 0.000000e+00 : f32
    %22 = vector.broadcast %cst_17 : f32 to vector<2x512xf32>
    %23 = arith.maximumf %21, %22 : vector<2x512xf32>
    %24 = arith.truncf %23 : vector<2x512xf32> to vector<2x512xbf16>
    %c0_18 = arith.constant 0 : index
    %c0_19 = arith.constant 0 : index
    %25 = vector.load %arg7[%c0_18, %c0_19] : memref<512x3072xbf16, #tpu.memory_space<vmem>>, vector<512x3072xbf16>
    %cst_20 = arith.constant dense<0.000000e+00> : vector<2x3072xf32>
    %26 = tpu.matmul %24, %25, %cst_20 {dimension_numbers = #tpu.dot_dimension_numbers<[1], [0], [0], [1], [0, 0, 1, 1], [], []>} : vector<2x512xbf16>, vector<512x3072xbf16>, vector<2x3072xf32> -> vector<2x3072xf32>
    %c0_21 = arith.constant 0 : index
    %c0_22 = arith.constant 0 : index
    %27 = vector.load %arg8[%c0_21, %c0_22] : memref<1x3072xf32, #tpu.memory_space<vmem>>, vector<1x3072xf32>
    %28 = vector.broadcast %27 : vector<1x3072xf32> to vector<2x3072xf32>
    %29 = arith.addf %26, %28 : vector<2x3072xf32>
    %30 = arith.negf %29 : vector<2x3072xf32>
    %31 = math.exp %30 : vector<2x3072xf32>
    %cst_23 = arith.constant 1.000000e+00 : f32
    %32 = vector.broadcast %cst_23 : f32 to vector<2x3072xf32>
    %33 = arith.addf %32, %31 : vector<2x3072xf32>
    %34 = arith.divf %32, %33 : vector<2x3072xf32>
    %c0_24 = arith.constant 0 : index
    %c0_25 = arith.constant 0 : index
    %35 = vector.load %arg9[%c0_24, %c0_25] : memref<2x3072xf32, #tpu.memory_space<vmem>>, vector<2x3072xf32>
    tpu.vector_store %arg9[%c0_24, %c0_25], %34 {strides = array<i32>} : memref<2x3072xf32, #tpu.memory_space<vmem>>, vector<2x3072xf32>,
    return
  }
}

</mosaic_0001>

<llo_original>
// kernel: conv_autoencoder_forward.1
$region0: #{conv_autoencoder_forward.1}
  #allocation0 [shape = 'u32[]', space=smem, size = 0x4, offset = 0x4, fixed_abs, tag = 'smem constant byte address 0x4 - core index']
  #allocation1 [shape = 'u32[144,128]{1,0:T(1,128)}', space=vmem, size = 0x12000, scoped, tag = 'internal scratch']
  %s0 = inlined_call_operand.vmem [shape: bf16[2,3072], index: 0, kind: input, shape index: {}]
  %s1 = inlined_call_operand.hbm [shape: bf16[3072,512], index: 1, kind: input, shape index: {}]
  %s2 = inlined_call_operand.hbm [shape: f32[1,512], index: 2, kind: input, shape index: {}]
  %s3 = inlined_call_operand.hbm [shape: bf16[512,512], index: 3, kind: input, shape index: {}]
  %s4 = inlined_call_operand.hbm [shape: f32[1,512], index: 4, kind: input, shape index: {}]
  %s5 = inlined_call_operand.hbm [shape: bf16[512,512], index: 5, kind: input, shape index: {}]
  %s6 = inlined_call_operand.hbm [shape: f32[1,512], index: 6, kind: input, shape index: {}]
  %s7 = inlined_call_operand.hbm [shape: bf16[512,3072], index: 7, kind: input, shape index: {}]
  %s8 = inlined_call_operand.hbm [shape: f32[1,3072], index: 8, kind: input, shape index: {}]
  %s9 = inlined_call_operand.vmem [shape: f32[2,3072], index: 9, kind: output, shape index: {}]
  %s10 = sld [smem:[#allocation0]]
  $region78: #{conv_autoencoder_forward.1} parent=0
    _
  %s12 = ssub.s32 1, %s10
  %s13 = scalar_select 0, %s12, %s10
  $region1: #{conv_autoencoder_forward.1} parent=0
    #allocation2 [shape = 'u8[3145728]{0}', space=vmem, size = 0x300000, scoped, tag = 'input window, operand 1, single buffered']
    #allocation3 [shape = 's32[1]{0}', space=sflag, size = 0x4, scoped, tag = 'scoped memory for conv_autoencoder_forward.1']
    #allocation4 [shape = 'u8[2048]{0}', space=vmem, size = 0x800, scoped, tag = 'input window, operand 2, single buffered']
    #allocation5 [shape = 's32[1]{0}', space=sflag, size = 0x4, scoped, tag = 'scoped memory for conv_autoencoder_forward.1']
    #allocation6 [shape = 'u8[524288]{0}', space=vmem, size = 0x80000, scoped, tag = 'input window, operand 3, single buffered']
    #allocation7 [shape = 'u8[2048]{0}', space=vmem, size = 0x800, scoped, tag = 'input window, operand 4, single buffered']
    #allocation8 [shape = 's32[1]{0}', space=sflag, size = 0x4, scoped, tag = 'scoped memory for conv_autoencoder_forward.1']
    #allocation9 [shape = 'u8[524288]{0}', space=vmem, size = 0x80000, scoped, tag = 'input window, operand 5, single buffered']
    #allocation10 [shape = 'u8[2048]{0}', space=vmem, size = 0x800, scoped, tag = 'input window, operand 6, single buffered']
    #allocation11 [shape = 's32[1]{0}', space=sflag, size = 0x4, scoped, tag = 'scoped memory for conv_autoencoder_forward.1']
    #allocation12 [shape = 'u8[3145728]{0}', space=vmem, size = 0x300000, scoped, tag = 'input window, operand 7, single buffered']
    #allocation13 [shape = 'u8[12288]{0}', space=vmem, size = 0x3000, scoped, tag = 'input window, operand 8, single buffered']
    #allocation14 [shape = 's32[1]{0}', space=sflag, size = 0x4, scoped, tag = 'scoped memory for conv_autoencoder_forward.1']
    %14 = vsyncpa [#allocation3], 0
    %15 = vsyncpa [#allocation5], 0
    %16 = vsyncpa [#allocation8], 0
    %17 = vsyncpa [#allocation11], 0
    %18 = vsyncpa [#allocation14], 0
    // Predicated region
    $region2: #{conv_autoencoder_forward.1} parent=1 // pred_check
      _
    $region3: #{conv_autoencoder_forward.1} parent=1 // pred_check_branch
      %20 = sbr.rel (0) target = $region5
    $region4: #{conv_autoencoder_forward.1} parent=1 // pred_region
      _
    $region5: #{conv_autoencoder_forward.1} parent=1 // pred_fallthru
      _
    // Predicated region
    $region6: #{conv_autoencoder_forward.1} parent=1 // pred_check
      _
    $region7: #{conv_autoencoder_forward.1} parent=1 // pred_check_branch
      %22 = sbr.rel (0) target = $region9
    $region8: #{conv_autoencoder_forward.1} parent=1 // pred_region
      %s24 = ssub.s32 98304, 98304
      %25 = vsyncadd [#allocation3], %s24
      %s26 = sshll.u32 [#allocation2], 4
      %s27 = int_to_ptr.vmem [resolvable:$true] %s26
      %32 = dma.hbm_to_vmem [thread:$0]  %s1, 98304, %s27, [#allocation3], 256, 256, 16
    $region9: #{conv_autoencoder_forward.1} parent=1 // pred_fallthru
      _
    // Predicated region
    $region10: #{conv_autoencoder_forward.1} parent=1 // pred_check
      _
    $region11: #{conv_autoencoder_forward.1} parent=1 // pred_check_branch
      %34 = sbr.rel (0) target = $region13
    $region12: #{conv_autoencoder_forward.1} parent=1 // pred_region
      %s36 = ssub.s32 64, 64
      %37 = vsyncadd [#allocation5], %s36
      %s39 = sshll.u32 [#allocation4], 4
      %s40 = int_to_ptr.vmem [resolvable:$true] %s39
      %42 = dma.hbm_to_vmem [thread:$0]  %s2, 64, %s40, [#allocation5]
    $region13: #{conv_autoencoder_forward.1} parent=1 // pred_fallthru
      _
    // Predicated region
    $region14: #{conv_autoencoder_forward.1} parent=1 // pred_check
      _
    $region15: #{conv_autoencoder_forward.1} parent=1 // pred_check_branch
      %44 = sbr.rel (0) target = $region17
    $region16: #{conv_autoencoder_forward.1} parent=1 // pred_region
      %s46 = ssub.s32 16384, 16384
      %47 = vsyncadd [#allocation5], %s46
      %s48 = sshll.u32 [#allocation6], 4
      %s49 = int_to_ptr.vmem [resolvable:$true] %s48
      %54 = dma.hbm_to_vmem [thread:$0]  %s3, 16384, %s49, [#allocation5], 256, 256, 16
    $region17: #{conv_autoencoder_forward.1} parent=1 // pred_fallthru
      _
    // Predicated region
    $region18: #{conv_autoencoder_forward.1} parent=1 // pred_check
      _
    $region19: #{conv_autoencoder_forward.1} parent=1 // pred_check_branch
      %56 = sbr.rel (0) target = $region21
    $region20: #{conv_autoencoder_forward.1} parent=1 // pred_region
      %s58 = ssub.s32 64, 64
      %59 = vsyncadd [#allocation8], %s58
      %s61 = sshll.u32 [#allocation7], 4
      %s62 = int_to_ptr.vmem [resolvable:$true] %s61
      %64 = dma.hbm_to_vmem [thread:$0]  %s4, 64, %s62, [#allocation8]
    $region21: #{conv_autoencoder_forward.1} parent=1 // pred_fallthru
      _
    // Predicated region
    $region22: #{conv_autoencoder_forward.1} parent=1 // pred_check
      _
    $region23: #{conv_autoencoder_forward.1} parent=1 // pred_check_branch
      %66 = sbr.rel (0) target = $region25
    $region24: #{conv_autoencoder_forward.1} parent=1 // pred_region
      %s68 = ssub.s32 16384, 16384
      %69 = vsyncadd [#allocation8], %s68
      %s70 = sshll.u32 [#allocation9], 4
      %s71 = int_to_ptr.vmem [resolvable:$true] %s70
      %76 = dma.hbm_to_vmem [thread:$0]  %s5, 16384, %s71, [#allocation8], 256, 256, 16
    $region25: #{conv_autoencoder_forward.1} parent=1 // pred_fallthru
      _
    // Predicated region
    $region26: #{conv_autoencoder_forward.1} parent=1 // pred_check
      _
    $region27: #{conv_autoencoder_forward.1} parent=1 // pred_check_branch
      %78 = sbr.rel (0) target = $region29
    $region28: #{conv_autoencoder_forward.1} parent=1 // pred_region
      %s80 = ssub.s32 64, 64
      %81 = vsyncadd [#allocation11], %s80
      %s83 = sshll.u32 [#allocation10], 4
      %s84 = int_to_ptr.vmem [resolvable:$true] %s83
      %86 = dma.hbm_to_vmem [thread:$0]  %s6, 64, %s84, [#allocation11]
    $region29: #{conv_autoencoder_forward.1} parent=1 // pred_fallthru
      _
    // Predicated region
    $region30: #{conv_autoencoder_forward.1} parent=1 // pred_check
      _
    $region31: #{conv_autoencoder_forward.1} parent=1 // pred_check_branch
      %88 = sbr.rel (0) target = $region33
    $region32: #{conv_autoencoder_forward.1} parent=1 // pred_region
      %s90 = ssub.s32 98304, 98304
      %91 = vsyncadd [#allocation11], %s90
      %s92 = sshll.u32 [#allocation12], 4
      %s93 = int_to_ptr.vmem [resolvable:$true] %s92
      %98 = dma.hbm_to_vmem [thread:$0]  %s7, 98304, %s93, [#allocation11], 1536, 1536, 96
    $region33: #{conv_autoencoder_forward.1} parent=1 // pred_fallthru
      _
    // Predicated region
    $region34: #{conv_autoencoder_forward.1} parent=1 // pred_check
      _
    $region35: #{conv_autoencoder_forward.1} parent=1 // pred_check_branch
      %100 = sbr.rel (0) target = $region37
    $region36: #{conv_autoencoder_forward.1} parent=1 // pred_region
      %s102 = ssub.s32 384, 384
      %103 = vsyncadd [#allocation14], %s102
      %s105 = sshll.u32 [#allocation13], 4
      %s106 = int_to_ptr.vmem [resolvable:$true] %s105
      %108 = dma.hbm_to_vmem [thread:$0]  %s8, 384, %s106, [#allocation14]
    $region37: #{conv_autoencoder_forward.1} parent=1 // pred_fallthru
      _
    // Predicated region
    $region38: #{conv_autoencoder_forward.1} parent=1 // pred_check
      _
    $region39: #{conv_autoencoder_forward.1} parent=1 // pred_check_branch
      %110 = sbr.rel (0) target = $region41
    $region40: #{conv_autoencoder_forward.1} parent=1 // pred_region
      %111 = dma.done [#allocation3], 98304
    $region41: #{conv_autoencoder_forward.1} parent=1 // pred_fallthru
      _
    // Predicated region
    $region42: #{conv_autoencoder_forward.1} parent=1 // pred_check
      _
    $region43: #{conv_autoencoder_forward.1} parent=1 // pred_check_branch
      %113 = sbr.rel (0) target = $region45
    $region44: #{conv_autoencoder_forward.1} parent=1 // pred_region
      %114 = dma.done [#allocation5], 64
    $region45: #{conv_autoencoder_forward.1} parent=1 // pred_fallthru
      _
    // Predicated region
    $region46: #{conv_autoencoder_forward.1} parent=1 // pred_check
      _
    $region47: #{conv_autoencoder_forward.1} parent=1 // pred_check_branch
      %116 = sbr.rel (0) target = $region49
    $region48: #{conv_autoencoder_forward.1} parent=1 // pred_region
      %117 = dma.done [#allocation5], 16384
    $region49: #{conv_autoencoder_forward.1} parent=1 // pred_fallthru
      _
    // Predicated region
    $region50: #{conv_autoencoder_forward.1} parent=1 // pred_check
      _
    $region51: #{conv_autoencoder_forward.1} parent=1 // pred_check_branch
      %119 = sbr.rel (0) target = $region53
    $region52: #{conv_autoencoder_forward.1} parent=1 // pred_region
      %120 = dma.done [#allocation8], 64
    $region53: #{conv_autoencoder_forward.1} parent=1 // pred_fallthru
      _
    // Predicated region
    $region54: #{conv_autoencoder_forward.1} parent=1 // pred_check
      _
    $region55: #{conv_autoencoder_forward.1} parent=1 // pred_check_branch
      %122 = sbr.rel (0) target = $region57
    $region56: #{conv_autoencoder_forward.1} parent=1 // pred_region
      %123 = dma.done [#allocation8], 16384
    $region57: #{conv_autoencoder_forward.1} parent=1 // pred_fallthru
      _
    // Predicated region
    $region58: #{conv_autoencoder_forward.1} parent=1 // pred_check
      _
    $region59: #{conv_autoencoder_forward.1} parent=1 // pred_check_branch
      %125 = sbr.rel (0) target = $region61
    $region60: #{conv_autoencoder_forward.1} parent=1 // pred_region
      %126 = dma.done [#allocation11], 64
    $region61: #{conv_autoencoder_forward.1} parent=1 // pred_fallthru
      _
    // Predicated region
    $region62: #{conv_autoencoder_forward.1} parent=1 // pred_check
      _
    $region63: #{conv_autoencoder_forward.1} parent=1 // pred_check_branch
      %128 = sbr.rel (0) target = $region65
    $region64: #{conv_autoencoder_forward.1} parent=1 // pred_region
      %129 = dma.done [#allocation11], 98304
    $region65: #{conv_autoencoder_forward.1} parent=1 // pred_fallthru
      _
    // Predicated region
    $region66: #{conv_autoencoder_forward.1} parent=1 // pred_check
      _
    $region67: #{conv_autoencoder_forward.1} parent=1 // pred_check_branch
      %131 = sbr.rel (0) target = $region69
    $region68: #{conv_autoencoder_forward.1} parent=1 // pred_region
      %132 = dma.done [#allocation14], 384
    $region69: #{conv_autoencoder_forward.1} parent=1 // pred_fallthru
      _
    %v133 = vld [vmem:[%s0] sm:$0xff]
    %v134 = vld [vmem:[%s0 + $0x8] sm:$0xff]
    %v135 = vld [vmem:[%s0 + $0x10] sm:$0xff]
    %v136 = vld [vmem:[#allocation2] sm:$0xff]
    %v137 = vld [vmem:[#allocation2 + $0x8] sm:$0xff]
    %v138 = vld [vmem:[#allocation2 + $0x10] sm:$0xff]
    %v139 = vld [vmem:[#allocation2 + $0x18] sm:$0xff]
    %v140 = vld [vmem:[#allocation2 + $0x20] sm:$0xff]
    %v141 = vld [vmem:[#allocation2 + $0x28] sm:$0xff]
    %v142 = vld [vmem:[#allocation2 + $0x30] sm:$0xff]
    %v143 = vld [vmem:[#allocation2 + $0x38] sm:$0xff]
    %v144 = vld [vmem:[#allocation2 + $0x40] sm:$0xff]
    %v145 = vld [vmem:[#allocation2 + $0x48] sm:$0xff]
    %v146 = vld [vmem:[#allocation2 + $0x50] sm:$0xff]
    %v147 = vld [vmem:[#allocation2 + $0x58] sm:$0xff]
    %v148 = vld [vmem:[#allocation2 + $0x60] sm:$0xff]
    %v149 = vld [vmem:[#allocation2 + $0x68] sm:$0xff]
    %v150 = vld [vmem:[#allocation2 + $0x70] sm:$0xff]
    %v151 = vld [vmem:[#allocation2 + $0x78] sm:$0xff]
    %v152 = vld [vmem:[#allocation2 + $0x80] sm:$0xff]
    %v153 = vld [vmem:[#allocation2 + $0x88] sm:$0xff]
    %v154 = vld [vmem:[#allocation2 + $0x90] sm:$0xff]
    %v155 = vld [vmem:[#allocation2 + $0x98] sm:$0xff]
    %v156 = vld [vmem:[#allocation2 + $0xa0] sm:$0xff]
    %v157 = vld [vmem:[#allocation2 + $0xa8] sm:$0xff]
    %v158 = vld [vmem:[#allocation2 + $0xb0] sm:$0xff]
    %v159 = vld [vmem:[#allocation2 + $0xb8] sm:$0xff]
    %v160 = vld [vmem:[#allocation2 + $0xc0] sm:$0xff]
    %v161 = vld [vmem:[#allocation2 + $0xc8] sm:$0xff]
    %v162 = vld [vmem:[#allocation2 + $0xd0] sm:$0xff]
    %v163 = vld [vmem:[#allocation2 + $0xd8] sm:$0xff]
    %v164 = vld [vmem:[#allocation2 + $0xe0] sm:$0xff]
    %v165 = vld [vmem:[#allocation2 + $0xe8] sm:$0xff]
    %v166 = vld [vmem:[#allocation2 + $0xf0] sm:$0xff]
    %v167 = vld [vmem:[#allocation2 + $0xf8] sm:$0xff]
    %v168 = vld [vmem:[#allocation2 + $0x100] sm:$0xff]
    %v169 = vld [vmem:[#allocation2 + $0x108] sm:$0xff]
    %v170 = vld [vmem:[#allocation2 + $0x110] sm:$0xff]
    %v171 = vld [vmem:[#allocation2 + $0x118] sm:$0xff]
    %v172 = vld [vmem:[#allocation2 + $0x120] sm:$0xff]
    %v173 = vld [vmem:[#allocation2 + $0x128] sm:$0xff]
    %v174 = vld [vmem:[#allocation2 + $0x130] sm:$0xff]
    %v175 = vld [vmem:[#allocation2 + $0x138] sm:$0xff]
    %v176 = vld [vmem:[#allocation2 + $0x140] sm:$0xff]
    %v177 = vld [vmem:[#allocation2 + $0x148] sm:$0xff]
    %v178 = vld [vmem:[#allocation2 + $0x150] sm:$0xff]
    %v179 = vld [vmem:[#allocation2 + $0x158] sm:$0xff]
    %v180 = vld [vmem:[#allocation2 + $0x160] sm:$0xff]
    %v181 = vld [vmem:[#allocation2 + $0x168] sm:$0xff]
    %v182 = vld [vmem:[#allocation2 + $0x170] sm:$0xff]
    %v183 = vld [vmem:[#allocation2 + $0x178] sm:$0xff]
    %v184 = vld [vmem:[#allocation2 + $0x180] sm:$0xff]
    %v185 = vld [vmem:[#allocation2 + $0x188] sm:$0xff]
    %v186 = vld [vmem:[#allocation2 + $0x190] sm:$0xff]
    %v187 = vld [vmem:[#allocation2 + $0x198] sm:$0xff]
    %v188 = vld [vmem:[#allocation2 + $0x1a0] sm:$0xff]
    %v189 = vld [vmem:[#allocation2 + $0x1a8] sm:$0xff]
    %v190 = vld [vmem:[#allocation2 + $0x1b0] sm:$0xff]
    %v191 = vld [vmem:[#allocation2 + $0x1b8] sm:$0xff]
    %v192 = vld [vmem:[#allocation2 + $0x1c0] sm:$0xff]
    %v193 = vld [vmem:[#allocation2 + $0x1c8] sm:$0xff]
    %v194 = vld [vmem:[#allocation2 + $0x1d0] sm:$0xff]
    %v195 = vld [vmem:[#allocation2 + $0x1d8] sm:$0xff]
    %v196 = vld [vmem:[#allocation2 + $0x1e0] sm:$0xff]
    %v197 = vld [vmem:[#allocation2 + $0x1e8] sm:$0xff]
    %v198 = vld [vmem:[#allocation2 + $0x1f0] sm:$0xff]
    %v199 = vld [vmem:[#allocation2 + $0x1f8] sm:$0xff]
    %v200 = vld [vmem:[#allocation2 + $0x200] sm:$0xff]
    %v201 = vld [vmem:[#allocation2 + $0x208] sm:$0xff]
    %v202 = vld [vmem:[#allocation2 + $0x210] sm:$0xff]
    %v203 = vld [vmem:[#allocation2 + $0x218] sm:$0xff]
    %v204 = vld [vmem:[#allocation2 + $0x220] sm:$0xff]
    %v205 = vld [vmem:[#allocation2 + $0x228] sm:$0xff]
    %v206 = vld [vmem:[#allocation2 + $0x230] sm:$0xff]
    %v207 = vld [vmem:[#allocation2 + $0x238] sm:$0xff]
    %v208 = vld [vmem:[#allocation2 + $0x240] sm:$0xff]
    %v209 = vld [vmem:[#allocation2 + $0x248] sm:$0xff]
    %v210 = vld [vmem:[#allocation2 + $0x250] sm:$0xff]
    %v211 = vld [vmem:[#allocation2 + $0x258] sm:$0xff]
    %v212 = vld [vmem:[#allocation2 + $0x260] sm:$0xff]
    %v213 = vld [vmem:[#allocation2 + $0x268] sm:$0xff]
    %v214 = vld [vmem:[#allocation2 + $0x270] sm:$0xff]
    %v215 = vld [vmem:[#allocation2 + $0x278] sm:$0xff]
    %v216 = vld [vmem:[#allocation2 + $0x280] sm:$0xff]
    %v217 = vld [vmem:[#allocation2 + $0x288] sm:$0xff]
    %v218 = vld [vmem:[#allocation2 + $0x290] sm:$0xff]
    %v219 = vld [vmem:[#allocation2 + $0x298] sm:$0xff]
    %v220 = vld [vmem:[#allocation2 + $0x2a0] sm:$0xff]
    %v221 = vld [vmem:[#allocation2 + $0x2a8] sm:$0xff]
    %v222 = vld [vmem:[#allocation2 + $0x2b0] sm:$0xff]
    %v223 = vld [vmem:[#allocation2 + $0x2b8] sm:$0xff]
    %v224 = vld [vmem:[#allocation2 + $0x2c0] sm:$0xff]
    %v225 = vld [vmem:[#allocation2 + $0x2c8] sm:$0xff]
    %v226 = vld [vmem:[#allocation2 + $0x2d0] sm:$0xff]
    %v227 = vld [vmem:[#allocation2 + $0x2d8] sm:$0xff]
    %v228 = vld [vmem:[#allocation2 + $0x2e0] sm:$0xff]
    %v229 = vld [vmem:[#allocation2 + $0x2e8] sm:$0xff]
    %v230 = vld [vmem:[#allocation2 + $0x2f0] sm:$0xff]
    %v231 = vld [vmem:[#allocation2 + $0x2f8] sm:$0xff]
    %v232 = vld [vmem:[#allocation2 + $0x300] sm:$0xff]
    %v233 = vld [vmem:[#allocation2 + $0x308] sm:$0xff]
    %v234 = vld [vmem:[#allocation2 + $0x310] sm:$0xff]
    %v235 = vld [vmem:[#allocation2 + $0x318] sm:$0xff]
    %v236 = vld [vmem:[#allocation2 + $0x320] sm:$0xff]
    %v237 = vld [vmem:[#allocation2 + $0x328] sm:$0xff]
    %v238 = vld [vmem:[#allocation2 + $0x330] sm:$0xff]
    %v239 = vld [vmem:[#allocation2 + $0x338] sm:$0xff]
    %v240 = vld [vmem:[#allocation2 + $0x340] sm:$0xff]
    %v241 = vld [vmem:[#allocation2 + $0x348] sm:$0xff]
    %v242 = vld [vmem:[#allocation2 + $0x350] sm:$0xff]
    %v243 = vld [vmem:[#allocation2 + $0x358] sm:$0xff]
    %v244 = vld [vmem:[#allocation2 + $0x360] sm:$0xff]
    %v245 = vld [vmem:[#allocation2 + $0x368] sm:$0xff]
    %v246 = vld [vmem:[#allocation2 + $0x370] sm:$0xff]
    %v247 = vld [vmem:[#allocation2 + $0x378] sm:$0xff]
    %v248 = vld [vmem:[#allocation2 + $0x380] sm:$0xff]
    %v249 = vld [vmem:[#allocation2 + $0x388] sm:$0xff]
    %v250 = vld [vmem:[#allocation2 + $0x390] sm:$0xff]
    %v251 = vld [vmem:[#allocation2 + $0x398] sm:$0xff]
    %v252 = vld [vmem:[#allocation2 + $0x3a0] sm:$0xff]
    %v253 = vld [vmem:[#allocation2 + $0x3a8] sm:$0xff]
    %v254 = vld [vmem:[#allocation2 + $0x3b0] sm:$0xff]
    %v255 = vld [vmem:[#allocation2 + $0x3b8] sm:$0xff]
    %v256 = vld [vmem:[#allocation2 + $0x3c0] sm:$0xff]
    %v257 = vld [vmem:[#allocation2 + $0x3c8] sm:$0xff]
    %v258 = vld [vmem:[#allocation2 + $0x3d0] sm:$0xff]
    %v259 = vld [vmem:[#allocation2 + $0x3d8] sm:$0xff]
    %v260 = vld [vmem:[#allocation2 + $0x3e0] sm:$0xff]
    %v261 = vld [vmem:[#allocation2 + $0x3e8] sm:$0xff]
    %v262 = vld [vmem:[#allocation2 + $0x3f0] sm:$0xff]
    %v263 = vld [vmem:[#allocation2 + $0x3f8] sm:$0xff]
    %v264 = vld [vmem:[#allocation2 + $0x400] sm:$0xff]
    %v265 = vld [vmem:[#allocation2 + $0x408] sm:$0xff]
    %v266 = vld [vmem:[#allocation2 + $0x410] sm:$0xff]
    %v267 = vld [vmem:[#allocation2 + $0x418] sm:$0xff]
    %v268 = vld [vmem:[#allocation2 + $0x420] sm:$0xff]
    %v269 = vld [vmem:[#allocation2 + $0x428] sm:$0xff]
    %v270 = vld [vmem:[#allocation2 + $0x430] sm:$0xff]
    %v271 = vld [vmem:[#allocation2 + $0x438] sm:$0xff]
    %v272 = vld [vmem:[#allocation2 + $0x440] sm:$0xff]
    %v273 = vld [vmem:[#allocation2 + $0x448] sm:$0xff]
    %v274 = vld [vmem:[#allocation2 + $0x450] sm:$0xff]
    %v275 = vld [vmem:[#allocation2 + $0x458] sm:$0xff]
    %v276 = vld [vmem:[#allocation2 + $0x460] sm:$0xff]
    %v277 = vld [vmem:[#allocation2 + $0x468] sm:$0xff]
    %v278 = vld [vmem:[#allocation2 + $0x470] sm:$0xff]
    %v279 = vld [vmem:[#allocation2 + $0x478] sm:$0xff]
    %v280 = vld [vmem:[#allocation2 + $0x480] sm:$0xff]
    %v281 = vld [vmem:[#allocation2 + $0x488] sm:$0xff]
    %v282 = vld [vmem:[#allocation2 + $0x490] sm:$0xff]
    %v283 = vld [vmem:[#allocation2 + $0x498] sm:$0xff]
    %v284 = vld [vmem:[#allocation2 + $0x4a0] sm:$0xff]
    %v285 = vld [vmem:[#allocation2 + $0x4a8] sm:$0xff]
    %v286 = vld [vmem:[#allocation2 + $0x4b0] sm:$0xff]
    %v287 = vld [vmem:[#allocation2 + $0x4b8] sm:$0xff]
    %v288 = vld [vmem:[#allocation2 + $0x4c0] sm:$0xff]
    %v289 = vld [vmem:[#allocation2 + $0x4c8] sm:$0xff]
    %v290 = vld [vmem:[#allocation2 + $0x4d0] sm:$0xff]
    %v291 = vld [vmem:[#allocation2 + $0x4d8] sm:$0xff]
    %v292 = vld [vmem:[#allocation2 + $0x4e0] sm:$0xff]
    %v293 = vld [vmem:[#allocation2 + $0x4e8] sm:$0xff]
    %v294 = vld [vmem:[#allocation2 + $0x4f0] sm:$0xff]
    %v295 = vld [vmem:[#allocation2 + $0x4f8] sm:$0xff]
    %v296 = vld [vmem:[#allocation2 + $0x500] sm:$0xff]
    %v297 = vld [vmem:[#allocation2 + $0x508] sm:$0xff]
    %v298 = vld [vmem:[#allocation2 + $0x510] sm:$0xff]
    %v299 = vld [vmem:[#allocation2 + $0x518] sm:$0xff]
    %v300 = vld [vmem:[#allocation2 + $0x520] sm:$0xff]
    %v301 = vld [vmem:[#allocation2 + $0x528] sm:$0xff]
    %v302 = vld [vmem:[#allocation2 + $0x530] sm:$0xff]
    %v303 = vld [vmem:[#allocation2 + $0x538] sm:$0xff]
    %v304 = vld [vmem:[#allocation2 + $0x540] sm:$0xff]
    %v305 = vld [vmem:[#allocation2 + $0x548] sm:$0xff]
    %v306 = vld [vmem:[#allocation2 + $0x550] sm:$0xff]
    %v307 = vld [vmem:[#allocation2 + $0x558] sm:$0xff]
    %v308 = vld [vmem:[#allocation2 + $0x560] sm:$0xff]
    %v309 = vld [vmem:[#allocation2 + $0x568] sm:$0xff]
    %v310 = vld [vmem:[#allocation2 + $0x570] sm:$0xff]
    %v311 = vld [vmem:[#allocation2 + $0x578] sm:$0xff]
    %v312 = vld [vmem:[#allocation2 + $0x580] sm:$0xff]
    %v313 = vld [vmem:[#allocation2 + $0x588] sm:$0xff]
    %v314 = vld [vmem:[#allocation2 + $0x590] sm:$0xff]
    %v315 = vld [vmem:[#allocation2 + $0x598] sm:$0xff]
    %v316 = vld [vmem:[#allocation2 + $0x5a0] sm:$0xff]
    %v317 = vld [vmem:[#allocation2 + $0x5a8] sm:$0xff]
    %v318 = vld [vmem:[#allocation2 + $0x5b0] sm:$0xff]
    %v319 = vld [vmem:[#allocation2 + $0x5b8] sm:$0xff]
    %v320 = vld [vmem:[#allocation2 + $0x5c0] sm:$0xff]
    %v321 = vld [vmem:[#allocation2 + $0x5c8] sm:$0xff]
    %v322 = vld [vmem:[#allocation2 + $0x5d0] sm:$0xff]
    %v323 = vld [vmem:[#allocation2 + $0x5d8] sm:$0xff]
    %v324 = vld [vmem:[#allocation2 + $0x5e0] sm:$0xff]
    %v325 = vld [vmem:[#allocation2 + $0x5e8] sm:$0xff]
    %v326 = vld [vmem:[#allocation2 + $0x5f0] sm:$0xff]
    %v327 = vld [vmem:[#allocation2 + $0x5f8] sm:$0xff]
    %v328 = vld [vmem:[#allocation2 + $0x600] sm:$0xff]
    %v329 = vld [vmem:[#allocation2 + $0x608] sm:$0xff]
    %v330 = vld [vmem:[#allocation2 + $0x610] sm:$0xff]
    %v331 = vld [vmem:[#allocation2 + $0x618] sm:$0xff]
    %v332 = vld [vmem:[#allocation2 + $0x620] sm:$0xff]
    %v333 = vld [vmem:[#allocation2 + $0x628] sm:$0xff]
    %v334 = vld [vmem:[#allocation2 + $0x630] sm:$0xff]
    %v335 = vld [vmem:[#allocation2 + $0x638] sm:$0xff]
    %v336 = vld [vmem:[#allocation2 + $0x640] sm:$0xff]
    %v337 = vld [vmem:[#allocation2 + $0x648] sm:$0xff]
    %v338 = vld [vmem:[#allocation2 + $0x650] sm:$0xff]
    %v339 = vld [vmem:[#allocation2 + $0x658] sm:$0xff]
    %v340 = vld [vmem:[#allocation2 + $0x660] sm:$0xff]
    %v341 = vld [vmem:[#allocation2 + $0x668] sm:$0xff]
    %v342 = vld [vmem:[#allocation2 + $0x670] sm:$0xff]
    %v343 = vld [vmem:[#allocation2 + $0x678] sm:$0xff]
    %v344 = vld [vmem:[#allocation2 + $0x680] sm:$0xff]
    %v345 = vld [vmem:[#allocation2 + $0x688] sm:$0xff]
    %v346 = vld [vmem:[#allocation2 + $0x690] sm:$0xff]
    %v347 = vld [vmem:[#allocation2 + $0x698] sm:$0xff]
    %v348 = vld [vmem:[#allocation2 + $0x6a0] sm:$0xff]
    %v349 = vld [vmem:[#allocation2 + $0x6a8] sm:$0xff]
    %v350 = vld [vmem:[#allocation2 + $0x6b0] sm:$0xff]
    %v351 = vld [vmem:[#allocation2 + $0x6b8] sm:$0xff]
    %v352 = vld [vmem:[#allocation2 + $0x6c0] sm:$0xff]
    %v353 = vld [vmem:[#allocation2 + $0x6c8] sm:$0xff]
    %v354 = vld [vmem:[#allocation2 + $0x6d0] sm:$0xff]
    %v355 = vld [vmem:[#allocation2 + $0x6d8] sm:$0xff]
    %v356 = vld [vmem:[#allocation2 + $0x6e0] sm:$0xff]
    %v357 = vld [vmem:[#allocation2 + $0x6e8] sm:$0xff]
    %v358 = vld [vmem:[#allocation2 + $0x6f0] sm:$0xff]
    %v359 = vld [vmem:[#allocation2 + $0x6f8] sm:$0xff]
    %v360 = vld [vmem:[#allocation2 + $0x700] sm:$0xff]
    %v361 = vld [vmem:[#allocation2 + $0x708] sm:$0xff]
    %v362 = vld [vmem:[#allocation2 + $0x710] sm:$0xff]
    %v363 = vld [vmem:[#allocation2 + $0x718] sm:$0xff]
    %v364 = vld [vmem:[#allocation2 + $0x720] sm:$0xff]
    %v365 = vld [vmem:[#allocation2 + $0x728] sm:$0xff]
    %v366 = vld [vmem:[#allocation2 + $0x730] sm:$0xff]
    %v367 = vld [vmem:[#allocation2 + $0x738] sm:$0xff]
    %v368 = vld [vmem:[#allocation2 + $0x740] sm:$0xff]
    %v369 = vld [vmem:[#allocation2 + $0x748] sm:$0xff]
    %v370 = vld [vmem:[#allocation2 + $0x750] sm:$0xff]
    %v371 = vld [vmem:[#allocation2 + $0x758] sm:$0xff]
    %v372 = vld [vmem:[#allocation2 + $0x760] sm:$0xff]
    %v373 = vld [vmem:[#allocation2 + $0x768] sm:$0xff]
    %v374 = vld [vmem:[#allocation2 + $0x770] sm:$0xff]
    %v375 = vld [vmem:[#allocation2 + $0x778] sm:$0xff]
    %v376 = vld [vmem:[#allocation2 + $0x780] sm:$0xff]
    %v377 = vld [vmem:[#allocation2 + $0x788] sm:$0xff]
    %v378 = vld [vmem:[#allocation2 + $0x790] sm:$0xff]
    %v379 = vld [vmem:[#allocation2 + $0x798] sm:$0xff]
    %v380 = vld [vmem:[#allocation2 + $0x7a0] sm:$0xff]
    %v381 = vld [vmem:[#allocation2 + $0x7a8] sm:$0xff]
    %v382 = vld [vmem:[#allocation2 + $0x7b0] sm:$0xff]
    %v383 = vld [vmem:[#allocation2 + $0x7b8] sm:$0xff]
    %v384 = vld [vmem:[#allocation2 + $0x7c0] sm:$0xff]
    %v385 = vld [vmem:[#allocation2 + $0x7c8] sm:$0xff]
    %v386 = vld [vmem:[#allocation2 + $0x7d0] sm:$0xff]
    %v387 = vld [vmem:[#allocation2 + $0x7d8] sm:$0xff]
    %v388 = vld [vmem:[#allocation2 + $0x7e0] sm:$0xff]
    %v389 = vld [vmem:[#allocation2 + $0x7e8] sm:$0xff]
    %v390 = vld [vmem:[#allocation2 + $0x7f0] sm:$0xff]
    %v391 = vld [vmem:[#allocation2 + $0x7f8] sm:$0xff]
    %v392 = vld [vmem:[#allocation2 + $0x800] sm:$0xff]
    %v393 = vld [vmem:[#allocation2 + $0x808] sm:$0xff]
    %v394 = vld [vmem:[#allocation2 + $0x810] sm:$0xff]
    %v395 = vld [vmem:[#allocation2 + $0x818] sm:$0xff]
    %v396 = vld [vmem:[#allocation2 + $0x820] sm:$0xff]
    %v397 = vld [vmem:[#allocation2 + $0x828] sm:$0xff]
    %v398 = vld [vmem:[#allocation2 + $0x830] sm:$0xff]
    %v399 = vld [vmem:[#allocation2 + $0x838] sm:$0xff]
    %v400 = vld [vmem:[#allocation2 + $0x840] sm:$0xff]
    %v401 = vld [vmem:[#allocation2 + $0x848] sm:$0xff]
    %v402 = vld [vmem:[#allocation2 + $0x850] sm:$0xff]
    %v403 = vld [vmem:[#allocation2 + $0x858] sm:$0xff]
    %v404 = vld [vmem:[#allocation2 + $0x860] sm:$0xff]
    %v405 = vld [vmem:[#allocation2 + $0x868] sm:$0xff]
    %v406 = vld [vmem:[#allocation2 + $0x870] sm:$0xff]
    %v407 = vld [vmem:[#allocation2 + $0x878] sm:$0xff]
    %v408 = vld [vmem:[#allocation2 + $0x880] sm:$0xff]
    %v409 = vld [vmem:[#allocation2 + $0x888] sm:$0xff]
    %v410 = vld [vmem:[#allocation2 + $0x890] sm:$0xff]
    %v411 = vld [vmem:[#allocation2 + $0x898] sm:$0xff]
    %v412 = vld [vmem:[#allocation2 + $0x8a0] sm:$0xff]
    %v413 = vld [vmem:[#allocation2 + $0x8a8] sm:$0xff]
    %v414 = vld [vmem:[#allocation2 + $0x8b0] sm:$0xff]
    %v415 = vld [vmem:[#allocation2 + $0x8b8] sm:$0xff]
    %v416 = vld [vmem:[#allocation2 + $0x8c0] sm:$0xff]
    %v417 = vld [vmem:[#allocation2 + $0x8c8] sm:$0xff]
    %v418 = vld [vmem:[#allocation2 + $0x8d0] sm:$0xff]
    %v419 = vld [vmem:[#allocation2 + $0x8d8] sm:$0xff]
    %v420 = vld [vmem:[#allocation2 + $0x8e0] sm:$0xff]
    %v421 = vld [vmem:[#allocation2 + $0x8e8] sm:$0xff]
    %v422 = vld [vmem:[#allocation2 + $0x8f0] sm:$0xff]
    %v423 = vld [vmem:[#allocation2 + $0x8f8] sm:$0xff]
    %v424 = vld [vmem:[#allocation2 + $0x900] sm:$0xff]
    %v425 = vld [vmem:[#allocation2 + $0x908] sm:$0xff]
    %v426 = vld [vmem:[#allocation2 + $0x910] sm:$0xff]
    %v427 = vld [vmem:[#allocation2 + $0x918] sm:$0xff]
    %v428 = vld [vmem:[#allocation2 + $0x920] sm:$0xff]
    %v429 = vld [vmem:[#allocation2 + $0x928] sm:$0xff]
    %v430 = vld [vmem:[#allocation2 + $0x930] sm:$0xff]
    %v431 = vld [vmem:[#allocation2 + $0x938] sm:$0xff]
    %v432 = vld [vmem:[#allocation2 + $0x940] sm:$0xff]
    %v433 = vld [vmem:[#allocation2 + $0x948] sm:$0xff]
    %v434 = vld [vmem:[#allocation2 + $0x950] sm:$0xff]
    %v435 = vld [vmem:[#allocation2 + $0x958] sm:$0xff]
    %v436 = vld [vmem:[#allocation2 + $0x960] sm:$0xff]
    %v437 = vld [vmem:[#allocation2 + $0x968] sm:$0xff]
    %v438 = vld [vmem:[#allocation2 + $0x970] sm:$0xff]
    %v439 = vld [vmem:[#allocation2 + $0x978] sm:$0xff]
    %v440 = vld [vmem:[#allocation2 + $0x980] sm:$0xff]
    %v441 = vld [vmem:[#allocation2 + $0x988] sm:$0xff]
    %v442 = vld [vmem:[#allocation2 + $0x990] sm:$0xff]
    %v443 = vld [vmem:[#allocation2 + $0x998] sm:$0xff]
    %v444 = vld [vmem:[#allocation2 + $0x9a0] sm:$0xff]
    %v445 = vld [vmem:[#allocation2 + $0x9a8] sm:$0xff]
    %v446 = vld [vmem:[#allocation2 + $0x9b0] sm:$0xff]
    %v447 = vld [vmem:[#allocation2 + $0x9b8] sm:$0xff]
    %v448 = vld [vmem:[#allocation2 + $0x9c0] sm:$0xff]
    %v449 = vld [vmem:[#allocation2 + $0x9c8] sm:$0xff]
    %v450 = vld [vmem:[#allocation2 + $0x9d0] sm:$0xff]
    %v451 = vld [vmem:[#allocation2 + $0x9d8] sm:$0xff]
    %v452 = vld [vmem:[#allocation2 + $0x9e0] sm:$0xff]
    %v453 = vld [vmem:[#allocation2 + $0x9e8] sm:$0xff]
    %v454 = vld [vmem:[#allocation2 + $0x9f0] sm:$0xff]
    %v455 = vld [vmem:[#allocation2 + $0x9f8] sm:$0xff]
    %v456 = vld [vmem:[#allocation2 + $0xa00] sm:$0xff]
    %v457 = vld [vmem:[#allocation2 + $0xa08] sm:$0xff]
    %v458 = vld [vmem:[#allocation2 + $0xa10] sm:$0xff]
    %v459 = vld [vmem:[#allocation2 + $0xa18] sm:$0xff]
    %v460 = vld [vmem:[#allocation2 + $0xa20] sm:$0xff]
    %v461 = vld [vmem:[#allocation2 + $0xa28] sm:$0xff]
    %v462 = vld [vmem:[#allocation2 + $0xa30] sm:$0xff]
    %v463 = vld [vmem:[#allocation2 + $0xa38] sm:$0xff]
    %v464 = vld [vmem:[#allocation2 + $0xa40] sm:$0xff]
    %v465 = vld [vmem:[#allocation2 + $0xa48] sm:$0xff]
    %v466 = vld [vmem:[#allocation2 + $0xa50] sm:$0xff]
    %v467 = vld [vmem:[#allocation2 + $0xa58] sm:$0xff]
    %v468 = vld [vmem:[#allocation2 + $0xa60] sm:$0xff]
    %v469 = vld [vmem:[#allocation2 + $0xa68] sm:$0xff]
    %v470 = vld [vmem:[#allocation2 + $0xa70] sm:$0xff]
    %v471 = vld [vmem:[#allocation2 + $0xa78] sm:$0xff]
    %v472 = vld [vmem:[#allocation2 + $0xa80] sm:$0xff]
    %v473 = vld [vmem:[#allocation2 + $0xa88] sm:$0xff]
    %v474 = vld [vmem:[#allocation2 + $0xa90] sm:$0xff]
    %v475 = vld [vmem:[#allocation2 + $0xa98] sm:$0xff]
    %v476 = vld [vmem:[#allocation2 + $0xaa0] sm:$0xff]
    %v477 = vld [vmem:[#allocation2 + $0xaa8] sm:$0xff]
    %v478 = vld [vmem:[#allocation2 + $0xab0] sm:$0xff]
    %v479 = vld [vmem:[#allocation2 + $0xab8] sm:$0xff]
    %v480 = vld [vmem:[#allocation2 + $0xac0] sm:$0xff]
    %v481 = vld [vmem:[#allocation2 + $0xac8] sm:$0xff]
    %v482 = vld [vmem:[#allocation2 + $0xad0] sm:$0xff]
    %v483 = vld [vmem:[#allocation2 + $0xad8] sm:$0xff]
    %v484 = vld [vmem:[#allocation2 + $0xae0] sm:$0xff]
    %v485 = vld [vmem:[#allocation2 + $0xae8] sm:$0xff]
    %v486 = vld [vmem:[#allocation2 + $0xaf0] sm:$0xff]
    %v487 = vld [vmem:[#allocation2 + $0xaf8] sm:$0xff]
    %v488 = vld [vmem:[#allocation2 + $0xb00] sm:$0xff]
    %v489 = vld [vmem:[#allocation2 + $0xb08] sm:$0xff]
    %v490 = vld [vmem:[#allocation2 + $0xb10] sm:$0xff]
    %v491 = vld [vmem:[#allocation2 + $0xb18] sm:$0xff]
    %v492 = vld [vmem:[#allocation2 + $0xb20] sm:$0xff]
    %v493 = vld [vmem:[#allocation2 + $0xb28] sm:$0xff]
    %v494 = vld [vmem:[#allocation2 + $0xb30] sm:$0xff]
    %v495 = vld [vmem:[#allocation2 + $0xb38] sm:$0xff]
    %v496 = vld [vmem:[#allocation2 + $0xb40] sm:$0xff]
    %v497 = vld [vmem:[#allocation2 + $0xb48] sm:$0xff]
    %v498 = vld [vmem:[#allocation2 + $0xb50] sm:$0xff]
    %v499 = vld [vmem:[#allocation2 + $0xb58] sm:$0xff]
    %v500 = vld [vmem:[#allocation2 + $0xb60] sm:$0xff]
    %v501 = vld [vmem:[#allocation2 + $0xb68] sm:$0xff]
    %v502 = vld [vmem:[#allocation2 + $0xb70] sm:$0xff]
    %v503 = vld [vmem:[#allocation2 + $0xb78] sm:$0xff]
    %v504 = vld [vmem:[#allocation2 + $0xb80] sm:$0xff]
    %v505 = vld [vmem:[#allocation2 + $0xb88] sm:$0xff]
    %v506 = vld [vmem:[#allocation2 + $0xb90] sm:$0xff]
    %v507 = vld [vmem:[#allocation2 + $0xb98] sm:$0xff]
    %v508 = vld [vmem:[#allocation2 + $0xba0] sm:$0xff]
    %v509 = vld [vmem:[#allocation2 + $0xba8] sm:$0xff]
    %v510 = vld [vmem:[#allocation2 + $0xbb0] sm:$0xff]
    %v511 = vld [vmem:[#allocation2 + $0xbb8] sm:$0xff]
    %v512 = vld [vmem:[#allocation2 + $0xbc0] sm:$0xff]
    %v513 = vld [vmem:[#allocation2 + $0xbc8] sm:$0xff]
    %v514 = vld [vmem:[#allocation2 + $0xbd0] sm:$0xff]
    %v515 = vld [vmem:[#allocation2 + $0xbd8] sm:$0xff]
    %v516 = vld [vmem:[#allocation2 + $0xbe0] sm:$0xff]
    %v517 = vld [vmem:[#allocation2 + $0xbe8] sm:$0xff]
    %v518 = vld [vmem:[#allocation2 + $0xbf0] sm:$0xff]
    %v519 = vld [vmem:[#allocation2 + $0xbf8] sm:$0xff]
    %v520 = vld [vmem:[#allocation2 + $0xc00] sm:$0xff]
    %v521 = vld [vmem:[#allocation2 + $0xc08] sm:$0xff]
    %v522 = vld [vmem:[#allocation2 + $0xc10] sm:$0xff]
    %v523 = vld [vmem:[#allocation2 + $0xc18] sm:$0xff]
    %v524 = vld [vmem:[#allocation2 + $0xc20] sm:$0xff]
    %v525 = vld [vmem:[#allocation2 + $0xc28] sm:$0xff]
    %v526 = vld [vmem:[#allocation2 + $0xc30] sm:$0xff]
    %v527 = vld [vmem:[#allocation2 + $0xc38] sm:$0xff]
    %v528 = vld [vmem:[#allocation2 + $0xc40] sm:$0xff]
    %v529 = vld [vmem:[#allocation2 + $0xc48] sm:$0xff]
    %v530 = vld [vmem:[#allocation2 + $0xc50] sm:$0xff]
    %v531 = vld [vmem:[#allocation2 + $0xc58] sm:$0xff]
    %v532 = vld [vmem:[#allocation2 + $0xc60] sm:$0xff]
    %v533 = vld [vmem:[#allocation2 + $0xc68] sm:$0xff]
    %v534 = vld [vmem:[#allocation2 + $0xc70] sm:$0xff]
    %v535 = vld [vmem:[#allocation2 + $0xc78] sm:$0xff]
    %v536 = vld [vmem:[#allocation2 + $0xc80] sm:$0xff]
    %v537 = vld [vmem:[#allocation2 + $0xc88] sm:$0xff]
    %v538 = vld [vmem:[#allocation2 + $0xc90] sm:$0xff]
    %v539 = vld [vmem:[#allocation2 + $0xc98] sm:$0xff]
    %v540 = vld [vmem:[#allocation2 + $0xca0] sm:$0xff]
    %v541 = vld [vmem:[#allocation2 + $0xca8] sm:$0xff]
    %v542 = vld [vmem:[#allocation2 + $0xcb0] sm:$0xff]
    %v543 = vld [vmem:[#allocation2 + $0xcb8] sm:$0xff]
    %v544 = vld [vmem:[#allocation2 + $0xcc0] sm:$0xff]
    %v545 = vld [vmem:[#allocation2 + $0xcc8] sm:$0xff]
    %v546 = vld [vmem:[#allocation2 + $0xcd0] sm:$0xff]
    %v547 = vld [vmem:[#allocation2 + $0xcd8] sm:$0xff]
    %v548 = vld [vmem:[#allocation2 + $0xce0] sm:$0xff]
    %v549 = vld [vmem:[#allocation2 + $0xce8] sm:$0xff]
    %v550 = vld [vmem:[#allocation2 + $0xcf0] sm:$0xff]
    %v551 = vld [vmem:[#allocation2 + $0xcf8] sm:$0xff]
    %v552 = vld [vmem:[#allocation2 + $0xd00] sm:$0xff]
    %v553 = vld [vmem:[#allocation2 + $0xd08] sm:$0xff]
    %v554 = vld [vmem:[#allocation2 + $0xd10] sm:$0xff]
    %v555 = vld [vmem:[#allocation2 + $0xd18] sm:$0xff]
    %v556 = vld [vmem:[#allocation2 + $0xd20] sm:$0xff]
    %v557 = vld [vmem:[#allocation2 + $0xd28] sm:$0xff]
    %v558 = vld [vmem:[#allocation2 + $0xd30] sm:$0xff]
    %v559 = vld [vmem:[#allocation2 + $0xd38] sm:$0xff]
    %v560 = vld [vmem:[#allocation2 + $0xd40] sm:$0xff]
    %v561 = vld [vmem:[#allocation2 + $0xd48] sm:$0xff]
    %v562 = vld [vmem:[#allocation2 + $0xd50] sm:$0xff]
    %v563 = vld [vmem:[#allocation2 + $0xd58] sm:$0xff]
    %v564 = vld [vmem:[#allocation2 + $0xd60] sm:$0xff]
    %v565 = vld [vmem:[#allocation2 + $0xd68] sm:$0xff]
    %v566 = vld [vmem:[#allocation2 + $0xd70] sm:$0xff]
    %v567 = vld [vmem:[#allocation2 + $0xd78] sm:$0xff]
    %v568 = vld [vmem:[#allocation2 + $0xd80] sm:$0xff]
    %v569 = vld [vmem:[#allocation2 + $0xd88] sm:$0xff]
    %v570 = vld [vmem:[#allocation2 + $0xd90] sm:$0xff]
    %v571 = vld [vmem:[#allocation2 + $0xd98] sm:$0xff]
    %v572 = vld [vmem:[#allocation2 + $0xda0] sm:$0xff]
    %v573 = vld [vmem:[#allocation2 + $0xda8] sm:$0xff]
    %v574 = vld [vmem:[#allocation2 + $0xdb0] sm:$0xff]
    %v575 = vld [vmem:[#allocation2 + $0xdb8] sm:$0xff]
    %v576 = vld [vmem:[#allocation2 + $0xdc0] sm:$0xff]
    %v577 = vld [vmem:[#allocation2 + $0xdc8] sm:$0xff]
    %v578 = vld [vmem:[#allocation2 + $0xdd0] sm:$0xff]
    %v579 = vld [vmem:[#allocation2 + $0xdd8] sm:$0xff]
    %v580 = vld [vmem:[#allocation2 + $0xde0] sm:$0xff]
    %v581 = vld [vmem:[#allocation2 + $0xde8] sm:$0xff]
    %v582 = vld [vmem:[#allocation2 + $0xdf0] sm:$0xff]
    %v583 = vld [vmem:[#allocation2 + $0xdf8] sm:$0xff]
    %v584 = vld [vmem:[#allocation2 + $0xe00] sm:$0xff]
    %v585 = vld [vmem:[#allocation2 + $0xe08] sm:$0xff]
    %v586 = vld [vmem:[#allocation2 + $0xe10] sm:$0xff]
    %v587 = vld [vmem:[#allocation2 + $0xe18] sm:$0xff]
    %v588 = vld [vmem:[#allocation2 + $0xe20] sm:$0xff]
    %v589 = vld [vmem:[#allocation2 + $0xe28] sm:$0xff]
    %v590 = vld [vmem:[#allocation2 + $0xe30] sm:$0xff]
    %v591 = vld [vmem:[#allocation2 + $0xe38] sm:$0xff]
    %v592 = vld [vmem:[#allocation2 + $0xe40] sm:$0xff]
    %v593 = vld [vmem:[#allocation2 + $0xe48] sm:$0xff]
    %v594 = vld [vmem:[#allocation2 + $0xe50] sm:$0xff]
    %v595 = vld [vmem:[#allocation2 + $0xe58] sm:$0xff]
    %v596 = vld [vmem:[#allocation2 + $0xe60] sm:$0xff]
    %v597 = vld [vmem:[#allocation2 + $0xe68] sm:$0xff]
    %v598 = vld [vmem:[#allocation2 + $0xe70] sm:$0xff]
    %v599 = vld [vmem:[#allocation2 + $0xe78] sm:$0xff]
    %v600 = vld [vmem:[#allocation2 + $0xe80] sm:$0xff]
    %v601 = vld [vmem:[#allocation2 + $0xe88] sm:$0xff]
    %v602 = vld [vmem:[#allocation2 + $0xe90] sm:$0xff]
    %v603 = vld [vmem:[#allocation2 + $0xe98] sm:$0xff]
    %v604 = vld [vmem:[#allocation2 + $0xea0] sm:$0xff]
    %v605 = vld [vmem:[#allocation2 + $0xea8] sm:$0xff]
    %v606 = vld [vmem:[#allocation2 + $0xeb0] sm:$0xff]
    %v607 = vld [vmem:[#allocation2 + $0xeb8] sm:$0xff]
    %v608 = vld [vmem:[#allocation2 + $0xec0] sm:$0xff]
    %v609 = vld [vmem:[#allocation2 + $0xec8] sm:$0xff]
    %v610 = vld [vmem:[#allocation2 + $0xed0] sm:$0xff]
    %v611 = vld [vmem:[#allocation2 + $0xed8] sm:$0xff]
    %v612 = vld [vmem:[#allocation2 + $0xee0] sm:$0xff]
    %v613 = vld [vmem:[#allocation2 + $0xee8] sm:$0xff]
    %v614 = vld [vmem:[#allocation2 + $0xef0] sm:$0xff]
    %v615 = vld [vmem:[#allocation2 + $0xef8] sm:$0xff]
    %v616 = vld [vmem:[#allocation2 + $0xf00] sm:$0xff]
    %v617 = vld [vmem:[#allocation2 + $0xf08] sm:$0xff]
    %v618 = vld [vmem:[#allocation2 + $0xf10] sm:$0xff]
    %v619 = vld [vmem:[#allocation2 + $0xf18] sm:$0xff]
    %v620 = vld [vmem:[#allocation2 + $0xf20] sm:$0xff]
    %v621 = vld [vmem:[#allocation2 + $0xf28] sm:$0xff]
    %v622 = vld [vmem:[#allocation2 + $0xf30] sm:$0xff]
    %v623 = vld [vmem:[#allocation2 + $0xf38] sm:$0xff]
    %v624 = vld [vmem:[#allocation2 + $0xf40] sm:$0xff]
    %v625 = vld [vmem:[#allocation2 + $0xf48] sm:$0xff]
    %v626 = vld [vmem:[#allocation2 + $0xf50] sm:$0xff]
    %v627 = vld [vmem:[#allocation2 + $0xf58] sm:$0xff]
    %v628 = vld [vmem:[#allocation2 + $0xf60] sm:$0xff]
    %v629 = vld [vmem:[#allocation2 + $0xf68] sm:$0xff]
    %v630 = vld [vmem:[#allocation2 + $0xf70] sm:$0xff]
    %v631 = vld [vmem:[#allocation2 + $0xf78] sm:$0xff]
    %v632 = vld [vmem:[#allocation2 + $0xf80] sm:$0xff]
    %v633 = vld [vmem:[#allocation2 + $0xf88] sm:$0xff]
    %v634 = vld [vmem:[#allocation2 + $0xf90] sm:$0xff]
    %v635 = vld [vmem:[#allocation2 + $0xf98] sm:$0xff]
    %v636 = vld [vmem:[#allocation2 + $0xfa0] sm:$0xff]
    %v637 = vld [vmem:[#allocation2 + $0xfa8] sm:$0xff]
    %v638 = vld [vmem:[#allocation2 + $0xfb0] sm:$0xff]
    %v639 = vld [vmem:[#allocation2 + $0xfb8] sm:$0xff]
    %v640 = vld [vmem:[#allocation2 + $0xfc0] sm:$0xff]
    %v641 = vld [vmem:[#allocation2 + $0xfc8] sm:$0xff]
    %v642 = vld [vmem:[#allocation2 + $0xfd0] sm:$0xff]
    %v643 = vld [vmem:[#allocation2 + $0xfd8] sm:$0xff]
    %v644 = vld [vmem:[#allocation2 + $0xfe0] sm:$0xff]
    %v645 = vld [vmem:[#allocation2 + $0xfe8] sm:$0xff]
    %v646 = vld [vmem:[#allocation2 + $0xff0] sm:$0xff]
    %v647 = vld [vmem:[#allocation2 + $0xff8] sm:$0xff]
    %v648 = vld [vmem:[#allocation2 + $0x1000] sm:$0xff]
    %v649 = vld [vmem:[#allocation2 + $0x1008] sm:$0xff]
    %v650 = vld [vmem:[#allocation2 + $0x1010] sm:$0xff]
    %v651 = vld [vmem:[#allocation2 + $0x1018] sm:$0xff]
    %v652 = vld [vmem:[#allocation2 + $0x1020] sm:$0xff]
    %v653 = vld [vmem:[#allocation2 + $0x1028] sm:$0xff]
    %v654 = vld [vmem:[#allocation2 + $0x1030] sm:$0xff]
    %v655 = vld [vmem:[#allocation2 + $0x1038] sm:$0xff]
    %v656 = vld [vmem:[#allocation2 + $0x1040] sm:$0xff]
    %v657 = vld [vmem:[#allocation2 + $0x1048] sm:$0xff]
    %v658 = vld [vmem:[#allocation2 + $0x1050] sm:$0xff]
    %v659 = vld [vmem:[#allocation2 + $0x1058] sm:$0xff]
    %v660 = vld [vmem:[#allocation2 + $0x1060] sm:$0xff]
    %v661 = vld [vmem:[#allocation2 + $0x1068] sm:$0xff]
    %v662 = vld [vmem:[#allocation2 + $0x1070] sm:$0xff]
    %v663 = vld [vmem:[#allocation2 + $0x1078] sm:$0xff]
    %v664 = vld [vmem:[#allocation2 + $0x1080] sm:$0xff]
    %v665 = vld [vmem:[#allocation2 + $0x1088] sm:$0xff]
    %v666 = vld [vmem:[#allocation2 + $0x1090] sm:$0xff]
    %v667 = vld [vmem:[#allocation2 + $0x1098] sm:$0xff]
    %v668 = vld [vmem:[#allocation2 + $0x10a0] sm:$0xff]
    %v669 = vld [vmem:[#allocation2 + $0x10a8] sm:$0xff]
    %v670 = vld [vmem:[#allocation2 + $0x10b0] sm:$0xff]
    %v671 = vld [vmem:[#allocation2 + $0x10b8] sm:$0xff]
    %v672 = vld [vmem:[#allocation2 + $0x10c0] sm:$0xff]
    %v673 = vld [vmem:[#allocation2 + $0x10c8] sm:$0xff]
    %v674 = vld [vmem:[#allocation2 + $0x10d0] sm:$0xff]
    %v675 = vld [vmem:[#allocation2 + $0x10d8] sm:$0xff]
    %v676 = vld [vmem:[#allocation2 + $0x10e0] sm:$0xff]
    %v677 = vld [vmem:[#allocation2 + $0x10e8] sm:$0xff]
    %v678 = vld [vmem:[#allocation2 + $0x10f0] sm:$0xff]
    %v679 = vld [vmem:[#allocation2 + $0x10f8] sm:$0xff]
    %v680 = vld [vmem:[#allocation2 + $0x1100] sm:$0xff]
    %v681 = vld [vmem:[#allocation2 + $0x1108] sm:$0xff]
    %v682 = vld [vmem:[#allocation2 + $0x1110] sm:$0xff]
    %v683 = vld [vmem:[#allocation2 + $0x1118] sm:$0xff]
    %v684 = vld [vmem:[#allocation2 + $0x1120] sm:$0xff]
    %v685 = vld [vmem:[#allocation2 + $0x1128] sm:$0xff]
    %v686 = vld [vmem:[#allocation2 + $0x1130] sm:$0xff]
    %v687 = vld [vmem:[#allocation2 + $0x1138] sm:$0xff]
    %v688 = vld [vmem:[#allocation2 + $0x1140] sm:$0xff]
    %v689 = vld [vmem:[#allocation2 + $0x1148] sm:$0xff]
    %v690 = vld [vmem:[#allocation2 + $0x1150] sm:$0xff]
    %v691 = vld [vmem:[#allocation2 + $0x1158] sm:$0xff]
    %v692 = vld [vmem:[#allocation2 + $0x1160] sm:$0xff]
    %v693 = vld [vmem:[#allocation2 + $0x1168] sm:$0xff]
    %v694 = vld [vmem:[#allocation2 + $0x1170] sm:$0xff]
    %v695 = vld [vmem:[#allocation2 + $0x1178] sm:$0xff]
    %v696 = vld [vmem:[#allocation2 + $0x1180] sm:$0xff]
    %v697 = vld [vmem:[#allocation2 + $0x1188] sm:$0xff]
    %v698 = vld [vmem:[#allocation2 + $0x1190] sm:$0xff]
    %v699 = vld [vmem:[#allocation2 + $0x1198] sm:$0xff]
    %v700 = vld [vmem:[#allocation2 + $0x11a0] sm:$0xff]
    %v701 = vld [vmem:[#allocation2 + $0x11a8] sm:$0xff]
    %v702 = vld [vmem:[#allocation2 + $0x11b0] sm:$0xff]
    %v703 = vld [vmem:[#allocation2 + $0x11b8] sm:$0xff]
    %v704 = vld [vmem:[#allocation2 + $0x11c0] sm:$0xff]
    %v705 = vld [vmem:[#allocation2 + $0x11c8] sm:$0xff]
    %v706 = vld [vmem:[#allocation2 + $0x11d0] sm:$0xff]
    %v707 = vld [vmem:[#allocation2 + $0x11d8] sm:$0xff]
    %v708 = vld [vmem:[#allocation2 + $0x11e0] sm:$0xff]
    %v709 = vld [vmem:[#allocation2 + $0x11e8] sm:$0xff]
    %v710 = vld [vmem:[#allocation2 + $0x11f0] sm:$0xff]
    %v711 = vld [vmem:[#allocation2 + $0x11f8] sm:$0xff]
    %v712 = vld [vmem:[#allocation2 + $0x1200] sm:$0xff]
    %v713 = vld [vmem:[#allocation2 + $0x1208] sm:$0xff]
    %v714 = vld [vmem:[#allocation2 + $0x1210] sm:$0xff]
    %v715 = vld [vmem:[#allocation2 + $0x1218] sm:$0xff]
    %v716 = vld [vmem:[#allocation2 + $0x1220] sm:$0xff]
    %v717 = vld [vmem:[#allocation2 + $0x1228] sm:$0xff]
    %v718 = vld [vmem:[#allocation2 + $0x1230] sm:$0xff]
    %v719 = vld [vmem:[#allocation2 + $0x1238] sm:$0xff]
    %v720 = vld [vmem:[#allocation2 + $0x1240] sm:$0xff]
    %v721 = vld [vmem:[#allocation2 + $0x1248] sm:$0xff]
    %v722 = vld [vmem:[#allocation2 + $0x1250] sm:$0xff]
    %v723 = vld [vmem:[#allocation2 + $0x1258] sm:$0xff]
    %v724 = vld [vmem:[#allocation2 + $0x1260] sm:$0xff]
    %v725 = vld [vmem:[#allocation2 + $0x1268] sm:$0xff]
    %v726 = vld [vmem:[#allocation2 + $0x1270] sm:$0xff]
    %v727 = vld [vmem:[#allocation2 + $0x1278] sm:$0xff]
    %v728 = vld [vmem:[#allocation2 + $0x1280] sm:$0xff]
    %v729 = vld [vmem:[#allocation2 + $0x1288] sm:$0xff]
    %v730 = vld [vmem:[#allocation2 + $0x1290] sm:$0xff]
    %v731 = vld [vmem:[#allocation2 + $0x1298] sm:$0xff]
    %v732 = vld [vmem:[#allocation2 + $0x12a0] sm:$0xff]
    %v733 = vld [vmem:[#allocation2 + $0x12a8] sm:$0xff]
    %v734 = vld [vmem:[#allocation2 + $0x12b0] sm:$0xff]
    %v735 = vld [vmem:[#allocation2 + $0x12b8] sm:$0xff]
    %v736 = vld [vmem:[#allocation2 + $0x12c0] sm:$0xff]
    %v737 = vld [vmem:[#allocation2 + $0x12c8] sm:$0xff]
    %v738 = vld [vmem:[#allocation2 + $0x12d0] sm:$0xff]
    %v739 = vld [vmem:[#allocation2 + $0x12d8] sm:$0xff]
    %v740 = vld [vmem:[#allocation2 + $0x12e0] sm:$0xff]
    %v741 = vld [vmem:[#allocation2 + $0x12e8] sm:$0xff]
    %v742 = vld [vmem:[#allocation2 + $0x12f0] sm:$0xff]
    %v743 = vld [vmem:[#allocation2 + $0x12f8] sm:$0xff]
    %v744 = vld [vmem:[#allocation2 + $0x1300] sm:$0xff]
    %v745 = vld [vmem:[#allocation2 + $0x1308] sm:$0xff]
    %v746 = vld [vmem:[#allocation2 + $0x1310] sm:$0xff]
    %v747 = vld [vmem:[#allocation2 + $0x1318] sm:$0xff]
    %v748 = vld [vmem:[#allocation2 + $0x1320] sm:$0xff]
    %v749 = vld [vmem:[#allocation2 + $0x1328] sm:$0xff]
    %v750 = vld [vmem:[#allocation2 + $0x1330] sm:$0xff]
    %v751 = vld [vmem:[#allocation2 + $0x1338] sm:$0xff]
    %v752 = vld [vmem:[#allocation2 + $0x1340] sm:$0xff]
    %v753 = vld [vmem:[#allocation2 + $0x1348] sm:$0xff]
    %v754 = vld [vmem:[#allocation2 + $0x1350] sm:$0xff]
    %v755 = vld [vmem:[#allocation2 + $0x1358] sm:$0xff]
    %v756 = vld [vmem:[#allocation2 + $0x1360] sm:$0xff]
    %v757 = vld [vmem:[#allocation2 + $0x1368] sm:$0xff]
    %v758 = vld [vmem:[#allocation2 + $0x1370] sm:$0xff]
    %v759 = vld [vmem:[#allocation2 + $0x1378] sm:$0xff]
    %v760 = vld [vmem:[#allocation2 + $0x1380] sm:$0xff]
    %v761 = vld [vmem:[#allocation2 + $0x1388] sm:$0xff]
    %v762 = vld [vmem:[#allocation2 + $0x1390] sm:$0xff]
    %v763 = vld [vmem:[#allocation2 + $0x1398] sm:$0xff]
    %v764 = vld [vmem:[#allocation2 + $0x13a0] sm:$0xff]
    %v765 = vld [vmem:[#allocation2 + $0x13a8] sm:$0xff]
    %v766 = vld [vmem:[#allocation2 + $0x13b0] sm:$0xff]
    %v767 = vld [vmem:[#allocation2 + $0x13b8] sm:$0xff]
    %v768 = vld [vmem:[#allocation2 + $0x13c0] sm:$0xff]
    %v769 = vld [vmem:[#allocation2 + $0x13c8] sm:$0xff]
    %v770 = vld [vmem:[#allocation2 + $0x13d0] sm:$0xff]
    %v771 = vld [vmem:[#allocation2 + $0x13d8] sm:$0xff]
    %v772 = vld [vmem:[#allocation2 + $0x13e0] sm:$0xff]
    %v773 = vld [vmem:[#allocation2 + $0x13e8] sm:$0xff]
    %v774 = vld [vmem:[#allocation2 + $0x13f0] sm:$0xff]
    %v775 = vld [vmem:[#allocation2 + $0x13f8] sm:$0xff]
    %v776 = vld [vmem:[#allocation2 + $0x1400] sm:$0xff]
    %v777 = vld [vmem:[#allocation2 + $0x1408] sm:$0xff]
    %v778 = vld [vmem:[#allocation2 + $0x1410] sm:$0xff]
    %v779 = vld [vmem:[#allocation2 + $0x1418] sm:$0xff]
    %v780 = vld [vmem:[#allocation2 + $0x1420] sm:$0xff]
    %v781 = vld [vmem:[#allocation2 + $0x1428] sm:$0xff]
    %v782 = vld [vmem:[#allocation2 + $0x1430] sm:$0xff]
    %v783 = vld [vmem:[#allocation2 + $0x1438] sm:$0xff]
    %v784 = vld [vmem:[#allocation2 + $0x1440] sm:$0xff]
    %v785 = vld [vmem:[#allocation2 + $0x1448] sm:$0xff]
    %v786 = vld [vmem:[#allocation2 + $0x1450] sm:$0xff]
    %v787 = vld [vmem:[#allocation2 + $0x1458] sm:$0xff]
    %v788 = vld [vmem:[#allocation2 + $0x1460] sm:$0xff]
    %v789 = vld [vmem:[#allocation2 + $0x1468] sm:$0xff]
    %v790 = vld [vmem:[#allocation2 + $0x1470] sm:$0xff]
    %v791 = vld [vmem:[#allocation2 + $0x1478] sm:$0xff]
    %v792 = vld [vmem:[#allocation2 + $0x1480] sm:$0xff]
    %v793 = vld [vmem:[#allocation2 + $0x1488] sm:$0xff]
    %v794 = vld [vmem:[#allocation2 + $0x1490] sm:$0xff]
    %v795 = vld [vmem:[#allocation2 + $0x1498] sm:$0xff]
    %v796 = vld [vmem:[#allocation2 + $0x14a0] sm:$0xff]
    %v797 = vld [vmem:[#allocation2 + $0x14a8] sm:$0xff]
    %v798 = vld [vmem:[#allocation2 + $0x14b0] sm:$0xff]
    %v799 = vld [vmem:[#allocation2 + $0x14b8] sm:$0xff]
    %v800 = vld [vmem:[#allocation2 + $0x14c0] sm:$0xff]
    %v801 = vld [vmem:[#allocation2 + $0x14c8] sm:$0xff]
    %v802 = vld [vmem:[#allocation2 + $0x14d0] sm:$0xff]
    %v803 = vld [vmem:[#allocation2 + $0x14d8] sm:$0xff]
    %v804 = vld [vmem:[#allocation2 + $0x14e0] sm:$0xff]
    %v805 = vld [vmem:[#allocation2 + $0x14e8] sm:$0xff]
    %v806 = vld [vmem:[#allocation2 + $0x14f0] sm:$0xff]
    %v807 = vld [vmem:[#allocation2 + $0x14f8] sm:$0xff]
    %v808 = vld [vmem:[#allocation2 + $0x1500] sm:$0xff]
    %v809 = vld [vmem:[#allocation2 + $0x1508] sm:$0xff]
    %v810 = vld [vmem:[#allocation2 + $0x1510] sm:$0xff]
    %v811 = vld [vmem:[#allocation2 + $0x1518] sm:$0xff]
    %v812 = vld [vmem:[#allocation2 + $0x1520] sm:$0xff]
    %v813 = vld [vmem:[#allocation2 + $0x1528] sm:$0xff]
    %v814 = vld [vmem:[#allocation2 + $0x1530] sm:$0xff]
    %v815 = vld [vmem:[#allocation2 + $0x1538] sm:$0xff]
    %v816 = vld [vmem:[#allocation2 + $0x1540] sm:$0xff]
    %v817 = vld [vmem:[#allocation2 + $0x1548] sm:$0xff]
    %v818 = vld [vmem:[#allocation2 + $0x1550] sm:$0xff]
    %v819 = vld [vmem:[#allocation2 + $0x1558] sm:$0xff]
    %v820 = vld [vmem:[#allocation2 + $0x1560] sm:$0xff]
    %v821 = vld [vmem:[#allocation2 + $0x1568] sm:$0xff]
    %v822 = vld [vmem:[#allocation2 + $0x1570] sm:$0xff]
    %v823 = vld [vmem:[#allocation2 + $0x1578] sm:$0xff]
    %v824 = vld [vmem:[#allocation2 + $0x1580] sm:$0xff]
    %v825 = vld [vmem:[#allocation2 + $0x1588] sm:$0xff]
    %v826 = vld [vmem:[#allocation2 + $0x1590] sm:$0xff]
    %v827 = vld [vmem:[#allocation2 + $0x1598] sm:$0xff]
    %v828 = vld [vmem:[#allocation2 + $0x15a0] sm:$0xff]
    %v829 = vld [vmem:[#allocation2 + $0x15a8] sm:$0xff]
    %v830 = vld [vmem:[#allocation2 + $0x15b0] sm:$0xff]
    %v831 = vld [vmem:[#allocation2 + $0x15b8] sm:$0xff]
    %v832 = vld [vmem:[#allocation2 + $0x15c0] sm:$0xff]
    %v833 = vld [vmem:[#allocation2 + $0x15c8] sm:$0xff]
    %v834 = vld [vmem:[#allocation2 + $0x15d0] sm:$0xff]
    %v835 = vld [vmem:[#allocation2 + $0x15d8] sm:$0xff]
    %v836 = vld [vmem:[#allocation2 + $0x15e0] sm:$0xff]
    %v837 = vld [vmem:[#allocation2 + $0x15e8] sm:$0xff]
    %v838 = vld [vmem:[#allocation2 + $0x15f0] sm:$0xff]
    %v839 = vld [vmem:[#allocation2 + $0x15f8] sm:$0xff]
    %v840 = vld [vmem:[#allocation2 + $0x1600] sm:$0xff]
    %v841 = vld [vmem:[#allocation2 + $0x1608] sm:$0xff]
    %v842 = vld [vmem:[#allocation2 + $0x1610] sm:$0xff]
    %v843 = vld [vmem:[#allocation2 + $0x1618] sm:$0xff]
    %v844 = vld [vmem:[#allocation2 + $0x1620] sm:$0xff]
    %v845 = vld [vmem:[#allocation2 + $0x1628] sm:$0xff]
    %v846 = vld [vmem:[#allocation2 + $0x1630] sm:$0xff]
    %v847 = vld [vmem:[#allocation2 + $0x1638] sm:$0xff]
    %v848 = vld [vmem:[#allocation2 + $0x1640] sm:$0xff]
    %v849 = vld [vmem:[#allocation2 + $0x1648] sm:$0xff]
    %v850 = vld [vmem:[#allocation2 + $0x1650] sm:$0xff]
    %v851 = vld [vmem:[#allocation2 + $0x1658] sm:$0xff]
    %v852 = vld [vmem:[#allocation2 + $0x1660] sm:$0xff]
    %v853 = vld [vmem:[#allocation2 + $0x1668] sm:$0xff]
    %v854 = vld [vmem:[#allocation2 + $0x1670] sm:$0xff]
    %v855 = vld [vmem:[#allocation2 + $0x1678] sm:$0xff]
    %v856 = vld [vmem:[#allocation2 + $0x1680] sm:$0xff]
    %v857 = vld [vmem:[#allocation2 + $0x1688] sm:$0xff]
    %v858 = vld [vmem:[#allocation2 + $0x1690] sm:$0xff]
    %v859 = vld [vmem:[#allocation2 + $0x1698] sm:$0xff]
    %v860 = vld [vmem:[#allocation2 + $0x16a0] sm:$0xff]
    %v861 = vld [vmem:[#allocation2 + $0x16a8] sm:$0xff]
    %v862 = vld [vmem:[#allocation2 + $0x16b0] sm:$0xff]
    %v863 = vld [vmem:[#allocation2 + $0x16b8] sm:$0xff]
    %v864 = vld [vmem:[#allocation2 + $0x16c0] sm:$0xff]
    %v865 = vld [vmem:[#allocation2 + $0x16c8] sm:$0xff]
    %v866 = vld [vmem:[#allocation2 + $0x16d0] sm:$0xff]
    %v867 = vld [vmem:[#allocation2 + $0x16d8] sm:$0xff]
    %v868 = vld [vmem:[#allocation2 + $0x16e0] sm:$0xff]
    %v869 = vld [vmem:[#allocation2 + $0x16e8] sm:$0xff]
    %v870 = vld [vmem:[#allocation2 + $0x16f0] sm:$0xff]
    %v871 = vld [vmem:[#allocation2 + $0x16f8] sm:$0xff]
    %v872 = vld [vmem:[#allocation2 + $0x1700] sm:$0xff]
    %v873 = vld [vmem:[#allocation2 + $0x1708] sm:$0xff]
    %v874 = vld [vmem:[#allocation2 + $0x1710] sm:$0xff]
    %v875 = vld [vmem:[#allocation2 + $0x1718] sm:$0xff]
    %v876 = vld [vmem:[#allocation2 + $0x1720] sm:$0xff]
    %v877 = vld [vmem:[#allocation2 + $0x1728] sm:$0xff]
    %v878 = vld [vmem:[#allocation2 + $0x1730] sm:$0xff]
    %v879 = vld [vmem:[#allocation2 + $0x1738] sm:$0xff]
    %v880 = vld [vmem:[#allocation2 + $0x1740] sm:$0xff]
    %v881 = vld [vmem:[#allocation2 + $0x1748] sm:$0xff]
    %v882 = vld [vmem:[#allocation2 + $0x1750] sm:$0xff]
    %v883 = vld [vmem:[#allocation2 + $0x1758] sm:$0xff]
    %v884 = vld [vmem:[#allocation2 + $0x1760] sm:$0xff]
    %v885 = vld [vmem:[#allocation2 + $0x1768] sm:$0xff]
    %v886 = vld [vmem:[#allocation2 + $0x1770] sm:$0xff]
    %v887 = vld [vmem:[#allocation2 + $0x1778] sm:$0xff]
    %v888 = vld [vmem:[#allocation2 + $0x1780] sm:$0xff]
    %v889 = vld [vmem:[#allocation2 + $0x1788] sm:$0xff]
    %v890 = vld [vmem:[#allocation2 + $0x1790] sm:$0xff]
    %v891 = vld [vmem:[#allocation2 + $0x1798] sm:$0xff]
    %v892 = vld [vmem:[#allocation2 + $0x17a0] sm:$0xff]
    %v893 = vld [vmem:[#allocation2 + $0x17a8] sm:$0xff]
    %v894 = vld [vmem:[#allocation2 + $0x17b0] sm:$0xff]
    %v895 = vld [vmem:[#allocation2 + $0x17b8] sm:$0xff]
    %v896 = vld [vmem:[#allocation2 + $0x17c0] sm:$0xff]
    %v897 = vld [vmem:[#allocation2 + $0x17c8] sm:$0xff]
    %v898 = vld [vmem:[#allocation2 + $0x17d0] sm:$0xff]
    %v899 = vld [vmem:[#allocation2 + $0x17d8] sm:$0xff]
    %v900 = vld [vmem:[#allocation2 + $0x17e0] sm:$0xff]
    %v901 = vld [vmem:[#allocation2 + $0x17e8] sm:$0xff]
    %v902 = vld [vmem:[#allocation2 + $0x17f0] sm:$0xff]
    %v903 = vld [vmem:[#allocation2 + $0x17f8] sm:$0xff]
    %v904 = vld [vmem:[#allocation4] sm:$0xf]
    %v906 = vlaneseq
    %v907 = vshrl.u32 %v906, 7
    %v908 = vsub.s32 0, %v907
    %v909 = vrot.slane %v904, %v908
    %v910 = vlaneseq
    %v911 = vshrl.u32 %v910, 7
    %v912 = vsub.s32 1, %v911
    %v913 = vrot.slane %v904, %v912
    %v914 = vlaneseq
    %v915 = vshrl.u32 %v914, 7
    %v916 = vsub.s32 2, %v915
    %v917 = vrot.slane %v904, %v916
    %v918 = vlaneseq
    %v919 = vshrl.u32 %v918, 7
    %v920 = vsub.s32 3, %v919
    %v921 = vrot.slane %v904, %v920
    %v929 = vcombine.high %v133, %v133
    %v931 = vunpack.c.l.s4 1966171168
    %v932 = vunpack.c.0.s8 %v931
    %v933 = vlaneseq
    %v934 = vshrl.u32 %v933, 7
    %v935 = vsub.s32 %v932, %v934
    %v936 = vrot.slane %v133, %v935
    %v938 = vunpack.c.l.s4 1966171168
    %v939 = vunpack.c.0.s8 %v938
    %v940 = vlaneseq
    %v941 = vshrl.u32 %v940, 7
    %v942 = vsub.s32 %v939, %v941
    %v943 = vrot.slane %v929, %v942
    %v944 = vcombine.high %v936, %v936
    %v945 = vcombine.high %v943, %v943
    %v947 = vunpack.c.l.s4 1966171168
    %v948 = vunpack.c.0.s8 %v947
    %v949 = vlaneseq
    %v950 = vshrl.u32 %v949, 7
    %v951 = vsub.s32 %v948, %v950
    %v952 = vrot.slane %v936, %v951
    %v954 = vunpack.c.l.s4 1966171168
    %v955 = vunpack.c.0.s8 %v954
    %v956 = vlaneseq
    %v957 = vshrl.u32 %v956, 7
    %v958 = vsub.s32 %v955, %v957
    %v959 = vrot.slane %v943, %v958
    %v961 = vunpack.c.l.s4 1966171168
    %v962 = vunpack.c.0.s8 %v961
    %v963 = vlaneseq
    %v964 = vshrl.u32 %v963, 7
    %v965 = vsub.s32 %v962, %v964
    %v966 = vrot.slane %v944, %v965
    %v968 = vunpack.c.l.s4 1966171168
    %v969 = vunpack.c.0.s8 %v968
    %v970 = vlaneseq
    %v971 = vshrl.u32 %v970, 7
    %v972 = vsub.s32 %v969, %v971
    %v973 = vrot.slane %v945, %v972
    %v974 = vcombine.high %v952, %v952
    %v975 = vcombine.high %v959, %v959
    %v976 = vcombine.high %v966, %v966
    %v977 = vcombine.high %v973, %v973
    %v978 = vcombine.high %v134, %v134
    %v980 = vunpack.c.l.s4 1966171168
    %v981 = vunpack.c.0.s8 %v980
    %v982 = vlaneseq
    %v983 = vshrl.u32 %v982, 7
    %v984 = vsub.s32 %v981, %v983
    %v985 = vrot.slane %v134, %v984
    %v987 = vunpack.c.l.s4 1966171168
    %v988 = vunpack.c.0.s8 %v987
    %v989 = vlaneseq
    %v990 = vshrl.u32 %v989, 7
    %v991 = vsub.s32 %v988, %v990
    %v992 = vrot.slane %v978, %v991
    %v993 = vcombine.high %v985, %v985
    %v994 = vcombine.high %v992, %v992
    %v996 = vunpack.c.l.s4 1966171168
    %v997 = vunpack.c.0.s8 %v996
    %v998 = vlaneseq
    %v999 = vshrl.u32 %v998, 7
    %v1000 = vsub.s32 %v997, %v999
    %v1001 = vrot.slane %v985, %v1000
    %v1003 = vunpack.c.l.s4 1966171168
    %v1004 = vunpack.c.0.s8 %v1003
    %v1005 = vlaneseq
    %v1006 = vshrl.u32 %v1005, 7
    %v1007 = vsub.s32 %v1004, %v1006
    %v1008 = vrot.slane %v992, %v1007
    %v1010 = vunpack.c.l.s4 1966171168
    %v1011 = vunpack.c.0.s8 %v1010
    %v1012 = vlaneseq
    %v1013 = vshrl.u32 %v1012, 7
    %v1014 = vsub.s32 %v1011, %v1013
    %v1015 = vrot.slane %v993, %v1014
    %v1017 = vunpack.c.l.s4 1966171168
    %v1018 = vunpack.c.0.s8 %v1017
    %v1019 = vlaneseq
    %v1020 = vshrl.u32 %v1019, 7
    %v1021 = vsub.s32 %v1018, %v1020
    %v1022 = vrot.slane %v994, %v1021
    %v1023 = vcombine.high %v1001, %v1001
    %v1024 = vcombine.high %v1008, %v1008
    %v1025 = vcombine.high %v1015, %v1015
    %v1026 = vcombine.high %v1022, %v1022
    %v1027 = vcombine.high %v135, %v135
    %v1029 = vunpack.c.l.s4 1966171168
    %v1030 = vunpack.c.0.s8 %v1029
    %v1031 = vlaneseq
    %v1032 = vshrl.u32 %v1031, 7
    %v1033 = vsub.s32 %v1030, %v1032
    %v1034 = vrot.slane %v135, %v1033
    %v1036 = vunpack.c.l.s4 1966171168
    %v1037 = vunpack.c.0.s8 %v1036
    %v1038 = vlaneseq
    %v1039 = vshrl.u32 %v1038, 7
    %v1040 = vsub.s32 %v1037, %v1039
    %v1041 = vrot.slane %v1027, %v1040
    %v1042 = vcombine.high %v1034, %v1034
    %v1043 = vcombine.high %v1041, %v1041
    %v1045 = vunpack.c.l.s4 1966171168
    %v1046 = vunpack.c.0.s8 %v1045
    %v1047 = vlaneseq
    %v1048 = vshrl.u32 %v1047, 7
    %v1049 = vsub.s32 %v1046, %v1048
    %v1050 = vrot.slane %v1034, %v1049
    %v1052 = vunpack.c.l.s4 1966171168
    %v1053 = vunpack.c.0.s8 %v1052
    %v1054 = vlaneseq
    %v1055 = vshrl.u32 %v1054, 7
    %v1056 = vsub.s32 %v1053, %v1055
    %v1057 = vrot.slane %v1041, %v1056
    %v1059 = vunpack.c.l.s4 1966171168
    %v1060 = vunpack.c.0.s8 %v1059
    %v1061 = vlaneseq
    %v1062 = vshrl.u32 %v1061, 7
    %v1063 = vsub.s32 %v1060, %v1062
    %v1064 = vrot.slane %v1042, %v1063
    %v1066 = vunpack.c.l.s4 1966171168
    %v1067 = vunpack.c.0.s8 %v1066
    %v1068 = vlaneseq
    %v1069 = vshrl.u32 %v1068, 7
    %v1070 = vsub.s32 %v1067, %v1069
    %v1071 = vrot.slane %v1043, %v1070
    %v1072 = vcombine.high %v1050, %v1050
    %v1073 = vcombine.high %v1057, %v1057
    %v1074 = vcombine.high %v1064, %v1064
    %v1075 = vcombine.high %v1071, %v1071
    %v1868 = vunpack.c.l.b16 %v136
    %v1869 = vunpack.c.h.b16 %v136
    %v1870 = vunpack.c.l.b16 %v137
    %v1871 = vunpack.c.h.b16 %v137
    %v1872 = vunpack.c.l.b16 %v138
    %v1873 = vunpack.c.h.b16 %v138
    %v1874 = vunpack.c.l.b16 %v139
    %v1875 = vunpack.c.h.b16 %v139
    %v1876 = vunpack.c.l.b16 %v140
    %v1877 = vunpack.c.h.b16 %v140
    %v1878 = vunpack.c.l.b16 %v141
    %v1879 = vunpack.c.h.b16 %v141
    %v1880 = vunpack.c.l.b16 %v142
    %v1881 = vunpack.c.h.b16 %v142
    %v1882 = vunpack.c.l.b16 %v143
    %v1883 = vunpack.c.h.b16 %v143
    %v1884 = vunpack.c.l.b16 %v144
    %v1885 = vunpack.c.h.b16 %v144
    %v1886 = vunpack.c.l.b16 %v145
    %v1887 = vunpack.c.h.b16 %v145
    %v1888 = vunpack.c.l.b16 %v146
    %v1889 = vunpack.c.h.b16 %v146
    %v1890 = vunpack.c.l.b16 %v147
    %v1891 = vunpack.c.h.b16 %v147
    %v1892 = vunpack.c.l.b16 %v148
    %v1893 = vunpack.c.h.b16 %v148
    %v1894 = vunpack.c.l.b16 %v149
    %v1895 = vunpack.c.h.b16 %v149
    %v1896 = vunpack.c.l.b16 %v150
    %v1897 = vunpack.c.h.b16 %v150
    %v1898 = vunpack.c.l.b16 %v151
    %v1899 = vunpack.c.h.b16 %v151
    %v1900 = vunpack.c.l.b16 %v152
    %v1901 = vunpack.c.h.b16 %v152
    %v1902 = vunpack.c.l.b16 %v153
    %v1903 = vunpack.c.h.b16 %v153
    %v1904 = vunpack.c.l.b16 %v154
    %v1905 = vunpack.c.h.b16 %v154
    %v1906 = vunpack.c.l.b16 %v155
    %v1907 = vunpack.c.h.b16 %v155
    %v1908 = vunpack.c.l.b16 %v156
    %v1909 = vunpack.c.h.b16 %v156
    %v1910 = vunpack.c.l.b16 %v157
    %v1911 = vunpack.c.h.b16 %v157
    %v1912 = vunpack.c.l.b16 %v158
    %v1913 = vunpack.c.h.b16 %v158
    %v1914 = vunpack.c.l.b16 %v159
    %v1915 = vunpack.c.h.b16 %v159
    %v1916 = vunpack.c.l.b16 %v160
    %v1917 = vunpack.c.h.b16 %v160
    %v1918 = vunpack.c.l.b16 %v161
    %v1919 = vunpack.c.h.b16 %v161
    %v1920 = vunpack.c.l.b16 %v162
    %v1921 = vunpack.c.h.b16 %v162
    %v1922 = vunpack.c.l.b16 %v163
    %v1923 = vunpack.c.h.b16 %v163
    %v1924 = vunpack.c.l.b16 %v164
    %v1925 = vunpack.c.h.b16 %v164
    %v1926 = vunpack.c.l.b16 %v165
    %v1927 = vunpack.c.h.b16 %v165
    %v1928 = vunpack.c.l.b16 %v166
    %v1929 = vunpack.c.h.b16 %v166
    %v1930 = vunpack.c.l.b16 %v167
    %v1931 = vunpack.c.h.b16 %v167
    %v1932 = vunpack.c.l.b16 %v168
    %v1933 = vunpack.c.h.b16 %v168
    %v1934 = vunpack.c.l.b16 %v169
    %v1935 = vunpack.c.h.b16 %v169
    %v1936 = vunpack.c.l.b16 %v170
    %v1937 = vunpack.c.h.b16 %v170
    %v1938 = vunpack.c.l.b16 %v171
    %v1939 = vunpack.c.h.b16 %v171
    %v1940 = vunpack.c.l.b16 %v172
    %v1941 = vunpack.c.h.b16 %v172
    %v1942 = vunpack.c.l.b16 %v173
    %v1943 = vunpack.c.h.b16 %v173
    %v1944 = vunpack.c.l.b16 %v174
    %v1945 = vunpack.c.h.b16 %v174
    %v1946 = vunpack.c.l.b16 %v175
    %v1947 = vunpack.c.h.b16 %v175
    %v1948 = vunpack.c.l.b16 %v176
    %v1949 = vunpack.c.h.b16 %v176
    %v1950 = vunpack.c.l.b16 %v177
    %v1951 = vunpack.c.h.b16 %v177
    %v1952 = vunpack.c.l.b16 %v178
    %v1953 = vunpack.c.h.b16 %v178
    %v1954 = vunpack.c.l.b16 %v179
    %v1955 = vunpack.c.h.b16 %v179
    %v1956 = vunpack.c.l.b16 %v180
    %v1957 = vunpack.c.h.b16 %v180
    %v1958 = vunpack.c.l.b16 %v181
    %v1959 = vunpack.c.h.b16 %v181
    %v1960 = vunpack.c.l.b16 %v182
    %v1961 = vunpack.c.h.b16 %v182
    %v1962 = vunpack.c.l.b16 %v183
    %v1963 = vunpack.c.h.b16 %v183
    %v1964 = vunpack.c.l.b16 %v184
    %v1965 = vunpack.c.h.b16 %v184
    %v1966 = vunpack.c.l.b16 %v185
    %v1967 = vunpack.c.h.b16 %v185
    %v1968 = vunpack.c.l.b16 %v186
    %v1969 = vunpack.c.h.b16 %v186
    %v1970 = vunpack.c.l.b16 %v187
    %v1971 = vunpack.c.h.b16 %v187
    %v1972 = vunpack.c.l.b16 %v188
    %v1973 = vunpack.c.h.b16 %v188
    %v1974 = vunpack.c.l.b16 %v189
    %v1975 = vunpack.c.h.b16 %v189
    %v1976 = vunpack.c.l.b16 %v190
    %v1977 = vunpack.c.h.b16 %v190
    %v1978 = vunpack.c.l.b16 %v191
    %v1979 = vunpack.c.h.b16 %v191
    %v1980 = vunpack.c.l.b16 %v192
    %v1981 = vunpack.c.h.b16 %v192
    %v1982 = vunpack.c.l.b16 %v193
    %v1983 = vunpack.c.h.b16 %v193
    %v1984 = vunpack.c.l.b16 %v194
    %v1985 = vunpack.c.h.b16 %v194
    %v1986 = vunpack.c.l.b16 %v195
    %v1987 = vunpack.c.h.b16 %v195
    %v1988 = vunpack.c.l.b16 %v196
    %v1989 = vunpack.c.h.b16 %v196
    %v1990 = vunpack.c.l.b16 %v197
    %v1991 = vunpack.c.h.b16 %v197
    %v1992 = vunpack.c.l.b16 %v198
    %v1993 = vunpack.c.h.b16 %v198
    %v1994 = vunpack.c.l.b16 %v199
    %v1995 = vunpack.c.h.b16 %v199
    %v1996 = vunpack.c.l.b16 %v200
    %v1997 = vunpack.c.h.b16 %v200
    %v1998 = vunpack.c.l.b16 %v201
    %v1999 = vunpack.c.h.b16 %v201
    %v2000 = vunpack.c.l.b16 %v202
    %v2001 = vunpack.c.h.b16 %v202
    %v2002 = vunpack.c.l.b16 %v203
    %v2003 = vunpack.c.h.b16 %v203
    %v2004 = vunpack.c.l.b16 %v204
    %v2005 = vunpack.c.h.b16 %v204
    %v2006 = vunpack.c.l.b16 %v205
    %v2007 = vunpack.c.h.b16 %v205
    %v2008 = vunpack.c.l.b16 %v206
    %v2009 = vunpack.c.h.b16 %v206
    %v2010 = vunpack.c.l.b16 %v207
    %v2011 = vunpack.c.h.b16 %v207
    %v2012 = vunpack.c.l.b16 %v208
    %v2013 = vunpack.c.h.b16 %v208
    %v2014 = vunpack.c.l.b16 %v209
    %v2015 = vunpack.c.h.b16 %v209
    %v2016 = vunpack.c.l.b16 %v210
    %v2017 = vunpack.c.h.b16 %v210
    %v2018 = vunpack.c.l.b16 %v211
    %v2019 = vunpack.c.h.b16 %v211
    %v2020 = vunpack.c.l.b16 %v212
    %v2021 = vunpack.c.h.b16 %v212
    %v2022 = vunpack.c.l.b16 %v213
    %v2023 = vunpack.c.h.b16 %v213
    %v2024 = vunpack.c.l.b16 %v214
    %v2025 = vunpack.c.h.b16 %v214
    %v2026 = vunpack.c.l.b16 %v215
    %v2027 = vunpack.c.h.b16 %v215
    %v2028 = vunpack.c.l.b16 %v216
    %v2029 = vunpack.c.h.b16 %v216
    %v2030 = vunpack.c.l.b16 %v217
    %v2031 = vunpack.c.h.b16 %v217
    %v2032 = vunpack.c.l.b16 %v218
    %v2033 = vunpack.c.h.b16 %v218
    %v2034 = vunpack.c.l.b16 %v219
    %v2035 = vunpack.c.h.b16 %v219
    %v2036 = vunpack.c.l.b16 %v220
    %v2037 = vunpack.c.h.b16 %v220
    %v2038 = vunpack.c.l.b16 %v221
    %v2039 = vunpack.c.h.b16 %v221
    %v2040 = vunpack.c.l.b16 %v222
    %v2041 = vunpack.c.h.b16 %v222
    %v2042 = vunpack.c.l.b16 %v223
    %v2043 = vunpack.c.h.b16 %v223
    %v2044 = vunpack.c.l.b16 %v224
    %v2045 = vunpack.c.h.b16 %v224
    %v2046 = vunpack.c.l.b16 %v225
    %v2047 = vunpack.c.h.b16 %v225
    %v2048 = vunpack.c.l.b16 %v226
    %v2049 = vunpack.c.h.b16 %v226
    %v2050 = vunpack.c.l.b16 %v227
    %v2051 = vunpack.c.h.b16 %v227
    %v2052 = vunpack.c.l.b16 %v228
    %v2053 = vunpack.c.h.b16 %v228
    %v2054 = vunpack.c.l.b16 %v229
    %v2055 = vunpack.c.h.b16 %v229
    %v2056 = vunpack.c.l.b16 %v230
    %v2057 = vunpack.c.h.b16 %v230
    %v2058 = vunpack.c.l.b16 %v231
    %v2059 = vunpack.c.h.b16 %v231
    %v2060 = vunpack.c.l.b16 %v232
    %v2061 = vunpack.c.h.b16 %v232
    %v2062 = vunpack.c.l.b16 %v233
    %v2063 = vunpack.c.h.b16 %v233
    %v2064 = vunpack.c.l.b16 %v234
    %v2065 = vunpack.c.h.b16 %v234
    %v2066 = vunpack.c.l.b16 %v235
    %v2067 = vunpack.c.h.b16 %v235
    %v2068 = vunpack.c.l.b16 %v236
    %v2069 = vunpack.c.h.b16 %v236
    %v2070 = vunpack.c.l.b16 %v237
    %v2071 = vunpack.c.h.b16 %v237
    %v2072 = vunpack.c.l.b16 %v238
    %v2073 = vunpack.c.h.b16 %v238
    %v2074 = vunpack.c.l.b16 %v239
    %v2075 = vunpack.c.h.b16 %v239
    %v2076 = vunpack.c.l.b16 %v240
    %v2077 = vunpack.c.h.b16 %v240
    %v2078 = vunpack.c.l.b16 %v241
    %v2079 = vunpack.c.h.b16 %v241
    %v2080 = vunpack.c.l.b16 %v242
    %v2081 = vunpack.c.h.b16 %v242
    %v2082 = vunpack.c.l.b16 %v243
    %v2083 = vunpack.c.h.b16 %v243
    %v2084 = vunpack.c.l.b16 %v244
    %v2085 = vunpack.c.h.b16 %v244
    %v2086 = vunpack.c.l.b16 %v245
    %v2087 = vunpack.c.h.b16 %v245
    %v2088 = vunpack.c.l.b16 %v246
    %v2089 = vunpack.c.h.b16 %v246
    %v2090 = vunpack.c.l.b16 %v247
    %v2091 = vunpack.c.h.b16 %v247
    %v2092 = vunpack.c.l.b16 %v248
    %v2093 = vunpack.c.h.b16 %v248
    %v2094 = vunpack.c.l.b16 %v249
    %v2095 = vunpack.c.h.b16 %v249
    %v2096 = vunpack.c.l.b16 %v250
    %v2097 = vunpack.c.h.b16 %v250
    %v2098 = vunpack.c.l.b16 %v251
    %v2099 = vunpack.c.h.b16 %v251
    %v2100 = vunpack.c.l.b16 %v252
    %v2101 = vunpack.c.h.b16 %v252
    %v2102 = vunpack.c.l.b16 %v253
    %v2103 = vunpack.c.h.b16 %v253
    %v2104 = vunpack.c.l.b16 %v254
    %v2105 = vunpack.c.h.b16 %v254
    %v2106 = vunpack.c.l.b16 %v255
    %v2107 = vunpack.c.h.b16 %v255
    %v2108 = vunpack.c.l.b16 %v256
    %v2109 = vunpack.c.h.b16 %v256
    %v2110 = vunpack.c.l.b16 %v257
    %v2111 = vunpack.c.h.b16 %v257
    %v2112 = vunpack.c.l.b16 %v258
    %v2113 = vunpack.c.h.b16 %v258
    %v2114 = vunpack.c.l.b16 %v259
    %v2115 = vunpack.c.h.b16 %v259
    %v2116 = vunpack.c.l.b16 %v260
    %v2117 = vunpack.c.h.b16 %v260
    %v2118 = vunpack.c.l.b16 %v261
    %v2119 = vunpack.c.h.b16 %v261
    %v2120 = vunpack.c.l.b16 %v262
    %v2121 = vunpack.c.h.b16 %v262
    %v2122 = vunpack.c.l.b16 %v263
    %v2123 = vunpack.c.h.b16 %v263
    %v2124 = vunpack.c.l.b16 %v264
    %v2125 = vunpack.c.h.b16 %v264
    %v2126 = vunpack.c.l.b16 %v265
    %v2127 = vunpack.c.h.b16 %v265
    %v2128 = vunpack.c.l.b16 %v266
    %v2129 = vunpack.c.h.b16 %v266
    %v2130 = vunpack.c.l.b16 %v267
    %v2131 = vunpack.c.h.b16 %v267
    %v2132 = vunpack.c.l.b16 %v268
    %v2133 = vunpack.c.h.b16 %v268
    %v2134 = vunpack.c.l.b16 %v269
    %v2135 = vunpack.c.h.b16 %v269
    %v2136 = vunpack.c.l.b16 %v270
    %v2137 = vunpack.c.h.b16 %v270
    %v2138 = vunpack.c.l.b16 %v271
    %v2139 = vunpack.c.h.b16 %v271
    %v2140 = vunpack.c.l.b16 %v272
    %v2141 = vunpack.c.h.b16 %v272
    %v2142 = vunpack.c.l.b16 %v273
    %v2143 = vunpack.c.h.b16 %v273
    %v2144 = vunpack.c.l.b16 %v274
    %v2145 = vunpack.c.h.b16 %v274
    %v2146 = vunpack.c.l.b16 %v275
    %v2147 = vunpack.c.h.b16 %v275
    %v2148 = vunpack.c.l.b16 %v276
    %v2149 = vunpack.c.h.b16 %v276
    %v2150 = vunpack.c.l.b16 %v277
    %v2151 = vunpack.c.h.b16 %v277
    %v2152 = vunpack.c.l.b16 %v278
    %v2153 = vunpack.c.h.b16 %v278
    %v2154 = vunpack.c.l.b16 %v279
    %v2155 = vunpack.c.h.b16 %v279
    %v2156 = vunpack.c.l.b16 %v280
    %v2157 = vunpack.c.h.b16 %v280
    %v2158 = vunpack.c.l.b16 %v281
    %v2159 = vunpack.c.h.b16 %v281
    %v2160 = vunpack.c.l.b16 %v282
    %v2161 = vunpack.c.h.b16 %v282
    %v2162 = vunpack.c.l.b16 %v283
    %v2163 = vunpack.c.h.b16 %v283
    %v2164 = vunpack.c.l.b16 %v284
    %v2165 = vunpack.c.h.b16 %v284
    %v2166 = vunpack.c.l.b16 %v285
    %v2167 = vunpack.c.h.b16 %v285
    %v2168 = vunpack.c.l.b16 %v286
    %v2169 = vunpack.c.h.b16 %v286
    %v2170 = vunpack.c.l.b16 %v287
    %v2171 = vunpack.c.h.b16 %v287
    %v2172 = vunpack.c.l.b16 %v288
    %v2173 = vunpack.c.h.b16 %v288
    %v2174 = vunpack.c.l.b16 %v289
    %v2175 = vunpack.c.h.b16 %v289
    %v2176 = vunpack.c.l.b16 %v290
    %v2177 = vunpack.c.h.b16 %v290
    %v2178 = vunpack.c.l.b16 %v291
    %v2179 = vunpack.c.h.b16 %v291
    %v2180 = vunpack.c.l.b16 %v292
    %v2181 = vunpack.c.h.b16 %v292
    %v2182 = vunpack.c.l.b16 %v293
    %v2183 = vunpack.c.h.b16 %v293
    %v2184 = vunpack.c.l.b16 %v294
    %v2185 = vunpack.c.h.b16 %v294
    %v2186 = vunpack.c.l.b16 %v295
    %v2187 = vunpack.c.h.b16 %v295
    %v2188 = vunpack.c.l.b16 %v296
    %v2189 = vunpack.c.h.b16 %v296
    %v2190 = vunpack.c.l.b16 %v297
    %v2191 = vunpack.c.h.b16 %v297
    %v2192 = vunpack.c.l.b16 %v298
    %v2193 = vunpack.c.h.b16 %v298
    %v2194 = vunpack.c.l.b16 %v299
    %v2195 = vunpack.c.h.b16 %v299
    %v2196 = vunpack.c.l.b16 %v300
    %v2197 = vunpack.c.h.b16 %v300
    %v2198 = vunpack.c.l.b16 %v301
    %v2199 = vunpack.c.h.b16 %v301
    %v2200 = vunpack.c.l.b16 %v302
    %v2201 = vunpack.c.h.b16 %v302
    %v2202 = vunpack.c.l.b16 %v303
    %v2203 = vunpack.c.h.b16 %v303
    %v2204 = vunpack.c.l.b16 %v304
    %v2205 = vunpack.c.h.b16 %v304
    %v2206 = vunpack.c.l.b16 %v305
    %v2207 = vunpack.c.h.b16 %v305
    %v2208 = vunpack.c.l.b16 %v306
    %v2209 = vunpack.c.h.b16 %v306
    %v2210 = vunpack.c.l.b16 %v307
    %v2211 = vunpack.c.h.b16 %v307
    %v2212 = vunpack.c.l.b16 %v308
    %v2213 = vunpack.c.h.b16 %v308
    %v2214 = vunpack.c.l.b16 %v309
    %v2215 = vunpack.c.h.b16 %v309
    %v2216 = vunpack.c.l.b16 %v310
    %v2217 = vunpack.c.h.b16 %v310
    %v2218 = vunpack.c.l.b16 %v311
    %v2219 = vunpack.c.h.b16 %v311
    %v2220 = vunpack.c.l.b16 %v312
    %v2221 = vunpack.c.h.b16 %v312
    %v2222 = vunpack.c.l.b16 %v313
    %v2223 = vunpack.c.h.b16 %v313
    %v2224 = vunpack.c.l.b16 %v314
    %v2225 = vunpack.c.h.b16 %v314
    %v2226 = vunpack.c.l.b16 %v315
    %v2227 = vunpack.c.h.b16 %v315
    %v2228 = vunpack.c.l.b16 %v316
    %v2229 = vunpack.c.h.b16 %v316
    %v2230 = vunpack.c.l.b16 %v317
    %v2231 = vunpack.c.h.b16 %v317
    %v2232 = vunpack.c.l.b16 %v318
    %v2233 = vunpack.c.h.b16 %v318
    %v2234 = vunpack.c.l.b16 %v319
    %v2235 = vunpack.c.h.b16 %v319
    %v2236 = vunpack.c.l.b16 %v320
    %v2237 = vunpack.c.h.b16 %v320
    %v2238 = vunpack.c.l.b16 %v321
    %v2239 = vunpack.c.h.b16 %v321
    %v2240 = vunpack.c.l.b16 %v322
    %v2241 = vunpack.c.h.b16 %v322
    %v2242 = vunpack.c.l.b16 %v323
    %v2243 = vunpack.c.h.b16 %v323
    %v2244 = vunpack.c.l.b16 %v324
    %v2245 = vunpack.c.h.b16 %v324
    %v2246 = vunpack.c.l.b16 %v325
    %v2247 = vunpack.c.h.b16 %v325
    %v2248 = vunpack.c.l.b16 %v326
    %v2249 = vunpack.c.h.b16 %v326
    %v2250 = vunpack.c.l.b16 %v327
    %v2251 = vunpack.c.h.b16 %v327
    %v2252 = vunpack.c.l.b16 %v328
    %v2253 = vunpack.c.h.b16 %v328
    %v2254 = vunpack.c.l.b16 %v329
    %v2255 = vunpack.c.h.b16 %v329
    %v2256 = vunpack.c.l.b16 %v330
    %v2257 = vunpack.c.h.b16 %v330
    %v2258 = vunpack.c.l.b16 %v331
    %v2259 = vunpack.c.h.b16 %v331
    %v2260 = vunpack.c.l.b16 %v332
    %v2261 = vunpack.c.h.b16 %v332
    %v2262 = vunpack.c.l.b16 %v333
    %v2263 = vunpack.c.h.b16 %v333
    %v2264 = vunpack.c.l.b16 %v334
    %v2265 = vunpack.c.h.b16 %v334
    %v2266 = vunpack.c.l.b16 %v335
    %v2267 = vunpack.c.h.b16 %v335
    %v2268 = vunpack.c.l.b16 %v336
    %v2269 = vunpack.c.h.b16 %v336
    %v2270 = vunpack.c.l.b16 %v337
    %v2271 = vunpack.c.h.b16 %v337
    %v2272 = vunpack.c.l.b16 %v338
    %v2273 = vunpack.c.h.b16 %v338
    %v2274 = vunpack.c.l.b16 %v339
    %v2275 = vunpack.c.h.b16 %v339
    %v2276 = vunpack.c.l.b16 %v340
    %v2277 = vunpack.c.h.b16 %v340
    %v2278 = vunpack.c.l.b16 %v341
    %v2279 = vunpack.c.h.b16 %v341
    %v2280 = vunpack.c.l.b16 %v342
    %v2281 = vunpack.c.h.b16 %v342
    %v2282 = vunpack.c.l.b16 %v343
    %v2283 = vunpack.c.h.b16 %v343
    %v2284 = vunpack.c.l.b16 %v344
    %v2285 = vunpack.c.h.b16 %v344
    %v2286 = vunpack.c.l.b16 %v345
    %v2287 = vunpack.c.h.b16 %v345
    %v2288 = vunpack.c.l.b16 %v346
    %v2289 = vunpack.c.h.b16 %v346
    %v2290 = vunpack.c.l.b16 %v347
    %v2291 = vunpack.c.h.b16 %v347
    %v2292 = vunpack.c.l.b16 %v348
    %v2293 = vunpack.c.h.b16 %v348
    %v2294 = vunpack.c.l.b16 %v349
    %v2295 = vunpack.c.h.b16 %v349
    %v2296 = vunpack.c.l.b16 %v350
    %v2297 = vunpack.c.h.b16 %v350
    %v2298 = vunpack.c.l.b16 %v351
    %v2299 = vunpack.c.h.b16 %v351
    %v2300 = vunpack.c.l.b16 %v352
    %v2301 = vunpack.c.h.b16 %v352
    %v2302 = vunpack.c.l.b16 %v353
    %v2303 = vunpack.c.h.b16 %v353
    %v2304 = vunpack.c.l.b16 %v354
    %v2305 = vunpack.c.h.b16 %v354
    %v2306 = vunpack.c.l.b16 %v355
    %v2307 = vunpack.c.h.b16 %v355
    %v2308 = vunpack.c.l.b16 %v356
    %v2309 = vunpack.c.h.b16 %v356
    %v2310 = vunpack.c.l.b16 %v357
    %v2311 = vunpack.c.h.b16 %v357
    %v2312 = vunpack.c.l.b16 %v358
    %v2313 = vunpack.c.h.b16 %v358
    %v2314 = vunpack.c.l.b16 %v359
    %v2315 = vunpack.c.h.b16 %v359
    %v2316 = vunpack.c.l.b16 %v360
    %v2317 = vunpack.c.h.b16 %v360
    %v2318 = vunpack.c.l.b16 %v361
    %v2319 = vunpack.c.h.b16 %v361
    %v2320 = vunpack.c.l.b16 %v362
    %v2321 = vunpack.c.h.b16 %v362
    %v2322 = vunpack.c.l.b16 %v363
    %v2323 = vunpack.c.h.b16 %v363
    %v2324 = vunpack.c.l.b16 %v364
    %v2325 = vunpack.c.h.b16 %v364
    %v2326 = vunpack.c.l.b16 %v365
    %v2327 = vunpack.c.h.b16 %v365
    %v2328 = vunpack.c.l.b16 %v366
    %v2329 = vunpack.c.h.b16 %v366
    %v2330 = vunpack.c.l.b16 %v367
    %v2331 = vunpack.c.h.b16 %v367
    %v2332 = vunpack.c.l.b16 %v368
    %v2333 = vunpack.c.h.b16 %v368
    %v2334 = vunpack.c.l.b16 %v369
    %v2335 = vunpack.c.h.b16 %v369
    %v2336 = vunpack.c.l.b16 %v370
    %v2337 = vunpack.c.h.b16 %v370
    %v2338 = vunpack.c.l.b16 %v371
    %v2339 = vunpack.c.h.b16 %v371
    %v2340 = vunpack.c.l.b16 %v372
    %v2341 = vunpack.c.h.b16 %v372
    %v2342 = vunpack.c.l.b16 %v373
    %v2343 = vunpack.c.h.b16 %v373
    %v2344 = vunpack.c.l.b16 %v374
    %v2345 = vunpack.c.h.b16 %v374
    %v2346 = vunpack.c.l.b16 %v375
    %v2347 = vunpack.c.h.b16 %v375
    %v2348 = vunpack.c.l.b16 %v376
    %v2349 = vunpack.c.h.b16 %v376
    %v2350 = vunpack.c.l.b16 %v377
    %v2351 = vunpack.c.h.b16 %v377
    %v2352 = vunpack.c.l.b16 %v378
    %v2353 = vunpack.c.h.b16 %v378
    %v2354 = vunpack.c.l.b16 %v379
    %v2355 = vunpack.c.h.b16 %v379
    %v2356 = vunpack.c.l.b16 %v380
    %v2357 = vunpack.c.h.b16 %v380
    %v2358 = vunpack.c.l.b16 %v381
    %v2359 = vunpack.c.h.b16 %v381
    %v2360 = vunpack.c.l.b16 %v382
    %v2361 = vunpack.c.h.b16 %v382
    %v2362 = vunpack.c.l.b16 %v383
    %v2363 = vunpack.c.h.b16 %v383
    %v2364 = vunpack.c.l.b16 %v384
    %v2365 = vunpack.c.h.b16 %v384
    %v2366 = vunpack.c.l.b16 %v385
    %v2367 = vunpack.c.h.b16 %v385
    %v2368 = vunpack.c.l.b16 %v386
    %v2369 = vunpack.c.h.b16 %v386
    %v2370 = vunpack.c.l.b16 %v387
    %v2371 = vunpack.c.h.b16 %v387
    %v2372 = vunpack.c.l.b16 %v388
    %v2373 = vunpack.c.h.b16 %v388
    %v2374 = vunpack.c.l.b16 %v389
    %v2375 = vunpack.c.h.b16 %v389
    %v2376 = vunpack.c.l.b16 %v390
    %v2377 = vunpack.c.h.b16 %v390
    %v2378 = vunpack.c.l.b16 %v391
    %v2379 = vunpack.c.h.b16 %v391
    %v2380 = vunpack.c.l.b16 %v392
    %v2381 = vunpack.c.h.b16 %v392
    %v2382 = vunpack.c.l.b16 %v393
    %v2383 = vunpack.c.h.b16 %v393
    %v2384 = vunpack.c.l.b16 %v394
    %v2385 = vunpack.c.h.b16 %v394
    %v2386 = vunpack.c.l.b16 %v395
    %v2387 = vunpack.c.h.b16 %v395
    %v2388 = vunpack.c.l.b16 %v396
    %v2389 = vunpack.c.h.b16 %v396
    %v2390 = vunpack.c.l.b16 %v397
    %v2391 = vunpack.c.h.b16 %v397
    %v2392 = vunpack.c.l.b16 %v398
    %v2393 = vunpack.c.h.b16 %v398
    %v2394 = vunpack.c.l.b16 %v399
    %v2395 = vunpack.c.h.b16 %v399
    %v2396 = vunpack.c.l.b16 %v400
    %v2397 = vunpack.c.h.b16 %v400
    %v2398 = vunpack.c.l.b16 %v401
    %v2399 = vunpack.c.h.b16 %v401
    %v2400 = vunpack.c.l.b16 %v402
    %v2401 = vunpack.c.h.b16 %v402
    %v2402 = vunpack.c.l.b16 %v403
    %v2403 = vunpack.c.h.b16 %v403
    %v2404 = vunpack.c.l.b16 %v404
    %v2405 = vunpack.c.h.b16 %v404
    %v2406 = vunpack.c.l.b16 %v405
    %v2407 = vunpack.c.h.b16 %v405
    %v2408 = vunpack.c.l.b16 %v406
    %v2409 = vunpack.c.h.b16 %v406
    %v2410 = vunpack.c.l.b16 %v407
    %v2411 = vunpack.c.h.b16 %v407
    %v2412 = vunpack.c.l.b16 %v408
    %v2413 = vunpack.c.h.b16 %v408
    %v2414 = vunpack.c.l.b16 %v409
    %v2415 = vunpack.c.h.b16 %v409
    %v2416 = vunpack.c.l.b16 %v410
    %v2417 = vunpack.c.h.b16 %v410
    %v2418 = vunpack.c.l.b16 %v411
    %v2419 = vunpack.c.h.b16 %v411
    %v2420 = vunpack.c.l.b16 %v412
    %v2421 = vunpack.c.h.b16 %v412
    %v2422 = vunpack.c.l.b16 %v413
    %v2423 = vunpack.c.h.b16 %v413
    %v2424 = vunpack.c.l.b16 %v414
    %v2425 = vunpack.c.h.b16 %v414
    %v2426 = vunpack.c.l.b16 %v415
    %v2427 = vunpack.c.h.b16 %v415
    %v2428 = vunpack.c.l.b16 %v416
    %v2429 = vunpack.c.h.b16 %v416
    %v2430 = vunpack.c.l.b16 %v417
    %v2431 = vunpack.c.h.b16 %v417
    %v2432 = vunpack.c.l.b16 %v418
    %v2433 = vunpack.c.h.b16 %v418
    %v2434 = vunpack.c.l.b16 %v419
    %v2435 = vunpack.c.h.b16 %v419
    %v2436 = vunpack.c.l.b16 %v420
    %v2437 = vunpack.c.h.b16 %v420
    %v2438 = vunpack.c.l.b16 %v421
    %v2439 = vunpack.c.h.b16 %v421
    %v2440 = vunpack.c.l.b16 %v422
    %v2441 = vunpack.c.h.b16 %v422
    %v2442 = vunpack.c.l.b16 %v423
    %v2443 = vunpack.c.h.b16 %v423
    %v2444 = vunpack.c.l.b16 %v424
    %v2445 = vunpack.c.h.b16 %v424
    %v2446 = vunpack.c.l.b16 %v425
    %v2447 = vunpack.c.h.b16 %v425
    %v2448 = vunpack.c.l.b16 %v426
    %v2449 = vunpack.c.h.b16 %v426
    %v2450 = vunpack.c.l.b16 %v427
    %v2451 = vunpack.c.h.b16 %v427
    %v2452 = vunpack.c.l.b16 %v428
    %v2453 = vunpack.c.h.b16 %v428
    %v2454 = vunpack.c.l.b16 %v429
    %v2455 = vunpack.c.h.b16 %v429
    %v2456 = vunpack.c.l.b16 %v430
    %v2457 = vunpack.c.h.b16 %v430
    %v2458 = vunpack.c.l.b16 %v431
    %v2459 = vunpack.c.h.b16 %v431
    %v2460 = vunpack.c.l.b16 %v432
    %v2461 = vunpack.c.h.b16 %v432
    %v2462 = vunpack.c.l.b16 %v433
    %v2463 = vunpack.c.h.b16 %v433
    %v2464 = vunpack.c.l.b16 %v434
    %v2465 = vunpack.c.h.b16 %v434
    %v2466 = vunpack.c.l.b16 %v435
    %v2467 = vunpack.c.h.b16 %v435
    %v2468 = vunpack.c.l.b16 %v436
    %v2469 = vunpack.c.h.b16 %v436
    %v2470 = vunpack.c.l.b16 %v437
    %v2471 = vunpack.c.h.b16 %v437
    %v2472 = vunpack.c.l.b16 %v438
    %v2473 = vunpack.c.h.b16 %v438
    %v2474 = vunpack.c.l.b16 %v439
    %v2475 = vunpack.c.h.b16 %v439
    %v2476 = vunpack.c.l.b16 %v440
    %v2477 = vunpack.c.h.b16 %v440
    %v2478 = vunpack.c.l.b16 %v441
    %v2479 = vunpack.c.h.b16 %v441
    %v2480 = vunpack.c.l.b16 %v442
    %v2481 = vunpack.c.h.b16 %v442
    %v2482 = vunpack.c.l.b16 %v443
    %v2483 = vunpack.c.h.b16 %v443
    %v2484 = vunpack.c.l.b16 %v444
    %v2485 = vunpack.c.h.b16 %v444
    %v2486 = vunpack.c.l.b16 %v445
    %v2487 = vunpack.c.h.b16 %v445
    %v2488 = vunpack.c.l.b16 %v446
    %v2489 = vunpack.c.h.b16 %v446
    %v2490 = vunpack.c.l.b16 %v447
    %v2491 = vunpack.c.h.b16 %v447
    %v2492 = vunpack.c.l.b16 %v448
    %v2493 = vunpack.c.h.b16 %v448
    %v2494 = vunpack.c.l.b16 %v449
    %v2495 = vunpack.c.h.b16 %v449
    %v2496 = vunpack.c.l.b16 %v450
    %v2497 = vunpack.c.h.b16 %v450
    %v2498 = vunpack.c.l.b16 %v451
    %v2499 = vunpack.c.h.b16 %v451
    %v2500 = vunpack.c.l.b16 %v452
    %v2501 = vunpack.c.h.b16 %v452
    %v2502 = vunpack.c.l.b16 %v453
    %v2503 = vunpack.c.h.b16 %v453
    %v2504 = vunpack.c.l.b16 %v454
    %v2505 = vunpack.c.h.b16 %v454
    %v2506 = vunpack.c.l.b16 %v455
    %v2507 = vunpack.c.h.b16 %v455
    %v2508 = vunpack.c.l.b16 %v456
    %v2509 = vunpack.c.h.b16 %v456
    %v2510 = vunpack.c.l.b16 %v457
    %v2511 = vunpack.c.h.b16 %v457
    %v2512 = vunpack.c.l.b16 %v458
    %v2513 = vunpack.c.h.b16 %v458
    %v2514 = vunpack.c.l.b16 %v459
    %v2515 = vunpack.c.h.b16 %v459
    %v2516 = vunpack.c.l.b16 %v460
    %v2517 = vunpack.c.h.b16 %v460
    %v2518 = vunpack.c.l.b16 %v461
    %v2519 = vunpack.c.h.b16 %v461
    %v2520 = vunpack.c.l.b16 %v462
    %v2521 = vunpack.c.h.b16 %v462
    %v2522 = vunpack.c.l.b16 %v463
    %v2523 = vunpack.c.h.b16 %v463
    %v2524 = vunpack.c.l.b16 %v464
    %v2525 = vunpack.c.h.b16 %v464
    %v2526 = vunpack.c.l.b16 %v465
    %v2527 = vunpack.c.h.b16 %v465
    %v2528 = vunpack.c.l.b16 %v466
    %v2529 = vunpack.c.h.b16 %v466
    %v2530 = vunpack.c.l.b16 %v467
    %v2531 = vunpack.c.h.b16 %v467
    %v2532 = vunpack.c.l.b16 %v468
    %v2533 = vunpack.c.h.b16 %v468
    %v2534 = vunpack.c.l.b16 %v469
    %v2535 = vunpack.c.h.b16 %v469
    %v2536 = vunpack.c.l.b16 %v470
    %v2537 = vunpack.c.h.b16 %v470
    %v2538 = vunpack.c.l.b16 %v471
    %v2539 = vunpack.c.h.b16 %v471
    %v2540 = vunpack.c.l.b16 %v472
    %v2541 = vunpack.c.h.b16 %v472
    %v2542 = vunpack.c.l.b16 %v473
    %v2543 = vunpack.c.h.b16 %v473
    %v2544 = vunpack.c.l.b16 %v474
    %v2545 = vunpack.c.h.b16 %v474
    %v2546 = vunpack.c.l.b16 %v475
    %v2547 = vunpack.c.h.b16 %v475
    %v2548 = vunpack.c.l.b16 %v476
    %v2549 = vunpack.c.h.b16 %v476
    %v2550 = vunpack.c.l.b16 %v477
    %v2551 = vunpack.c.h.b16 %v477
    %v2552 = vunpack.c.l.b16 %v478
    %v2553 = vunpack.c.h.b16 %v478
    %v2554 = vunpack.c.l.b16 %v479
    %v2555 = vunpack.c.h.b16 %v479
    %v2556 = vunpack.c.l.b16 %v480
    %v2557 = vunpack.c.h.b16 %v480
    %v2558 = vunpack.c.l.b16 %v481
    %v2559 = vunpack.c.h.b16 %v481
    %v2560 = vunpack.c.l.b16 %v482
    %v2561 = vunpack.c.h.b16 %v482
    %v2562 = vunpack.c.l.b16 %v483
    %v2563 = vunpack.c.h.b16 %v483
    %v2564 = vunpack.c.l.b16 %v484
    %v2565 = vunpack.c.h.b16 %v484
    %v2566 = vunpack.c.l.b16 %v485
    %v2567 = vunpack.c.h.b16 %v485
    %v2568 = vunpack.c.l.b16 %v486
    %v2569 = vunpack.c.h.b16 %v486
    %v2570 = vunpack.c.l.b16 %v487
    %v2571 = vunpack.c.h.b16 %v487
    %v2572 = vunpack.c.l.b16 %v488
    %v2573 = vunpack.c.h.b16 %v488
    %v2574 = vunpack.c.l.b16 %v489
    %v2575 = vunpack.c.h.b16 %v489
    %v2576 = vunpack.c.l.b16 %v490
    %v2577 = vunpack.c.h.b16 %v490
    %v2578 = vunpack.c.l.b16 %v491
    %v2579 = vunpack.c.h.b16 %v491
    %v2580 = vunpack.c.l.b16 %v492
    %v2581 = vunpack.c.h.b16 %v492
    %v2582 = vunpack.c.l.b16 %v493
    %v2583 = vunpack.c.h.b16 %v493
    %v2584 = vunpack.c.l.b16 %v494
    %v2585 = vunpack.c.h.b16 %v494
    %v2586 = vunpack.c.l.b16 %v495
    %v2587 = vunpack.c.h.b16 %v495
    %v2588 = vunpack.c.l.b16 %v496
    %v2589 = vunpack.c.h.b16 %v496
    %v2590 = vunpack.c.l.b16 %v497
    %v2591 = vunpack.c.h.b16 %v497
    %v2592 = vunpack.c.l.b16 %v498
    %v2593 = vunpack.c.h.b16 %v498
    %v2594 = vunpack.c.l.b16 %v499
    %v2595 = vunpack.c.h.b16 %v499
    %v2596 = vunpack.c.l.b16 %v500
    %v2597 = vunpack.c.h.b16 %v500
    %v2598 = vunpack.c.l.b16 %v501
    %v2599 = vunpack.c.h.b16 %v501
    %v2600 = vunpack.c.l.b16 %v502
    %v2601 = vunpack.c.h.b16 %v502
    %v2602 = vunpack.c.l.b16 %v503
    %v2603 = vunpack.c.h.b16 %v503
    %v2604 = vunpack.c.l.b16 %v504
    %v2605 = vunpack.c.h.b16 %v504
    %v2606 = vunpack.c.l.b16 %v505
    %v2607 = vunpack.c.h.b16 %v505
    %v2608 = vunpack.c.l.b16 %v506
    %v2609 = vunpack.c.h.b16 %v506
    %v2610 = vunpack.c.l.b16 %v507
    %v2611 = vunpack.c.h.b16 %v507
    %v2612 = vunpack.c.l.b16 %v508
    %v2613 = vunpack.c.h.b16 %v508
    %v2614 = vunpack.c.l.b16 %v509
    %v2615 = vunpack.c.h.b16 %v509
    %v2616 = vunpack.c.l.b16 %v510
    %v2617 = vunpack.c.h.b16 %v510
    %v2618 = vunpack.c.l.b16 %v511
    %v2619 = vunpack.c.h.b16 %v511
    %v2620 = vunpack.c.l.b16 %v512
    %v2621 = vunpack.c.h.b16 %v512
    %v2622 = vunpack.c.l.b16 %v513
    %v2623 = vunpack.c.h.b16 %v513
    %v2624 = vunpack.c.l.b16 %v514
    %v2625 = vunpack.c.h.b16 %v514
    %v2626 = vunpack.c.l.b16 %v515
    %v2627 = vunpack.c.h.b16 %v515
    %v2628 = vunpack.c.l.b16 %v516
    %v2629 = vunpack.c.h.b16 %v516
    %v2630 = vunpack.c.l.b16 %v517
    %v2631 = vunpack.c.h.b16 %v517
    %v2632 = vunpack.c.l.b16 %v518
    %v2633 = vunpack.c.h.b16 %v518
    %v2634 = vunpack.c.l.b16 %v519
    %v2635 = vunpack.c.h.b16 %v519
    %v2636 = vunpack.c.l.b16 %v520
    %v2637 = vunpack.c.h.b16 %v520
    %v2638 = vunpack.c.l.b16 %v521
    %v2639 = vunpack.c.h.b16 %v521
    %v2640 = vunpack.c.l.b16 %v522
    %v2641 = vunpack.c.h.b16 %v522
    %v2642 = vunpack.c.l.b16 %v523
    %v2643 = vunpack.c.h.b16 %v523
    %v2644 = vunpack.c.l.b16 %v524
    %v2645 = vunpack.c.h.b16 %v524
    %v2646 = vunpack.c.l.b16 %v525
    %v2647 = vunpack.c.h.b16 %v525
    %v2648 = vunpack.c.l.b16 %v526
    %v2649 = vunpack.c.h.b16 %v526
    %v2650 = vunpack.c.l.b16 %v527
    %v2651 = vunpack.c.h.b16 %v527
    %v2652 = vunpack.c.l.b16 %v528
    %v2653 = vunpack.c.h.b16 %v528
    %v2654 = vunpack.c.l.b16 %v529
    %v2655 = vunpack.c.h.b16 %v529
    %v2656 = vunpack.c.l.b16 %v530
    %v2657 = vunpack.c.h.b16 %v530
    %v2658 = vunpack.c.l.b16 %v531
    %v2659 = vunpack.c.h.b16 %v531
    %v2660 = vunpack.c.l.b16 %v532
    %v2661 = vunpack.c.h.b16 %v532
    %v2662 = vunpack.c.l.b16 %v533
    %v2663 = vunpack.c.h.b16 %v533
    %v2664 = vunpack.c.l.b16 %v534
    %v2665 = vunpack.c.h.b16 %v534
    %v2666 = vunpack.c.l.b16 %v535
    %v2667 = vunpack.c.h.b16 %v535
    %v2668 = vunpack.c.l.b16 %v536
    %v2669 = vunpack.c.h.b16 %v536
    %v2670 = vunpack.c.l.b16 %v537
    %v2671 = vunpack.c.h.b16 %v537
    %v2672 = vunpack.c.l.b16 %v538
    %v2673 = vunpack.c.h.b16 %v538
    %v2674 = vunpack.c.l.b16 %v539
    %v2675 = vunpack.c.h.b16 %v539
    %v2676 = vunpack.c.l.b16 %v540
    %v2677 = vunpack.c.h.b16 %v540
    %v2678 = vunpack.c.l.b16 %v541
    %v2679 = vunpack.c.h.b16 %v541
    %v2680 = vunpack.c.l.b16 %v542
    %v2681 = vunpack.c.h.b16 %v542
    %v2682 = vunpack.c.l.b16 %v543
    %v2683 = vunpack.c.h.b16 %v543
    %v2684 = vunpack.c.l.b16 %v544
    %v2685 = vunpack.c.h.b16 %v544
    %v2686 = vunpack.c.l.b16 %v545
    %v2687 = vunpack.c.h.b16 %v545
    %v2688 = vunpack.c.l.b16 %v546
    %v2689 = vunpack.c.h.b16 %v546
    %v2690 = vunpack.c.l.b16 %v547
    %v2691 = vunpack.c.h.b16 %v547
    %v2692 = vunpack.c.l.b16 %v548
    %v2693 = vunpack.c.h.b16 %v548
    %v2694 = vunpack.c.l.b16 %v549
    %v2695 = vunpack.c.h.b16 %v549
    %v2696 = vunpack.c.l.b16 %v550
    %v2697 = vunpack.c.h.b16 %v550
    %v2698 = vunpack.c.l.b16 %v551
    %v2699 = vunpack.c.h.b16 %v551
    %v2700 = vunpack.c.l.b16 %v552
    %v2701 = vunpack.c.h.b16 %v552
    %v2702 = vunpack.c.l.b16 %v553
    %v2703 = vunpack.c.h.b16 %v553
    %v2704 = vunpack.c.l.b16 %v554
    %v2705 = vunpack.c.h.b16 %v554
    %v2706 = vunpack.c.l.b16 %v555
    %v2707 = vunpack.c.h.b16 %v555
    %v2708 = vunpack.c.l.b16 %v556
    %v2709 = vunpack.c.h.b16 %v556
    %v2710 = vunpack.c.l.b16 %v557
    %v2711 = vunpack.c.h.b16 %v557
    %v2712 = vunpack.c.l.b16 %v558
    %v2713 = vunpack.c.h.b16 %v558
    %v2714 = vunpack.c.l.b16 %v559
    %v2715 = vunpack.c.h.b16 %v559
    %v2716 = vunpack.c.l.b16 %v560
    %v2717 = vunpack.c.h.b16 %v560
    %v2718 = vunpack.c.l.b16 %v561
    %v2719 = vunpack.c.h.b16 %v561
    %v2720 = vunpack.c.l.b16 %v562
    %v2721 = vunpack.c.h.b16 %v562
    %v2722 = vunpack.c.l.b16 %v563
    %v2723 = vunpack.c.h.b16 %v563
    %v2724 = vunpack.c.l.b16 %v564
    %v2725 = vunpack.c.h.b16 %v564
    %v2726 = vunpack.c.l.b16 %v565
    %v2727 = vunpack.c.h.b16 %v565
    %v2728 = vunpack.c.l.b16 %v566
    %v2729 = vunpack.c.h.b16 %v566
    %v2730 = vunpack.c.l.b16 %v567
    %v2731 = vunpack.c.h.b16 %v567
    %v2732 = vunpack.c.l.b16 %v568
    %v2733 = vunpack.c.h.b16 %v568
    %v2734 = vunpack.c.l.b16 %v569
    %v2735 = vunpack.c.h.b16 %v569
    %v2736 = vunpack.c.l.b16 %v570
    %v2737 = vunpack.c.h.b16 %v570
    %v2738 = vunpack.c.l.b16 %v571
    %v2739 = vunpack.c.h.b16 %v571
    %v2740 = vunpack.c.l.b16 %v572
    %v2741 = vunpack.c.h.b16 %v572
    %v2742 = vunpack.c.l.b16 %v573
    %v2743 = vunpack.c.h.b16 %v573
    %v2744 = vunpack.c.l.b16 %v574
    %v2745 = vunpack.c.h.b16 %v574
    %v2746 = vunpack.c.l.b16 %v575
    %v2747 = vunpack.c.h.b16 %v575
    %v2748 = vunpack.c.l.b16 %v576
    %v2749 = vunpack.c.h.b16 %v576
    %v2750 = vunpack.c.l.b16 %v577
    %v2751 = vunpack.c.h.b16 %v577
    %v2752 = vunpack.c.l.b16 %v578
    %v2753 = vunpack.c.h.b16 %v578
    %v2754 = vunpack.c.l.b16 %v579
    %v2755 = vunpack.c.h.b16 %v579
    %v2756 = vunpack.c.l.b16 %v580
    %v2757 = vunpack.c.h.b16 %v580
    %v2758 = vunpack.c.l.b16 %v581
    %v2759 = vunpack.c.h.b16 %v581
    %v2760 = vunpack.c.l.b16 %v582
    %v2761 = vunpack.c.h.b16 %v582
    %v2762 = vunpack.c.l.b16 %v583
    %v2763 = vunpack.c.h.b16 %v583
    %v2764 = vunpack.c.l.b16 %v584
    %v2765 = vunpack.c.h.b16 %v584
    %v2766 = vunpack.c.l.b16 %v585
    %v2767 = vunpack.c.h.b16 %v585
    %v2768 = vunpack.c.l.b16 %v586
    %v2769 = vunpack.c.h.b16 %v586
    %v2770 = vunpack.c.l.b16 %v587
    %v2771 = vunpack.c.h.b16 %v587
    %v2772 = vunpack.c.l.b16 %v588
    %v2773 = vunpack.c.h.b16 %v588
    %v2774 = vunpack.c.l.b16 %v589
    %v2775 = vunpack.c.h.b16 %v589
    %v2776 = vunpack.c.l.b16 %v590
    %v2777 = vunpack.c.h.b16 %v590
    %v2778 = vunpack.c.l.b16 %v591
    %v2779 = vunpack.c.h.b16 %v591
    %v2780 = vunpack.c.l.b16 %v592
    %v2781 = vunpack.c.h.b16 %v592
    %v2782 = vunpack.c.l.b16 %v593
    %v2783 = vunpack.c.h.b16 %v593
    %v2784 = vunpack.c.l.b16 %v594
    %v2785 = vunpack.c.h.b16 %v594
    %v2786 = vunpack.c.l.b16 %v595
    %v2787 = vunpack.c.h.b16 %v595
    %v2788 = vunpack.c.l.b16 %v596
    %v2789 = vunpack.c.h.b16 %v596
    %v2790 = vunpack.c.l.b16 %v597
    %v2791 = vunpack.c.h.b16 %v597
    %v2792 = vunpack.c.l.b16 %v598
    %v2793 = vunpack.c.h.b16 %v598
    %v2794 = vunpack.c.l.b16 %v599
    %v2795 = vunpack.c.h.b16 %v599
    %v2796 = vunpack.c.l.b16 %v600
    %v2797 = vunpack.c.h.b16 %v600
    %v2798 = vunpack.c.l.b16 %v601
    %v2799 = vunpack.c.h.b16 %v601
    %v2800 = vunpack.c.l.b16 %v602
    %v2801 = vunpack.c.h.b16 %v602
    %v2802 = vunpack.c.l.b16 %v603
    %v2803 = vunpack.c.h.b16 %v603
    %v2804 = vunpack.c.l.b16 %v604
    %v2805 = vunpack.c.h.b16 %v604
    %v2806 = vunpack.c.l.b16 %v605
    %v2807 = vunpack.c.h.b16 %v605
    %v2808 = vunpack.c.l.b16 %v606
    %v2809 = vunpack.c.h.b16 %v606
    %v2810 = vunpack.c.l.b16 %v607
    %v2811 = vunpack.c.h.b16 %v607
    %v2812 = vunpack.c.l.b16 %v608
    %v2813 = vunpack.c.h.b16 %v608
    %v2814 = vunpack.c.l.b16 %v609
    %v2815 = vunpack.c.h.b16 %v609
    %v2816 = vunpack.c.l.b16 %v610
    %v2817 = vunpack.c.h.b16 %v610
    %v2818 = vunpack.c.l.b16 %v611
    %v2819 = vunpack.c.h.b16 %v611
    %v2820 = vunpack.c.l.b16 %v612
    %v2821 = vunpack.c.h.b16 %v612
    %v2822 = vunpack.c.l.b16 %v613
    %v2823 = vunpack.c.h.b16 %v613
    %v2824 = vunpack.c.l.b16 %v614
    %v2825 = vunpack.c.h.b16 %v614
    %v2826 = vunpack.c.l.b16 %v615
    %v2827 = vunpack.c.h.b16 %v615
    %v2828 = vunpack.c.l.b16 %v616
    %v2829 = vunpack.c.h.b16 %v616
    %v2830 = vunpack.c.l.b16 %v617
    %v2831 = vunpack.c.h.b16 %v617
    %v2832 = vunpack.c.l.b16 %v618
    %v2833 = vunpack.c.h.b16 %v618
    %v2834 = vunpack.c.l.b16 %v619
    %v2835 = vunpack.c.h.b16 %v619
    %v2836 = vunpack.c.l.b16 %v620
    %v2837 = vunpack.c.h.b16 %v620
    %v2838 = vunpack.c.l.b16 %v621
    %v2839 = vunpack.c.h.b16 %v621
    %v2840 = vunpack.c.l.b16 %v622
    %v2841 = vunpack.c.h.b16 %v622
    %v2842 = vunpack.c.l.b16 %v623
    %v2843 = vunpack.c.h.b16 %v623
    %v2844 = vunpack.c.l.b16 %v624
    %v2845 = vunpack.c.h.b16 %v624
    %v2846 = vunpack.c.l.b16 %v625
    %v2847 = vunpack.c.h.b16 %v625
    %v2848 = vunpack.c.l.b16 %v626
    %v2849 = vunpack.c.h.b16 %v626
    %v2850 = vunpack.c.l.b16 %v627
    %v2851 = vunpack.c.h.b16 %v627
    %v2852 = vunpack.c.l.b16 %v628
    %v2853 = vunpack.c.h.b16 %v628
    %v2854 = vunpack.c.l.b16 %v629
    %v2855 = vunpack.c.h.b16 %v629
    %v2856 = vunpack.c.l.b16 %v630
    %v2857 = vunpack.c.h.b16 %v630
    %v2858 = vunpack.c.l.b16 %v631
    %v2859 = vunpack.c.h.b16 %v631
    %v2860 = vunpack.c.l.b16 %v632
    %v2861 = vunpack.c.h.b16 %v632
    %v2862 = vunpack.c.l.b16 %v633
    %v2863 = vunpack.c.h.b16 %v633
    %v2864 = vunpack.c.l.b16 %v634
    %v2865 = vunpack.c.h.b16 %v634
    %v2866 = vunpack.c.l.b16 %v635
    %v2867 = vunpack.c.h.b16 %v635
    %v2868 = vunpack.c.l.b16 %v636
    %v2869 = vunpack.c.h.b16 %v636
    %v2870 = vunpack.c.l.b16 %v637
    %v2871 = vunpack.c.h.b16 %v637
    %v2872 = vunpack.c.l.b16 %v638
    %v2873 = vunpack.c.h.b16 %v638
    %v2874 = vunpack.c.l.b16 %v639
    %v2875 = vunpack.c.h.b16 %v639
    %v2876 = vunpack.c.l.b16 %v640
    %v2877 = vunpack.c.h.b16 %v640
    %v2878 = vunpack.c.l.b16 %v641
    %v2879 = vunpack.c.h.b16 %v641
    %v2880 = vunpack.c.l.b16 %v642
    %v2881 = vunpack.c.h.b16 %v642
    %v2882 = vunpack.c.l.b16 %v643
    %v2883 = vunpack.c.h.b16 %v643
    %v2884 = vunpack.c.l.b16 %v644
    %v2885 = vunpack.c.h.b16 %v644
    %v2886 = vunpack.c.l.b16 %v645
    %v2887 = vunpack.c.h.b16 %v645
    %v2888 = vunpack.c.l.b16 %v646
    %v2889 = vunpack.c.h.b16 %v646
    %v2890 = vunpack.c.l.b16 %v647
    %v2891 = vunpack.c.h.b16 %v647
    %v2892 = vunpack.c.l.b16 %v648
    %v2893 = vunpack.c.h.b16 %v648
    %v2894 = vunpack.c.l.b16 %v649
    %v2895 = vunpack.c.h.b16 %v649
    %v2896 = vunpack.c.l.b16 %v650
    %v2897 = vunpack.c.h.b16 %v650
    %v2898 = vunpack.c.l.b16 %v651
    %v2899 = vunpack.c.h.b16 %v651
    %v2900 = vunpack.c.l.b16 %v652
    %v2901 = vunpack.c.h.b16 %v652
    %v2902 = vunpack.c.l.b16 %v653
    %v2903 = vunpack.c.h.b16 %v653
    %v2904 = vunpack.c.l.b16 %v654
    %v2905 = vunpack.c.h.b16 %v654
    %v2906 = vunpack.c.l.b16 %v655
    %v2907 = vunpack.c.h.b16 %v655
    %v2908 = vunpack.c.l.b16 %v656
    %v2909 = vunpack.c.h.b16 %v656
    %v2910 = vunpack.c.l.b16 %v657
    %v2911 = vunpack.c.h.b16 %v657
    %v2912 = vunpack.c.l.b16 %v658
    %v2913 = vunpack.c.h.b16 %v658
    %v2914 = vunpack.c.l.b16 %v659
    %v2915 = vunpack.c.h.b16 %v659
    %v2916 = vunpack.c.l.b16 %v660
    %v2917 = vunpack.c.h.b16 %v660
    %v2918 = vunpack.c.l.b16 %v661
    %v2919 = vunpack.c.h.b16 %v661
    %v2920 = vunpack.c.l.b16 %v662
    %v2921 = vunpack.c.h.b16 %v662
    %v2922 = vunpack.c.l.b16 %v663
    %v2923 = vunpack.c.h.b16 %v663
    %v2924 = vunpack.c.l.b16 %v664
    %v2925 = vunpack.c.h.b16 %v664
    %v2926 = vunpack.c.l.b16 %v665
    %v2927 = vunpack.c.h.b16 %v665
    %v2928 = vunpack.c.l.b16 %v666
    %v2929 = vunpack.c.h.b16 %v666
    %v2930 = vunpack.c.l.b16 %v667
    %v2931 = vunpack.c.h.b16 %v667
    %v2932 = vunpack.c.l.b16 %v668
    %v2933 = vunpack.c.h.b16 %v668
    %v2934 = vunpack.c.l.b16 %v669
    %v2935 = vunpack.c.h.b16 %v669
    %v2936 = vunpack.c.l.b16 %v670
    %v2937 = vunpack.c.h.b16 %v670
    %v2938 = vunpack.c.l.b16 %v671
    %v2939 = vunpack.c.h.b16 %v671
    %v2940 = vunpack.c.l.b16 %v672
    %v2941 = vunpack.c.h.b16 %v672
    %v2942 = vunpack.c.l.b16 %v673
    %v2943 = vunpack.c.h.b16 %v673
    %v2944 = vunpack.c.l.b16 %v674
    %v2945 = vunpack.c.h.b16 %v674
    %v2946 = vunpack.c.l.b16 %v675
    %v2947 = vunpack.c.h.b16 %v675
    %v2948 = vunpack.c.l.b16 %v676
    %v2949 = vunpack.c.h.b16 %v676
    %v2950 = vunpack.c.l.b16 %v677
    %v2951 = vunpack.c.h.b16 %v677
    %v2952 = vunpack.c.l.b16 %v678
    %v2953 = vunpack.c.h.b16 %v678
    %v2954 = vunpack.c.l.b16 %v679
    %v2955 = vunpack.c.h.b16 %v679
    %v2956 = vunpack.c.l.b16 %v680
    %v2957 = vunpack.c.h.b16 %v680
    %v2958 = vunpack.c.l.b16 %v681
    %v2959 = vunpack.c.h.b16 %v681
    %v2960 = vunpack.c.l.b16 %v682
    %v2961 = vunpack.c.h.b16 %v682
    %v2962 = vunpack.c.l.b16 %v683
    %v2963 = vunpack.c.h.b16 %v683
    %v2964 = vunpack.c.l.b16 %v684
    %v2965 = vunpack.c.h.b16 %v684
    %v2966 = vunpack.c.l.b16 %v685
    %v2967 = vunpack.c.h.b16 %v685
    %v2968 = vunpack.c.l.b16 %v686
    %v2969 = vunpack.c.h.b16 %v686
    %v2970 = vunpack.c.l.b16 %v687
    %v2971 = vunpack.c.h.b16 %v687
    %v2972 = vunpack.c.l.b16 %v688
    %v2973 = vunpack.c.h.b16 %v688
    %v2974 = vunpack.c.l.b16 %v689
    %v2975 = vunpack.c.h.b16 %v689
    %v2976 = vunpack.c.l.b16 %v690
    %v2977 = vunpack.c.h.b16 %v690
    %v2978 = vunpack.c.l.b16 %v691
    %v2979 = vunpack.c.h.b16 %v691
    %v2980 = vunpack.c.l.b16 %v692
    %v2981 = vunpack.c.h.b16 %v692
    %v2982 = vunpack.c.l.b16 %v693
    %v2983 = vunpack.c.h.b16 %v693
    %v2984 = vunpack.c.l.b16 %v694
    %v2985 = vunpack.c.h.b16 %v694
    %v2986 = vunpack.c.l.b16 %v695
    %v2987 = vunpack.c.h.b16 %v695
    %v2988 = vunpack.c.l.b16 %v696
    %v2989 = vunpack.c.h.b16 %v696
    %v2990 = vunpack.c.l.b16 %v697
    %v2991 = vunpack.c.h.b16 %v697
    %v2992 = vunpack.c.l.b16 %v698
    %v2993 = vunpack.c.h.b16 %v698
    %v2994 = vunpack.c.l.b16 %v699
    %v2995 = vunpack.c.h.b16 %v699
    %v2996 = vunpack.c.l.b16 %v700
    %v2997 = vunpack.c.h.b16 %v700
    %v2998 = vunpack.c.l.b16 %v701
    %v2999 = vunpack.c.h.b16 %v701
    %v3000 = vunpack.c.l.b16 %v702
    %v3001 = vunpack.c.h.b16 %v702
    %v3002 = vunpack.c.l.b16 %v703
    %v3003 = vunpack.c.h.b16 %v703
    %v3004 = vunpack.c.l.b16 %v704
    %v3005 = vunpack.c.h.b16 %v704
    %v3006 = vunpack.c.l.b16 %v705
    %v3007 = vunpack.c.h.b16 %v705
    %v3008 = vunpack.c.l.b16 %v706
    %v3009 = vunpack.c.h.b16 %v706
    %v3010 = vunpack.c.l.b16 %v707
    %v3011 = vunpack.c.h.b16 %v707
    %v3012 = vunpack.c.l.b16 %v708
    %v3013 = vunpack.c.h.b16 %v708
    %v3014 = vunpack.c.l.b16 %v709
    %v3015 = vunpack.c.h.b16 %v709
    %v3016 = vunpack.c.l.b16 %v710
    %v3017 = vunpack.c.h.b16 %v710
    %v3018 = vunpack.c.l.b16 %v711
    %v3019 = vunpack.c.h.b16 %v711
    %v3020 = vunpack.c.l.b16 %v712
    %v3021 = vunpack.c.h.b16 %v712
    %v3022 = vunpack.c.l.b16 %v713
    %v3023 = vunpack.c.h.b16 %v713
    %v3024 = vunpack.c.l.b16 %v714
    %v3025 = vunpack.c.h.b16 %v714
    %v3026 = vunpack.c.l.b16 %v715
    %v3027 = vunpack.c.h.b16 %v715
    %v3028 = vunpack.c.l.b16 %v716
    %v3029 = vunpack.c.h.b16 %v716
    %v3030 = vunpack.c.l.b16 %v717
    %v3031 = vunpack.c.h.b16 %v717
    %v3032 = vunpack.c.l.b16 %v718
    %v3033 = vunpack.c.h.b16 %v718
    %v3034 = vunpack.c.l.b16 %v719
    %v3035 = vunpack.c.h.b16 %v719
    %v3036 = vunpack.c.l.b16 %v720
    %v3037 = vunpack.c.h.b16 %v720
    %v3038 = vunpack.c.l.b16 %v721
    %v3039 = vunpack.c.h.b16 %v721
    %v3040 = vunpack.c.l.b16 %v722
    %v3041 = vunpack.c.h.b16 %v722
    %v3042 = vunpack.c.l.b16 %v723
    %v3043 = vunpack.c.h.b16 %v723
    %v3044 = vunpack.c.l.b16 %v724
    %v3045 = vunpack.c.h.b16 %v724
    %v3046 = vunpack.c.l.b16 %v725
    %v3047 = vunpack.c.h.b16 %v725
    %v3048 = vunpack.c.l.b16 %v726
    %v3049 = vunpack.c.h.b16 %v726
    %v3050 = vunpack.c.l.b16 %v727
    %v3051 = vunpack.c.h.b16 %v727
    %v3052 = vunpack.c.l.b16 %v728
    %v3053 = vunpack.c.h.b16 %v728
    %v3054 = vunpack.c.l.b16 %v729
    %v3055 = vunpack.c.h.b16 %v729
    %v3056 = vunpack.c.l.b16 %v730
    %v3057 = vunpack.c.h.b16 %v730
    %v3058 = vunpack.c.l.b16 %v731
    %v3059 = vunpack.c.h.b16 %v731
    %v3060 = vunpack.c.l.b16 %v732
    %v3061 = vunpack.c.h.b16 %v732
    %v3062 = vunpack.c.l.b16 %v733
    %v3063 = vunpack.c.h.b16 %v733
    %v3064 = vunpack.c.l.b16 %v734
    %v3065 = vunpack.c.h.b16 %v734
    %v3066 = vunpack.c.l.b16 %v735
    %v3067 = vunpack.c.h.b16 %v735
    %v3068 = vunpack.c.l.b16 %v736
    %v3069 = vunpack.c.h.b16 %v736
    %v3070 = vunpack.c.l.b16 %v737
    %v3071 = vunpack.c.h.b16 %v737
    %v3072 = vunpack.c.l.b16 %v738
    %v3073 = vunpack.c.h.b16 %v738
    %v3074 = vunpack.c.l.b16 %v739
    %v3075 = vunpack.c.h.b16 %v739
    %v3076 = vunpack.c.l.b16 %v740
    %v3077 = vunpack.c.h.b16 %v740
    %v3078 = vunpack.c.l.b16 %v741
    %v3079 = vunpack.c.h.b16 %v741
    %v3080 = vunpack.c.l.b16 %v742
    %v3081 = vunpack.c.h.b16 %v742
    %v3082 = vunpack.c.l.b16 %v743
    %v3083 = vunpack.c.h.b16 %v743
    %v3084 = vunpack.c.l.b16 %v744
    %v3085 = vunpack.c.h.b16 %v744
    %v3086 = vunpack.c.l.b16 %v745
    %v3087 = vunpack.c.h.b16 %v745
    %v3088 = vunpack.c.l.b16 %v746
    %v3089 = vunpack.c.h.b16 %v746
    %v3090 = vunpack.c.l.b16 %v747
    %v3091 = vunpack.c.h.b16 %v747
    %v3092 = vunpack.c.l.b16 %v748
    %v3093 = vunpack.c.h.b16 %v748
    %v3094 = vunpack.c.l.b16 %v749
    %v3095 = vunpack.c.h.b16 %v749
    %v3096 = vunpack.c.l.b16 %v750
    %v3097 = vunpack.c.h.b16 %v750
    %v3098 = vunpack.c.l.b16 %v751
    %v3099 = vunpack.c.h.b16 %v751
    %v3100 = vunpack.c.l.b16 %v752
    %v3101 = vunpack.c.h.b16 %v752
    %v3102 = vunpack.c.l.b16 %v753
    %v3103 = vunpack.c.h.b16 %v753
    %v3104 = vunpack.c.l.b16 %v754
    %v3105 = vunpack.c.h.b16 %v754
    %v3106 = vunpack.c.l.b16 %v755
    %v3107 = vunpack.c.h.b16 %v755
    %v3108 = vunpack.c.l.b16 %v756
    %v3109 = vunpack.c.h.b16 %v756
    %v3110 = vunpack.c.l.b16 %v757
    %v3111 = vunpack.c.h.b16 %v757
    %v3112 = vunpack.c.l.b16 %v758
    %v3113 = vunpack.c.h.b16 %v758
    %v3114 = vunpack.c.l.b16 %v759
    %v3115 = vunpack.c.h.b16 %v759
    %v3116 = vunpack.c.l.b16 %v760
    %v3117 = vunpack.c.h.b16 %v760
    %v3118 = vunpack.c.l.b16 %v761
    %v3119 = vunpack.c.h.b16 %v761
    %v3120 = vunpack.c.l.b16 %v762
    %v3121 = vunpack.c.h.b16 %v762
    %v3122 = vunpack.c.l.b16 %v763
    %v3123 = vunpack.c.h.b16 %v763
    %v3124 = vunpack.c.l.b16 %v764
    %v3125 = vunpack.c.h.b16 %v764
    %v3126 = vunpack.c.l.b16 %v765
    %v3127 = vunpack.c.h.b16 %v765
    %v3128 = vunpack.c.l.b16 %v766
    %v3129 = vunpack.c.h.b16 %v766
    %v3130 = vunpack.c.l.b16 %v767
    %v3131 = vunpack.c.h.b16 %v767
    %v3132 = vunpack.c.l.b16 %v768
    %v3133 = vunpack.c.h.b16 %v768
    %v3134 = vunpack.c.l.b16 %v769
    %v3135 = vunpack.c.h.b16 %v769
    %v3136 = vunpack.c.l.b16 %v770
    %v3137 = vunpack.c.h.b16 %v770
    %v3138 = vunpack.c.l.b16 %v771
    %v3139 = vunpack.c.h.b16 %v771
    %v3140 = vunpack.c.l.b16 %v772
    %v3141 = vunpack.c.h.b16 %v772
    %v3142 = vunpack.c.l.b16 %v773
    %v3143 = vunpack.c.h.b16 %v773
    %v3144 = vunpack.c.l.b16 %v774
    %v3145 = vunpack.c.h.b16 %v774
    %v3146 = vunpack.c.l.b16 %v775
    %v3147 = vunpack.c.h.b16 %v775
    %v3148 = vunpack.c.l.b16 %v776
    %v3149 = vunpack.c.h.b16 %v776
    %v3150 = vunpack.c.l.b16 %v777
    %v3151 = vunpack.c.h.b16 %v777
    %v3152 = vunpack.c.l.b16 %v778
    %v3153 = vunpack.c.h.b16 %v778
    %v3154 = vunpack.c.l.b16 %v779
    %v3155 = vunpack.c.h.b16 %v779
    %v3156 = vunpack.c.l.b16 %v780
    %v3157 = vunpack.c.h.b16 %v780
    %v3158 = vunpack.c.l.b16 %v781
    %v3159 = vunpack.c.h.b16 %v781
    %v3160 = vunpack.c.l.b16 %v782
    %v3161 = vunpack.c.h.b16 %v782
    %v3162 = vunpack.c.l.b16 %v783
    %v3163 = vunpack.c.h.b16 %v783
    %v3164 = vunpack.c.l.b16 %v784
    %v3165 = vunpack.c.h.b16 %v784
    %v3166 = vunpack.c.l.b16 %v785
    %v3167 = vunpack.c.h.b16 %v785
    %v3168 = vunpack.c.l.b16 %v786
    %v3169 = vunpack.c.h.b16 %v786
    %v3170 = vunpack.c.l.b16 %v787
    %v3171 = vunpack.c.h.b16 %v787
    %v3172 = vunpack.c.l.b16 %v788
    %v3173 = vunpack.c.h.b16 %v788
    %v3174 = vunpack.c.l.b16 %v789
    %v3175 = vunpack.c.h.b16 %v789
    %v3176 = vunpack.c.l.b16 %v790
    %v3177 = vunpack.c.h.b16 %v790
    %v3178 = vunpack.c.l.b16 %v791
    %v3179 = vunpack.c.h.b16 %v791
    %v3180 = vunpack.c.l.b16 %v792
    %v3181 = vunpack.c.h.b16 %v792
    %v3182 = vunpack.c.l.b16 %v793
    %v3183 = vunpack.c.h.b16 %v793
    %v3184 = vunpack.c.l.b16 %v794
    %v3185 = vunpack.c.h.b16 %v794
    %v3186 = vunpack.c.l.b16 %v795
    %v3187 = vunpack.c.h.b16 %v795
    %v3188 = vunpack.c.l.b16 %v796
    %v3189 = vunpack.c.h.b16 %v796
    %v3190 = vunpack.c.l.b16 %v797
    %v3191 = vunpack.c.h.b16 %v797
    %v3192 = vunpack.c.l.b16 %v798
    %v3193 = vunpack.c.h.b16 %v798
    %v3194 = vunpack.c.l.b16 %v799
    %v3195 = vunpack.c.h.b16 %v799
    %v3196 = vunpack.c.l.b16 %v800
    %v3197 = vunpack.c.h.b16 %v800
    %v3198 = vunpack.c.l.b16 %v801
    %v3199 = vunpack.c.h.b16 %v801
    %v3200 = vunpack.c.l.b16 %v802
    %v3201 = vunpack.c.h.b16 %v802
    %v3202 = vunpack.c.l.b16 %v803
    %v3203 = vunpack.c.h.b16 %v803
    %v3204 = vunpack.c.l.b16 %v804
    %v3205 = vunpack.c.h.b16 %v804
    %v3206 = vunpack.c.l.b16 %v805
    %v3207 = vunpack.c.h.b16 %v805
    %v3208 = vunpack.c.l.b16 %v806
    %v3209 = vunpack.c.h.b16 %v806
    %v3210 = vunpack.c.l.b16 %v807
    %v3211 = vunpack.c.h.b16 %v807
    %v3212 = vunpack.c.l.b16 %v808
    %v3213 = vunpack.c.h.b16 %v808
    %v3214 = vunpack.c.l.b16 %v809
    %v3215 = vunpack.c.h.b16 %v809
    %v3216 = vunpack.c.l.b16 %v810
    %v3217 = vunpack.c.h.b16 %v810
    %v3218 = vunpack.c.l.b16 %v811
    %v3219 = vunpack.c.h.b16 %v811
    %v3220 = vunpack.c.l.b16 %v812
    %v3221 = vunpack.c.h.b16 %v812
    %v3222 = vunpack.c.l.b16 %v813
    %v3223 = vunpack.c.h.b16 %v813
    %v3224 = vunpack.c.l.b16 %v814
    %v3225 = vunpack.c.h.b16 %v814
    %v3226 = vunpack.c.l.b16 %v815
    %v3227 = vunpack.c.h.b16 %v815
    %v3228 = vunpack.c.l.b16 %v816
    %v3229 = vunpack.c.h.b16 %v816
    %v3230 = vunpack.c.l.b16 %v817
    %v3231 = vunpack.c.h.b16 %v817
    %v3232 = vunpack.c.l.b16 %v818
    %v3233 = vunpack.c.h.b16 %v818
    %v3234 = vunpack.c.l.b16 %v819
    %v3235 = vunpack.c.h.b16 %v819
    %v3236 = vunpack.c.l.b16 %v820
    %v3237 = vunpack.c.h.b16 %v820
    %v3238 = vunpack.c.l.b16 %v821
    %v3239 = vunpack.c.h.b16 %v821
    %v3240 = vunpack.c.l.b16 %v822
    %v3241 = vunpack.c.h.b16 %v822
    %v3242 = vunpack.c.l.b16 %v823
    %v3243 = vunpack.c.h.b16 %v823
    %v3244 = vunpack.c.l.b16 %v824
    %v3245 = vunpack.c.h.b16 %v824
    %v3246 = vunpack.c.l.b16 %v825
    %v3247 = vunpack.c.h.b16 %v825
    %v3248 = vunpack.c.l.b16 %v826
    %v3249 = vunpack.c.h.b16 %v826
    %v3250 = vunpack.c.l.b16 %v827
    %v3251 = vunpack.c.h.b16 %v827
    %v3252 = vunpack.c.l.b16 %v828
    %v3253 = vunpack.c.h.b16 %v828
    %v3254 = vunpack.c.l.b16 %v829
    %v3255 = vunpack.c.h.b16 %v829
    %v3256 = vunpack.c.l.b16 %v830
    %v3257 = vunpack.c.h.b16 %v830
    %v3258 = vunpack.c.l.b16 %v831
    %v3259 = vunpack.c.h.b16 %v831
    %v3260 = vunpack.c.l.b16 %v832
    %v3261 = vunpack.c.h.b16 %v832
    %v3262 = vunpack.c.l.b16 %v833
    %v3263 = vunpack.c.h.b16 %v833
    %v3264 = vunpack.c.l.b16 %v834
    %v3265 = vunpack.c.h.b16 %v834
    %v3266 = vunpack.c.l.b16 %v835
    %v3267 = vunpack.c.h.b16 %v835
    %v3268 = vunpack.c.l.b16 %v836
    %v3269 = vunpack.c.h.b16 %v836
    %v3270 = vunpack.c.l.b16 %v837
    %v3271 = vunpack.c.h.b16 %v837
    %v3272 = vunpack.c.l.b16 %v838
    %v3273 = vunpack.c.h.b16 %v838
    %v3274 = vunpack.c.l.b16 %v839
    %v3275 = vunpack.c.h.b16 %v839
    %v3276 = vunpack.c.l.b16 %v840
    %v3277 = vunpack.c.h.b16 %v840
    %v3278 = vunpack.c.l.b16 %v841
    %v3279 = vunpack.c.h.b16 %v841
    %v3280 = vunpack.c.l.b16 %v842
    %v3281 = vunpack.c.h.b16 %v842
    %v3282 = vunpack.c.l.b16 %v843
    %v3283 = vunpack.c.h.b16 %v843
    %v3284 = vunpack.c.l.b16 %v844
    %v3285 = vunpack.c.h.b16 %v844
    %v3286 = vunpack.c.l.b16 %v845
    %v3287 = vunpack.c.h.b16 %v845
    %v3288 = vunpack.c.l.b16 %v846
    %v3289 = vunpack.c.h.b16 %v846
    %v3290 = vunpack.c.l.b16 %v847
    %v3291 = vunpack.c.h.b16 %v847
    %v3292 = vunpack.c.l.b16 %v848
    %v3293 = vunpack.c.h.b16 %v848
    %v3294 = vunpack.c.l.b16 %v849
    %v3295 = vunpack.c.h.b16 %v849
    %v3296 = vunpack.c.l.b16 %v850
    %v3297 = vunpack.c.h.b16 %v850
    %v3298 = vunpack.c.l.b16 %v851
    %v3299 = vunpack.c.h.b16 %v851
    %v3300 = vunpack.c.l.b16 %v852
    %v3301 = vunpack.c.h.b16 %v852
    %v3302 = vunpack.c.l.b16 %v853
    %v3303 = vunpack.c.h.b16 %v853
    %v3304 = vunpack.c.l.b16 %v854
    %v3305 = vunpack.c.h.b16 %v854
    %v3306 = vunpack.c.l.b16 %v855
    %v3307 = vunpack.c.h.b16 %v855
    %v3308 = vunpack.c.l.b16 %v856
    %v3309 = vunpack.c.h.b16 %v856
    %v3310 = vunpack.c.l.b16 %v857
    %v3311 = vunpack.c.h.b16 %v857
    %v3312 = vunpack.c.l.b16 %v858
    %v3313 = vunpack.c.h.b16 %v858
    %v3314 = vunpack.c.l.b16 %v859
    %v3315 = vunpack.c.h.b16 %v859
    %v3316 = vunpack.c.l.b16 %v860
    %v3317 = vunpack.c.h.b16 %v860
    %v3318 = vunpack.c.l.b16 %v861
    %v3319 = vunpack.c.h.b16 %v861
    %v3320 = vunpack.c.l.b16 %v862
    %v3321 = vunpack.c.h.b16 %v862
    %v3322 = vunpack.c.l.b16 %v863
    %v3323 = vunpack.c.h.b16 %v863
    %v3324 = vunpack.c.l.b16 %v864
    %v3325 = vunpack.c.h.b16 %v864
    %v3326 = vunpack.c.l.b16 %v865
    %v3327 = vunpack.c.h.b16 %v865
    %v3328 = vunpack.c.l.b16 %v866
    %v3329 = vunpack.c.h.b16 %v866
    %v3330 = vunpack.c.l.b16 %v867
    %v3331 = vunpack.c.h.b16 %v867
    %v3332 = vunpack.c.l.b16 %v868
    %v3333 = vunpack.c.h.b16 %v868
    %v3334 = vunpack.c.l.b16 %v869
    %v3335 = vunpack.c.h.b16 %v869
    %v3336 = vunpack.c.l.b16 %v870
    %v3337 = vunpack.c.h.b16 %v870
    %v3338 = vunpack.c.l.b16 %v871
    %v3339 = vunpack.c.h.b16 %v871
    %v3340 = vunpack.c.l.b16 %v872
    %v3341 = vunpack.c.h.b16 %v872
    %v3342 = vunpack.c.l.b16 %v873
    %v3343 = vunpack.c.h.b16 %v873
    %v3344 = vunpack.c.l.b16 %v874
    %v3345 = vunpack.c.h.b16 %v874
    %v3346 = vunpack.c.l.b16 %v875
    %v3347 = vunpack.c.h.b16 %v875
    %v3348 = vunpack.c.l.b16 %v876
    %v3349 = vunpack.c.h.b16 %v876
    %v3350 = vunpack.c.l.b16 %v877
    %v3351 = vunpack.c.h.b16 %v877
    %v3352 = vunpack.c.l.b16 %v878
    %v3353 = vunpack.c.h.b16 %v878
    %v3354 = vunpack.c.l.b16 %v879
    %v3355 = vunpack.c.h.b16 %v879
    %v3356 = vunpack.c.l.b16 %v880
    %v3357 = vunpack.c.h.b16 %v880
    %v3358 = vunpack.c.l.b16 %v881
    %v3359 = vunpack.c.h.b16 %v881
    %v3360 = vunpack.c.l.b16 %v882
    %v3361 = vunpack.c.h.b16 %v882
    %v3362 = vunpack.c.l.b16 %v883
    %v3363 = vunpack.c.h.b16 %v883
    %v3364 = vunpack.c.l.b16 %v884
    %v3365 = vunpack.c.h.b16 %v884
    %v3366 = vunpack.c.l.b16 %v885
    %v3367 = vunpack.c.h.b16 %v885
    %v3368 = vunpack.c.l.b16 %v886
    %v3369 = vunpack.c.h.b16 %v886
    %v3370 = vunpack.c.l.b16 %v887
    %v3371 = vunpack.c.h.b16 %v887
    %v3372 = vunpack.c.l.b16 %v888
    %v3373 = vunpack.c.h.b16 %v888
    %v3374 = vunpack.c.l.b16 %v889
    %v3375 = vunpack.c.h.b16 %v889
    %v3376 = vunpack.c.l.b16 %v890
    %v3377 = vunpack.c.h.b16 %v890
    %v3378 = vunpack.c.l.b16 %v891
    %v3379 = vunpack.c.h.b16 %v891
    %v3380 = vunpack.c.l.b16 %v892
    %v3381 = vunpack.c.h.b16 %v892
    %v3382 = vunpack.c.l.b16 %v893
    %v3383 = vunpack.c.h.b16 %v893
    %v3384 = vunpack.c.l.b16 %v894
    %v3385 = vunpack.c.h.b16 %v894
    %v3386 = vunpack.c.l.b16 %v895
    %v3387 = vunpack.c.h.b16 %v895
    %v3388 = vunpack.c.l.b16 %v896
    %v3389 = vunpack.c.h.b16 %v896
    %v3390 = vunpack.c.l.b16 %v897
    %v3391 = vunpack.c.h.b16 %v897
    %v3392 = vunpack.c.l.b16 %v898
    %v3393 = vunpack.c.h.b16 %v898
    %v3394 = vunpack.c.l.b16 %v899
    %v3395 = vunpack.c.h.b16 %v899
    %v3396 = vunpack.c.l.b16 %v900
    %v3397 = vunpack.c.h.b16 %v900
    %v3398 = vunpack.c.l.b16 %v901
    %v3399 = vunpack.c.h.b16 %v901
    %v3400 = vunpack.c.l.b16 %v902
    %v3401 = vunpack.c.h.b16 %v902
    %v3402 = vunpack.c.l.b16 %v903
    %v3403 = vunpack.c.h.b16 %v903
    %v3404 = vpack.c.b16 %v1872, %v1868
    %v3405 = vpack.c.b16 %v1873, %v1869
    %v3406 = vpack.c.b16 %v1874, %v1870
    %v3407 = vpack.c.b16 %v1875, %v1871
    %v3408 = vpack.c.b16 %v1880, %v1876
    %v3409 = vpack.c.b16 %v1881, %v1877
    %v3410 = vpack.c.b16 %v1882, %v1878
    %v3411 = vpack.c.b16 %v1883, %v1879
    %v3412 = vpack.c.b16 %v1888, %v1884
    %v3413 = vpack.c.b16 %v1889, %v1885
    %v3414 = vpack.c.b16 %v1890, %v1886
    %v3415 = vpack.c.b16 %v1891, %v1887
    %v3416 = vpack.c.b16 %v1896, %v1892
    %v3417 = vpack.c.b16 %v1897, %v1893
    %v3418 = vpack.c.b16 %v1898, %v1894
    %v3419 = vpack.c.b16 %v1899, %v1895
    %v3420 = vpack.c.b16 %v1904, %v1900
    %v3421 = vpack.c.b16 %v1905, %v1901
    %v3422 = vpack.c.b16 %v1906, %v1902
    %v3423 = vpack.c.b16 %v1907, %v1903
    %v3424 = vpack.c.b16 %v1912, %v1908
    %v3425 = vpack.c.b16 %v1913, %v1909
    %v3426 = vpack.c.b16 %v1914, %v1910
    %v3427 = vpack.c.b16 %v1915, %v1911
    %v3428 = vpack.c.b16 %v1920, %v1916
    %v3429 = vpack.c.b16 %v1921, %v1917
    %v3430 = vpack.c.b16 %v1922, %v1918
    %v3431 = vpack.c.b16 %v1923, %v1919
    %v3432 = vpack.c.b16 %v1928, %v1924
    %v3433 = vpack.c.b16 %v1929, %v1925
    %v3434 = vpack.c.b16 %v1930, %v1926
    %v3435 = vpack.c.b16 %v1931, %v1927
    %v3436 = vpack.c.b16 %v1936, %v1932
    %v3437 = vpack.c.b16 %v1937, %v1933
    %v3438 = vpack.c.b16 %v1938, %v1934
    %v3439 = vpack.c.b16 %v1939, %v1935
    %v3440 = vpack.c.b16 %v1944, %v1940
    %v3441 = vpack.c.b16 %v1945, %v1941
    %v3442 = vpack.c.b16 %v1946, %v1942
    %v3443 = vpack.c.b16 %v1947, %v1943
    %v3444 = vpack.c.b16 %v1952, %v1948
    %v3445 = vpack.c.b16 %v1953, %v1949
    %v3446 = vpack.c.b16 %v1954, %v1950
    %v3447 = vpack.c.b16 %v1955, %v1951
    %v3448 = vpack.c.b16 %v1960, %v1956
    %v3449 = vpack.c.b16 %v1961, %v1957
    %v3450 = vpack.c.b16 %v1962, %v1958
    %v3451 = vpack.c.b16 %v1963, %v1959
    %v3452 = vpack.c.b16 %v1968, %v1964
    %v3453 = vpack.c.b16 %v1969, %v1965
    %v3454 = vpack.c.b16 %v1970, %v1966
    %v3455 = vpack.c.b16 %v1971, %v1967
    %v3456 = vpack.c.b16 %v1976, %v1972
    %v3457 = vpack.c.b16 %v1977, %v1973
    %v3458 = vpack.c.b16 %v1978, %v1974
    %v3459 = vpack.c.b16 %v1979, %v1975
    %v3460 = vpack.c.b16 %v1984, %v1980
    %v3461 = vpack.c.b16 %v1985, %v1981
    %v3462 = vpack.c.b16 %v1986, %v1982
    %v3463 = vpack.c.b16 %v1987, %v1983
    %v3464 = vpack.c.b16 %v1992, %v1988
    %v3465 = vpack.c.b16 %v1993, %v1989
    %v3466 = vpack.c.b16 %v1994, %v1990
    %v3467 = vpack.c.b16 %v1995, %v1991
    %v3468 = vpack.c.b16 %v2000, %v1996
    %v3469 = vpack.c.b16 %v2001, %v1997
    %v3470 = vpack.c.b16 %v2002, %v1998
    %v3471 = vpack.c.b16 %v2003, %v1999
    %v3472 = vpack.c.b16 %v2008, %v2004
    %v3473 = vpack.c.b16 %v2009, %v2005
    %v3474 = vpack.c.b16 %v2010, %v2006
    %v3475 = vpack.c.b16 %v2011, %v2007
    %v3476 = vpack.c.b16 %v2016, %v2012
    %v3477 = vpack.c.b16 %v2017, %v2013
    %v3478 = vpack.c.b16 %v2018, %v2014
    %v3479 = vpack.c.b16 %v2019, %v2015
    %v3480 = vpack.c.b16 %v2024, %v2020
    %v3481 = vpack.c.b16 %v2025, %v2021
    %v3482 = vpack.c.b16 %v2026, %v2022
    %v3483 = vpack.c.b16 %v2027, %v2023
    %v3484 = vpack.c.b16 %v2032, %v2028
    %v3485 = vpack.c.b16 %v2033, %v2029
    %v3486 = vpack.c.b16 %v2034, %v2030
    %v3487 = vpack.c.b16 %v2035, %v2031
    %v3488 = vpack.c.b16 %v2040, %v2036
    %v3489 = vpack.c.b16 %v2041, %v2037
    %v3490 = vpack.c.b16 %v2042, %v2038
    %v3491 = vpack.c.b16 %v2043, %v2039
    %v3492 = vpack.c.b16 %v2048, %v2044
    %v3493 = vpack.c.b16 %v2049, %v2045
    %v3494 = vpack.c.b16 %v2050, %v2046
    %v3495 = vpack.c.b16 %v2051, %v2047
    %v3496 = vpack.c.b16 %v2056, %v2052
    %v3497 = vpack.c.b16 %v2057, %v2053
    %v3498 = vpack.c.b16 %v2058, %v2054
    %v3499 = vpack.c.b16 %v2059, %v2055
    %v3500 = vpack.c.b16 %v2064, %v2060
    %v3501 = vpack.c.b16 %v2065, %v2061
    %v3502 = vpack.c.b16 %v2066, %v2062
    %v3503 = vpack.c.b16 %v2067, %v2063
    %v3504 = vpack.c.b16 %v2072, %v2068
    %v3505 = vpack.c.b16 %v2073, %v2069
    %v3506 = vpack.c.b16 %v2074, %v2070
    %v3507 = vpack.c.b16 %v2075, %v2071
    %v3508 = vpack.c.b16 %v2080, %v2076
    %v3509 = vpack.c.b16 %v2081, %v2077
    %v3510 = vpack.c.b16 %v2082, %v2078
    %v3511 = vpack.c.b16 %v2083, %v2079
    %v3512 = vpack.c.b16 %v2088, %v2084
    %v3513 = vpack.c.b16 %v2089, %v2085
    %v3514 = vpack.c.b16 %v2090, %v2086
    %v3515 = vpack.c.b16 %v2091, %v2087
    %v3516 = vpack.c.b16 %v2096, %v2092
    %v3517 = vpack.c.b16 %v2097, %v2093
    %v3518 = vpack.c.b16 %v2098, %v2094
    %v3519 = vpack.c.b16 %v2099, %v2095
    %v3520 = vpack.c.b16 %v2104, %v2100
    %v3521 = vpack.c.b16 %v2105, %v2101
    %v3522 = vpack.c.b16 %v2106, %v2102
    %v3523 = vpack.c.b16 %v2107, %v2103
    %v3524 = vpack.c.b16 %v2112, %v2108
    %v3525 = vpack.c.b16 %v2113, %v2109
    %v3526 = vpack.c.b16 %v2114, %v2110
    %v3527 = vpack.c.b16 %v2115, %v2111
    %v3528 = vpack.c.b16 %v2120, %v2116
    %v3529 = vpack.c.b16 %v2121, %v2117
    %v3530 = vpack.c.b16 %v2122, %v2118
    %v3531 = vpack.c.b16 %v2123, %v2119
    %v3532 = vpack.c.b16 %v2128, %v2124
    %v3533 = vpack.c.b16 %v2129, %v2125
    %v3534 = vpack.c.b16 %v2130, %v2126
    %v3535 = vpack.c.b16 %v2131, %v2127
    %v3536 = vpack.c.b16 %v2136, %v2132
    %v3537 = vpack.c.b16 %v2137, %v2133
    %v3538 = vpack.c.b16 %v2138, %v2134
    %v3539 = vpack.c.b16 %v2139, %v2135
    %v3540 = vpack.c.b16 %v2144, %v2140
    %v3541 = vpack.c.b16 %v2145, %v2141
    %v3542 = vpack.c.b16 %v2146, %v2142
    %v3543 = vpack.c.b16 %v2147, %v2143
    %v3544 = vpack.c.b16 %v2152, %v2148
    %v3545 = vpack.c.b16 %v2153, %v2149
    %v3546 = vpack.c.b16 %v2154, %v2150
    %v3547 = vpack.c.b16 %v2155, %v2151
    %v3548 = vpack.c.b16 %v2160, %v2156
    %v3549 = vpack.c.b16 %v2161, %v2157
    %v3550 = vpack.c.b16 %v2162, %v2158
    %v3551 = vpack.c.b16 %v2163, %v2159
    %v3552 = vpack.c.b16 %v2168, %v2164
    %v3553 = vpack.c.b16 %v2169, %v2165
    %v3554 = vpack.c.b16 %v2170, %v2166
    %v3555 = vpack.c.b16 %v2171, %v2167
    %v3556 = vpack.c.b16 %v2176, %v2172
    %v3557 = vpack.c.b16 %v2177, %v2173
    %v3558 = vpack.c.b16 %v2178, %v2174
    %v3559 = vpack.c.b16 %v2179, %v2175
    %v3560 = vpack.c.b16 %v2184, %v2180
    %v3561 = vpack.c.b16 %v2185, %v2181
    %v3562 = vpack.c.b16 %v2186, %v2182
    %v3563 = vpack.c.b16 %v2187, %v2183
    %v3564 = vpack.c.b16 %v2192, %v2188
    %v3565 = vpack.c.b16 %v2193, %v2189
    %v3566 = vpack.c.b16 %v2194, %v2190
    %v3567 = vpack.c.b16 %v2195, %v2191
    %v3568 = vpack.c.b16 %v2200, %v2196
    %v3569 = vpack.c.b16 %v2201, %v2197
    %v3570 = vpack.c.b16 %v2202, %v2198
    %v3571 = vpack.c.b16 %v2203, %v2199
    %v3572 = vpack.c.b16 %v2208, %v2204
    %v3573 = vpack.c.b16 %v2209, %v2205
    %v3574 = vpack.c.b16 %v2210, %v2206
    %v3575 = vpack.c.b16 %v2211, %v2207
    %v3576 = vpack.c.b16 %v2216, %v2212
    %v3577 = vpack.c.b16 %v2217, %v2213
    %v3578 = vpack.c.b16 %v2218, %v2214
    %v3579 = vpack.c.b16 %v2219, %v2215
    %v3580 = vpack.c.b16 %v2224, %v2220
    %v3581 = vpack.c.b16 %v2225, %v2221
    %v3582 = vpack.c.b16 %v2226, %v2222
    %v3583 = vpack.c.b16 %v2227, %v2223
    %v3584 = vpack.c.b16 %v2232, %v2228
    %v3585 = vpack.c.b16 %v2233, %v2229
    %v3586 = vpack.c.b16 %v2234, %v2230
    %v3587 = vpack.c.b16 %v2235, %v2231
    %v3588 = vpack.c.b16 %v2240, %v2236
    %v3589 = vpack.c.b16 %v2241, %v2237
    %v3590 = vpack.c.b16 %v2242, %v2238
    %v3591 = vpack.c.b16 %v2243, %v2239
    %v3592 = vpack.c.b16 %v2248, %v2244
    %v3593 = vpack.c.b16 %v2249, %v2245
    %v3594 = vpack.c.b16 %v2250, %v2246
    %v3595 = vpack.c.b16 %v2251, %v2247
    %v3596 = vpack.c.b16 %v2256, %v2252
    %v3597 = vpack.c.b16 %v2257, %v2253
    %v3598 = vpack.c.b16 %v2258, %v2254
    %v3599 = vpack.c.b16 %v2259, %v2255
    %v3600 = vpack.c.b16 %v2264, %v2260
    %v3601 = vpack.c.b16 %v2265, %v2261
    %v3602 = vpack.c.b16 %v2266, %v2262
    %v3603 = vpack.c.b16 %v2267, %v2263
    %v3604 = vpack.c.b16 %v2272, %v2268
    %v3605 = vpack.c.b16 %v2273, %v2269
    %v3606 = vpack.c.b16 %v2274, %v2270
    %v3607 = vpack.c.b16 %v2275, %v2271
    %v3608 = vpack.c.b16 %v2280, %v2276
    %v3609 = vpack.c.b16 %v2281, %v2277
    %v3610 = vpack.c.b16 %v2282, %v2278
    %v3611 = vpack.c.b16 %v2283, %v2279
    %v3612 = vpack.c.b16 %v2288, %v2284
    %v3613 = vpack.c.b16 %v2289, %v2285
    %v3614 = vpack.c.b16 %v2290, %v2286
    %v3615 = vpack.c.b16 %v2291, %v2287
    %v3616 = vpack.c.b16 %v2296, %v2292
    %v3617 = vpack.c.b16 %v2297, %v2293
    %v3618 = vpack.c.b16 %v2298, %v2294
    %v3619 = vpack.c.b16 %v2299, %v2295
    %v3620 = vpack.c.b16 %v2304, %v2300
    %v3621 = vpack.c.b16 %v2305, %v2301
    %v3622 = vpack.c.b16 %v2306, %v2302
    %v3623 = vpack.c.b16 %v2307, %v2303
    %v3624 = vpack.c.b16 %v2312, %v2308
    %v3625 = vpack.c.b16 %v2313, %v2309
    %v3626 = vpack.c.b16 %v2314, %v2310
    %v3627 = vpack.c.b16 %v2315, %v2311
    %v3628 = vpack.c.b16 %v2320, %v2316
    %v3629 = vpack.c.b16 %v2321, %v2317
    %v3630 = vpack.c.b16 %v2322, %v2318
    %v3631 = vpack.c.b16 %v2323, %v2319
    %v3632 = vpack.c.b16 %v2328, %v2324
    %v3633 = vpack.c.b16 %v2329, %v2325
    %v3634 = vpack.c.b16 %v2330, %v2326
    %v3635 = vpack.c.b16 %v2331, %v2327
    %v3636 = vpack.c.b16 %v2336, %v2332
    %v3637 = vpack.c.b16 %v2337, %v2333
    %v3638 = vpack.c.b16 %v2338, %v2334
    %v3639 = vpack.c.b16 %v2339, %v2335
    %v3640 = vpack.c.b16 %v2344, %v2340
    %v3641 = vpack.c.b16 %v2345, %v2341
    %v3642 = vpack.c.b16 %v2346, %v2342
    %v3643 = vpack.c.b16 %v2347, %v2343
    %v3644 = vpack.c.b16 %v2352, %v2348
    %v3645 = vpack.c.b16 %v2353, %v2349
    %v3646 = vpack.c.b16 %v2354, %v2350
    %v3647 = vpack.c.b16 %v2355, %v2351
    %v3648 = vpack.c.b16 %v2360, %v2356
    %v3649 = vpack.c.b16 %v2361, %v2357
    %v3650 = vpack.c.b16 %v2362, %v2358
    %v3651 = vpack.c.b16 %v2363, %v2359
    %v3652 = vpack.c.b16 %v2368, %v2364
    %v3653 = vpack.c.b16 %v2369, %v2365
    %v3654 = vpack.c.b16 %v2370, %v2366
    %v3655 = vpack.c.b16 %v2371, %v2367
    %v3656 = vpack.c.b16 %v2376, %v2372
    %v3657 = vpack.c.b16 %v2377, %v2373
    %v3658 = vpack.c.b16 %v2378, %v2374
    %v3659 = vpack.c.b16 %v2379, %v2375
    %v3660 = vpack.c.b16 %v2384, %v2380
    %v3661 = vpack.c.b16 %v2385, %v2381
    %v3662 = vpack.c.b16 %v2386, %v2382
    %v3663 = vpack.c.b16 %v2387, %v2383
    %v3664 = vpack.c.b16 %v2392, %v2388
    %v3665 = vpack.c.b16 %v2393, %v2389
    %v3666 = vpack.c.b16 %v2394, %v2390
    %v3667 = vpack.c.b16 %v2395, %v2391
    %v3668 = vpack.c.b16 %v2400, %v2396
    %v3669 = vpack.c.b16 %v2401, %v2397
    %v3670 = vpack.c.b16 %v2402, %v2398
    %v3671 = vpack.c.b16 %v2403, %v2399
    %v3672 = vpack.c.b16 %v2408, %v2404
    %v3673 = vpack.c.b16 %v2409, %v2405
    %v3674 = vpack.c.b16 %v2410, %v2406
    %v3675 = vpack.c.b16 %v2411, %v2407
    %v3676 = vpack.c.b16 %v2416, %v2412
    %v3677 = vpack.c.b16 %v2417, %v2413
    %v3678 = vpack.c.b16 %v2418, %v2414
    %v3679 = vpack.c.b16 %v2419, %v2415
    %v3680 = vpack.c.b16 %v2424, %v2420
    %v3681 = vpack.c.b16 %v2425, %v2421
    %v3682 = vpack.c.b16 %v2426, %v2422
    %v3683 = vpack.c.b16 %v2427, %v2423
    %v3684 = vpack.c.b16 %v2432, %v2428
    %v3685 = vpack.c.b16 %v2433, %v2429
    %v3686 = vpack.c.b16 %v2434, %v2430
    %v3687 = vpack.c.b16 %v2435, %v2431
    %v3688 = vpack.c.b16 %v2440, %v2436
    %v3689 = vpack.c.b16 %v2441, %v2437
    %v3690 = vpack.c.b16 %v2442, %v2438
    %v3691 = vpack.c.b16 %v2443, %v2439
    %v3692 = vpack.c.b16 %v2448, %v2444
    %v3693 = vpack.c.b16 %v2449, %v2445
    %v3694 = vpack.c.b16 %v2450, %v2446
    %v3695 = vpack.c.b16 %v2451, %v2447
    %v3696 = vpack.c.b16 %v2456, %v2452
    %v3697 = vpack.c.b16 %v2457, %v2453
    %v3698 = vpack.c.b16 %v2458, %v2454
    %v3699 = vpack.c.b16 %v2459, %v2455
    %v3700 = vpack.c.b16 %v2464, %v2460
    %v3701 = vpack.c.b16 %v2465, %v2461
    %v3702 = vpack.c.b16 %v2466, %v2462
    %v3703 = vpack.c.b16 %v2467, %v2463
    %v3704 = vpack.c.b16 %v2472, %v2468
    %v3705 = vpack.c.b16 %v2473, %v2469
    %v3706 = vpack.c.b16 %v2474, %v2470
    %v3707 = vpack.c.b16 %v2475, %v2471
    %v3708 = vpack.c.b16 %v2480, %v2476
    %v3709 = vpack.c.b16 %v2481, %v2477
    %v3710 = vpack.c.b16 %v2482, %v2478
    %v3711 = vpack.c.b16 %v2483, %v2479
    %v3712 = vpack.c.b16 %v2488, %v2484
    %v3713 = vpack.c.b16 %v2489, %v2485
    %v3714 = vpack.c.b16 %v2490, %v2486
    %v3715 = vpack.c.b16 %v2491, %v2487
    %v3716 = vpack.c.b16 %v2496, %v2492
    %v3717 = vpack.c.b16 %v2497, %v2493
    %v3718 = vpack.c.b16 %v2498, %v2494
    %v3719 = vpack.c.b16 %v2499, %v2495
    %v3720 = vpack.c.b16 %v2504, %v2500
    %v3721 = vpack.c.b16 %v2505, %v2501
    %v3722 = vpack.c.b16 %v2506, %v2502
    %v3723 = vpack.c.b16 %v2507, %v2503
    %v3724 = vpack.c.b16 %v2512, %v2508
    %v3725 = vpack.c.b16 %v2513, %v2509
    %v3726 = vpack.c.b16 %v2514, %v2510
    %v3727 = vpack.c.b16 %v2515, %v2511
    %v3728 = vpack.c.b16 %v2520, %v2516
    %v3729 = vpack.c.b16 %v2521, %v2517
    %v3730 = vpack.c.b16 %v2522, %v2518
    %v3731 = vpack.c.b16 %v2523, %v2519
    %v3732 = vpack.c.b16 %v2528, %v2524
    %v3733 = vpack.c.b16 %v2529, %v2525
    %v3734 = vpack.c.b16 %v2530, %v2526
    %v3735 = vpack.c.b16 %v2531, %v2527
    %v3736 = vpack.c.b16 %v2536, %v2532
    %v3737 = vpack.c.b16 %v2537, %v2533
    %v3738 = vpack.c.b16 %v2538, %v2534
    %v3739 = vpack.c.b16 %v2539, %v2535
    %v3740 = vpack.c.b16 %v2544, %v2540
    %v3741 = vpack.c.b16 %v2545, %v2541
    %v3742 = vpack.c.b16 %v2546, %v2542
    %v3743 = vpack.c.b16 %v2547, %v2543
    %v3744 = vpack.c.b16 %v2552, %v2548
    %v3745 = vpack.c.b16 %v2553, %v2549
    %v3746 = vpack.c.b16 %v2554, %v2550
    %v3747 = vpack.c.b16 %v2555, %v2551
    %v3748 = vpack.c.b16 %v2560, %v2556
    %v3749 = vpack.c.b16 %v2561, %v2557
    %v3750 = vpack.c.b16 %v2562, %v2558
    %v3751 = vpack.c.b16 %v2563, %v2559
    %v3752 = vpack.c.b16 %v2568, %v2564
    %v3753 = vpack.c.b16 %v2569, %v2565
    %v3754 = vpack.c.b16 %v2570, %v2566
    %v3755 = vpack.c.b16 %v2571, %v2567
    %v3756 = vpack.c.b16 %v2576, %v2572
    %v3757 = vpack.c.b16 %v2577, %v2573
    %v3758 = vpack.c.b16 %v2578, %v2574
    %v3759 = vpack.c.b16 %v2579, %v2575
    %v3760 = vpack.c.b16 %v2584, %v2580
    %v3761 = vpack.c.b16 %v2585, %v2581
    %v3762 = vpack.c.b16 %v2586, %v2582
    %v3763 = vpack.c.b16 %v2587, %v2583
    %v3764 = vpack.c.b16 %v2592, %v2588
    %v3765 = vpack.c.b16 %v2593, %v2589
    %v3766 = vpack.c.b16 %v2594, %v2590
    %v3767 = vpack.c.b16 %v2595, %v2591
    %v3768 = vpack.c.b16 %v2600, %v2596
    %v3769 = vpack.c.b16 %v2601, %v2597
    %v3770 = vpack.c.b16 %v2602, %v2598
    %v3771 = vpack.c.b16 %v2603, %v2599
    %v3772 = vpack.c.b16 %v2608, %v2604
    %v3773 = vpack.c.b16 %v2609, %v2605
    %v3774 = vpack.c.b16 %v2610, %v2606
    %v3775 = vpack.c.b16 %v2611, %v2607
    %v3776 = vpack.c.b16 %v2616, %v2612
    %v3777 = vpack.c.b16 %v2617, %v2613
    %v3778 = vpack.c.b16 %v2618, %v2614
    %v3779 = vpack.c.b16 %v2619, %v2615
    %v3780 = vpack.c.b16 %v2624, %v2620
    %v3781 = vpack.c.b16 %v2625, %v2621
    %v3782 = vpack.c.b16 %v2626, %v2622
    %v3783 = vpack.c.b16 %v2627, %v2623
    %v3784 = vpack.c.b16 %v2632, %v2628
    %v3785 = vpack.c.b16 %v2633, %v2629
    %v3786 = vpack.c.b16 %v2634, %v2630
    %v3787 = vpack.c.b16 %v2635, %v2631
    %v3788 = vpack.c.b16 %v2640, %v2636
    %v3789 = vpack.c.b16 %v2641, %v2637
    %v3790 = vpack.c.b16 %v2642, %v2638
    %v3791 = vpack.c.b16 %v2643, %v2639
    %v3792 = vpack.c.b16 %v2648, %v2644
    %v3793 = vpack.c.b16 %v2649, %v2645
    %v3794 = vpack.c.b16 %v2650, %v2646
    %v3795 = vpack.c.b16 %v2651, %v2647
    %v3796 = vpack.c.b16 %v2656, %v2652
    %v3797 = vpack.c.b16 %v2657, %v2653
    %v3798 = vpack.c.b16 %v2658, %v2654
    %v3799 = vpack.c.b16 %v2659, %v2655
    %v3800 = vpack.c.b16 %v2664, %v2660
    %v3801 = vpack.c.b16 %v2665, %v2661
    %v3802 = vpack.c.b16 %v2666, %v2662
    %v3803 = vpack.c.b16 %v2667, %v2663
    %v3804 = vpack.c.b16 %v2672, %v2668
    %v3805 = vpack.c.b16 %v2673, %v2669
    %v3806 = vpack.c.b16 %v2674, %v2670
    %v3807 = vpack.c.b16 %v2675, %v2671
    %v3808 = vpack.c.b16 %v2680, %v2676
    %v3809 = vpack.c.b16 %v2681, %v2677
    %v3810 = vpack.c.b16 %v2682, %v2678
    %v3811 = vpack.c.b16 %v2683, %v2679
    %v3812 = vpack.c.b16 %v2688, %v2684
    %v3813 = vpack.c.b16 %v2689, %v2685
    %v3814 = vpack.c.b16 %v2690, %v2686
    %v3815 = vpack.c.b16 %v2691, %v2687
    %v3816 = vpack.c.b16 %v2696, %v2692
    %v3817 = vpack.c.b16 %v2697, %v2693
    %v3818 = vpack.c.b16 %v2698, %v2694
    %v3819 = vpack.c.b16 %v2699, %v2695
    %v3820 = vpack.c.b16 %v2704, %v2700
    %v3821 = vpack.c.b16 %v2705, %v2701
    %v3822 = vpack.c.b16 %v2706, %v2702
    %v3823 = vpack.c.b16 %v2707, %v2703
    %v3824 = vpack.c.b16 %v2712, %v2708
    %v3825 = vpack.c.b16 %v2713, %v2709
    %v3826 = vpack.c.b16 %v2714, %v2710
    %v3827 = vpack.c.b16 %v2715, %v2711
    %v3828 = vpack.c.b16 %v2720, %v2716
    %v3829 = vpack.c.b16 %v2721, %v2717
    %v3830 = vpack.c.b16 %v2722, %v2718
    %v3831 = vpack.c.b16 %v2723, %v2719
    %v3832 = vpack.c.b16 %v2728, %v2724
    %v3833 = vpack.c.b16 %v2729, %v2725
    %v3834 = vpack.c.b16 %v2730, %v2726
    %v3835 = vpack.c.b16 %v2731, %v2727
    %v3836 = vpack.c.b16 %v2736, %v2732
    %v3837 = vpack.c.b16 %v2737, %v2733
    %v3838 = vpack.c.b16 %v2738, %v2734
    %v3839 = vpack.c.b16 %v2739, %v2735
    %v3840 = vpack.c.b16 %v2744, %v2740
    %v3841 = vpack.c.b16 %v2745, %v2741
    %v3842 = vpack.c.b16 %v2746, %v2742
    %v3843 = vpack.c.b16 %v2747, %v2743
    %v3844 = vpack.c.b16 %v2752, %v2748
    %v3845 = vpack.c.b16 %v2753, %v2749
    %v3846 = vpack.c.b16 %v2754, %v2750
    %v3847 = vpack.c.b16 %v2755, %v2751
    %v3848 = vpack.c.b16 %v2760, %v2756
    %v3849 = vpack.c.b16 %v2761, %v2757
    %v3850 = vpack.c.b16 %v2762, %v2758
    %v3851 = vpack.c.b16 %v2763, %v2759
    %v3852 = vpack.c.b16 %v2768, %v2764
    %v3853 = vpack.c.b16 %v2769, %v2765
    %v3854 = vpack.c.b16 %v2770, %v2766
    %v3855 = vpack.c.b16 %v2771, %v2767
    %v3856 = vpack.c.b16 %v2776, %v2772
    %v3857 = vpack.c.b16 %v2777, %v2773
    %v3858 = vpack.c.b16 %v2778, %v2774
    %v3859 = vpack.c.b16 %v2779, %v2775
    %v3860 = vpack.c.b16 %v2784, %v2780
    %v3861 = vpack.c.b16 %v2785, %v2781
    %v3862 = vpack.c.b16 %v2786, %v2782
    %v3863 = vpack.c.b16 %v2787, %v2783
    %v3864 = vpack.c.b16 %v2792, %v2788
    %v3865 = vpack.c.b16 %v2793, %v2789
    %v3866 = vpack.c.b16 %v2794, %v2790
    %v3867 = vpack.c.b16 %v2795, %v2791
    %v3868 = vpack.c.b16 %v2800, %v2796
    %v3869 = vpack.c.b16 %v2801, %v2797
    %v3870 = vpack.c.b16 %v2802, %v2798
    %v3871 = vpack.c.b16 %v2803, %v2799
    %v3872 = vpack.c.b16 %v2808, %v2804
    %v3873 = vpack.c.b16 %v2809, %v2805
    %v3874 = vpack.c.b16 %v2810, %v2806
    %v3875 = vpack.c.b16 %v2811, %v2807
    %v3876 = vpack.c.b16 %v2816, %v2812
    %v3877 = vpack.c.b16 %v2817, %v2813
    %v3878 = vpack.c.b16 %v2818, %v2814
    %v3879 = vpack.c.b16 %v2819, %v2815
    %v3880 = vpack.c.b16 %v2824, %v2820
    %v3881 = vpack.c.b16 %v2825, %v2821
    %v3882 = vpack.c.b16 %v2826, %v2822
    %v3883 = vpack.c.b16 %v2827, %v2823
    %v3884 = vpack.c.b16 %v2832, %v2828
    %v3885 = vpack.c.b16 %v2833, %v2829
    %v3886 = vpack.c.b16 %v2834, %v2830
    %v3887 = vpack.c.b16 %v2835, %v2831
    %v3888 = vpack.c.b16 %v2840, %v2836
    %v3889 = vpack.c.b16 %v2841, %v2837
    %v3890 = vpack.c.b16 %v2842, %v2838
    %v3891 = vpack.c.b16 %v2843, %v2839
    %v3892 = vpack.c.b16 %v2848, %v2844
    %v3893 = vpack.c.b16 %v2849, %v2845
    %v3894 = vpack.c.b16 %v2850, %v2846
    %v3895 = vpack.c.b16 %v2851, %v2847
    %v3896 = vpack.c.b16 %v2856, %v2852
    %v3897 = vpack.c.b16 %v2857, %v2853
    %v3898 = vpack.c.b16 %v2858, %v2854
    %v3899 = vpack.c.b16 %v2859, %v2855
    %v3900 = vpack.c.b16 %v2864, %v2860
    %v3901 = vpack.c.b16 %v2865, %v2861
    %v3902 = vpack.c.b16 %v2866, %v2862
    %v3903 = vpack.c.b16 %v2867, %v2863
    %v3904 = vpack.c.b16 %v2872, %v2868
    %v3905 = vpack.c.b16 %v2873, %v2869
    %v3906 = vpack.c.b16 %v2874, %v2870
    %v3907 = vpack.c.b16 %v2875, %v2871
    %v3908 = vpack.c.b16 %v2880, %v2876
    %v3909 = vpack.c.b16 %v2881, %v2877
    %v3910 = vpack.c.b16 %v2882, %v2878
    %v3911 = vpack.c.b16 %v2883, %v2879
    %v3912 = vpack.c.b16 %v2888, %v2884
    %v3913 = vpack.c.b16 %v2889, %v2885
    %v3914 = vpack.c.b16 %v2890, %v2886
    %v3915 = vpack.c.b16 %v2891, %v2887
    %v3916 = vpack.c.b16 %v2896, %v2892
    %v3917 = vpack.c.b16 %v2897, %v2893
    %v3918 = vpack.c.b16 %v2898, %v2894
    %v3919 = vpack.c.b16 %v2899, %v2895
    %v3920 = vpack.c.b16 %v2904, %v2900
    %v3921 = vpack.c.b16 %v2905, %v2901
    %v3922 = vpack.c.b16 %v2906, %v2902
    %v3923 = vpack.c.b16 %v2907, %v2903
    %v3924 = vpack.c.b16 %v2912, %v2908
    %v3925 = vpack.c.b16 %v2913, %v2909
    %v3926 = vpack.c.b16 %v2914, %v2910
    %v3927 = vpack.c.b16 %v2915, %v2911
    %v3928 = vpack.c.b16 %v2920, %v2916
    %v3929 = vpack.c.b16 %v2921, %v2917
    %v3930 = vpack.c.b16 %v2922, %v2918
    %v3931 = vpack.c.b16 %v2923, %v2919
    %v3932 = vpack.c.b16 %v2928, %v2924
    %v3933 = vpack.c.b16 %v2929, %v2925
    %v3934 = vpack.c.b16 %v2930, %v2926
    %v3935 = vpack.c.b16 %v2931, %v2927
    %v3936 = vpack.c.b16 %v2936, %v2932
    %v3937 = vpack.c.b16 %v2937, %v2933
    %v3938 = vpack.c.b16 %v2938, %v2934
    %v3939 = vpack.c.b16 %v2939, %v2935
    %v3940 = vpack.c.b16 %v2944, %v2940
    %v3941 = vpack.c.b16 %v2945, %v2941
    %v3942 = vpack.c.b16 %v2946, %v2942
    %v3943 = vpack.c.b16 %v2947, %v2943
    %v3944 = vpack.c.b16 %v2952, %v2948
    %v3945 = vpack.c.b16 %v2953, %v2949
    %v3946 = vpack.c.b16 %v2954, %v2950
    %v3947 = vpack.c.b16 %v2955, %v2951
    %v3948 = vpack.c.b16 %v2960, %v2956
    %v3949 = vpack.c.b16 %v2961, %v2957
    %v3950 = vpack.c.b16 %v2962, %v2958
    %v3951 = vpack.c.b16 %v2963, %v2959
    %v3952 = vpack.c.b16 %v2968, %v2964
    %v3953 = vpack.c.b16 %v2969, %v2965
    %v3954 = vpack.c.b16 %v2970, %v2966
    %v3955 = vpack.c.b16 %v2971, %v2967
    %v3956 = vpack.c.b16 %v2976, %v2972
    %v3957 = vpack.c.b16 %v2977, %v2973
    %v3958 = vpack.c.b16 %v2978, %v2974
    %v3959 = vpack.c.b16 %v2979, %v2975
    %v3960 = vpack.c.b16 %v2984, %v2980
    %v3961 = vpack.c.b16 %v2985, %v2981
    %v3962 = vpack.c.b16 %v2986, %v2982
    %v3963 = vpack.c.b16 %v2987, %v2983
    %v3964 = vpack.c.b16 %v2992, %v2988
    %v3965 = vpack.c.b16 %v2993, %v2989
    %v3966 = vpack.c.b16 %v2994, %v2990
    %v3967 = vpack.c.b16 %v2995, %v2991
    %v3968 = vpack.c.b16 %v3000, %v2996
    %v3969 = vpack.c.b16 %v3001, %v2997
    %v3970 = vpack.c.b16 %v3002, %v2998
    %v3971 = vpack.c.b16 %v3003, %v2999
    %v3972 = vpack.c.b16 %v3008, %v3004
    %v3973 = vpack.c.b16 %v3009, %v3005
    %v3974 = vpack.c.b16 %v3010, %v3006
    %v3975 = vpack.c.b16 %v3011, %v3007
    %v3976 = vpack.c.b16 %v3016, %v3012
    %v3977 = vpack.c.b16 %v3017, %v3013
    %v3978 = vpack.c.b16 %v3018, %v3014
    %v3979 = vpack.c.b16 %v3019, %v3015
    %v3980 = vpack.c.b16 %v3024, %v3020
    %v3981 = vpack.c.b16 %v3025, %v3021
    %v3982 = vpack.c.b16 %v3026, %v3022
    %v3983 = vpack.c.b16 %v3027, %v3023
    %v3984 = vpack.c.b16 %v3032, %v3028
    %v3985 = vpack.c.b16 %v3033, %v3029
    %v3986 = vpack.c.b16 %v3034, %v3030
    %v3987 = vpack.c.b16 %v3035, %v3031
    %v3988 = vpack.c.b16 %v3040, %v3036
    %v3989 = vpack.c.b16 %v3041, %v3037
    %v3990 = vpack.c.b16 %v3042, %v3038
    %v3991 = vpack.c.b16 %v3043, %v3039
    %v3992 = vpack.c.b16 %v3048, %v3044
    %v3993 = vpack.c.b16 %v3049, %v3045
    %v3994 = vpack.c.b16 %v3050, %v3046
    %v3995 = vpack.c.b16 %v3051, %v3047
    %v3996 = vpack.c.b16 %v3056, %v3052
    %v3997 = vpack.c.b16 %v3057, %v3053
    %v3998 = vpack.c.b16 %v3058, %v3054
    %v3999 = vpack.c.b16 %v3059, %v3055
    %v4000 = vpack.c.b16 %v3064, %v3060
    %v4001 = vpack.c.b16 %v3065, %v3061
    %v4002 = vpack.c.b16 %v3066, %v3062
    %v4003 = vpack.c.b16 %v3067, %v3063
    %v4004 = vpack.c.b16 %v3072, %v3068
    %v4005 = vpack.c.b16 %v3073, %v3069
    %v4006 = vpack.c.b16 %v3074, %v3070
    %v4007 = vpack.c.b16 %v3075, %v3071
    %v4008 = vpack.c.b16 %v3080, %v3076
    %v4009 = vpack.c.b16 %v3081, %v3077
    %v4010 = vpack.c.b16 %v3082, %v3078
    %v4011 = vpack.c.b16 %v3083, %v3079
    %v4012 = vpack.c.b16 %v3088, %v3084
    %v4013 = vpack.c.b16 %v3089, %v3085
    %v4014 = vpack.c.b16 %v3090, %v3086
    %v4015 = vpack.c.b16 %v3091, %v3087
    %v4016 = vpack.c.b16 %v3096, %v3092
    %v4017 = vpack.c.b16 %v3097, %v3093
    %v4018 = vpack.c.b16 %v3098, %v3094
    %v4019 = vpack.c.b16 %v3099, %v3095
    %v4020 = vpack.c.b16 %v3104, %v3100
    %v4021 = vpack.c.b16 %v3105, %v3101
    %v4022 = vpack.c.b16 %v3106, %v3102
    %v4023 = vpack.c.b16 %v3107, %v3103
    %v4024 = vpack.c.b16 %v3112, %v3108
    %v4025 = vpack.c.b16 %v3113, %v3109
    %v4026 = vpack.c.b16 %v3114, %v3110
    %v4027 = vpack.c.b16 %v3115, %v3111
    %v4028 = vpack.c.b16 %v3120, %v3116
    %v4029 = vpack.c.b16 %v3121, %v3117
    %v4030 = vpack.c.b16 %v3122, %v3118
    %v4031 = vpack.c.b16 %v3123, %v3119
    %v4032 = vpack.c.b16 %v3128, %v3124
    %v4033 = vpack.c.b16 %v3129, %v3125
    %v4034 = vpack.c.b16 %v3130, %v3126
    %v4035 = vpack.c.b16 %v3131, %v3127
    %v4036 = vpack.c.b16 %v3136, %v3132
    %v4037 = vpack.c.b16 %v3137, %v3133
    %v4038 = vpack.c.b16 %v3138, %v3134
    %v4039 = vpack.c.b16 %v3139, %v3135
    %v4040 = vpack.c.b16 %v3144, %v3140
    %v4041 = vpack.c.b16 %v3145, %v3141
    %v4042 = vpack.c.b16 %v3146, %v3142
    %v4043 = vpack.c.b16 %v3147, %v3143
    %v4044 = vpack.c.b16 %v3152, %v3148
    %v4045 = vpack.c.b16 %v3153, %v3149
    %v4046 = vpack.c.b16 %v3154, %v3150
    %v4047 = vpack.c.b16 %v3155, %v3151
    %v4048 = vpack.c.b16 %v3160, %v3156
    %v4049 = vpack.c.b16 %v3161, %v3157
    %v4050 = vpack.c.b16 %v3162, %v3158
    %v4051 = vpack.c.b16 %v3163, %v3159
    %v4052 = vpack.c.b16 %v3168, %v3164
    %v4053 = vpack.c.b16 %v3169, %v3165
    %v4054 = vpack.c.b16 %v3170, %v3166
    %v4055 = vpack.c.b16 %v3171, %v3167
    %v4056 = vpack.c.b16 %v3176, %v3172
    %v4057 = vpack.c.b16 %v3177, %v3173
    %v4058 = vpack.c.b16 %v3178, %v3174
    %v4059 = vpack.c.b16 %v3179, %v3175
    %v4060 = vpack.c.b16 %v3184, %v3180
    %v4061 = vpack.c.b16 %v3185, %v3181
    %v4062 = vpack.c.b16 %v3186, %v3182
    %v4063 = vpack.c.b16 %v3187, %v3183
    %v4064 = vpack.c.b16 %v3192, %v3188
    %v4065 = vpack.c.b16 %v3193, %v3189
    %v4066 = vpack.c.b16 %v3194, %v3190
    %v4067 = vpack.c.b16 %v3195, %v3191
    %v4068 = vpack.c.b16 %v3200, %v3196
    %v4069 = vpack.c.b16 %v3201, %v3197
    %v4070 = vpack.c.b16 %v3202, %v3198
    %v4071 = vpack.c.b16 %v3203, %v3199
    %v4072 = vpack.c.b16 %v3208, %v3204
    %v4073 = vpack.c.b16 %v3209, %v3205
    %v4074 = vpack.c.b16 %v3210, %v3206
    %v4075 = vpack.c.b16 %v3211, %v3207
    %v4076 = vpack.c.b16 %v3216, %v3212
    %v4077 = vpack.c.b16 %v3217, %v3213
    %v4078 = vpack.c.b16 %v3218, %v3214
    %v4079 = vpack.c.b16 %v3219, %v3215
    %v4080 = vpack.c.b16 %v3224, %v3220
    %v4081 = vpack.c.b16 %v3225, %v3221
    %v4082 = vpack.c.b16 %v3226, %v3222
    %v4083 = vpack.c.b16 %v3227, %v3223
    %v4084 = vpack.c.b16 %v3232, %v3228
    %v4085 = vpack.c.b16 %v3233, %v3229
    %v4086 = vpack.c.b16 %v3234, %v3230
    %v4087 = vpack.c.b16 %v3235, %v3231
    %v4088 = vpack.c.b16 %v3240, %v3236
    %v4089 = vpack.c.b16 %v3241, %v3237
    %v4090 = vpack.c.b16 %v3242, %v3238
    %v4091 = vpack.c.b16 %v3243, %v3239
    %v4092 = vpack.c.b16 %v3248, %v3244
    %v4093 = vpack.c.b16 %v3249, %v3245
    %v4094 = vpack.c.b16 %v3250, %v3246
    %v4095 = vpack.c.b16 %v3251, %v3247
    %v4096 = vpack.c.b16 %v3256, %v3252
    %v4097 = vpack.c.b16 %v3257, %v3253
    %v4098 = vpack.c.b16 %v3258, %v3254
    %v4099 = vpack.c.b16 %v3259, %v3255
    %v4100 = vpack.c.b16 %v3264, %v3260
    %v4101 = vpack.c.b16 %v3265, %v3261
    %v4102 = vpack.c.b16 %v3266, %v3262
    %v4103 = vpack.c.b16 %v3267, %v3263
    %v4104 = vpack.c.b16 %v3272, %v3268
    %v4105 = vpack.c.b16 %v3273, %v3269
    %v4106 = vpack.c.b16 %v3274, %v3270
    %v4107 = vpack.c.b16 %v3275, %v3271
    %v4108 = vpack.c.b16 %v3280, %v3276
    %v4109 = vpack.c.b16 %v3281, %v3277
    %v4110 = vpack.c.b16 %v3282, %v3278
    %v4111 = vpack.c.b16 %v3283, %v3279
    %v4112 = vpack.c.b16 %v3288, %v3284
    %v4113 = vpack.c.b16 %v3289, %v3285
    %v4114 = vpack.c.b16 %v3290, %v3286
    %v4115 = vpack.c.b16 %v3291, %v3287
    %v4116 = vpack.c.b16 %v3296, %v3292
    %v4117 = vpack.c.b16 %v3297, %v3293
    %v4118 = vpack.c.b16 %v3298, %v3294
    %v4119 = vpack.c.b16 %v3299, %v3295
    %v4120 = vpack.c.b16 %v3304, %v3300
    %v4121 = vpack.c.b16 %v3305, %v3301
    %v4122 = vpack.c.b16 %v3306, %v3302
    %v4123 = vpack.c.b16 %v3307, %v3303
    %v4124 = vpack.c.b16 %v3312, %v3308
    %v4125 = vpack.c.b16 %v3313, %v3309
    %v4126 = vpack.c.b16 %v3314, %v3310
    %v4127 = vpack.c.b16 %v3315, %v3311
    %v4128 = vpack.c.b16 %v3320, %v3316
    %v4129 = vpack.c.b16 %v3321, %v3317
    %v4130 = vpack.c.b16 %v3322, %v3318
    %v4131 = vpack.c.b16 %v3323, %v3319
    %v4132 = vpack.c.b16 %v3328, %v3324
    %v4133 = vpack.c.b16 %v3329, %v3325
    %v4134 = vpack.c.b16 %v3330, %v3326
    %v4135 = vpack.c.b16 %v3331, %v3327
    %v4136 = vpack.c.b16 %v3336, %v3332
    %v4137 = vpack.c.b16 %v3337, %v3333
    %v4138 = vpack.c.b16 %v3338, %v3334
    %v4139 = vpack.c.b16 %v3339, %v3335
    %v4140 = vpack.c.b16 %v3344, %v3340
    %v4141 = vpack.c.b16 %v3345, %v3341
    %v4142 = vpack.c.b16 %v3346, %v3342
    %v4143 = vpack.c.b16 %v3347, %v3343
    %v4144 = vpack.c.b16 %v3352, %v3348
    %v4145 = vpack.c.b16 %v3353, %v3349
    %v4146 = vpack.c.b16 %v3354, %v3350
    %v4147 = vpack.c.b16 %v3355, %v3351
    %v4148 = vpack.c.b16 %v3360, %v3356
    %v4149 = vpack.c.b16 %v3361, %v3357
    %v4150 = vpack.c.b16 %v3362, %v3358
    %v4151 = vpack.c.b16 %v3363, %v3359
    %v4152 = vpack.c.b16 %v3368, %v3364
    %v4153 = vpack.c.b16 %v3369, %v3365
    %v4154 = vpack.c.b16 %v3370, %v3366
    %v4155 = vpack.c.b16 %v3371, %v3367
    %v4156 = vpack.c.b16 %v3376, %v3372
    %v4157 = vpack.c.b16 %v3377, %v3373
    %v4158 = vpack.c.b16 %v3378, %v3374
    %v4159 = vpack.c.b16 %v3379, %v3375
    %v4160 = vpack.c.b16 %v3384, %v3380
    %v4161 = vpack.c.b16 %v3385, %v3381
    %v4162 = vpack.c.b16 %v3386, %v3382
    %v4163 = vpack.c.b16 %v3387, %v3383
    %v4164 = vpack.c.b16 %v3392, %v3388
    %v4165 = vpack.c.b16 %v3393, %v3389
    %v4166 = vpack.c.b16 %v3394, %v3390
    %v4167 = vpack.c.b16 %v3395, %v3391
    %v4168 = vpack.c.b16 %v3400, %v3396
    %v4169 = vpack.c.b16 %v3401, %v3397
    %v4170 = vpack.c.b16 %v3402, %v3398
    %v4171 = vpack.c.b16 %v3403, %v3399
    %4940 = vmatprep.subr.bf16.mxu0 %v3405
    %4941 = vmatpush1.bf16.msra.mxu0 %v3404
    %4942 = vmatprep.subr.bf16.mxu0 %v3409
    %4943 = vmatpush1.bf16.msra.mxu0 %v3408
    %4944 = vmatprep.subr.bf16.mxu0 %v3413
    %4945 = vmatpush1.bf16.msra.mxu0 %v3412
    %4946 = vmatprep.subr.bf16.mxu0 %v3417
    %4947 = vmatpush1.bf16.msra.mxu0 %v3416
    %4948 = vmatprep.subr.bf16.mxu0 %v3421
    %4949 = vmatpush1.bf16.msra.mxu0 %v3420
    %4950 = vmatprep.subr.bf16.mxu0 %v3425
    %4951 = vmatpush1.bf16.msra.mxu0 %v3424
    %4952 = vmatprep.subr.bf16.mxu0 %v3429
    %4953 = vmatpush1.bf16.msra.mxu0 %v3428
    %4954 = vmatprep.subr.bf16.mxu0 %v3433
    %4955 = vmatpush1.bf16.msra.mxu0 %v3432
    %4956 = vmatprep.subr.bf16.mxu0 %v3437
    %4957 = vmatpush1.bf16.msra.mxu0 %v3436
    %4958 = vmatprep.subr.bf16.mxu0 %v3441
    %4959 = vmatpush1.bf16.msra.mxu0 %v3440
    %4960 = vmatprep.subr.bf16.mxu0 %v3445
    %4961 = vmatpush1.bf16.msra.mxu0 %v3444
    %4962 = vmatprep.subr.bf16.mxu0 %v3449
    %4963 = vmatpush1.bf16.msra.mxu0 %v3448
    %4964 = vmatprep.subr.bf16.mxu0 %v3453
    %4965 = vmatpush1.bf16.msra.mxu0 %v3452
    %4966 = vmatprep.subr.bf16.mxu0 %v3457
    %4967 = vmatpush1.bf16.msra.mxu0 %v3456
    %4968 = vmatprep.subr.bf16.mxu0 %v3461
    %4969 = vmatpush1.bf16.msra.mxu0 %v3460
    %4970 = vmatprep.subr.bf16.mxu0 %v3465
    %4971 = vmatpush1.bf16.msra.mxu0 %v3464
    %4972 = vmatprep.mubr.bf16.mxu0 %v966
    %4973 = vmatmul.mubr.bf16.gmra.mrb[0].mxu0 %v952
    %v4974 = vpop.f32.mrb[0].mxu0
    %v4975 = vadd.f32 %v909, %v4974
    %v4976 = vpop.f32.mrb[0].mxu0
    %v4977 = vadd.f32 %v913, %v4976
    %v4978 = vpop.f32.mrb[0].mxu0
    %v4979 = vpop.f32.mrb[0].mxu0
    %4980 = vdwg.mxu0
    %4981 = vmatprep.subr.bf16.mxu0 %v3469
    %4982 = vmatpush1.bf16.msra.mxu0 %v3468
    %4983 = vmatprep.subr.bf16.mxu0 %v3473
    %4984 = vmatpush1.bf16.msra.mxu0 %v3472
    %4985 = vmatprep.subr.bf16.mxu0 %v3477
    %4986 = vmatpush1.bf16.msra.mxu0 %v3476
    %4987 = vmatprep.subr.bf16.mxu0 %v3481
    %4988 = vmatpush1.bf16.msra.mxu0 %v3480
    %4989 = vmatprep.subr.bf16.mxu0 %v3485
    %4990 = vmatpush1.bf16.msra.mxu0 %v3484
    %4991 = vmatprep.subr.bf16.mxu0 %v3489
    %4992 = vmatpush1.bf16.msra.mxu0 %v3488
    %4993 = vmatprep.subr.bf16.mxu0 %v3493
    %4994 = vmatpush1.bf16.msra.mxu0 %v3492
    %4995 = vmatprep.subr.bf16.mxu0 %v3497
    %4996 = vmatpush1.bf16.msra.mxu0 %v3496
    %4997 = vmatprep.subr.bf16.mxu0 %v3501
    %4998 = vmatpush1.bf16.msra.mxu0 %v3500
    %4999 = vmatprep.subr.bf16.mxu0 %v3505
    %5000 = vmatpush1.bf16.msra.mxu0 %v3504
    %5001 = vmatprep.subr.bf16.mxu0 %v3509
    %5002 = vmatpush1.bf16.msra.mxu0 %v3508
    %5003 = vmatprep.subr.bf16.mxu0 %v3513
    %5004 = vmatpush1.bf16.msra.mxu0 %v3512
    %5005 = vmatprep.subr.bf16.mxu0 %v3517
    %5006 = vmatpush1.bf16.msra.mxu0 %v3516
    %5007 = vmatprep.subr.bf16.mxu0 %v3521
    %5008 = vmatpush1.bf16.msra.mxu0 %v3520
    %5009 = vmatprep.subr.bf16.mxu0 %v3525
    %5010 = vmatpush1.bf16.msra.mxu0 %v3524
    %5011 = vmatprep.subr.bf16.mxu0 %v3529
    %5012 = vmatpush1.bf16.msra.mxu0 %v3528
    %5013 = vmatprep.mubr.bf16.mxu0 %v976
    %5014 = vmatmul.mubr.bf16.gmra.mrb[0].mxu0 %v974
    %v5015 = vpop.f32.mrb[0].mxu0
    %v5016 = vadd.f32 %v4975, %v5015
    %v5017 = vpop.f32.mrb[0].mxu0
    %v5018 = vadd.f32 %v4977, %v5017
    %v5019 = vpop.f32.mrb[0].mxu0
    %v5020 = vpop.f32.mrb[0].mxu0
    %5021 = vdwg.mxu0
    %5022 = vmatprep.subr.bf16.mxu0 %v3533
    %5023 = vmatpush1.bf16.msra.mxu0 %v3532
    %5024 = vmatprep.subr.bf16.mxu0 %v3537
    %5025 = vmatpush1.bf16.msra.mxu0 %v3536
    %5026 = vmatprep.subr.bf16.mxu0 %v3541
    %5027 = vmatpush1.bf16.msra.mxu0 %v3540
    %5028 = vmatprep.subr.bf16.mxu0 %v3545
    %5029 = vmatpush1.bf16.msra.mxu0 %v3544
    %5030 = vmatprep.subr.bf16.mxu0 %v3549
    %5031 = vmatpush1.bf16.msra.mxu0 %v3548
    %5032 = vmatprep.subr.bf16.mxu0 %v3553
    %5033 = vmatpush1.bf16.msra.mxu0 %v3552
    %5034 = vmatprep.subr.bf16.mxu0 %v3557
    %5035 = vmatpush1.bf16.msra.mxu0 %v3556
    %5036 = vmatprep.subr.bf16.mxu0 %v3561
    %5037 = vmatpush1.bf16.msra.mxu0 %v3560
    %5038 = vmatprep.subr.bf16.mxu0 %v3565
    %5039 = vmatpush1.bf16.msra.mxu0 %v3564
    %5040 = vmatprep.subr.bf16.mxu0 %v3569
    %5041 = vmatpush1.bf16.msra.mxu0 %v3568
    %5042 = vmatprep.subr.bf16.mxu0 %v3573
    %5043 = vmatpush1.bf16.msra.mxu0 %v3572
    %5044 = vmatprep.subr.bf16.mxu0 %v3577
    %5045 = vmatpush1.bf16.msra.mxu0 %v3576
    %5046 = vmatprep.subr.bf16.mxu0 %v3581
    %5047 = vmatpush1.bf16.msra.mxu0 %v3580
    %5048 = vmatprep.subr.bf16.mxu0 %v3585
    %5049 = vmatpush1.bf16.msra.mxu0 %v3584
    %5050 = vmatprep.subr.bf16.mxu0 %v3589
    %5051 = vmatpush1.bf16.msra.mxu0 %v3588
    %5052 = vmatprep.subr.bf16.mxu0 %v3593
    %5053 = vmatpush1.bf16.msra.mxu0 %v3592
    %5054 = vmatprep.mubr.bf16.mxu0 %v973
    %5055 = vmatmul.mubr.bf16.gmra.mrb[0].mxu0 %v959
    %v5056 = vpop.f32.mrb[0].mxu0
    %v5057 = vadd.f32 %v5016, %v5056
    %v5058 = vpop.f32.mrb[0].mxu0
    %v5059 = vadd.f32 %v5018, %v5058
    %v5060 = vpop.f32.mrb[0].mxu0
    %v5061 = vpop.f32.mrb[0].mxu0
    %5062 = vdwg.mxu0
    %5063 = vmatprep.subr.bf16.mxu0 %v3597
    %5064 = vmatpush1.bf16.msra.mxu0 %v3596
    %5065 = vmatprep.subr.bf16.mxu0 %v3601
    %5066 = vmatpush1.bf16.msra.mxu0 %v3600
    %5067 = vmatprep.subr.bf16.mxu0 %v3605
    %5068 = vmatpush1.bf16.msra.mxu0 %v3604
    %5069 = vmatprep.subr.bf16.mxu0 %v3609
    %5070 = vmatpush1.bf16.msra.mxu0 %v3608
    %5071 = vmatprep.subr.bf16.mxu0 %v3613
    %5072 = vmatpush1.bf16.msra.mxu0 %v3612
    %5073 = vmatprep.subr.bf16.mxu0 %v3617
    %5074 = vmatpush1.bf16.msra.mxu0 %v3616
    %5075 = vmatprep.subr.bf16.mxu0 %v3621
    %5076 = vmatpush1.bf16.msra.mxu0 %v3620
    %5077 = vmatprep.subr.bf16.mxu0 %v3625
    %5078 = vmatpush1.bf16.msra.mxu0 %v3624
    %5079 = vmatprep.subr.bf16.mxu0 %v3629
    %5080 = vmatpush1.bf16.msra.mxu0 %v3628
    %5081 = vmatprep.subr.bf16.mxu0 %v3633
    %5082 = vmatpush1.bf16.msra.mxu0 %v3632
    %5083 = vmatprep.subr.bf16.mxu0 %v3637
    %5084 = vmatpush1.bf16.msra.mxu0 %v3636
    %5085 = vmatprep.subr.bf16.mxu0 %v3641
    %5086 = vmatpush1.bf16.msra.mxu0 %v3640
    %5087 = vmatprep.subr.bf16.mxu0 %v3645
    %5088 = vmatpush1.bf16.msra.mxu0 %v3644
    %5089 = vmatprep.subr.bf16.mxu0 %v3649
    %5090 = vmatpush1.bf16.msra.mxu0 %v3648
    %5091 = vmatprep.subr.bf16.mxu0 %v3653
    %5092 = vmatpush1.bf16.msra.mxu0 %v3652
    %5093 = vmatprep.subr.bf16.mxu0 %v3657
    %5094 = vmatpush1.bf16.msra.mxu0 %v3656
    %5095 = vmatprep.mubr.bf16.mxu0 %v977
    %5096 = vmatmul.mubr.bf16.gmra.mrb[0].mxu0 %v975
    %v5097 = vpop.f32.mrb[0].mxu0
    %v5098 = vadd.f32 %v5057, %v5097
    %v5099 = vpop.f32.mrb[0].mxu0
    %v5100 = vadd.f32 %v5059, %v5099
    %v5101 = vpop.f32.mrb[0].mxu0
    %v5102 = vpop.f32.mrb[0].mxu0
    %5103 = vdwg.mxu0
    %5104 = vmatprep.subr.bf16.mxu0 %v3661
    %5105 = vmatpush1.bf16.msra.mxu0 %v3660
    %5106 = vmatprep.subr.bf16.mxu0 %v3665
    %5107 = vmatpush1.bf16.msra.mxu0 %v3664
    %5108 = vmatprep.subr.bf16.mxu0 %v3669
    %5109 = vmatpush1.bf16.msra.mxu0 %v3668
    %5110 = vmatprep.subr.bf16.mxu0 %v3673
    %5111 = vmatpush1.bf16.msra.mxu0 %v3672
    %5112 = vmatprep.subr.bf16.mxu0 %v3677
    %5113 = vmatpush1.bf16.msra.mxu0 %v3676
    %5114 = vmatprep.subr.bf16.mxu0 %v3681
    %5115 = vmatpush1.bf16.msra.mxu0 %v3680
    %5116 = vmatprep.subr.bf16.mxu0 %v3685
    %5117 = vmatpush1.bf16.msra.mxu0 %v3684
    %5118 = vmatprep.subr.bf16.mxu0 %v3689
    %5119 = vmatpush1.bf16.msra.mxu0 %v3688
    %5120 = vmatprep.subr.bf16.mxu0 %v3693
    %5121 = vmatpush1.bf16.msra.mxu0 %v3692
    %5122 = vmatprep.subr.bf16.mxu0 %v3697
    %5123 = vmatpush1.bf16.msra.mxu0 %v3696
    %5124 = vmatprep.subr.bf16.mxu0 %v3701
    %5125 = vmatpush1.bf16.msra.mxu0 %v3700
    %5126 = vmatprep.subr.bf16.mxu0 %v3705
    %5127 = vmatpush1.bf16.msra.mxu0 %v3704
    %5128 = vmatprep.subr.bf16.mxu0 %v3709
    %5129 = vmatpush1.bf16.msra.mxu0 %v3708
    %5130 = vmatprep.subr.bf16.mxu0 %v3713
    %5131 = vmatpush1.bf16.msra.mxu0 %v3712
    %5132 = vmatprep.subr.bf16.mxu0 %v3717
    %5133 = vmatpush1.bf16.msra.mxu0 %v3716
    %5134 = vmatprep.subr.bf16.mxu0 %v3721
    %5135 = vmatpush1.bf16.msra.mxu0 %v3720
    %5136 = vmatprep.mubr.bf16.mxu0 %v1015
    %5137 = vmatmul.mubr.bf16.gmra.mrb[0].mxu0 %v1001
    %v5138 = vpop.f32.mrb[0].mxu0
    %v5139 = vadd.f32 %v5098, %v5138
    %v5140 = vpop.f32.mrb[0].mxu0
    %v5141 = vadd.f32 %v5100, %v5140
    %v5142 = vpop.f32.mrb[0].mxu0
    %v5143 = vpop.f32.mrb[0].mxu0
    %5144 = vdwg.mxu0
    %5145 = vmatprep.subr.bf16.mxu0 %v3725
    %5146 = vmatpush1.bf16.msra.mxu0 %v3724
    %5147 = vmatprep.subr.bf16.mxu0 %v3729
    %5148 = vmatpush1.bf16.msra.mxu0 %v3728
    %5149 = vmatprep.subr.bf16.mxu0 %v3733
    %5150 = vmatpush1.bf16.msra.mxu0 %v3732
    %5151 = vmatprep.subr.bf16.mxu0 %v3737
    %5152 = vmatpush1.bf16.msra.mxu0 %v3736
    %5153 = vmatprep.subr.bf16.mxu0 %v3741
    %5154 = vmatpush1.bf16.msra.mxu0 %v3740
    %5155 = vmatprep.subr.bf16.mxu0 %v3745
    %5156 = vmatpush1.bf16.msra.mxu0 %v3744
    %5157 = vmatprep.subr.bf16.mxu0 %v3749
    %5158 = vmatpush1.bf16.msra.mxu0 %v3748
    %5159 = vmatprep.subr.bf16.mxu0 %v3753
    %5160 = vmatpush1.bf16.msra.mxu0 %v3752
    %5161 = vmatprep.subr.bf16.mxu0 %v3757
    %5162 = vmatpush1.bf16.msra.mxu0 %v3756
    %5163 = vmatprep.subr.bf16.mxu0 %v3761
    %5164 = vmatpush1.bf16.msra.mxu0 %v3760
    %5165 = vmatprep.subr.bf16.mxu0 %v3765
    %5166 = vmatpush1.bf16.msra.mxu0 %v3764
    %5167 = vmatprep.subr.bf16.mxu0 %v3769
    %5168 = vmatpush1.bf16.msra.mxu0 %v3768
    %5169 = vmatprep.subr.bf16.mxu0 %v3773
    %5170 = vmatpush1.bf16.msra.mxu0 %v3772
    %5171 = vmatprep.subr.bf16.mxu0 %v3777
    %5172 = vmatpush1.bf16.msra.mxu0 %v3776
    %5173 = vmatprep.subr.bf16.mxu0 %v3781
    %5174 = vmatpush1.bf16.msra.mxu0 %v3780
    %5175 = vmatprep.subr.bf16.mxu0 %v3785
    %5176 = vmatpush1.bf16.msra.mxu0 %v3784
    %5177 = vmatprep.mubr.bf16.mxu0 %v1025
    %5178 = vmatmul.mubr.bf16.gmra.mrb[0].mxu0 %v1023
    %v5179 = vpop.f32.mrb[0].mxu0
    %v5180 = vadd.f32 %v5139, %v5179
    %v5181 = vpop.f32.mrb[0].mxu0
    %v5182 = vadd.f32 %v5141, %v5181
    %v5183 = vpop.f32.mrb[0].mxu0
    %v5184 = vpop.f32.mrb[0].mxu0
    %5185 = vdwg.mxu0
    %5186 = vmatprep.subr.bf16.mxu0 %v3789
    %5187 = vmatpush1.bf16.msra.mxu0 %v3788
    %5188 = vmatprep.subr.bf16.mxu0 %v3793
    %5189 = vmatpush1.bf16.msra.mxu0 %v3792
    %5190 = vmatprep.subr.bf16.mxu0 %v3797
    %5191 = vmatpush1.bf16.msra.mxu0 %v3796
    %5192 = vmatprep.subr.bf16.mxu0 %v3801
    %5193 = vmatpush1.bf16.msra.mxu0 %v3800
    %5194 = vmatprep.subr.bf16.mxu0 %v3805
    %5195 = vmatpush1.bf16.msra.mxu0 %v3804
    %5196 = vmatprep.subr.bf16.mxu0 %v3809
    %5197 = vmatpush1.bf16.msra.mxu0 %v3808
    %5198 = vmatprep.subr.bf16.mxu0 %v3813
    %5199 = vmatpush1.bf16.msra.mxu0 %v3812
    %5200 = vmatprep.subr.bf16.mxu0 %v3817
    %5201 = vmatpush1.bf16.msra.mxu0 %v3816
    %5202 = vmatprep.subr.bf16.mxu0 %v3821
    %5203 = vmatpush1.bf16.msra.mxu0 %v3820
    %5204 = vmatprep.subr.bf16.mxu0 %v3825
    %5205 = vmatpush1.bf16.msra.mxu0 %v3824
    %5206 = vmatprep.subr.bf16.mxu0 %v3829
    %5207 = vmatpush1.bf16.msra.mxu0 %v3828
    %5208 = vmatprep.subr.bf16.mxu0 %v3833
    %5209 = vmatpush1.bf16.msra.mxu0 %v3832
    %5210 = vmatprep.subr.bf16.mxu0 %v3837
    %5211 = vmatpush1.bf16.msra.mxu0 %v3836
    %5212 = vmatprep.subr.bf16.mxu0 %v3841
    %5213 = vmatpush1.bf16.msra.mxu0 %v3840
    %5214 = vmatprep.subr.bf16.mxu0 %v3845
    %5215 = vmatpush1.bf16.msra.mxu0 %v3844
    %5216 = vmatprep.subr.bf16.mxu0 %v3849
    %5217 = vmatpush1.bf16.msra.mxu0 %v3848
    %5218 = vmatprep.mubr.bf16.mxu0 %v1022
    %5219 = vmatmul.mubr.bf16.gmra.mrb[0].mxu0 %v1008
    %v5220 = vpop.f32.mrb[0].mxu0
    %v5221 = vadd.f32 %v5180, %v5220
    %v5222 = vpop.f32.mrb[0].mxu0
    %v5223 = vadd.f32 %v5182, %v5222
    %v5224 = vpop.f32.mrb[0].mxu0
    %v5225 = vpop.f32.mrb[0].mxu0
    %5226 = vdwg.mxu0
    %5227 = vmatprep.subr.bf16.mxu0 %v3853
    %5228 = vmatpush1.bf16.msra.mxu0 %v3852
    %5229 = vmatprep.subr.bf16.mxu0 %v3857
    %5230 = vmatpush1.bf16.msra.mxu0 %v3856
    %5231 = vmatprep.subr.bf16.mxu0 %v3861
    %5232 = vmatpush1.bf16.msra.mxu0 %v3860
    %5233 = vmatprep.subr.bf16.mxu0 %v3865
    %5234 = vmatpush1.bf16.msra.mxu0 %v3864
    %5235 = vmatprep.subr.bf16.mxu0 %v3869
    %5236 = vmatpush1.bf16.msra.mxu0 %v3868
    %5237 = vmatprep.subr.bf16.mxu0 %v3873
    %5238 = vmatpush1.bf16.msra.mxu0 %v3872
    %5239 = vmatprep.subr.bf16.mxu0 %v3877
    %5240 = vmatpush1.bf16.msra.mxu0 %v3876
    %5241 = vmatprep.subr.bf16.mxu0 %v3881
    %5242 = vmatpush1.bf16.msra.mxu0 %v3880
    %5243 = vmatprep.subr.bf16.mxu0 %v3885
    %5244 = vmatpush1.bf16.msra.mxu0 %v3884
    %5245 = vmatprep.subr.bf16.mxu0 %v3889
    %5246 = vmatpush1.bf16.msra.mxu0 %v3888
    %5247 = vmatprep.subr.bf16.mxu0 %v3893
    %5248 = vmatpush1.bf16.msra.mxu0 %v3892
    %5249 = vmatprep.subr.bf16.mxu0 %v3897
    %5250 = vmatpush1.bf16.msra.mxu0 %v3896
    %5251 = vmatprep.subr.bf16.mxu0 %v3901
    %5252 = vmatpush1.bf16.msra.mxu0 %v3900
    %5253 = vmatprep.subr.bf16.mxu0 %v3905
    %5254 = vmatpush1.bf16.msra.mxu0 %v3904
    %5255 = vmatprep.subr.bf16.mxu0 %v3909
    %5256 = vmatpush1.bf16.msra.mxu0 %v3908
    %5257 = vmatprep.subr.bf16.mxu0 %v3913
    %5258 = vmatpush1.bf16.msra.mxu0 %v3912
    %5259 = vmatprep.mubr.bf16.mxu0 %v1026
    %5260 = vmatmul.mubr.bf16.gmra.mrb[0].mxu0 %v1024
    %v5261 = vpop.f32.mrb[0].mxu0
    %v5262 = vadd.f32 %v5221, %v5261
    %v5263 = vpop.f32.mrb[0].mxu0
    %v5264 = vadd.f32 %v5223, %v5263
    %v5265 = vpop.f32.mrb[0].mxu0
    %v5266 = vpop.f32.mrb[0].mxu0
    %5267 = vdwg.mxu0
    %5268 = vmatprep.subr.bf16.mxu0 %v3917
    %5269 = vmatpush1.bf16.msra.mxu0 %v3916
    %5270 = vmatprep.subr.bf16.mxu0 %v3921
    %5271 = vmatpush1.bf16.msra.mxu0 %v3920
    %5272 = vmatprep.subr.bf16.mxu0 %v3925
    %5273 = vmatpush1.bf16.msra.mxu0 %v3924
    %5274 = vmatprep.subr.bf16.mxu0 %v3929
    %5275 = vmatpush1.bf16.msra.mxu0 %v3928
    %5276 = vmatprep.subr.bf16.mxu0 %v3933
    %5277 = vmatpush1.bf16.msra.mxu0 %v3932
    %5278 = vmatprep.subr.bf16.mxu0 %v3937
    %5279 = vmatpush1.bf16.msra.mxu0 %v3936
    %5280 = vmatprep.subr.bf16.mxu0 %v3941
    %5281 = vmatpush1.bf16.msra.mxu0 %v3940
    %5282 = vmatprep.subr.bf16.mxu0 %v3945
    %5283 = vmatpush1.bf16.msra.mxu0 %v3944
    %5284 = vmatprep.subr.bf16.mxu0 %v3949
    %5285 = vmatpush1.bf16.msra.mxu0 %v3948
    %5286 = vmatprep.subr.bf16.mxu0 %v3953
    %5287 = vmatpush1.bf16.msra.mxu0 %v3952
    %5288 = vmatprep.subr.bf16.mxu0 %v3957
    %5289 = vmatpush1.bf16.msra.mxu0 %v3956
    %5290 = vmatprep.subr.bf16.mxu0 %v3961
    %5291 = vmatpush1.bf16.msra.mxu0 %v3960
    %5292 = vmatprep.subr.bf16.mxu0 %v3965
    %5293 = vmatpush1.bf16.msra.mxu0 %v3964
    %5294 = vmatprep.subr.bf16.mxu0 %v3969
    %5295 = vmatpush1.bf16.msra.mxu0 %v3968
    %5296 = vmatprep.subr.bf16.mxu0 %v3973
    %5297 = vmatpush1.bf16.msra.mxu0 %v3972
    %5298 = vmatprep.subr.bf16.mxu0 %v3977
    %5299 = vmatpush1.bf16.msra.mxu0 %v3976
    %5300 = vmatprep.mubr.bf16.mxu0 %v1064
    %5301 = vmatmul.mubr.bf16.gmra.mrb[0].mxu0 %v1050
    %v5302 = vpop.f32.mrb[0].mxu0
    %v5303 = vadd.f32 %v5262, %v5302
    %v5304 = vpop.f32.mrb[0].mxu0
    %v5305 = vadd.f32 %v5264, %v5304
    %v5306 = vpop.f32.mrb[0].mxu0
    %v5307 = vpop.f32.mrb[0].mxu0
    %5308 = vdwg.mxu0
    %5309 = vmatprep.subr.bf16.mxu0 %v3981
    %5310 = vmatpush1.bf16.msra.mxu0 %v3980
    %5311 = vmatprep.subr.bf16.mxu0 %v3985
    %5312 = vmatpush1.bf16.msra.mxu0 %v3984
    %5313 = vmatprep.subr.bf16.mxu0 %v3989
    %5314 = vmatpush1.bf16.msra.mxu0 %v3988
    %5315 = vmatprep.subr.bf16.mxu0 %v3993
    %5316 = vmatpush1.bf16.msra.mxu0 %v3992
    %5317 = vmatprep.subr.bf16.mxu0 %v3997
    %5318 = vmatpush1.bf16.msra.mxu0 %v3996
    %5319 = vmatprep.subr.bf16.mxu0 %v4001
    %5320 = vmatpush1.bf16.msra.mxu0 %v4000
    %5321 = vmatprep.subr.bf16.mxu0 %v4005
    %5322 = vmatpush1.bf16.msra.mxu0 %v4004
    %5323 = vmatprep.subr.bf16.mxu0 %v4009
    %5324 = vmatpush1.bf16.msra.mxu0 %v4008
    %5325 = vmatprep.subr.bf16.mxu0 %v4013
    %5326 = vmatpush1.bf16.msra.mxu0 %v4012
    %5327 = vmatprep.subr.bf16.mxu0 %v4017
    %5328 = vmatpush1.bf16.msra.mxu0 %v4016
    %5329 = vmatprep.subr.bf16.mxu0 %v4021
    %5330 = vmatpush1.bf16.msra.mxu0 %v4020
    %5331 = vmatprep.subr.bf16.mxu0 %v4025
    %5332 = vmatpush1.bf16.msra.mxu0 %v4024
    %5333 = vmatprep.subr.bf16.mxu0 %v4029
    %5334 = vmatpush1.bf16.msra.mxu0 %v4028
    %5335 = vmatprep.subr.bf16.mxu0 %v4033
    %5336 = vmatpush1.bf16.msra.mxu0 %v4032
    %5337 = vmatprep.subr.bf16.mxu0 %v4037
    %5338 = vmatpush1.bf16.msra.mxu0 %v4036
    %5339 = vmatprep.subr.bf16.mxu0 %v4041
    %5340 = vmatpush1.bf16.msra.mxu0 %v4040
    %5341 = vmatprep.mubr.bf16.mxu0 %v1074
    %5342 = vmatmul.mubr.bf16.gmra.mrb[0].mxu0 %v1072
    %v5343 = vpop.f32.mrb[0].mxu0
    %v5344 = vadd.f32 %v5303, %v5343
    %v5345 = vpop.f32.mrb[0].mxu0
    %v5346 = vadd.f32 %v5305, %v5345
    %v5347 = vpop.f32.mrb[0].mxu0
    %v5348 = vpop.f32.mrb[0].mxu0
    %5349 = vdwg.mxu0
    %5350 = vmatprep.subr.bf16.mxu0 %v4045
    %5351 = vmatpush1.bf16.msra.mxu0 %v4044
    %5352 = vmatprep.subr.bf16.mxu0 %v4049
    %5353 = vmatpush1.bf16.msra.mxu0 %v4048
    %5354 = vmatprep.subr.bf16.mxu0 %v4053
    %5355 = vmatpush1.bf16.msra.mxu0 %v4052
    %5356 = vmatprep.subr.bf16.mxu0 %v4057
    %5357 = vmatpush1.bf16.msra.mxu0 %v4056
    %5358 = vmatprep.subr.bf16.mxu0 %v4061
    %5359 = vmatpush1.bf16.msra.mxu0 %v4060
    %5360 = vmatprep.subr.bf16.mxu0 %v4065
    %5361 = vmatpush1.bf16.msra.mxu0 %v4064
    %5362 = vmatprep.subr.bf16.mxu0 %v4069
    %5363 = vmatpush1.bf16.msra.mxu0 %v4068
    %5364 = vmatprep.subr.bf16.mxu0 %v4073
    %5365 = vmatpush1.bf16.msra.mxu0 %v4072
    %5366 = vmatprep.subr.bf16.mxu0 %v4077
    %5367 = vmatpush1.bf16.msra.mxu0 %v4076
    %5368 = vmatprep.subr.bf16.mxu0 %v4081
    %5369 = vmatpush1.bf16.msra.mxu0 %v4080
    %5370 = vmatprep.subr.bf16.mxu0 %v4085
    %5371 = vmatpush1.bf16.msra.mxu0 %v4084
    %5372 = vmatprep.subr.bf16.mxu0 %v4089
    %5373 = vmatpush1.bf16.msra.mxu0 %v4088
    %5374 = vmatprep.subr.bf16.mxu0 %v4093
    %5375 = vmatpush1.bf16.msra.mxu0 %v4092
    %5376 = vmatprep.subr.bf16.mxu0 %v4097
    %5377 = vmatpush1.bf16.msra.mxu0 %v4096
    %5378 = vmatprep.subr.bf16.mxu0 %v4101
    %5379 = vmatpush1.bf16.msra.mxu0 %v4100
    %5380 = vmatprep.subr.bf16.mxu0 %v4105
    %5381 = vmatpush1.bf16.msra.mxu0 %v4104
    %5382 = vmatprep.mubr.bf16.mxu0 %v1071
    %5383 = vmatmul.mubr.bf16.gmra.mrb[0].mxu0 %v1057
    %v5384 = vpop.f32.mrb[0].mxu0
    %v5385 = vadd.f32 %v5344, %v5384
    %v5386 = vpop.f32.mrb[0].mxu0
    %v5387 = vadd.f32 %v5346, %v5386
    %v5388 = vpop.f32.mrb[0].mxu0
    %v5389 = vpop.f32.mrb[0].mxu0
    %5390 = vdwg.mxu0
    %5391 = vmatprep.subr.bf16.mxu0 %v4109
    %5392 = vmatpush1.bf16.msra.mxu0 %v4108
    %5393 = vmatprep.subr.bf16.mxu0 %v4113
    %5394 = vmatpush1.bf16.msra.mxu0 %v4112
    %5395 = vmatprep.subr.bf16.mxu0 %v4117
    %5396 = vmatpush1.bf16.msra.mxu0 %v4116
    %5397 = vmatprep.subr.bf16.mxu0 %v4121
    %5398 = vmatpush1.bf16.msra.mxu0 %v4120
    %5399 = vmatprep.subr.bf16.mxu0 %v4125
    %5400 = vmatpush1.bf16.msra.mxu0 %v4124
    %5401 = vmatprep.subr.bf16.mxu0 %v4129
    %5402 = vmatpush1.bf16.msra.mxu0 %v4128
    %5403 = vmatprep.subr.bf16.mxu0 %v4133
    %5404 = vmatpush1.bf16.msra.mxu0 %v4132
    %5405 = vmatprep.subr.bf16.mxu0 %v4137
    %5406 = vmatpush1.bf16.msra.mxu0 %v4136
    %5407 = vmatprep.subr.bf16.mxu0 %v4141
    %5408 = vmatpush1.bf16.msra.mxu0 %v4140
    %5409 = vmatprep.subr.bf16.mxu0 %v4145
    %5410 = vmatpush1.bf16.msra.mxu0 %v4144
    %5411 = vmatprep.subr.bf16.mxu0 %v4149
    %5412 = vmatpush1.bf16.msra.mxu0 %v4148
    %5413 = vmatprep.subr.bf16.mxu0 %v4153
    %5414 = vmatpush1.bf16.msra.mxu0 %v4152
    %5415 = vmatprep.subr.bf16.mxu0 %v4157
    %5416 = vmatpush1.bf16.msra.mxu0 %v4156
    %5417 = vmatprep.subr.bf16.mxu0 %v4161
    %5418 = vmatpush1.bf16.msra.mxu0 %v4160
    %5419 = vmatprep.subr.bf16.mxu0 %v4165
    %5420 = vmatpush1.bf16.msra.mxu0 %v4164
    %5421 = vmatprep.subr.bf16.mxu0 %v4169
    %5422 = vmatpush1.bf16.msra.mxu0 %v4168
    %5423 = vmatprep.mubr.bf16.mxu0 %v1075
    %5424 = vmatmul.mubr.bf16.gmra.mrb[0].mxu0 %v1073
    %v5425 = vpop.f32.mrb[0].mxu0
    %v5426 = vadd.f32 %v5385, %v5425
    %v5427 = vpop.f32.mrb[0].mxu0
    %v5428 = vadd.f32 %v5387, %v5427
    %v5429 = vpop.f32.mrb[0].mxu0
    %v5430 = vpop.f32.mrb[0].mxu0
    %5431 = vdwg.mxu0
    %5432 = vmatprep.subr.bf16.mxu0 %v3407
    %5433 = vmatpush1.bf16.msra.mxu0 %v3406
    %5434 = vmatprep.subr.bf16.mxu0 %v3411
    %5435 = vmatpush1.bf16.msra.mxu0 %v3410
    %5436 = vmatprep.subr.bf16.mxu0 %v3415
    %5437 = vmatpush1.bf16.msra.mxu0 %v3414
    %5438 = vmatprep.subr.bf16.mxu0 %v3419
    %5439 = vmatpush1.bf16.msra.mxu0 %v3418
    %5440 = vmatprep.subr.bf16.mxu0 %v3423
    %5441 = vmatpush1.bf16.msra.mxu0 %v3422
    %5442 = vmatprep.subr.bf16.mxu0 %v3427
    %5443 = vmatpush1.bf16.msra.mxu0 %v3426
    %5444 = vmatprep.subr.bf16.mxu0 %v3431
    %5445 = vmatpush1.bf16.msra.mxu0 %v3430
    %5446 = vmatprep.subr.bf16.mxu0 %v3435
    %5447 = vmatpush1.bf16.msra.mxu0 %v3434
    %5448 = vmatprep.subr.bf16.mxu0 %v3439
    %5449 = vmatpush1.bf16.msra.mxu0 %v3438
    %5450 = vmatprep.subr.bf16.mxu0 %v3443
    %5451 = vmatpush1.bf16.msra.mxu0 %v3442
    %5452 = vmatprep.subr.bf16.mxu0 %v3447
    %5453 = vmatpush1.bf16.msra.mxu0 %v3446
    %5454 = vmatprep.subr.bf16.mxu0 %v3451
    %5455 = vmatpush1.bf16.msra.mxu0 %v3450
    %5456 = vmatprep.subr.bf16.mxu0 %v3455
    %5457 = vmatpush1.bf16.msra.mxu0 %v3454
    %5458 = vmatprep.subr.bf16.mxu0 %v3459
    %5459 = vmatpush1.bf16.msra.mxu0 %v3458
    %5460 = vmatprep.subr.bf16.mxu0 %v3463
    %5461 = vmatpush1.bf16.msra.mxu0 %v3462
    %5462 = vmatprep.subr.bf16.mxu0 %v3467
    %5463 = vmatpush1.bf16.msra.mxu0 %v3466
    %5464 = vmatprep.mubr.bf16.mxu0 %v966
    %5465 = vmatmul.mubr.bf16.gmra.mrb[0].mxu0 %v952
    %v5466 = vpop.f32.mrb[0].mxu0
    %v5467 = vadd.f32 %v917, %v5466
    %v5468 = vpop.f32.mrb[0].mxu0
    %v5469 = vadd.f32 %v921, %v5468
    %v5470 = vpop.f32.mrb[0].mxu0
    %v5471 = vpop.f32.mrb[0].mxu0
    %5472 = vdwg.mxu0
    %5473 = vmatprep.subr.bf16.mxu0 %v3471
    %5474 = vmatpush1.bf16.msra.mxu0 %v3470
    %5475 = vmatprep.subr.bf16.mxu0 %v3475
    %5476 = vmatpush1.bf16.msra.mxu0 %v3474
    %5477 = vmatprep.subr.bf16.mxu0 %v3479
    %5478 = vmatpush1.bf16.msra.mxu0 %v3478
    %5479 = vmatprep.subr.bf16.mxu0 %v3483
    %5480 = vmatpush1.bf16.msra.mxu0 %v3482
    %5481 = vmatprep.subr.bf16.mxu0 %v3487
    %5482 = vmatpush1.bf16.msra.mxu0 %v3486
    %5483 = vmatprep.subr.bf16.mxu0 %v3491
    %5484 = vmatpush1.bf16.msra.mxu0 %v3490
    %5485 = vmatprep.subr.bf16.mxu0 %v3495
    %5486 = vmatpush1.bf16.msra.mxu0 %v3494
    %5487 = vmatprep.subr.bf16.mxu0 %v3499
    %5488 = vmatpush1.bf16.msra.mxu0 %v3498
    %5489 = vmatprep.subr.bf16.mxu0 %v3503
    %5490 = vmatpush1.bf16.msra.mxu0 %v3502
    %5491 = vmatprep.subr.bf16.mxu0 %v3507
    %5492 = vmatpush1.bf16.msra.mxu0 %v3506
    %5493 = vmatprep.subr.bf16.mxu0 %v3511
    %5494 = vmatpush1.bf16.msra.mxu0 %v3510
    %5495 = vmatprep.subr.bf16.mxu0 %v3515
    %5496 = vmatpush1.bf16.msra.mxu0 %v3514
    %5497 = vmatprep.subr.bf16.mxu0 %v3519
    %5498 = vmatpush1.bf16.msra.mxu0 %v3518
    %5499 = vmatprep.subr.bf16.mxu0 %v3523
    %5500 = vmatpush1.bf16.msra.mxu0 %v3522
    %5501 = vmatprep.subr.bf16.mxu0 %v3527
    %5502 = vmatpush1.bf16.msra.mxu0 %v3526
    %5503 = vmatprep.subr.bf16.mxu0 %v3531
    %5504 = vmatpush1.bf16.msra.mxu0 %v3530
    %5505 = vmatprep.mubr.bf16.mxu0 %v976
    %5506 = vmatmul.mubr.bf16.gmra.mrb[0].mxu0 %v974
    %v5507 = vpop.f32.mrb[0].mxu0
    %v5508 = vadd.f32 %v5467, %v5507
    %v5509 = vpop.f32.mrb[0].mxu0
    %v5510 = vadd.f32 %v5469, %v5509
    %v5511 = vpop.f32.mrb[0].mxu0
    %v5512 = vpop.f32.mrb[0].mxu0
    %5513 = vdwg.mxu0
    %5514 = vmatprep.subr.bf16.mxu0 %v3535
    %5515 = vmatpush1.bf16.msra.mxu0 %v3534
    %5516 = vmatprep.subr.bf16.mxu0 %v3539
    %5517 = vmatpush1.bf16.msra.mxu0 %v3538
    %5518 = vmatprep.subr.bf16.mxu0 %v3543
    %5519 = vmatpush1.bf16.msra.mxu0 %v3542
    %5520 = vmatprep.subr.bf16.mxu0 %v3547
    %5521 = vmatpush1.bf16.msra.mxu0 %v3546
    %5522 = vmatprep.subr.bf16.mxu0 %v3551
    %5523 = vmatpush1.bf16.msra.mxu0 %v3550
    %5524 = vmatprep.subr.bf16.mxu0 %v3555
    %5525 = vmatpush1.bf16.msra.mxu0 %v3554
    %5526 = vmatprep.subr.bf16.mxu0 %v3559
    %5527 = vmatpush1.bf16.msra.mxu0 %v3558
    %5528 = vmatprep.subr.bf16.mxu0 %v3563
    %5529 = vmatpush1.bf16.msra.mxu0 %v3562
    %5530 = vmatprep.subr.bf16.mxu0 %v3567
    %5531 = vmatpush1.bf16.msra.mxu0 %v3566
    %5532 = vmatprep.subr.bf16.mxu0 %v3571
    %5533 = vmatpush1.bf16.msra.mxu0 %v3570
    %5534 = vmatprep.subr.bf16.mxu0 %v3575
    %5535 = vmatpush1.bf16.msra.mxu0 %v3574
    %5536 = vmatprep.subr.bf16.mxu0 %v3579
    %5537 = vmatpush1.bf16.msra.mxu0 %v3578
    %5538 = vmatprep.subr.bf16.mxu0 %v3583
    %5539 = vmatpush1.bf16.msra.mxu0 %v3582
    %5540 = vmatprep.subr.bf16.mxu0 %v3587
    %5541 = vmatpush1.bf16.msra.mxu0 %v3586
    %5542 = vmatprep.subr.bf16.mxu0 %v3591
    %5543 = vmatpush1.bf16.msra.mxu0 %v3590
    %5544 = vmatprep.subr.bf16.mxu0 %v3595
    %5545 = vmatpush1.bf16.msra.mxu0 %v3594
    %5546 = vmatprep.mubr.bf16.mxu0 %v973
    %5547 = vmatmul.mubr.bf16.gmra.mrb[0].mxu0 %v959
    %v5548 = vpop.f32.mrb[0].mxu0
    %v5549 = vadd.f32 %v5508, %v5548
    %v5550 = vpop.f32.mrb[0].mxu0
    %v5551 = vadd.f32 %v5510, %v5550
    %v5552 = vpop.f32.mrb[0].mxu0
    %v5553 = vpop.f32.mrb[0].mxu0
    %5554 = vdwg.mxu0
    %5555 = vmatprep.subr.bf16.mxu0 %v3599
    %5556 = vmatpush1.bf16.msra.mxu0 %v3598
    %5557 = vmatprep.subr.bf16.mxu0 %v3603
    %5558 = vmatpush1.bf16.msra.mxu0 %v3602
    %5559 = vmatprep.subr.bf16.mxu0 %v3607
    %5560 = vmatpush1.bf16.msra.mxu0 %v3606
    %5561 = vmatprep.subr.bf16.mxu0 %v3611
    %5562 = vmatpush1.bf16.msra.mxu0 %v3610
    %5563 = vmatprep.subr.bf16.mxu0 %v3615
    %5564 = vmatpush1.bf16.msra.mxu0 %v3614
    %5565 = vmatprep.subr.bf16.mxu0 %v3619
    %5566 = vmatpush1.bf16.msra.mxu0 %v3618
    %5567 = vmatprep.subr.bf16.mxu0 %v3623
    %5568 = vmatpush1.bf16.msra.mxu0 %v3622
    %5569 = vmatprep.subr.bf16.mxu0 %v3627
    %5570 = vmatpush1.bf16.msra.mxu0 %v3626
    %5571 = vmatprep.subr.bf16.mxu0 %v3631
    %5572 = vmatpush1.bf16.msra.mxu0 %v3630
    %5573 = vmatprep.subr.bf16.mxu0 %v3635
    %5574 = vmatpush1.bf16.msra.mxu0 %v3634
    %5575 = vmatprep.subr.bf16.mxu0 %v3639
    %5576 = vmatpush1.bf16.msra.mxu0 %v3638
    %5577 = vmatprep.subr.bf16.mxu0 %v3643
    %5578 = vmatpush1.bf16.msra.mxu0 %v3642
    %5579 = vmatprep.subr.bf16.mxu0 %v3647
    %5580 = vmatpush1.bf16.msra.mxu0 %v3646
    %5581 = vmatprep.subr.bf16.mxu0 %v3651
    %5582 = vmatpush1.bf16.msra.mxu0 %v3650
    %5583 = vmatprep.subr.bf16.mxu0 %v3655
    %5584 = vmatpush1.bf16.msra.mxu0 %v3654
    %5585 = vmatprep.subr.bf16.mxu0 %v3659
    %5586 = vmatpush1.bf16.msra.mxu0 %v3658
    %5587 = vmatprep.mubr.bf16.mxu0 %v977
    %5588 = vmatmul.mubr.bf16.gmra.mrb[0].mxu0 %v975
    %v5589 = vpop.f32.mrb[0].mxu0
    %v5590 = vadd.f32 %v5549, %v5589
    %v5591 = vpop.f32.mrb[0].mxu0
    %v5592 = vadd.f32 %v5551, %v5591
    %v5593 = vpop.f32.mrb[0].mxu0
    %v5594 = vpop.f32.mrb[0].mxu0
    %5595 = vdwg.mxu0
    %5596 = vmatprep.subr.bf16.mxu0 %v3663
    %5597 = vmatpush1.bf16.msra.mxu0 %v3662
    %5598 = vmatprep.subr.bf16.mxu0 %v3667
    %5599 = vmatpush1.bf16.msra.mxu0 %v3666
    %5600 = vmatprep.subr.bf16.mxu0 %v3671
    %5601 = vmatpush1.bf16.msra.mxu0 %v3670
    %5602 = vmatprep.subr.bf16.mxu0 %v3675
    %5603 = vmatpush1.bf16.msra.mxu0 %v3674
    %5604 = vmatprep.subr.bf16.mxu0 %v3679
    %5605 = vmatpush1.bf16.msra.mxu0 %v3678
    %5606 = vmatprep.subr.bf16.mxu0 %v3683
    %5607 = vmatpush1.bf16.msra.mxu0 %v3682
    %5608 = vmatprep.subr.bf16.mxu0 %v3687
    %5609 = vmatpush1.bf16.msra.mxu0 %v3686
    %5610 = vmatprep.subr.bf16.mxu0 %v3691
    %5611 = vmatpush1.bf16.msra.mxu0 %v3690
    %5612 = vmatprep.subr.bf16.mxu0 %v3695
    %5613 = vmatpush1.bf16.msra.mxu0 %v3694
    %5614 = vmatprep.subr.bf16.mxu0 %v3699
    %5615 = vmatpush1.bf16.msra.mxu0 %v3698
    %5616 = vmatprep.subr.bf16.mxu0 %v3703
    %5617 = vmatpush1.bf16.msra.mxu0 %v3702
    %5618 = vmatprep.subr.bf16.mxu0 %v3707
    %5619 = vmatpush1.bf16.msra.mxu0 %v3706
    %5620 = vmatprep.subr.bf16.mxu0 %v3711
    %5621 = vmatpush1.bf16.msra.mxu0 %v3710
    %5622 = vmatprep.subr.bf16.mxu0 %v3715
    %5623 = vmatpush1.bf16.msra.mxu0 %v3714
    %5624 = vmatprep.subr.bf16.mxu0 %v3719
    %5625 = vmatpush1.bf16.msra.mxu0 %v3718
    %5626 = vmatprep.subr.bf16.mxu0 %v3723
    %5627 = vmatpush1.bf16.msra.mxu0 %v3722
    %5628 = vmatprep.mubr.bf16.mxu0 %v1015
    %5629 = vmatmul.mubr.bf16.gmra.mrb[0].mxu0 %v1001
    %v5630 = vpop.f32.mrb[0].mxu0
    %v5631 = vadd.f32 %v5590, %v5630
    %v5632 = vpop.f32.mrb[0].mxu0
    %v5633 = vadd.f32 %v5592, %v5632
    %v5634 = vpop.f32.mrb[0].mxu0
    %v5635 = vpop.f32.mrb[0].mxu0
    %5636 = vdwg.mxu0
    %5637 = vmatprep.subr.bf16.mxu0 %v3727
    %5638 = vmatpush1.bf16.msra.mxu0 %v3726
    %5639 = vmatprep.subr.bf16.mxu0 %v3731
    %5640 = vmatpush1.bf16.msra.mxu0 %v3730
    %5641 = vmatprep.subr.bf16.mxu0 %v3735
    %5642 = vmatpush1.bf16.msra.mxu0 %v3734
    %5643 = vmatprep.subr.bf16.mxu0 %v3739
    %5644 = vmatpush1.bf16.msra.mxu0 %v3738
    %5645 = vmatprep.subr.bf16.mxu0 %v3743
    %5646 = vmatpush1.bf16.msra.mxu0 %v3742
    %5647 = vmatprep.subr.bf16.mxu0 %v3747
    %5648 = vmatpush1.bf16.msra.mxu0 %v3746
    %5649 = vmatprep.subr.bf16.mxu0 %v3751
    %5650 = vmatpush1.bf16.msra.mxu0 %v3750
    %5651 = vmatprep.subr.bf16.mxu0 %v3755
    %5652 = vmatpush1.bf16.msra.mxu0 %v3754
    %5653 = vmatprep.subr.bf16.mxu0 %v3759
    %5654 = vmatpush1.bf16.msra.mxu0 %v3758
    %5655 = vmatprep.subr.bf16.mxu0 %v3763
    %5656 = vmatpush1.bf16.msra.mxu0 %v3762
    %5657 = vmatprep.subr.bf16.mxu0 %v3767
    %5658 = vmatpush1.bf16.msra.mxu0 %v3766
    %5659 = vmatprep.subr.bf16.mxu0 %v3771
    %5660 = vmatpush1.bf16.msra.mxu0 %v3770
    %5661 = vmatprep.subr.bf16.mxu0 %v3775
    %5662 = vmatpush1.bf16.msra.mxu0 %v3774
    %5663 = vmatprep.subr.bf16.mxu0 %v3779
    %5664 = vmatpush1.bf16.msra.mxu0 %v3778
    %5665 = vmatprep.subr.bf16.mxu0 %v3783
    %5666 = vmatpush1.bf16.msra.mxu0 %v3782
    %5667 = vmatprep.subr.bf16.mxu0 %v3787
    %5668 = vmatpush1.bf16.msra.mxu0 %v3786
    %5669 = vmatprep.mubr.bf16.mxu0 %v1025
    %5670 = vmatmul.mubr.bf16.gmra.mrb[0].mxu0 %v1023
    %v5671 = vpop.f32.mrb[0].mxu0
    %v5672 = vadd.f32 %v5631, %v5671
    %v5673 = vpop.f32.mrb[0].mxu0
    %v5674 = vadd.f32 %v5633, %v5673
    %v5675 = vpop.f32.mrb[0].mxu0
    %v5676 = vpop.f32.mrb[0].mxu0
    %5677 = vdwg.mxu0
    %5678 = vmatprep.subr.bf16.mxu0 %v3791
    %5679 = vmatpush1.bf16.msra.mxu0 %v3790
    %5680 = vmatprep.subr.bf16.mxu0 %v3795
    %5681 = vmatpush1.bf16.msra.mxu0 %v3794
    %5682 = vmatprep.subr.bf16.mxu0 %v3799
    %5683 = vmatpush1.bf16.msra.mxu0 %v3798
    %5684 = vmatprep.subr.bf16.mxu0 %v3803
    %5685 = vmatpush1.bf16.msra.mxu0 %v3802
    %5686 = vmatprep.subr.bf16.mxu0 %v3807
    %5687 = vmatpush1.bf16.msra.mxu0 %v3806
    %5688 = vmatprep.subr.bf16.mxu0 %v3811
    %5689 = vmatpush1.bf16.msra.mxu0 %v3810
    %5690 = vmatprep.subr.bf16.mxu0 %v3815
    %5691 = vmatpush1.bf16.msra.mxu0 %v3814
    %5692 = vmatprep.subr.bf16.mxu0 %v3819
    %5693 = vmatpush1.bf16.msra.mxu0 %v3818
    %5694 = vmatprep.subr.bf16.mxu0 %v3823
    %5695 = vmatpush1.bf16.msra.mxu0 %v3822
    %5696 = vmatprep.subr.bf16.mxu0 %v3827
    %5697 = vmatpush1.bf16.msra.mxu0 %v3826
    %5698 = vmatprep.subr.bf16.mxu0 %v3831
    %5699 = vmatpush1.bf16.msra.mxu0 %v3830
    %5700 = vmatprep.subr.bf16.mxu0 %v3835
    %5701 = vmatpush1.bf16.msra.mxu0 %v3834
    %5702 = vmatprep.subr.bf16.mxu0 %v3839
    %5703 = vmatpush1.bf16.msra.mxu0 %v3838
    %5704 = vmatprep.subr.bf16.mxu0 %v3843
    %5705 = vmatpush1.bf16.msra.mxu0 %v3842
    %5706 = vmatprep.subr.bf16.mxu0 %v3847
    %5707 = vmatpush1.bf16.msra.mxu0 %v3846
    %5708 = vmatprep.subr.bf16.mxu0 %v3851
    %5709 = vmatpush1.bf16.msra.mxu0 %v3850
    %5710 = vmatprep.mubr.bf16.mxu0 %v1022
    %5711 = vmatmul.mubr.bf16.gmra.mrb[0].mxu0 %v1008
    %v5712 = vpop.f32.mrb[0].mxu0
    %v5713 = vadd.f32 %v5672, %v5712
    %v5714 = vpop.f32.mrb[0].mxu0
    %v5715 = vadd.f32 %v5674, %v5714
    %v5716 = vpop.f32.mrb[0].mxu0
    %v5717 = vpop.f32.mrb[0].mxu0
    %5718 = vdwg.mxu0
    %5719 = vmatprep.subr.bf16.mxu0 %v3855
    %5720 = vmatpush1.bf16.msra.mxu0 %v3854
    %5721 = vmatprep.subr.bf16.mxu0 %v3859
    %5722 = vmatpush1.bf16.msra.mxu0 %v3858
    %5723 = vmatprep.subr.bf16.mxu0 %v3863
    %5724 = vmatpush1.bf16.msra.mxu0 %v3862
    %5725 = vmatprep.subr.bf16.mxu0 %v3867
    %5726 = vmatpush1.bf16.msra.mxu0 %v3866
    %5727 = vmatprep.subr.bf16.mxu0 %v3871
    %5728 = vmatpush1.bf16.msra.mxu0 %v3870
    %5729 = vmatprep.subr.bf16.mxu0 %v3875
    %5730 = vmatpush1.bf16.msra.mxu0 %v3874
    %5731 = vmatprep.subr.bf16.mxu0 %v3879
    %5732 = vmatpush1.bf16.msra.mxu0 %v3878
    %5733 = vmatprep.subr.bf16.mxu0 %v3883
    %5734 = vmatpush1.bf16.msra.mxu0 %v3882
    %5735 = vmatprep.subr.bf16.mxu0 %v3887
    %5736 = vmatpush1.bf16.msra.mxu0 %v3886
    %5737 = vmatprep.subr.bf16.mxu0 %v3891
    %5738 = vmatpush1.bf16.msra.mxu0 %v3890
    %5739 = vmatprep.subr.bf16.mxu0 %v3895
    %5740 = vmatpush1.bf16.msra.mxu0 %v3894
    %5741 = vmatprep.subr.bf16.mxu0 %v3899
    %5742 = vmatpush1.bf16.msra.mxu0 %v3898
    %5743 = vmatprep.subr.bf16.mxu0 %v3903
    %5744 = vmatpush1.bf16.msra.mxu0 %v3902
    %5745 = vmatprep.subr.bf16.mxu0 %v3907
    %5746 = vmatpush1.bf16.msra.mxu0 %v3906
    %5747 = vmatprep.subr.bf16.mxu0 %v3911
    %5748 = vmatpush1.bf16.msra.mxu0 %v3910
    %5749 = vmatprep.subr.bf16.mxu0 %v3915
    %5750 = vmatpush1.bf16.msra.mxu0 %v3914
    %5751 = vmatprep.mubr.bf16.mxu0 %v1026
    %5752 = vmatmul.mubr.bf16.gmra.mrb[0].mxu0 %v1024
    %v5753 = vpop.f32.mrb[0].mxu0
    %v5754 = vadd.f32 %v5713, %v5753
    %v5755 = vpop.f32.mrb[0].mxu0
    %v5756 = vadd.f32 %v5715, %v5755
    %v5757 = vpop.f32.mrb[0].mxu0
    %v5758 = vpop.f32.mrb[0].mxu0
    %5759 = vdwg.mxu0
    %5760 = vmatprep.subr.bf16.mxu0 %v3919
    %5761 = vmatpush1.bf16.msra.mxu0 %v3918
    %5762 = vmatprep.subr.bf16.mxu0 %v3923
    %5763 = vmatpush1.bf16.msra.mxu0 %v3922
    %5764 = vmatprep.subr.bf16.mxu0 %v3927
    %5765 = vmatpush1.bf16.msra.mxu0 %v3926
    %5766 = vmatprep.subr.bf16.mxu0 %v3931
    %5767 = vmatpush1.bf16.msra.mxu0 %v3930
    %5768 = vmatprep.subr.bf16.mxu0 %v3935
    %5769 = vmatpush1.bf16.msra.mxu0 %v3934
    %5770 = vmatprep.subr.bf16.mxu0 %v3939
    %5771 = vmatpush1.bf16.msra.mxu0 %v3938
    %5772 = vmatprep.subr.bf16.mxu0 %v3943
    %5773 = vmatpush1.bf16.msra.mxu0 %v3942
    %5774 = vmatprep.subr.bf16.mxu0 %v3947
    %5775 = vmatpush1.bf16.msra.mxu0 %v3946
    %5776 = vmatprep.subr.bf16.mxu0 %v3951
    %5777 = vmatpush1.bf16.msra.mxu0 %v3950
    %5778 = vmatprep.subr.bf16.mxu0 %v3955
    %5779 = vmatpush1.bf16.msra.mxu0 %v3954
    %5780 = vmatprep.subr.bf16.mxu0 %v3959
    %5781 = vmatpush1.bf16.msra.mxu0 %v3958
    %5782 = vmatprep.subr.bf16.mxu0 %v3963
    %5783 = vmatpush1.bf16.msra.mxu0 %v3962
    %5784 = vmatprep.subr.bf16.mxu0 %v3967
    %5785 = vmatpush1.bf16.msra.mxu0 %v3966
    %5786 = vmatprep.subr.bf16.mxu0 %v3971
    %5787 = vmatpush1.bf16.msra.mxu0 %v3970
    %5788 = vmatprep.subr.bf16.mxu0 %v3975
    %5789 = vmatpush1.bf16.msra.mxu0 %v3974
    %5790 = vmatprep.subr.bf16.mxu0 %v3979
    %5791 = vmatpush1.bf16.msra.mxu0 %v3978
    %5792 = vmatprep.mubr.bf16.mxu0 %v1064
    %5793 = vmatmul.mubr.bf16.gmra.mrb[0].mxu0 %v1050
    %v5794 = vpop.f32.mrb[0].mxu0
    %v5795 = vadd.f32 %v5754, %v5794
    %v5796 = vpop.f32.mrb[0].mxu0
    %v5797 = vadd.f32 %v5756, %v5796
    %v5798 = vpop.f32.mrb[0].mxu0
    %v5799 = vpop.f32.mrb[0].mxu0
    %5800 = vdwg.mxu0
    %5801 = vmatprep.subr.bf16.mxu0 %v3983
    %5802 = vmatpush1.bf16.msra.mxu0 %v3982
    %5803 = vmatprep.subr.bf16.mxu0 %v3987
    %5804 = vmatpush1.bf16.msra.mxu0 %v3986
    %5805 = vmatprep.subr.bf16.mxu0 %v3991
    %5806 = vmatpush1.bf16.msra.mxu0 %v3990
    %5807 = vmatprep.subr.bf16.mxu0 %v3995
    %5808 = vmatpush1.bf16.msra.mxu0 %v3994
    %5809 = vmatprep.subr.bf16.mxu0 %v3999
    %5810 = vmatpush1.bf16.msra.mxu0 %v3998
    %5811 = vmatprep.subr.bf16.mxu0 %v4003
    %5812 = vmatpush1.bf16.msra.mxu0 %v4002
    %5813 = vmatprep.subr.bf16.mxu0 %v4007
    %5814 = vmatpush1.bf16.msra.mxu0 %v4006
    %5815 = vmatprep.subr.bf16.mxu0 %v4011
    %5816 = vmatpush1.bf16.msra.mxu0 %v4010
    %5817 = vmatprep.subr.bf16.mxu0 %v4015
    %5818 = vmatpush1.bf16.msra.mxu0 %v4014
    %5819 = vmatprep.subr.bf16.mxu0 %v4019
    %5820 = vmatpush1.bf16.msra.mxu0 %v4018
    %5821 = vmatprep.subr.bf16.mxu0 %v4023
    %5822 = vmatpush1.bf16.msra.mxu0 %v4022
    %5823 = vmatprep.subr.bf16.mxu0 %v4027
    %5824 = vmatpush1.bf16.msra.mxu0 %v4026
    %5825 = vmatprep.subr.bf16.mxu0 %v4031
    %5826 = vmatpush1.bf16.msra.mxu0 %v4030
    %5827 = vmatprep.subr.bf16.mxu0 %v4035
    %5828 = vmatpush1.bf16.msra.mxu0 %v4034
    %5829 = vmatprep.subr.bf16.mxu0 %v4039
    %5830 = vmatpush1.bf16.msra.mxu0 %v4038
    %5831 = vmatprep.subr.bf16.mxu0 %v4043
    %5832 = vmatpush1.bf16.msra.mxu0 %v4042
    %5833 = vmatprep.mubr.bf16.mxu0 %v1074
    %5834 = vmatmul.mubr.bf16.gmra.mrb[0].mxu0 %v1072
    %v5835 = vpop.f32.mrb[0].mxu0
    %v5836 = vadd.f32 %v5795, %v5835
    %v5837 = vpop.f32.mrb[0].mxu0
    %v5838 = vadd.f32 %v5797, %v5837
    %v5839 = vpop.f32.mrb[0].mxu0
    %v5840 = vpop.f32.mrb[0].mxu0
    %5841 = vdwg.mxu0
    %5842 = vmatprep.subr.bf16.mxu0 %v4047
    %5843 = vmatpush1.bf16.msra.mxu0 %v4046
    %5844 = vmatprep.subr.bf16.mxu0 %v4051
    %5845 = vmatpush1.bf16.msra.mxu0 %v4050
    %5846 = vmatprep.subr.bf16.mxu0 %v4055
    %5847 = vmatpush1.bf16.msra.mxu0 %v4054
    %5848 = vmatprep.subr.bf16.mxu0 %v4059
    %5849 = vmatpush1.bf16.msra.mxu0 %v4058
    %5850 = vmatprep.subr.bf16.mxu0 %v4063
    %5851 = vmatpush1.bf16.msra.mxu0 %v4062
    %5852 = vmatprep.subr.bf16.mxu0 %v4067
    %5853 = vmatpush1.bf16.msra.mxu0 %v4066
    %5854 = vmatprep.subr.bf16.mxu0 %v4071
    %5855 = vmatpush1.bf16.msra.mxu0 %v4070
    %5856 = vmatprep.subr.bf16.mxu0 %v4075
    %5857 = vmatpush1.bf16.msra.mxu0 %v4074
    %5858 = vmatprep.subr.bf16.mxu0 %v4079
    %5859 = vmatpush1.bf16.msra.mxu0 %v4078
    %5860 = vmatprep.subr.bf16.mxu0 %v4083
    %5861 = vmatpush1.bf16.msra.mxu0 %v4082
    %5862 = vmatprep.subr.bf16.mxu0 %v4087
    %5863 = vmatpush1.bf16.msra.mxu0 %v4086
    %5864 = vmatprep.subr.bf16.mxu0 %v4091
    %5865 = vmatpush1.bf16.msra.mxu0 %v4090
    %5866 = vmatprep.subr.bf16.mxu0 %v4095
    %5867 = vmatpush1.bf16.msra.mxu0 %v4094
    %5868 = vmatprep.subr.bf16.mxu0 %v4099
    %5869 = vmatpush1.bf16.msra.mxu0 %v4098
    %5870 = vmatprep.subr.bf16.mxu0 %v4103
    %5871 = vmatpush1.bf16.msra.mxu0 %v4102
    %5872 = vmatprep.subr.bf16.mxu0 %v4107
    %5873 = vmatpush1.bf16.msra.mxu0 %v4106
    %5874 = vmatprep.mubr.bf16.mxu0 %v1071
    %5875 = vmatmul.mubr.bf16.gmra.mrb[0].mxu0 %v1057
    %v5876 = vpop.f32.mrb[0].mxu0
    %v5877 = vadd.f32 %v5836, %v5876
    %v5878 = vpop.f32.mrb[0].mxu0
    %v5879 = vadd.f32 %v5838, %v5878
    %v5880 = vpop.f32.mrb[0].mxu0
    %v5881 = vpop.f32.mrb[0].mxu0
    %5882 = vdwg.mxu0
    %5883 = vmatprep.subr.bf16.mxu0 %v4111
    %5884 = vmatpush1.bf16.msra.mxu0 %v4110
    %5885 = vmatprep.subr.bf16.mxu0 %v4115
    %5886 = vmatpush1.bf16.msra.mxu0 %v4114
    %5887 = vmatprep.subr.bf16.mxu0 %v4119
    %5888 = vmatpush1.bf16.msra.mxu0 %v4118
    %5889 = vmatprep.subr.bf16.mxu0 %v4123
    %5890 = vmatpush1.bf16.msra.mxu0 %v4122
    %5891 = vmatprep.subr.bf16.mxu0 %v4127
    %5892 = vmatpush1.bf16.msra.mxu0 %v4126
    %5893 = vmatprep.subr.bf16.mxu0 %v4131
    %5894 = vmatpush1.bf16.msra.mxu0 %v4130
    %5895 = vmatprep.subr.bf16.mxu0 %v4135
    %5896 = vmatpush1.bf16.msra.mxu0 %v4134
    %5897 = vmatprep.subr.bf16.mxu0 %v4139
    %5898 = vmatpush1.bf16.msra.mxu0 %v4138
    %5899 = vmatprep.subr.bf16.mxu0 %v4143
    %5900 = vmatpush1.bf16.msra.mxu0 %v4142
    %5901 = vmatprep.subr.bf16.mxu0 %v4147
    %5902 = vmatpush1.bf16.msra.mxu0 %v4146
    %5903 = vmatprep.subr.bf16.mxu0 %v4151
    %5904 = vmatpush1.bf16.msra.mxu0 %v4150
    %5905 = vmatprep.subr.bf16.mxu0 %v4155
    %5906 = vmatpush1.bf16.msra.mxu0 %v4154
    %5907 = vmatprep.subr.bf16.mxu0 %v4159
    %5908 = vmatpush1.bf16.msra.mxu0 %v4158
    %5909 = vmatprep.subr.bf16.mxu0 %v4163
    %5910 = vmatpush1.bf16.msra.mxu0 %v4162
    %5911 = vmatprep.subr.bf16.mxu0 %v4167
    %5912 = vmatpush1.bf16.msra.mxu0 %v4166
    %5913 = vmatprep.subr.bf16.mxu0 %v4171
    %5914 = vmatpush1.bf16.msra.mxu0 %v4170
    %5915 = vmatprep.mubr.bf16.mxu0 %v1075
    %5916 = vmatmul.mubr.bf16.gmra.mrb[0].mxu0 %v1073
    %v5917 = vpop.f32.mrb[0].mxu0
    %v5918 = vadd.f32 %v5877, %v5917
    %v5919 = vpop.f32.mrb[0].mxu0
    %v5920 = vadd.f32 %v5879, %v5919
    %v5921 = vpop.f32.mrb[0].mxu0
    %v5922 = vpop.f32.mrb[0].mxu0
    %5923 = vdwg.mxu0
    %v5924 = vmax.f32 %v5426, 0.0
    %v5925 = vmax.f32 %v5428, 0.0
    %v5926 = vmax.f32 %v5918, 0.0
    %v5927 = vmax.f32 %v5920, 0.0
    %v5928 = vpack.c.bf16 %v5924, %v5924
    %v5929 = vpack.c.bf16 %v5925, %v5925
    %v5930 = vpack.c.bf16 %v5926, %v5926
    %v5931 = vpack.c.bf16 %v5927, %v5927
    %v5932 = vld [vmem:[#allocation6] sm:$0xff]
    %v5933 = vld [vmem:[#allocation6 + $0x8] sm:$0xff]
    %v5934 = vld [vmem:[#allocation6 + $0x10] sm:$0xff]
    %v5935 = vld [vmem:[#allocation6 + $0x18] sm:$0xff]
    %v5936 = vld [vmem:[#allocation6 + $0x20] sm:$0xff]
    %v5937 = vld [vmem:[#allocation6 + $0x28] sm:$0xff]
    %v5938 = vld [vmem:[#allocation6 + $0x30] sm:$0xff]
    %v5939 = vld [vmem:[#allocation6 + $0x38] sm:$0xff]
    %v5940 = vld [vmem:[#allocation6 + $0x40] sm:$0xff]
    %v5941 = vld [vmem:[#allocation6 + $0x48] sm:$0xff]
    %v5942 = vld [vmem:[#allocation6 + $0x50] sm:$0xff]
    %v5943 = vld [vmem:[#allocation6 + $0x58] sm:$0xff]
    %v5944 = vld [vmem:[#allocation6 + $0x60] sm:$0xff]
    %v5945 = vld [vmem:[#allocation6 + $0x68] sm:$0xff]
    %v5946 = vld [vmem:[#allocation6 + $0x70] sm:$0xff]
    %v5947 = vld [vmem:[#allocation6 + $0x78] sm:$0xff]
    %v5948 = vld [vmem:[#allocation6 + $0x80] sm:$0xff]
    %v5949 = vld [vmem:[#allocation6 + $0x88] sm:$0xff]
    %v5950 = vld [vmem:[#allocation6 + $0x90] sm:$0xff]
    %v5951 = vld [vmem:[#allocation6 + $0x98] sm:$0xff]
    %v5952 = vld [vmem:[#allocation6 + $0xa0] sm:$0xff]
    %v5953 = vld [vmem:[#allocation6 + $0xa8] sm:$0xff]
    %v5954 = vld [vmem:[#allocation6 + $0xb0] sm:$0xff]
    %v5955 = vld [vmem:[#allocation6 + $0xb8] sm:$0xff]
    %v5956 = vld [vmem:[#allocation6 + $0xc0] sm:$0xff]
    %v5957 = vld [vmem:[#allocation6 + $0xc8] sm:$0xff]
    %v5958 = vld [vmem:[#allocation6 + $0xd0] sm:$0xff]
    %v5959 = vld [vmem:[#allocation6 + $0xd8] sm:$0xff]
    %v5960 = vld [vmem:[#allocation6 + $0xe0] sm:$0xff]
    %v5961 = vld [vmem:[#allocation6 + $0xe8] sm:$0xff]
    %v5962 = vld [vmem:[#allocation6 + $0xf0] sm:$0xff]
    %v5963 = vld [vmem:[#allocation6 + $0xf8] sm:$0xff]
    %v5964 = vld [vmem:[#allocation6 + $0x100] sm:$0xff]
    %v5965 = vld [vmem:[#allocation6 + $0x108] sm:$0xff]
    %v5966 = vld [vmem:[#allocation6 + $0x110] sm:$0xff]
    %v5967 = vld [vmem:[#allocation6 + $0x118] sm:$0xff]
    %v5968 = vld [vmem:[#allocation6 + $0x120] sm:$0xff]
    %v5969 = vld [vmem:[#allocation6 + $0x128] sm:$0xff]
    %v5970 = vld [vmem:[#allocation6 + $0x130] sm:$0xff]
    %v5971 = vld [vmem:[#allocation6 + $0x138] sm:$0xff]
    %v5972 = vld [vmem:[#allocation6 + $0x140] sm:$0xff]
    %v5973 = vld [vmem:[#allocation6 + $0x148] sm:$0xff]
    %v5974 = vld [vmem:[#allocation6 + $0x150] sm:$0xff]
    %v5975 = vld [vmem:[#allocation6 + $0x158] sm:$0xff]
    %v5976 = vld [vmem:[#allocation6 + $0x160] sm:$0xff]
    %v5977 = vld [vmem:[#allocation6 + $0x168] sm:$0xff]
    %v5978 = vld [vmem:[#allocation6 + $0x170] sm:$0xff]
    %v5979 = vld [vmem:[#allocation6 + $0x178] sm:$0xff]
    %v5980 = vld [vmem:[#allocation6 + $0x180] sm:$0xff]
    %v5981 = vld [vmem:[#allocation6 + $0x188] sm:$0xff]
    %v5982 = vld [vmem:[#allocation6 + $0x190] sm:$0xff]
    %v5983 = vld [vmem:[#allocation6 + $0x198] sm:$0xff]
    %v5984 = vld [vmem:[#allocation6 + $0x1a0] sm:$0xff]
    %v5985 = vld [vmem:[#allocation6 + $0x1a8] sm:$0xff]
    %v5986 = vld [vmem:[#allocation6 + $0x1b0] sm:$0xff]
    %v5987 = vld [vmem:[#allocation6 + $0x1b8] sm:$0xff]
    %v5988 = vld [vmem:[#allocation6 + $0x1c0] sm:$0xff]
    %v5989 = vld [vmem:[#allocation6 + $0x1c8] sm:$0xff]
    %v5990 = vld [vmem:[#allocation6 + $0x1d0] sm:$0xff]
    %v5991 = vld [vmem:[#allocation6 + $0x1d8] sm:$0xff]
    %v5992 = vld [vmem:[#allocation6 + $0x1e0] sm:$0xff]
    %v5993 = vld [vmem:[#allocation6 + $0x1e8] sm:$0xff]
    %v5994 = vld [vmem:[#allocation6 + $0x1f0] sm:$0xff]
    %v5995 = vld [vmem:[#allocation6 + $0x1f8] sm:$0xff]
    %v5996 = vld [vmem:[#allocation6 + $0x200] sm:$0xff]
    %v5997 = vld [vmem:[#allocation6 + $0x208] sm:$0xff]
    %v5998 = vld [vmem:[#allocation6 + $0x210] sm:$0xff]
    %v5999 = vld [vmem:[#allocation6 + $0x218] sm:$0xff]
    %v6000 = vld [vmem:[#allocation6 + $0x220] sm:$0xff]
    %v6001 = vld [vmem:[#allocation6 + $0x228] sm:$0xff]
    %v6002 = vld [vmem:[#allocation6 + $0x230] sm:$0xff]
    %v6003 = vld [vmem:[#allocation6 + $0x238] sm:$0xff]
    %v6004 = vld [vmem:[#allocation6 + $0x240] sm:$0xff]
    %v6005 = vld [vmem:[#allocation6 + $0x248] sm:$0xff]
    %v6006 = vld [vmem:[#allocation6 + $0x250] sm:$0xff]
    %v6007 = vld [vmem:[#allocation6 + $0x258] sm:$0xff]
    %v6008 = vld [vmem:[#allocation6 + $0x260] sm:$0xff]
    %v6009 = vld [vmem:[#allocation6 + $0x268] sm:$0xff]
    %v6010 = vld [vmem:[#allocation6 + $0x270] sm:$0xff]
    %v6011 = vld [vmem:[#allocation6 + $0x278] sm:$0xff]
    %v6012 = vld [vmem:[#allocation6 + $0x280] sm:$0xff]
    %v6013 = vld [vmem:[#allocation6 + $0x288] sm:$0xff]
    %v6014 = vld [vmem:[#allocation6 + $0x290] sm:$0xff]
    %v6015 = vld [vmem:[#allocation6 + $0x298] sm:$0xff]
    %v6016 = vld [vmem:[#allocation6 + $0x2a0] sm:$0xff]
    %v6017 = vld [vmem:[#allocation6 + $0x2a8] sm:$0xff]
    %v6018 = vld [vmem:[#allocation6 + $0x2b0] sm:$0xff]
    %v6019 = vld [vmem:[#allocation6 + $0x2b8] sm:$0xff]
    %v6020 = vld [vmem:[#allocation6 + $0x2c0] sm:$0xff]
    %v6021 = vld [vmem:[#allocation6 + $0x2c8] sm:$0xff]
    %v6022 = vld [vmem:[#allocation6 + $0x2d0] sm:$0xff]
    %v6023 = vld [vmem:[#allocation6 + $0x2d8] sm:$0xff]
    %v6024 = vld [vmem:[#allocation6 + $0x2e0] sm:$0xff]
    %v6025 = vld [vmem:[#allocation6 + $0x2e8] sm:$0xff]
    %v6026 = vld [vmem:[#allocation6 + $0x2f0] sm:$0xff]
    %v6027 = vld [vmem:[#allocation6 + $0x2f8] sm:$0xff]
    %v6028 = vld [vmem:[#allocation6 + $0x300] sm:$0xff]
    %v6029 = vld [vmem:[#allocation6 + $0x308] sm:$0xff]
    %v6030 = vld [vmem:[#allocation6 + $0x310] sm:$0xff]
    %v6031 = vld [vmem:[#allocation6 + $0x318] sm:$0xff]
    %v6032 = vld [vmem:[#allocation6 + $0x320] sm:$0xff]
    %v6033 = vld [vmem:[#allocation6 + $0x328] sm:$0xff]
    %v6034 = vld [vmem:[#allocation6 + $0x330] sm:$0xff]
    %v6035 = vld [vmem:[#allocation6 + $0x338] sm:$0xff]
    %v6036 = vld [vmem:[#allocation6 + $0x340] sm:$0xff]
    %v6037 = vld [vmem:[#allocation6 + $0x348] sm:$0xff]
    %v6038 = vld [vmem:[#allocation6 + $0x350] sm:$0xff]
    %v6039 = vld [vmem:[#allocation6 + $0x358] sm:$0xff]
    %v6040 = vld [vmem:[#allocation6 + $0x360] sm:$0xff]
    %v6041 = vld [vmem:[#allocation6 + $0x368] sm:$0xff]
    %v6042 = vld [vmem:[#allocation6 + $0x370] sm:$0xff]
    %v6043 = vld [vmem:[#allocation6 + $0x378] sm:$0xff]
    %v6044 = vld [vmem:[#allocation6 + $0x380] sm:$0xff]
    %v6045 = vld [vmem:[#allocation6 + $0x388] sm:$0xff]
    %v6046 = vld [vmem:[#allocation6 + $0x390] sm:$0xff]
    %v6047 = vld [vmem:[#allocation6 + $0x398] sm:$0xff]
    %v6048 = vld [vmem:[#allocation6 + $0x3a0] sm:$0xff]
    %v6049 = vld [vmem:[#allocation6 + $0x3a8] sm:$0xff]
    %v6050 = vld [vmem:[#allocation6 + $0x3b0] sm:$0xff]
    %v6051 = vld [vmem:[#allocation6 + $0x3b8] sm:$0xff]
    %v6052 = vld [vmem:[#allocation6 + $0x3c0] sm:$0xff]
    %v6053 = vld [vmem:[#allocation6 + $0x3c8] sm:$0xff]
    %v6054 = vld [vmem:[#allocation6 + $0x3d0] sm:$0xff]
    %v6055 = vld [vmem:[#allocation6 + $0x3d8] sm:$0xff]
    %v6056 = vld [vmem:[#allocation6 + $0x3e0] sm:$0xff]
    %v6057 = vld [vmem:[#allocation6 + $0x3e8] sm:$0xff]
    %v6058 = vld [vmem:[#allocation6 + $0x3f0] sm:$0xff]
    %v6059 = vld [vmem:[#allocation6 + $0x3f8] sm:$0xff]
    %v6060 = vld [vmem:[#allocation7] sm:$0xf]
    %v6062 = vlaneseq
    %v6063 = vshrl.u32 %v6062, 7
    %v6064 = vsub.s32 0, %v6063
    %v6065 = vrot.slane %v6060, %v6064
    %v6066 = vlaneseq
    %v6067 = vshrl.u32 %v6066, 7
    %v6068 = vsub.s32 1, %v6067
    %v6069 = vrot.slane %v6060, %v6068
    %v6070 = vlaneseq
    %v6071 = vshrl.u32 %v6070, 7
    %v6072 = vsub.s32 2, %v6071
    %v6073 = vrot.slane %v6060, %v6072
    %v6074 = vlaneseq
    %v6075 = vshrl.u32 %v6074, 7
    %v6076 = vsub.s32 3, %v6075
    %v6077 = vrot.slane %v6060, %v6076
    %v6210 = vunpack.c.l.b16 %v5932
    %v6211 = vunpack.c.h.b16 %v5932
    %v6212 = vunpack.c.l.b16 %v5933
    %v6213 = vunpack.c.h.b16 %v5933
    %v6214 = vunpack.c.l.b16 %v5934
    %v6215 = vunpack.c.h.b16 %v5934
    %v6216 = vunpack.c.l.b16 %v5935
    %v6217 = vunpack.c.h.b16 %v5935
    %v6218 = vunpack.c.l.b16 %v5936
    %v6219 = vunpack.c.h.b16 %v5936
    %v6220 = vunpack.c.l.b16 %v5937
    %v6221 = vunpack.c.h.b16 %v5937
    %v6222 = vunpack.c.l.b16 %v5938
    %v6223 = vunpack.c.h.b16 %v5938
    %v6224 = vunpack.c.l.b16 %v5939
    %v6225 = vunpack.c.h.b16 %v5939
    %v6226 = vunpack.c.l.b16 %v5940
    %v6227 = vunpack.c.h.b16 %v5940
    %v6228 = vunpack.c.l.b16 %v5941
    %v6229 = vunpack.c.h.b16 %v5941
    %v6230 = vunpack.c.l.b16 %v5942
    %v6231 = vunpack.c.h.b16 %v5942
    %v6232 = vunpack.c.l.b16 %v5943
    %v6233 = vunpack.c.h.b16 %v5943
    %v6234 = vunpack.c.l.b16 %v5944
    %v6235 = vunpack.c.h.b16 %v5944
    %v6236 = vunpack.c.l.b16 %v5945
    %v6237 = vunpack.c.h.b16 %v5945
    %v6238 = vunpack.c.l.b16 %v5946
    %v6239 = vunpack.c.h.b16 %v5946
    %v6240 = vunpack.c.l.b16 %v5947
    %v6241 = vunpack.c.h.b16 %v5947
    %v6242 = vunpack.c.l.b16 %v5948
    %v6243 = vunpack.c.h.b16 %v5948
    %v6244 = vunpack.c.l.b16 %v5949
    %v6245 = vunpack.c.h.b16 %v5949
    %v6246 = vunpack.c.l.b16 %v5950
    %v6247 = vunpack.c.h.b16 %v5950
    %v6248 = vunpack.c.l.b16 %v5951
    %v6249 = vunpack.c.h.b16 %v5951
    %v6250 = vunpack.c.l.b16 %v5952
    %v6251 = vunpack.c.h.b16 %v5952
    %v6252 = vunpack.c.l.b16 %v5953
    %v6253 = vunpack.c.h.b16 %v5953
    %v6254 = vunpack.c.l.b16 %v5954
    %v6255 = vunpack.c.h.b16 %v5954
    %v6256 = vunpack.c.l.b16 %v5955
    %v6257 = vunpack.c.h.b16 %v5955
    %v6258 = vunpack.c.l.b16 %v5956
    %v6259 = vunpack.c.h.b16 %v5956
    %v6260 = vunpack.c.l.b16 %v5957
    %v6261 = vunpack.c.h.b16 %v5957
    %v6262 = vunpack.c.l.b16 %v5958
    %v6263 = vunpack.c.h.b16 %v5958
    %v6264 = vunpack.c.l.b16 %v5959
    %v6265 = vunpack.c.h.b16 %v5959
    %v6266 = vunpack.c.l.b16 %v5960
    %v6267 = vunpack.c.h.b16 %v5960
    %v6268 = vunpack.c.l.b16 %v5961
    %v6269 = vunpack.c.h.b16 %v5961
    %v6270 = vunpack.c.l.b16 %v5962
    %v6271 = vunpack.c.h.b16 %v5962
    %v6272 = vunpack.c.l.b16 %v5963
    %v6273 = vunpack.c.h.b16 %v5963
    %v6274 = vunpack.c.l.b16 %v5964
    %v6275 = vunpack.c.h.b16 %v5964
    %v6276 = vunpack.c.l.b16 %v5965
    %v6277 = vunpack.c.h.b16 %v5965
    %v6278 = vunpack.c.l.b16 %v5966
    %v6279 = vunpack.c.h.b16 %v5966
    %v6280 = vunpack.c.l.b16 %v5967
    %v6281 = vunpack.c.h.b16 %v5967
    %v6282 = vunpack.c.l.b16 %v5968
    %v6283 = vunpack.c.h.b16 %v5968
    %v6284 = vunpack.c.l.b16 %v5969
    %v6285 = vunpack.c.h.b16 %v5969
    %v6286 = vunpack.c.l.b16 %v5970
    %v6287 = vunpack.c.h.b16 %v5970
    %v6288 = vunpack.c.l.b16 %v5971
    %v6289 = vunpack.c.h.b16 %v5971
    %v6290 = vunpack.c.l.b16 %v5972
    %v6291 = vunpack.c.h.b16 %v5972
    %v6292 = vunpack.c.l.b16 %v5973
    %v6293 = vunpack.c.h.b16 %v5973
    %v6294 = vunpack.c.l.b16 %v5974
    %v6295 = vunpack.c.h.b16 %v5974
    %v6296 = vunpack.c.l.b16 %v5975
    %v6297 = vunpack.c.h.b16 %v5975
    %v6298 = vunpack.c.l.b16 %v5976
    %v6299 = vunpack.c.h.b16 %v5976
    %v6300 = vunpack.c.l.b16 %v5977
    %v6301 = vunpack.c.h.b16 %v5977
    %v6302 = vunpack.c.l.b16 %v5978
    %v6303 = vunpack.c.h.b16 %v5978
    %v6304 = vunpack.c.l.b16 %v5979
    %v6305 = vunpack.c.h.b16 %v5979
    %v6306 = vunpack.c.l.b16 %v5980
    %v6307 = vunpack.c.h.b16 %v5980
    %v6308 = vunpack.c.l.b16 %v5981
    %v6309 = vunpack.c.h.b16 %v5981
    %v6310 = vunpack.c.l.b16 %v5982
    %v6311 = vunpack.c.h.b16 %v5982
    %v6312 = vunpack.c.l.b16 %v5983
    %v6313 = vunpack.c.h.b16 %v5983
    %v6314 = vunpack.c.l.b16 %v5984
    %v6315 = vunpack.c.h.b16 %v5984
    %v6316 = vunpack.c.l.b16 %v5985
    %v6317 = vunpack.c.h.b16 %v5985
    %v6318 = vunpack.c.l.b16 %v5986
    %v6319 = vunpack.c.h.b16 %v5986
    %v6320 = vunpack.c.l.b16 %v5987
    %v6321 = vunpack.c.h.b16 %v5987
    %v6322 = vunpack.c.l.b16 %v5988
    %v6323 = vunpack.c.h.b16 %v5988
    %v6324 = vunpack.c.l.b16 %v5989
    %v6325 = vunpack.c.h.b16 %v5989
    %v6326 = vunpack.c.l.b16 %v5990
    %v6327 = vunpack.c.h.b16 %v5990
    %v6328 = vunpack.c.l.b16 %v5991
    %v6329 = vunpack.c.h.b16 %v5991
    %v6330 = vunpack.c.l.b16 %v5992
    %v6331 = vunpack.c.h.b16 %v5992
    %v6332 = vunpack.c.l.b16 %v5993
    %v6333 = vunpack.c.h.b16 %v5993
    %v6334 = vunpack.c.l.b16 %v5994
    %v6335 = vunpack.c.h.b16 %v5994
    %v6336 = vunpack.c.l.b16 %v5995
    %v6337 = vunpack.c.h.b16 %v5995
    %v6338 = vunpack.c.l.b16 %v5996
    %v6339 = vunpack.c.h.b16 %v5996
    %v6340 = vunpack.c.l.b16 %v5997
    %v6341 = vunpack.c.h.b16 %v5997
    %v6342 = vunpack.c.l.b16 %v5998
    %v6343 = vunpack.c.h.b16 %v5998
    %v6344 = vunpack.c.l.b16 %v5999
    %v6345 = vunpack.c.h.b16 %v5999
    %v6346 = vunpack.c.l.b16 %v6000
    %v6347 = vunpack.c.h.b16 %v6000
    %v6348 = vunpack.c.l.b16 %v6001
    %v6349 = vunpack.c.h.b16 %v6001
    %v6350 = vunpack.c.l.b16 %v6002
    %v6351 = vunpack.c.h.b16 %v6002
    %v6352 = vunpack.c.l.b16 %v6003
    %v6353 = vunpack.c.h.b16 %v6003
    %v6354 = vunpack.c.l.b16 %v6004
    %v6355 = vunpack.c.h.b16 %v6004
    %v6356 = vunpack.c.l.b16 %v6005
    %v6357 = vunpack.c.h.b16 %v6005
    %v6358 = vunpack.c.l.b16 %v6006
    %v6359 = vunpack.c.h.b16 %v6006
    %v6360 = vunpack.c.l.b16 %v6007
    %v6361 = vunpack.c.h.b16 %v6007
    %v6362 = vunpack.c.l.b16 %v6008
    %v6363 = vunpack.c.h.b16 %v6008
    %v6364 = vunpack.c.l.b16 %v6009
    %v6365 = vunpack.c.h.b16 %v6009
    %v6366 = vunpack.c.l.b16 %v6010
    %v6367 = vunpack.c.h.b16 %v6010
    %v6368 = vunpack.c.l.b16 %v6011
    %v6369 = vunpack.c.h.b16 %v6011
    %v6370 = vunpack.c.l.b16 %v6012
    %v6371 = vunpack.c.h.b16 %v6012
    %v6372 = vunpack.c.l.b16 %v6013
    %v6373 = vunpack.c.h.b16 %v6013
    %v6374 = vunpack.c.l.b16 %v6014
    %v6375 = vunpack.c.h.b16 %v6014
    %v6376 = vunpack.c.l.b16 %v6015
    %v6377 = vunpack.c.h.b16 %v6015
    %v6378 = vunpack.c.l.b16 %v6016
    %v6379 = vunpack.c.h.b16 %v6016
    %v6380 = vunpack.c.l.b16 %v6017
    %v6381 = vunpack.c.h.b16 %v6017
    %v6382 = vunpack.c.l.b16 %v6018
    %v6383 = vunpack.c.h.b16 %v6018
    %v6384 = vunpack.c.l.b16 %v6019
    %v6385 = vunpack.c.h.b16 %v6019
    %v6386 = vunpack.c.l.b16 %v6020
    %v6387 = vunpack.c.h.b16 %v6020
    %v6388 = vunpack.c.l.b16 %v6021
    %v6389 = vunpack.c.h.b16 %v6021
    %v6390 = vunpack.c.l.b16 %v6022
    %v6391 = vunpack.c.h.b16 %v6022
    %v6392 = vunpack.c.l.b16 %v6023
    %v6393 = vunpack.c.h.b16 %v6023
    %v6394 = vunpack.c.l.b16 %v6024
    %v6395 = vunpack.c.h.b16 %v6024
    %v6396 = vunpack.c.l.b16 %v6025
    %v6397 = vunpack.c.h.b16 %v6025
    %v6398 = vunpack.c.l.b16 %v6026
    %v6399 = vunpack.c.h.b16 %v6026
    %v6400 = vunpack.c.l.b16 %v6027
    %v6401 = vunpack.c.h.b16 %v6027
    %v6402 = vunpack.c.l.b16 %v6028
    %v6403 = vunpack.c.h.b16 %v6028
    %v6404 = vunpack.c.l.b16 %v6029
    %v6405 = vunpack.c.h.b16 %v6029
    %v6406 = vunpack.c.l.b16 %v6030
    %v6407 = vunpack.c.h.b16 %v6030
    %v6408 = vunpack.c.l.b16 %v6031
    %v6409 = vunpack.c.h.b16 %v6031
    %v6410 = vunpack.c.l.b16 %v6032
    %v6411 = vunpack.c.h.b16 %v6032
    %v6412 = vunpack.c.l.b16 %v6033
    %v6413 = vunpack.c.h.b16 %v6033
    %v6414 = vunpack.c.l.b16 %v6034
    %v6415 = vunpack.c.h.b16 %v6034
    %v6416 = vunpack.c.l.b16 %v6035
    %v6417 = vunpack.c.h.b16 %v6035
    %v6418 = vunpack.c.l.b16 %v6036
    %v6419 = vunpack.c.h.b16 %v6036
    %v6420 = vunpack.c.l.b16 %v6037
    %v6421 = vunpack.c.h.b16 %v6037
    %v6422 = vunpack.c.l.b16 %v6038
    %v6423 = vunpack.c.h.b16 %v6038
    %v6424 = vunpack.c.l.b16 %v6039
    %v6425 = vunpack.c.h.b16 %v6039
    %v6426 = vunpack.c.l.b16 %v6040
    %v6427 = vunpack.c.h.b16 %v6040
    %v6428 = vunpack.c.l.b16 %v6041
    %v6429 = vunpack.c.h.b16 %v6041
    %v6430 = vunpack.c.l.b16 %v6042
    %v6431 = vunpack.c.h.b16 %v6042
    %v6432 = vunpack.c.l.b16 %v6043
    %v6433 = vunpack.c.h.b16 %v6043
    %v6434 = vunpack.c.l.b16 %v6044
    %v6435 = vunpack.c.h.b16 %v6044
    %v6436 = vunpack.c.l.b16 %v6045
    %v6437 = vunpack.c.h.b16 %v6045
    %v6438 = vunpack.c.l.b16 %v6046
    %v6439 = vunpack.c.h.b16 %v6046
    %v6440 = vunpack.c.l.b16 %v6047
    %v6441 = vunpack.c.h.b16 %v6047
    %v6442 = vunpack.c.l.b16 %v6048
    %v6443 = vunpack.c.h.b16 %v6048
    %v6444 = vunpack.c.l.b16 %v6049
    %v6445 = vunpack.c.h.b16 %v6049
    %v6446 = vunpack.c.l.b16 %v6050
    %v6447 = vunpack.c.h.b16 %v6050
    %v6448 = vunpack.c.l.b16 %v6051
    %v6449 = vunpack.c.h.b16 %v6051
    %v6450 = vunpack.c.l.b16 %v6052
    %v6451 = vunpack.c.h.b16 %v6052
    %v6452 = vunpack.c.l.b16 %v6053
    %v6453 = vunpack.c.h.b16 %v6053
    %v6454 = vunpack.c.l.b16 %v6054
    %v6455 = vunpack.c.h.b16 %v6054
    %v6456 = vunpack.c.l.b16 %v6055
    %v6457 = vunpack.c.h.b16 %v6055
    %v6458 = vunpack.c.l.b16 %v6056
    %v6459 = vunpack.c.h.b16 %v6056
    %v6460 = vunpack.c.l.b16 %v6057
    %v6461 = vunpack.c.h.b16 %v6057
    %v6462 = vunpack.c.l.b16 %v6058
    %v6463 = vunpack.c.h.b16 %v6058
    %v6464 = vunpack.c.l.b16 %v6059
    %v6465 = vunpack.c.h.b16 %v6059
    %v6466 = vpack.c.b16 %v6214, %v6210
    %v6467 = vpack.c.b16 %v6215, %v6211
    %v6468 = vpack.c.b16 %v6216, %v6212
    %v6469 = vpack.c.b16 %v6217, %v6213
    %v6470 = vpack.c.b16 %v6222, %v6218
    %v6471 = vpack.c.b16 %v6223, %v6219
    %v6472 = vpack.c.b16 %v6224, %v6220
    %v6473 = vpack.c.b16 %v6225, %v6221
    %v6474 = vpack.c.b16 %v6230, %v6226
    %v6475 = vpack.c.b16 %v6231, %v6227
    %v6476 = vpack.c.b16 %v6232, %v6228
    %v6477 = vpack.c.b16 %v6233, %v6229
    %v6478 = vpack.c.b16 %v6238, %v6234
    %v6479 = vpack.c.b16 %v6239, %v6235
    %v6480 = vpack.c.b16 %v6240, %v6236
    %v6481 = vpack.c.b16 %v6241, %v6237
    %v6482 = vpack.c.b16 %v6246, %v6242
    %v6483 = vpack.c.b16 %v6247, %v6243
    %v6484 = vpack.c.b16 %v6248, %v6244
    %v6485 = vpack.c.b16 %v6249, %v6245
    %v6486 = vpack.c.b16 %v6254, %v6250
    %v6487 = vpack.c.b16 %v6255, %v6251
    %v6488 = vpack.c.b16 %v6256, %v6252
    %v6489 = vpack.c.b16 %v6257, %v6253
    %v6490 = vpack.c.b16 %v6262, %v6258
    %v6491 = vpack.c.b16 %v6263, %v6259
    %v6492 = vpack.c.b16 %v6264, %v6260
    %v6493 = vpack.c.b16 %v6265, %v6261
    %v6494 = vpack.c.b16 %v6270, %v6266
    %v6495 = vpack.c.b16 %v6271, %v6267
    %v6496 = vpack.c.b16 %v6272, %v6268
    %v6497 = vpack.c.b16 %v6273, %v6269
    %v6498 = vpack.c.b16 %v6278, %v6274
    %v6499 = vpack.c.b16 %v6279, %v6275
    %v6500 = vpack.c.b16 %v6280, %v6276
    %v6501 = vpack.c.b16 %v6281, %v6277
    %v6502 = vpack.c.b16 %v6286, %v6282
    %v6503 = vpack.c.b16 %v6287, %v6283
    %v6504 = vpack.c.b16 %v6288, %v6284
    %v6505 = vpack.c.b16 %v6289, %v6285
    %v6506 = vpack.c.b16 %v6294, %v6290
    %v6507 = vpack.c.b16 %v6295, %v6291
    %v6508 = vpack.c.b16 %v6296, %v6292
    %v6509 = vpack.c.b16 %v6297, %v6293
    %v6510 = vpack.c.b16 %v6302, %v6298
    %v6511 = vpack.c.b16 %v6303, %v6299
    %v6512 = vpack.c.b16 %v6304, %v6300
    %v6513 = vpack.c.b16 %v6305, %v6301
    %v6514 = vpack.c.b16 %v6310, %v6306
    %v6515 = vpack.c.b16 %v6311, %v6307
    %v6516 = vpack.c.b16 %v6312, %v6308
    %v6517 = vpack.c.b16 %v6313, %v6309
    %v6518 = vpack.c.b16 %v6318, %v6314
    %v6519 = vpack.c.b16 %v6319, %v6315
    %v6520 = vpack.c.b16 %v6320, %v6316
    %v6521 = vpack.c.b16 %v6321, %v6317
    %v6522 = vpack.c.b16 %v6326, %v6322
    %v6523 = vpack.c.b16 %v6327, %v6323
    %v6524 = vpack.c.b16 %v6328, %v6324
    %v6525 = vpack.c.b16 %v6329, %v6325
    %v6526 = vpack.c.b16 %v6334, %v6330
    %v6527 = vpack.c.b16 %v6335, %v6331
    %v6528 = vpack.c.b16 %v6336, %v6332
    %v6529 = vpack.c.b16 %v6337, %v6333
    %v6530 = vpack.c.b16 %v6342, %v6338
    %v6531 = vpack.c.b16 %v6343, %v6339
    %v6532 = vpack.c.b16 %v6344, %v6340
    %v6533 = vpack.c.b16 %v6345, %v6341
    %v6534 = vpack.c.b16 %v6350, %v6346
    %v6535 = vpack.c.b16 %v6351, %v6347
    %v6536 = vpack.c.b16 %v6352, %v6348
    %v6537 = vpack.c.b16 %v6353, %v6349
    %v6538 = vpack.c.b16 %v6358, %v6354
    %v6539 = vpack.c.b16 %v6359, %v6355
    %v6540 = vpack.c.b16 %v6360, %v6356
    %v6541 = vpack.c.b16 %v6361, %v6357
    %v6542 = vpack.c.b16 %v6366, %v6362
    %v6543 = vpack.c.b16 %v6367, %v6363
    %v6544 = vpack.c.b16 %v6368, %v6364
    %v6545 = vpack.c.b16 %v6369, %v6365
    %v6546 = vpack.c.b16 %v6374, %v6370
    %v6547 = vpack.c.b16 %v6375, %v6371
    %v6548 = vpack.c.b16 %v6376, %v6372
    %v6549 = vpack.c.b16 %v6377, %v6373
    %v6550 = vpack.c.b16 %v6382, %v6378
    %v6551 = vpack.c.b16 %v6383, %v6379
    %v6552 = vpack.c.b16 %v6384, %v6380
    %v6553 = vpack.c.b16 %v6385, %v6381
    %v6554 = vpack.c.b16 %v6390, %v6386
    %v6555 = vpack.c.b16 %v6391, %v6387
    %v6556 = vpack.c.b16 %v6392, %v6388
    %v6557 = vpack.c.b16 %v6393, %v6389
    %v6558 = vpack.c.b16 %v6398, %v6394
    %v6559 = vpack.c.b16 %v6399, %v6395
    %v6560 = vpack.c.b16 %v6400, %v6396
    %v6561 = vpack.c.b16 %v6401, %v6397
    %v6562 = vpack.c.b16 %v6406, %v6402
    %v6563 = vpack.c.b16 %v6407, %v6403
    %v6564 = vpack.c.b16 %v6408, %v6404
    %v6565 = vpack.c.b16 %v6409, %v6405
    %v6566 = vpack.c.b16 %v6414, %v6410
    %v6567 = vpack.c.b16 %v6415, %v6411
    %v6568 = vpack.c.b16 %v6416, %v6412
    %v6569 = vpack.c.b16 %v6417, %v6413
    %v6570 = vpack.c.b16 %v6422, %v6418
    %v6571 = vpack.c.b16 %v6423, %v6419
    %v6572 = vpack.c.b16 %v6424, %v6420
    %v6573 = vpack.c.b16 %v6425, %v6421
    %v6574 = vpack.c.b16 %v6430, %v6426
    %v6575 = vpack.c.b16 %v6431, %v6427
    %v6576 = vpack.c.b16 %v6432, %v6428
    %v6577 = vpack.c.b16 %v6433, %v6429
    %v6578 = vpack.c.b16 %v6438, %v6434
    %v6579 = vpack.c.b16 %v6439, %v6435
    %v6580 = vpack.c.b16 %v6440, %v6436
    %v6581 = vpack.c.b16 %v6441, %v6437
    %v6582 = vpack.c.b16 %v6446, %v6442
    %v6583 = vpack.c.b16 %v6447, %v6443
    %v6584 = vpack.c.b16 %v6448, %v6444
    %v6585 = vpack.c.b16 %v6449, %v6445
    %v6586 = vpack.c.b16 %v6454, %v6450
    %v6587 = vpack.c.b16 %v6455, %v6451
    %v6588 = vpack.c.b16 %v6456, %v6452
    %v6589 = vpack.c.b16 %v6457, %v6453
    %v6590 = vpack.c.b16 %v6462, %v6458
    %v6591 = vpack.c.b16 %v6463, %v6459
    %v6592 = vpack.c.b16 %v6464, %v6460
    %v6593 = vpack.c.b16 %v6465, %v6461
    %6722 = vmatprep.subr.bf16.mxu0 %v6467
    %6723 = vmatpush1.bf16.msra.mxu0 %v6466
    %6724 = vmatprep.subr.bf16.mxu0 %v6471
    %6725 = vmatpush1.bf16.msra.mxu0 %v6470
    %6726 = vmatprep.subr.bf16.mxu0 %v6475
    %6727 = vmatpush1.bf16.msra.mxu0 %v6474
    %6728 = vmatprep.subr.bf16.mxu0 %v6479
    %6729 = vmatpush1.bf16.msra.mxu0 %v6478
    %6730 = vmatprep.subr.bf16.mxu0 %v6483
    %6731 = vmatpush1.bf16.msra.mxu0 %v6482
    %6732 = vmatprep.subr.bf16.mxu0 %v6487
    %6733 = vmatpush1.bf16.msra.mxu0 %v6486
    %6734 = vmatprep.subr.bf16.mxu0 %v6491
    %6735 = vmatpush1.bf16.msra.mxu0 %v6490
    %6736 = vmatprep.subr.bf16.mxu0 %v6495
    %6737 = vmatpush1.bf16.msra.mxu0 %v6494
    %6738 = vmatprep.subr.bf16.mxu0 %v6499
    %6739 = vmatpush1.bf16.msra.mxu0 %v6498
    %6740 = vmatprep.subr.bf16.mxu0 %v6503
    %6741 = vmatpush1.bf16.msra.mxu0 %v6502
    %6742 = vmatprep.subr.bf16.mxu0 %v6507
    %6743 = vmatpush1.bf16.msra.mxu0 %v6506
    %6744 = vmatprep.subr.bf16.mxu0 %v6511
    %6745 = vmatpush1.bf16.msra.mxu0 %v6510
    %6746 = vmatprep.subr.bf16.mxu0 %v6515
    %6747 = vmatpush1.bf16.msra.mxu0 %v6514
    %6748 = vmatprep.subr.bf16.mxu0 %v6519
    %6749 = vmatpush1.bf16.msra.mxu0 %v6518
    %6750 = vmatprep.subr.bf16.mxu0 %v6523
    %6751 = vmatpush1.bf16.msra.mxu0 %v6522
    %6752 = vmatprep.subr.bf16.mxu0 %v6527
    %6753 = vmatpush1.bf16.msra.mxu0 %v6526
    %6754 = vmatprep.mubr.bf16.mxu0 %v5929
    %6755 = vmatmul.mubr.bf16.gmra.mrb[0].mxu0 %v5928
    %v6756 = vpop.f32.mrb[0].mxu0
    %v6757 = vadd.f32 %v6065, %v6756
    %v6758 = vpop.f32.mrb[0].mxu0
    %v6759 = vadd.f32 %v6069, %v6758
    %v6760 = vpop.f32.mrb[0].mxu0
    %v6761 = vpop.f32.mrb[0].mxu0
    %6762 = vdwg.mxu0
    %6763 = vmatprep.subr.bf16.mxu0 %v6531
    %6764 = vmatpush1.bf16.msra.mxu0 %v6530
    %6765 = vmatprep.subr.bf16.mxu0 %v6535
    %6766 = vmatpush1.bf16.msra.mxu0 %v6534
    %6767 = vmatprep.subr.bf16.mxu0 %v6539
    %6768 = vmatpush1.bf16.msra.mxu0 %v6538
    %6769 = vmatprep.subr.bf16.mxu0 %v6543
    %6770 = vmatpush1.bf16.msra.mxu0 %v6542
    %6771 = vmatprep.subr.bf16.mxu0 %v6547
    %6772 = vmatpush1.bf16.msra.mxu0 %v6546
    %6773 = vmatprep.subr.bf16.mxu0 %v6551
    %6774 = vmatpush1.bf16.msra.mxu0 %v6550
    %6775 = vmatprep.subr.bf16.mxu0 %v6555
    %6776 = vmatpush1.bf16.msra.mxu0 %v6554
    %6777 = vmatprep.subr.bf16.mxu0 %v6559
    %6778 = vmatpush1.bf16.msra.mxu0 %v6558
    %6779 = vmatprep.subr.bf16.mxu0 %v6563
    %6780 = vmatpush1.bf16.msra.mxu0 %v6562
    %6781 = vmatprep.subr.bf16.mxu0 %v6567
    %6782 = vmatpush1.bf16.msra.mxu0 %v6566
    %6783 = vmatprep.subr.bf16.mxu0 %v6571
    %6784 = vmatpush1.bf16.msra.mxu0 %v6570
    %6785 = vmatprep.subr.bf16.mxu0 %v6575
    %6786 = vmatpush1.bf16.msra.mxu0 %v6574
    %6787 = vmatprep.subr.bf16.mxu0 %v6579
    %6788 = vmatpush1.bf16.msra.mxu0 %v6578
    %6789 = vmatprep.subr.bf16.mxu0 %v6583
    %6790 = vmatpush1.bf16.msra.mxu0 %v6582
    %6791 = vmatprep.subr.bf16.mxu0 %v6587
    %6792 = vmatpush1.bf16.msra.mxu0 %v6586
    %6793 = vmatprep.subr.bf16.mxu0 %v6591
    %6794 = vmatpush1.bf16.msra.mxu0 %v6590
    %6795 = vmatprep.mubr.bf16.mxu0 %v5931
    %6796 = vmatmul.mubr.bf16.gmra.mrb[0].mxu0 %v5930
    %v6797 = vpop.f32.mrb[0].mxu0
    %v6798 = vadd.f32 %v6757, %v6797
    %v6799 = vpop.f32.mrb[0].mxu0
    %v6800 = vadd.f32 %v6759, %v6799
    %v6801 = vpop.f32.mrb[0].mxu0
    %v6802 = vpop.f32.mrb[0].mxu0
    %6803 = vdwg.mxu0
    %6804 = vmatprep.subr.bf16.mxu0 %v6469
    %6805 = vmatpush1.bf16.msra.mxu0 %v6468
    %6806 = vmatprep.subr.bf16.mxu0 %v6473
    %6807 = vmatpush1.bf16.msra.mxu0 %v6472
    %6808 = vmatprep.subr.bf16.mxu0 %v6477
    %6809 = vmatpush1.bf16.msra.mxu0 %v6476
    %6810 = vmatprep.subr.bf16.mxu0 %v6481
    %6811 = vmatpush1.bf16.msra.mxu0 %v6480
    %6812 = vmatprep.subr.bf16.mxu0 %v6485
    %6813 = vmatpush1.bf16.msra.mxu0 %v6484
    %6814 = vmatprep.subr.bf16.mxu0 %v6489
    %6815 = vmatpush1.bf16.msra.mxu0 %v6488
    %6816 = vmatprep.subr.bf16.mxu0 %v6493
    %6817 = vmatpush1.bf16.msra.mxu0 %v6492
    %6818 = vmatprep.subr.bf16.mxu0 %v6497
    %6819 = vmatpush1.bf16.msra.mxu0 %v6496
    %6820 = vmatprep.subr.bf16.mxu0 %v6501
    %6821 = vmatpush1.bf16.msra.mxu0 %v6500
    %6822 = vmatprep.subr.bf16.mxu0 %v6505
    %6823 = vmatpush1.bf16.msra.mxu0 %v6504
    %6824 = vmatprep.subr.bf16.mxu0 %v6509
    %6825 = vmatpush1.bf16.msra.mxu0 %v6508
    %6826 = vmatprep.subr.bf16.mxu0 %v6513
    %6827 = vmatpush1.bf16.msra.mxu0 %v6512
    %6828 = vmatprep.subr.bf16.mxu0 %v6517
    %6829 = vmatpush1.bf16.msra.mxu0 %v6516
    %6830 = vmatprep.subr.bf16.mxu0 %v6521
    %6831 = vmatpush1.bf16.msra.mxu0 %v6520
    %6832 = vmatprep.subr.bf16.mxu0 %v6525
    %6833 = vmatpush1.bf16.msra.mxu0 %v6524
    %6834 = vmatprep.subr.bf16.mxu0 %v6529
    %6835 = vmatpush1.bf16.msra.mxu0 %v6528
    %6836 = vmatprep.mubr.bf16.mxu0 %v5929
    %6837 = vmatmul.mubr.bf16.gmra.mrb[0].mxu0 %v5928
    %v6838 = vpop.f32.mrb[0].mxu0
    %v6839 = vadd.f32 %v6073, %v6838
    %v6840 = vpop.f32.mrb[0].mxu0
    %v6841 = vadd.f32 %v6077, %v6840
    %v6842 = vpop.f32.mrb[0].mxu0
    %v6843 = vpop.f32.mrb[0].mxu0
    %6844 = vdwg.mxu0
    %6845 = vmatprep.subr.bf16.mxu0 %v6533
    %6846 = vmatpush1.bf16.msra.mxu0 %v6532
    %6847 = vmatprep.subr.bf16.mxu0 %v6537
    %6848 = vmatpush1.bf16.msra.mxu0 %v6536
    %6849 = vmatprep.subr.bf16.mxu0 %v6541
    %6850 = vmatpush1.bf16.msra.mxu0 %v6540
    %6851 = vmatprep.subr.bf16.mxu0 %v6545
    %6852 = vmatpush1.bf16.msra.mxu0 %v6544
    %6853 = vmatprep.subr.bf16.mxu0 %v6549
    %6854 = vmatpush1.bf16.msra.mxu0 %v6548
    %6855 = vmatprep.subr.bf16.mxu0 %v6553
    %6856 = vmatpush1.bf16.msra.mxu0 %v6552
    %6857 = vmatprep.subr.bf16.mxu0 %v6557
    %6858 = vmatpush1.bf16.msra.mxu0 %v6556
    %6859 = vmatprep.subr.bf16.mxu0 %v6561
    %6860 = vmatpush1.bf16.msra.mxu0 %v6560
    %6861 = vmatprep.subr.bf16.mxu0 %v6565
    %6862 = vmatpush1.bf16.msra.mxu0 %v6564
    %6863 = vmatprep.subr.bf16.mxu0 %v6569
    %6864 = vmatpush1.bf16.msra.mxu0 %v6568
    %6865 = vmatprep.subr.bf16.mxu0 %v6573
    %6866 = vmatpush1.bf16.msra.mxu0 %v6572
    %6867 = vmatprep.subr.bf16.mxu0 %v6577
    %6868 = vmatpush1.bf16.msra.mxu0 %v6576
    %6869 = vmatprep.subr.bf16.mxu0 %v6581
    %6870 = vmatpush1.bf16.msra.mxu0 %v6580
    %6871 = vmatprep.subr.bf16.mxu0 %v6585
    %6872 = vmatpush1.bf16.msra.mxu0 %v6584
    %6873 = vmatprep.subr.bf16.mxu0 %v6589
    %6874 = vmatpush1.bf16.msra.mxu0 %v6588
    %6875 = vmatprep.subr.bf16.mxu0 %v6593
    %6876 = vmatpush1.bf16.msra.mxu0 %v6592
    %6877 = vmatprep.mubr.bf16.mxu0 %v5931
    %6878 = vmatmul.mubr.bf16.gmra.mrb[0].mxu0 %v5930
    %v6879 = vpop.f32.mrb[0].mxu0
    %v6880 = vadd.f32 %v6839, %v6879
    %v6881 = vpop.f32.mrb[0].mxu0
    %v6882 = vadd.f32 %v6841, %v6881
    %v6883 = vpop.f32.mrb[0].mxu0
    %v6884 = vpop.f32.mrb[0].mxu0
    %6885 = vdwg.mxu0
    %v6886 = vmax.f32 %v6798, 0.0
    %v6887 = vmax.f32 %v6800, 0.0
    %v6888 = vmax.f32 %v6880, 0.0
    %v6889 = vmax.f32 %v6882, 0.0
    %v6890 = vpack.c.bf16 %v6886, %v6886
    %v6891 = vpack.c.bf16 %v6887, %v6887
    %v6892 = vpack.c.bf16 %v6888, %v6888
    %v6893 = vpack.c.bf16 %v6889, %v6889
    %v6894 = vld [vmem:[#allocation9] sm:$0xff]
    %v6895 = vld [vmem:[#allocation9 + $0x8] sm:$0xff]
    %v6896 = vld [vmem:[#allocation9 + $0x10] sm:$0xff]
    %v6897 = vld [vmem:[#allocation9 + $0x18] sm:$0xff]
    %v6898 = vld [vmem:[#allocation9 + $0x20] sm:$0xff]
    %v6899 = vld [vmem:[#allocation9 + $0x28] sm:$0xff]
    %v6900 = vld [vmem:[#allocation9 + $0x30] sm:$0xff]
    %v6901 = vld [vmem:[#allocation9 + $0x38] sm:$0xff]
    %v6902 = vld [vmem:[#allocation9 + $0x40] sm:$0xff]
    %v6903 = vld [vmem:[#allocation9 + $0x48] sm:$0xff]
    %v6904 = vld [vmem:[#allocation9 + $0x50] sm:$0xff]
    %v6905 = vld [vmem:[#allocation9 + $0x58] sm:$0xff]
    %v6906 = vld [vmem:[#allocation9 + $0x60] sm:$0xff]
    %v6907 = vld [vmem:[#allocation9 + $0x68] sm:$0xff]
    %v6908 = vld [vmem:[#allocation9 + $0x70] sm:$0xff]
    %v6909 = vld [vmem:[#allocation9 + $0x78] sm:$0xff]
    %v6910 = vld [vmem:[#allocation9 + $0x80] sm:$0xff]
    %v6911 = vld [vmem:[#allocation9 + $0x88] sm:$0xff]
    %v6912 = vld [vmem:[#allocation9 + $0x90] sm:$0xff]
    %v6913 = vld [vmem:[#allocation9 + $0x98] sm:$0xff]
    %v6914 = vld [vmem:[#allocation9 + $0xa0] sm:$0xff]
    %v6915 = vld [vmem:[#allocation9 + $0xa8] sm:$0xff]
    %v6916 = vld [vmem:[#allocation9 + $0xb0] sm:$0xff]
    %v6917 = vld [vmem:[#allocation9 + $0xb8] sm:$0xff]
    %v6918 = vld [vmem:[#allocation9 + $0xc0] sm:$0xff]
    %v6919 = vld [vmem:[#allocation9 + $0xc8] sm:$0xff]
    %v6920 = vld [vmem:[#allocation9 + $0xd0] sm:$0xff]
    %v6921 = vld [vmem:[#allocation9 + $0xd8] sm:$0xff]
    %v6922 = vld [vmem:[#allocation9 + $0xe0] sm:$0xff]
    %v6923 = vld [vmem:[#allocation9 + $0xe8] sm:$0xff]
    %v6924 = vld [vmem:[#allocation9 + $0xf0] sm:$0xff]
    %v6925 = vld [vmem:[#allocation9 + $0xf8] sm:$0xff]
    %v6926 = vld [vmem:[#allocation9 + $0x100] sm:$0xff]
    %v6927 = vld [vmem:[#allocation9 + $0x108] sm:$0xff]
    %v6928 = vld [vmem:[#allocation9 + $0x110] sm:$0xff]
    %v6929 = vld [vmem:[#allocation9 + $0x118] sm:$0xff]
    %v6930 = vld [vmem:[#allocation9 + $0x120] sm:$0xff]
    %v6931 = vld [vmem:[#allocation9 + $0x128] sm:$0xff]
    %v6932 = vld [vmem:[#allocation9 + $0x130] sm:$0xff]
    %v6933 = vld [vmem:[#allocation9 + $0x138] sm:$0xff]
    %v6934 = vld [vmem:[#allocation9 + $0x140] sm:$0xff]
    %v6935 = vld [vmem:[#allocation9 + $0x148] sm:$0xff]
    %v6936 = vld [vmem:[#allocation9 + $0x150] sm:$0xff]
    %v6937 = vld [vmem:[#allocation9 + $0x158] sm:$0xff]
    %v6938 = vld [vmem:[#allocation9 + $0x160] sm:$0xff]
    %v6939 = vld [vmem:[#allocation9 + $0x168] sm:$0xff]
    %v6940 = vld [vmem:[#allocation9 + $0x170] sm:$0xff]
    %v6941 = vld [vmem:[#allocation9 + $0x178] sm:$0xff]
    %v6942 = vld [vmem:[#allocation9 + $0x180] sm:$0xff]
    %v6943 = vld [vmem:[#allocation9 + $0x188] sm:$0xff]
    %v6944 = vld [vmem:[#allocation9 + $0x190] sm:$0xff]
    %v6945 = vld [vmem:[#allocation9 + $0x198] sm:$0xff]
    %v6946 = vld [vmem:[#allocation9 + $0x1a0] sm:$0xff]
    %v6947 = vld [vmem:[#allocation9 + $0x1a8] sm:$0xff]
    %v6948 = vld [vmem:[#allocation9 + $0x1b0] sm:$0xff]
    %v6949 = vld [vmem:[#allocation9 + $0x1b8] sm:$0xff]
    %v6950 = vld [vmem:[#allocation9 + $0x1c0] sm:$0xff]
    %v6951 = vld [vmem:[#allocation9 + $0x1c8] sm:$0xff]
    %v6952 = vld [vmem:[#allocation9 + $0x1d0] sm:$0xff]
    %v6953 = vld [vmem:[#allocation9 + $0x1d8] sm:$0xff]
    %v6954 = vld [vmem:[#allocation9 + $0x1e0] sm:$0xff]
    %v6955 = vld [vmem:[#allocation9 + $0x1e8] sm:$0xff]
    %v6956 = vld [vmem:[#allocation9 + $0x1f0] sm:$0xff]
    %v6957 = vld [vmem:[#allocation9 + $0x1f8] sm:$0xff]
    %v6958 = vld [vmem:[#allocation9 + $0x200] sm:$0xff]
    %v6959 = vld [vmem:[#allocation9 + $0x208] sm:$0xff]
    %v6960 = vld [vmem:[#allocation9 + $0x210] sm:$0xff]
    %v6961 = vld [vmem:[#allocation9 + $0x218] sm:$0xff]
    %v6962 = vld [vmem:[#allocation9 + $0x220] sm:$0xff]
    %v6963 = vld [vmem:[#allocation9 + $0x228] sm:$0xff]
    %v6964 = vld [vmem:[#allocation9 + $0x230] sm:$0xff]
    %v6965 = vld [vmem:[#allocation9 + $0x238] sm:$0xff]
    %v6966 = vld [vmem:[#allocation9 + $0x240] sm:$0xff]
    %v6967 = vld [vmem:[#allocation9 + $0x248] sm:$0xff]
    %v6968 = vld [vmem:[#allocation9 + $0x250] sm:$0xff]
    %v6969 = vld [vmem:[#allocation9 + $0x258] sm:$0xff]
    %v6970 = vld [vmem:[#allocation9 + $0x260] sm:$0xff]
    %v6971 = vld [vmem:[#allocation9 + $0x268] sm:$0xff]
    %v6972 = vld [vmem:[#allocation9 + $0x270] sm:$0xff]
    %v6973 = vld [vmem:[#allocation9 + $0x278] sm:$0xff]
    %v6974 = vld [vmem:[#allocation9 + $0x280] sm:$0xff]
    %v6975 = vld [vmem:[#allocation9 + $0x288] sm:$0xff]
    %v6976 = vld [vmem:[#allocation9 + $0x290] sm:$0xff]
    %v6977 = vld [vmem:[#allocation9 + $0x298] sm:$0xff]
    %v6978 = vld [vmem:[#allocation9 + $0x2a0] sm:$0xff]
    %v6979 = vld [vmem:[#allocation9 + $0x2a8] sm:$0xff]
    %v6980 = vld [vmem:[#allocation9 + $0x2b0] sm:$0xff]
    %v6981 = vld [vmem:[#allocation9 + $0x2b8] sm:$0xff]
    %v6982 = vld [vmem:[#allocation9 + $0x2c0] sm:$0xff]
    %v6983 = vld [vmem:[#allocation9 + $0x2c8] sm:$0xff]
    %v6984 = vld [vmem:[#allocation9 + $0x2d0] sm:$0xff]
    %v6985 = vld [vmem:[#allocation9 + $0x2d8] sm:$0xff]
    %v6986 = vld [vmem:[#allocation9 + $0x2e0] sm:$0xff]
    %v6987 = vld [vmem:[#allocation9 + $0x2e8] sm:$0xff]
    %v6988 = vld [vmem:[#allocation9 + $0x2f0] sm:$0xff]
    %v6989 = vld [vmem:[#allocation9 + $0x2f8] sm:$0xff]
    %v6990 = vld [vmem:[#allocation9 + $0x300] sm:$0xff]
    %v6991 = vld [vmem:[#allocation9 + $0x308] sm:$0xff]
    %v6992 = vld [vmem:[#allocation9 + $0x310] sm:$0xff]
    %v6993 = vld [vmem:[#allocation9 + $0x318] sm:$0xff]
    %v6994 = vld [vmem:[#allocation9 + $0x320] sm:$0xff]
    %v6995 = vld [vmem:[#allocation9 + $0x328] sm:$0xff]
    %v6996 = vld [vmem:[#allocation9 + $0x330] sm:$0xff]
    %v6997 = vld [vmem:[#allocation9 + $0x338] sm:$0xff]
    %v6998 = vld [vmem:[#allocation9 + $0x340] sm:$0xff]
    %v6999 = vld [vmem:[#allocation9 + $0x348] sm:$0xff]
    %v7000 = vld [vmem:[#allocation9 + $0x350] sm:$0xff]
    %v7001 = vld [vmem:[#allocation9 + $0x358] sm:$0xff]
    %v7002 = vld [vmem:[#allocation9 + $0x360] sm:$0xff]
    %v7003 = vld [vmem:[#allocation9 + $0x368] sm:$0xff]
    %v7004 = vld [vmem:[#allocation9 + $0x370] sm:$0xff]
    %v7005 = vld [vmem:[#allocation9 + $0x378] sm:$0xff]
    %v7006 = vld [vmem:[#allocation9 + $0x380] sm:$0xff]
    %v7007 = vld [vmem:[#allocation9 + $0x388] sm:$0xff]
    %v7008 = vld [vmem:[#allocation9 + $0x390] sm:$0xff]
    %v7009 = vld [vmem:[#allocation9 + $0x398] sm:$0xff]
    %v7010 = vld [vmem:[#allocation9 + $0x3a0] sm:$0xff]
    %v7011 = vld [vmem:[#allocation9 + $0x3a8] sm:$0xff]
    %v7012 = vld [vmem:[#allocation9 + $0x3b0] sm:$0xff]
    %v7013 = vld [vmem:[#allocation9 + $0x3b8] sm:$0xff]
    %v7014 = vld [vmem:[#allocation9 + $0x3c0] sm:$0xff]
    %v7015 = vld [vmem:[#allocation9 + $0x3c8] sm:$0xff]
    %v7016 = vld [vmem:[#allocation9 + $0x3d0] sm:$0xff]
    %v7017 = vld [vmem:[#allocation9 + $0x3d8] sm:$0xff]
    %v7018 = vld [vmem:[#allocation9 + $0x3e0] sm:$0xff]
    %v7019 = vld [vmem:[#allocation9 + $0x3e8] sm:$0xff]
    %v7020 = vld [vmem:[#allocation9 + $0x3f0] sm:$0xff]
    %v7021 = vld [vmem:[#allocation9 + $0x3f8] sm:$0xff]
    %v7022 = vld [vmem:[#allocation10] sm:$0xf]
    %v7024 = vlaneseq
    %v7025 = vshrl.u32 %v7024, 7
    %v7026 = vsub.s32 0, %v7025
    %v7027 = vrot.slane %v7022, %v7026
    %v7028 = vlaneseq
    %v7029 = vshrl.u32 %v7028, 7
    %v7030 = vsub.s32 1, %v7029
    %v7031 = vrot.slane %v7022, %v7030
    %v7032 = vlaneseq
    %v7033 = vshrl.u32 %v7032, 7
    %v7034 = vsub.s32 2, %v7033
    %v7035 = vrot.slane %v7022, %v7034
    %v7036 = vlaneseq
    %v7037 = vshrl.u32 %v7036, 7
    %v7038 = vsub.s32 3, %v7037
    %v7039 = vrot.slane %v7022, %v7038
    %v7172 = vunpack.c.l.b16 %v6894
    %v7173 = vunpack.c.h.b16 %v6894
    %v7174 = vunpack.c.l.b16 %v6895
    %v7175 = vunpack.c.h.b16 %v6895
    %v7176 = vunpack.c.l.b16 %v6896
    %v7177 = vunpack.c.h.b16 %v6896
    %v7178 = vunpack.c.l.b16 %v6897
    %v7179 = vunpack.c.h.b16 %v6897
    %v7180 = vunpack.c.l.b16 %v6898
    %v7181 = vunpack.c.h.b16 %v6898
    %v7182 = vunpack.c.l.b16 %v6899
    %v7183 = vunpack.c.h.b16 %v6899
    %v7184 = vunpack.c.l.b16 %v6900
    %v7185 = vunpack.c.h.b16 %v6900
    %v7186 = vunpack.c.l.b16 %v6901
    %v7187 = vunpack.c.h.b16 %v6901
    %v7188 = vunpack.c.l.b16 %v6902
    %v7189 = vunpack.c.h.b16 %v6902
    %v7190 = vunpack.c.l.b16 %v6903
    %v7191 = vunpack.c.h.b16 %v6903
    %v7192 = vunpack.c.l.b16 %v6904
    %v7193 = vunpack.c.h.b16 %v6904
    %v7194 = vunpack.c.l.b16 %v6905
    %v7195 = vunpack.c.h.b16 %v6905
    %v7196 = vunpack.c.l.b16 %v6906
    %v7197 = vunpack.c.h.b16 %v6906
    %v7198 = vunpack.c.l.b16 %v6907
    %v7199 = vunpack.c.h.b16 %v6907
    %v7200 = vunpack.c.l.b16 %v6908
    %v7201 = vunpack.c.h.b16 %v6908
    %v7202 = vunpack.c.l.b16 %v6909
    %v7203 = vunpack.c.h.b16 %v6909
    %v7204 = vunpack.c.l.b16 %v6910
    %v7205 = vunpack.c.h.b16 %v6910
    %v7206 = vunpack.c.l.b16 %v6911
    %v7207 = vunpack.c.h.b16 %v6911
    %v7208 = vunpack.c.l.b16 %v6912
    %v7209 = vunpack.c.h.b16 %v6912
    %v7210 = vunpack.c.l.b16 %v6913
    %v7211 = vunpack.c.h.b16 %v6913
    %v7212 = vunpack.c.l.b16 %v6914
    %v7213 = vunpack.c.h.b16 %v6914
    %v7214 = vunpack.c.l.b16 %v6915
    %v7215 = vunpack.c.h.b16 %v6915
    %v7216 = vunpack.c.l.b16 %v6916
    %v7217 = vunpack.c.h.b16 %v6916
    %v7218 = vunpack.c.l.b16 %v6917
    %v7219 = vunpack.c.h.b16 %v6917
    %v7220 = vunpack.c.l.b16 %v6918
    %v7221 = vunpack.c.h.b16 %v6918
    %v7222 = vunpack.c.l.b16 %v6919
    %v7223 = vunpack.c.h.b16 %v6919
    %v7224 = vunpack.c.l.b16 %v6920
    %v7225 = vunpack.c.h.b16 %v6920
    %v7226 = vunpack.c.l.b16 %v6921
    %v7227 = vunpack.c.h.b16 %v6921
    %v7228 = vunpack.c.l.b16 %v6922
    %v7229 = vunpack.c.h.b16 %v6922
    %v7230 = vunpack.c.l.b16 %v6923
    %v7231 = vunpack.c.h.b16 %v6923
    %v7232 = vunpack.c.l.b16 %v6924
    %v7233 = vunpack.c.h.b16 %v6924
    %v7234 = vunpack.c.l.b16 %v6925
    %v7235 = vunpack.c.h.b16 %v6925
    %v7236 = vunpack.c.l.b16 %v6926
    %v7237 = vunpack.c.h.b16 %v6926
    %v7238 = vunpack.c.l.b16 %v6927
    %v7239 = vunpack.c.h.b16 %v6927
    %v7240 = vunpack.c.l.b16 %v6928
    %v7241 = vunpack.c.h.b16 %v6928
    %v7242 = vunpack.c.l.b16 %v6929
    %v7243 = vunpack.c.h.b16 %v6929
    %v7244 = vunpack.c.l.b16 %v6930
    %v7245 = vunpack.c.h.b16 %v6930
    %v7246 = vunpack.c.l.b16 %v6931
    %v7247 = vunpack.c.h.b16 %v6931
    %v7248 = vunpack.c.l.b16 %v6932
    %v7249 = vunpack.c.h.b16 %v6932
    %v7250 = vunpack.c.l.b16 %v6933
    %v7251 = vunpack.c.h.b16 %v6933
    %v7252 = vunpack.c.l.b16 %v6934
    %v7253 = vunpack.c.h.b16 %v6934
    %v7254 = vunpack.c.l.b16 %v6935
    %v7255 = vunpack.c.h.b16 %v6935
    %v7256 = vunpack.c.l.b16 %v6936
    %v7257 = vunpack.c.h.b16 %v6936
    %v7258 = vunpack.c.l.b16 %v6937
    %v7259 = vunpack.c.h.b16 %v6937
    %v7260 = vunpack.c.l.b16 %v6938
    %v7261 = vunpack.c.h.b16 %v6938
    %v7262 = vunpack.c.l.b16 %v6939
    %v7263 = vunpack.c.h.b16 %v6939
    %v7264 = vunpack.c.l.b16 %v6940
    %v7265 = vunpack.c.h.b16 %v6940
    %v7266 = vunpack.c.l.b16 %v6941
    %v7267 = vunpack.c.h.b16 %v6941
    %v7268 = vunpack.c.l.b16 %v6942
    %v7269 = vunpack.c.h.b16 %v6942
    %v7270 = vunpack.c.l.b16 %v6943
    %v7271 = vunpack.c.h.b16 %v6943
    %v7272 = vunpack.c.l.b16 %v6944
    %v7273 = vunpack.c.h.b16 %v6944
    %v7274 = vunpack.c.l.b16 %v6945
    %v7275 = vunpack.c.h.b16 %v6945
    %v7276 = vunpack.c.l.b16 %v6946
    %v7277 = vunpack.c.h.b16 %v6946
    %v7278 = vunpack.c.l.b16 %v6947
    %v7279 = vunpack.c.h.b16 %v6947
    %v7280 = vunpack.c.l.b16 %v6948
    %v7281 = vunpack.c.h.b16 %v6948
    %v7282 = vunpack.c.l.b16 %v6949
    %v7283 = vunpack.c.h.b16 %v6949
    %v7284 = vunpack.c.l.b16 %v6950
    %v7285 = vunpack.c.h.b16 %v6950
    %v7286 = vunpack.c.l.b16 %v6951
    %v7287 = vunpack.c.h.b16 %v6951
    %v7288 = vunpack.c.l.b16 %v6952
    %v7289 = vunpack.c.h.b16 %v6952
    %v7290 = vunpack.c.l.b16 %v6953
    %v7291 = vunpack.c.h.b16 %v6953
    %v7292 = vunpack.c.l.b16 %v6954
    %v7293 = vunpack.c.h.b16 %v6954
    %v7294 = vunpack.c.l.b16 %v6955
    %v7295 = vunpack.c.h.b16 %v6955
    %v7296 = vunpack.c.l.b16 %v6956
    %v7297 = vunpack.c.h.b16 %v6956
    %v7298 = vunpack.c.l.b16 %v6957
    %v7299 = vunpack.c.h.b16 %v6957
    %v7300 = vunpack.c.l.b16 %v6958
    %v7301 = vunpack.c.h.b16 %v6958
    %v7302 = vunpack.c.l.b16 %v6959
    %v7303 = vunpack.c.h.b16 %v6959
    %v7304 = vunpack.c.l.b16 %v6960
    %v7305 = vunpack.c.h.b16 %v6960
    %v7306 = vunpack.c.l.b16 %v6961
    %v7307 = vunpack.c.h.b16 %v6961
    %v7308 = vunpack.c.l.b16 %v6962
    %v7309 = vunpack.c.h.b16 %v6962
    %v7310 = vunpack.c.l.b16 %v6963
    %v7311 = vunpack.c.h.b16 %v6963
    %v7312 = vunpack.c.l.b16 %v6964
    %v7313 = vunpack.c.h.b16 %v6964
    %v7314 = vunpack.c.l.b16 %v6965
    %v7315 = vunpack.c.h.b16 %v6965
    %v7316 = vunpack.c.l.b16 %v6966
    %v7317 = vunpack.c.h.b16 %v6966
    %v7318 = vunpack.c.l.b16 %v6967
    %v7319 = vunpack.c.h.b16 %v6967
    %v7320 = vunpack.c.l.b16 %v6968
    %v7321 = vunpack.c.h.b16 %v6968
    %v7322 = vunpack.c.l.b16 %v6969
    %v7323 = vunpack.c.h.b16 %v6969
    %v7324 = vunpack.c.l.b16 %v6970
    %v7325 = vunpack.c.h.b16 %v6970
    %v7326 = vunpack.c.l.b16 %v6971
    %v7327 = vunpack.c.h.b16 %v6971
    %v7328 = vunpack.c.l.b16 %v6972
    %v7329 = vunpack.c.h.b16 %v6972
    %v7330 = vunpack.c.l.b16 %v6973
    %v7331 = vunpack.c.h.b16 %v6973
    %v7332 = vunpack.c.l.b16 %v6974
    %v7333 = vunpack.c.h.b16 %v6974
    %v7334 = vunpack.c.l.b16 %v6975
    %v7335 = vunpack.c.h.b16 %v6975
    %v7336 = vunpack.c.l.b16 %v6976
    %v7337 = vunpack.c.h.b16 %v6976
    %v7338 = vunpack.c.l.b16 %v6977
    %v7339 = vunpack.c.h.b16 %v6977
    %v7340 = vunpack.c.l.b16 %v6978
    %v7341 = vunpack.c.h.b16 %v6978
    %v7342 = vunpack.c.l.b16 %v6979
    %v7343 = vunpack.c.h.b16 %v6979
    %v7344 = vunpack.c.l.b16 %v6980
    %v7345 = vunpack.c.h.b16 %v6980
    %v7346 = vunpack.c.l.b16 %v6981
    %v7347 = vunpack.c.h.b16 %v6981
    %v7348 = vunpack.c.l.b16 %v6982
    %v7349 = vunpack.c.h.b16 %v6982
    %v7350 = vunpack.c.l.b16 %v6983
    %v7351 = vunpack.c.h.b16 %v6983
    %v7352 = vunpack.c.l.b16 %v6984
    %v7353 = vunpack.c.h.b16 %v6984
    %v7354 = vunpack.c.l.b16 %v6985
    %v7355 = vunpack.c.h.b16 %v6985
    %v7356 = vunpack.c.l.b16 %v6986
    %v7357 = vunpack.c.h.b16 %v6986
    %v7358 = vunpack.c.l.b16 %v6987
    %v7359 = vunpack.c.h.b16 %v6987
    %v7360 = vunpack.c.l.b16 %v6988
    %v7361 = vunpack.c.h.b16 %v6988
    %v7362 = vunpack.c.l.b16 %v6989
    %v7363 = vunpack.c.h.b16 %v6989
    %v7364 = vunpack.c.l.b16 %v6990
    %v7365 = vunpack.c.h.b16 %v6990
    %v7366 = vunpack.c.l.b16 %v6991
    %v7367 = vunpack.c.h.b16 %v6991
    %v7368 = vunpack.c.l.b16 %v6992
    %v7369 = vunpack.c.h.b16 %v6992
    %v7370 = vunpack.c.l.b16 %v6993
    %v7371 = vunpack.c.h.b16 %v6993
    %v7372 = vunpack.c.l.b16 %v6994
    %v7373 = vunpack.c.h.b16 %v6994
    %v7374 = vunpack.c.l.b16 %v6995
    %v7375 = vunpack.c.h.b16 %v6995
    %v7376 = vunpack.c.l.b16 %v6996
    %v7377 = vunpack.c.h.b16 %v6996
    %v7378 = vunpack.c.l.b16 %v6997
    %v7379 = vunpack.c.h.b16 %v6997
    %v7380 = vunpack.c.l.b16 %v6998
    %v7381 = vunpack.c.h.b16 %v6998
    %v7382 = vunpack.c.l.b16 %v6999
    %v7383 = vunpack.c.h.b16 %v6999
    %v7384 = vunpack.c.l.b16 %v7000
    %v7385 = vunpack.c.h.b16 %v7000
    %v7386 = vunpack.c.l.b16 %v7001
    %v7387 = vunpack.c.h.b16 %v7001
    %v7388 = vunpack.c.l.b16 %v7002
    %v7389 = vunpack.c.h.b16 %v7002
    %v7390 = vunpack.c.l.b16 %v7003
    %v7391 = vunpack.c.h.b16 %v7003
    %v7392 = vunpack.c.l.b16 %v7004
    %v7393 = vunpack.c.h.b16 %v7004
    %v7394 = vunpack.c.l.b16 %v7005
    %v7395 = vunpack.c.h.b16 %v7005
    %v7396 = vunpack.c.l.b16 %v7006
    %v7397 = vunpack.c.h.b16 %v7006
    %v7398 = vunpack.c.l.b16 %v7007
    %v7399 = vunpack.c.h.b16 %v7007
    %v7400 = vunpack.c.l.b16 %v7008
    %v7401 = vunpack.c.h.b16 %v7008
    %v7402 = vunpack.c.l.b16 %v7009
    %v7403 = vunpack.c.h.b16 %v7009
    %v7404 = vunpack.c.l.b16 %v7010
    %v7405 = vunpack.c.h.b16 %v7010
    %v7406 = vunpack.c.l.b16 %v7011
    %v7407 = vunpack.c.h.b16 %v7011
    %v7408 = vunpack.c.l.b16 %v7012
    %v7409 = vunpack.c.h.b16 %v7012
    %v7410 = vunpack.c.l.b16 %v7013
    %v7411 = vunpack.c.h.b16 %v7013
    %v7412 = vunpack.c.l.b16 %v7014
    %v7413 = vunpack.c.h.b16 %v7014
    %v7414 = vunpack.c.l.b16 %v7015
    %v7415 = vunpack.c.h.b16 %v7015
    %v7416 = vunpack.c.l.b16 %v7016
    %v7417 = vunpack.c.h.b16 %v7016
    %v7418 = vunpack.c.l.b16 %v7017
    %v7419 = vunpack.c.h.b16 %v7017
    %v7420 = vunpack.c.l.b16 %v7018
    %v7421 = vunpack.c.h.b16 %v7018
    %v7422 = vunpack.c.l.b16 %v7019
    %v7423 = vunpack.c.h.b16 %v7019
    %v7424 = vunpack.c.l.b16 %v7020
    %v7425 = vunpack.c.h.b16 %v7020
    %v7426 = vunpack.c.l.b16 %v7021
    %v7427 = vunpack.c.h.b16 %v7021
    %v7428 = vpack.c.b16 %v7176, %v7172
    %v7429 = vpack.c.b16 %v7177, %v7173
    %v7430 = vpack.c.b16 %v7178, %v7174
    %v7431 = vpack.c.b16 %v7179, %v7175
    %v7432 = vpack.c.b16 %v7184, %v7180
    %v7433 = vpack.c.b16 %v7185, %v7181
    %v7434 = vpack.c.b16 %v7186, %v7182
    %v7435 = vpack.c.b16 %v7187, %v7183
    %v7436 = vpack.c.b16 %v7192, %v7188
    %v7437 = vpack.c.b16 %v7193, %v7189
    %v7438 = vpack.c.b16 %v7194, %v7190
    %v7439 = vpack.c.b16 %v7195, %v7191
    %v7440 = vpack.c.b16 %v7200, %v7196
    %v7441 = vpack.c.b16 %v7201, %v7197
    %v7442 = vpack.c.b16 %v7202, %v7198
    %v7443 = vpack.c.b16 %v7203, %v7199
    %v7444 = vpack.c.b16 %v7208, %v7204
    %v7445 = vpack.c.b16 %v7209, %v7205
    %v7446 = vpack.c.b16 %v7210, %v7206
    %v7447 = vpack.c.b16 %v7211, %v7207
    %v7448 = vpack.c.b16 %v7216, %v7212
    %v7449 = vpack.c.b16 %v7217, %v7213
    %v7450 = vpack.c.b16 %v7218, %v7214
    %v7451 = vpack.c.b16 %v7219, %v7215
    %v7452 = vpack.c.b16 %v7224, %v7220
    %v7453 = vpack.c.b16 %v7225, %v7221
    %v7454 = vpack.c.b16 %v7226, %v7222
    %v7455 = vpack.c.b16 %v7227, %v7223
    %v7456 = vpack.c.b16 %v7232, %v7228
    %v7457 = vpack.c.b16 %v7233, %v7229
    %v7458 = vpack.c.b16 %v7234, %v7230
    %v7459 = vpack.c.b16 %v7235, %v7231
    %v7460 = vpack.c.b16 %v7240, %v7236
    %v7461 = vpack.c.b16 %v7241, %v7237
    %v7462 = vpack.c.b16 %v7242, %v7238
    %v7463 = vpack.c.b16 %v7243, %v7239
    %v7464 = vpack.c.b16 %v7248, %v7244
    %v7465 = vpack.c.b16 %v7249, %v7245
    %v7466 = vpack.c.b16 %v7250, %v7246
    %v7467 = vpack.c.b16 %v7251, %v7247
    %v7468 = vpack.c.b16 %v7256, %v7252
    %v7469 = vpack.c.b16 %v7257, %v7253
    %v7470 = vpack.c.b16 %v7258, %v7254
    %v7471 = vpack.c.b16 %v7259, %v7255
    %v7472 = vpack.c.b16 %v7264, %v7260
    %v7473 = vpack.c.b16 %v7265, %v7261
    %v7474 = vpack.c.b16 %v7266, %v7262
    %v7475 = vpack.c.b16 %v7267, %v7263
    %v7476 = vpack.c.b16 %v7272, %v7268
    %v7477 = vpack.c.b16 %v7273, %v7269
    %v7478 = vpack.c.b16 %v7274, %v7270
    %v7479 = vpack.c.b16 %v7275, %v7271
    %v7480 = vpack.c.b16 %v7280, %v7276
    %v7481 = vpack.c.b16 %v7281, %v7277
    %v7482 = vpack.c.b16 %v7282, %v7278
    %v7483 = vpack.c.b16 %v7283, %v7279
    %v7484 = vpack.c.b16 %v7288, %v7284
    %v7485 = vpack.c.b16 %v7289, %v7285
    %v7486 = vpack.c.b16 %v7290, %v7286
    %v7487 = vpack.c.b16 %v7291, %v7287
    %v7488 = vpack.c.b16 %v7296, %v7292
    %v7489 = vpack.c.b16 %v7297, %v7293
    %v7490 = vpack.c.b16 %v7298, %v7294
    %v7491 = vpack.c.b16 %v7299, %v7295
    %v7492 = vpack.c.b16 %v7304, %v7300
    %v7493 = vpack.c.b16 %v7305, %v7301
    %v7494 = vpack.c.b16 %v7306, %v7302
    %v7495 = vpack.c.b16 %v7307, %v7303
    %v7496 = vpack.c.b16 %v7312, %v7308
    %v7497 = vpack.c.b16 %v7313, %v7309
    %v7498 = vpack.c.b16 %v7314, %v7310
    %v7499 = vpack.c.b16 %v7315, %v7311
    %v7500 = vpack.c.b16 %v7320, %v7316
    %v7501 = vpack.c.b16 %v7321, %v7317
    %v7502 = vpack.c.b16 %v7322, %v7318
    %v7503 = vpack.c.b16 %v7323, %v7319
    %v7504 = vpack.c.b16 %v7328, %v7324
    %v7505 = vpack.c.b16 %v7329, %v7325
    %v7506 = vpack.c.b16 %v7330, %v7326
    %v7507 = vpack.c.b16 %v7331, %v7327
    %v7508 = vpack.c.b16 %v7336, %v7332
    %v7509 = vpack.c.b16 %v7337, %v7333
    %v7510 = vpack.c.b16 %v7338, %v7334
    %v7511 = vpack.c.b16 %v7339, %v7335
    %v7512 = vpack.c.b16 %v7344, %v7340
    %v7513 = vpack.c.b16 %v7345, %v7341
    %v7514 = vpack.c.b16 %v7346, %v7342
    %v7515 = vpack.c.b16 %v7347, %v7343
    %v7516 = vpack.c.b16 %v7352, %v7348
    %v7517 = vpack.c.b16 %v7353, %v7349
    %v7518 = vpack.c.b16 %v7354, %v7350
    %v7519 = vpack.c.b16 %v7355, %v7351
    %v7520 = vpack.c.b16 %v7360, %v7356
    %v7521 = vpack.c.b16 %v7361, %v7357
    %v7522 = vpack.c.b16 %v7362, %v7358
    %v7523 = vpack.c.b16 %v7363, %v7359
    %v7524 = vpack.c.b16 %v7368, %v7364
    %v7525 = vpack.c.b16 %v7369, %v7365
    %v7526 = vpack.c.b16 %v7370, %v7366
    %v7527 = vpack.c.b16 %v7371, %v7367
    %v7528 = vpack.c.b16 %v7376, %v7372
    %v7529 = vpack.c.b16 %v7377, %v7373
    %v7530 = vpack.c.b16 %v7378, %v7374
    %v7531 = vpack.c.b16 %v7379, %v7375
    %v7532 = vpack.c.b16 %v7384, %v7380
    %v7533 = vpack.c.b16 %v7385, %v7381
    %v7534 = vpack.c.b16 %v7386, %v7382
    %v7535 = vpack.c.b16 %v7387, %v7383
    %v7536 = vpack.c.b16 %v7392, %v7388
    %v7537 = vpack.c.b16 %v7393, %v7389
    %v7538 = vpack.c.b16 %v7394, %v7390
    %v7539 = vpack.c.b16 %v7395, %v7391
    %v7540 = vpack.c.b16 %v7400, %v7396
    %v7541 = vpack.c.b16 %v7401, %v7397
    %v7542 = vpack.c.b16 %v7402, %v7398
    %v7543 = vpack.c.b16 %v7403, %v7399
    %v7544 = vpack.c.b16 %v7408, %v7404
    %v7545 = vpack.c.b16 %v7409, %v7405
    %v7546 = vpack.c.b16 %v7410, %v7406
    %v7547 = vpack.c.b16 %v7411, %v7407
    %v7548 = vpack.c.b16 %v7416, %v7412
    %v7549 = vpack.c.b16 %v7417, %v7413
    %v7550 = vpack.c.b16 %v7418, %v7414
    %v7551 = vpack.c.b16 %v7419, %v7415
    %v7552 = vpack.c.b16 %v7424, %v7420
    %v7553 = vpack.c.b16 %v7425, %v7421
    %v7554 = vpack.c.b16 %v7426, %v7422
    %v7555 = vpack.c.b16 %v7427, %v7423
    %7684 = vmatprep.subr.bf16.mxu0 %v7429
    %7685 = vmatpush1.bf16.msra.mxu0 %v7428
    %7686 = vmatprep.subr.bf16.mxu0 %v7433
    %7687 = vmatpush1.bf16.msra.mxu0 %v7432
    %7688 = vmatprep.subr.bf16.mxu0 %v7437
    %7689 = vmatpush1.bf16.msra.mxu0 %v7436
    %7690 = vmatprep.subr.bf16.mxu0 %v7441
    %7691 = vmatpush1.bf16.msra.mxu0 %v7440
    %7692 = vmatprep.subr.bf16.mxu0 %v7445
    %7693 = vmatpush1.bf16.msra.mxu0 %v7444
    %7694 = vmatprep.subr.bf16.mxu0 %v7449
    %7695 = vmatpush1.bf16.msra.mxu0 %v7448
    %7696 = vmatprep.subr.bf16.mxu0 %v7453
    %7697 = vmatpush1.bf16.msra.mxu0 %v7452
    %7698 = vmatprep.subr.bf16.mxu0 %v7457
    %7699 = vmatpush1.bf16.msra.mxu0 %v7456
    %7700 = vmatprep.subr.bf16.mxu0 %v7461
    %7701 = vmatpush1.bf16.msra.mxu0 %v7460
    %7702 = vmatprep.subr.bf16.mxu0 %v7465
    %7703 = vmatpush1.bf16.msra.mxu0 %v7464
    %7704 = vmatprep.subr.bf16.mxu0 %v7469
    %7705 = vmatpush1.bf16.msra.mxu0 %v7468
    %7706 = vmatprep.subr.bf16.mxu0 %v7473
    %7707 = vmatpush1.bf16.msra.mxu0 %v7472
    %7708 = vmatprep.subr.bf16.mxu0 %v7477
    %7709 = vmatpush1.bf16.msra.mxu0 %v7476
    %7710 = vmatprep.subr.bf16.mxu0 %v7481
    %7711 = vmatpush1.bf16.msra.mxu0 %v7480
    %7712 = vmatprep.subr.bf16.mxu0 %v7485
    %7713 = vmatpush1.bf16.msra.mxu0 %v7484
    %7714 = vmatprep.subr.bf16.mxu0 %v7489
    %7715 = vmatpush1.bf16.msra.mxu0 %v7488
    %7716 = vmatprep.mubr.bf16.mxu0 %v6891
    %7717 = vmatmul.mubr.bf16.gmra.mrb[0].mxu0 %v6890
    %v7718 = vpop.f32.mrb[0].mxu0
    %v7719 = vadd.f32 %v7027, %v7718
    %v7720 = vpop.f32.mrb[0].mxu0
    %v7721 = vadd.f32 %v7031, %v7720
    %v7722 = vpop.f32.mrb[0].mxu0
    %v7723 = vpop.f32.mrb[0].mxu0
    %7724 = vdwg.mxu0
    %7725 = vmatprep.subr.bf16.mxu0 %v7493
    %7726 = vmatpush1.bf16.msra.mxu0 %v7492
    %7727 = vmatprep.subr.bf16.mxu0 %v7497
    %7728 = vmatpush1.bf16.msra.mxu0 %v7496
    %7729 = vmatprep.subr.bf16.mxu0 %v7501
    %7730 = vmatpush1.bf16.msra.mxu0 %v7500
    %7731 = vmatprep.subr.bf16.mxu0 %v7505
    %7732 = vmatpush1.bf16.msra.mxu0 %v7504
    %7733 = vmatprep.subr.bf16.mxu0 %v7509
    %7734 = vmatpush1.bf16.msra.mxu0 %v7508
    %7735 = vmatprep.subr.bf16.mxu0 %v7513
    %7736 = vmatpush1.bf16.msra.mxu0 %v7512
    %7737 = vmatprep.subr.bf16.mxu0 %v7517
    %7738 = vmatpush1.bf16.msra.mxu0 %v7516
    %7739 = vmatprep.subr.bf16.mxu0 %v7521
    %7740 = vmatpush1.bf16.msra.mxu0 %v7520
    %7741 = vmatprep.subr.bf16.mxu0 %v7525
    %7742 = vmatpush1.bf16.msra.mxu0 %v7524
    %7743 = vmatprep.subr.bf16.mxu0 %v7529
    %7744 = vmatpush1.bf16.msra.mxu0 %v7528
    %7745 = vmatprep.subr.bf16.mxu0 %v7533
    %7746 = vmatpush1.bf16.msra.mxu0 %v7532
    %7747 = vmatprep.subr.bf16.mxu0 %v7537
    %7748 = vmatpush1.bf16.msra.mxu0 %v7536
    %7749 = vmatprep.subr.bf16.mxu0 %v7541
    %7750 = vmatpush1.bf16.msra.mxu0 %v7540
    %7751 = vmatprep.subr.bf16.mxu0 %v7545
    %7752 = vmatpush1.bf16.msra.mxu0 %v7544
    %7753 = vmatprep.subr.bf16.mxu0 %v7549
    %7754 = vmatpush1.bf16.msra.mxu0 %v7548
    %7755 = vmatprep.subr.bf16.mxu0 %v7553
    %7756 = vmatpush1.bf16.msra.mxu0 %v7552
    %7757 = vmatprep.mubr.bf16.mxu0 %v6893
    %7758 = vmatmul.mubr.bf16.gmra.mrb[0].mxu0 %v6892
    %v7759 = vpop.f32.mrb[0].mxu0
    %v7760 = vadd.f32 %v7719, %v7759
    %v7761 = vpop.f32.mrb[0].mxu0
    %v7762 = vadd.f32 %v7721, %v7761
    %v7763 = vpop.f32.mrb[0].mxu0
    %v7764 = vpop.f32.mrb[0].mxu0
    %7765 = vdwg.mxu0
    %7766 = vmatprep.subr.bf16.mxu0 %v7431
    %7767 = vmatpush1.bf16.msra.mxu0 %v7430
    %7768 = vmatprep.subr.bf16.mxu0 %v7435
    %7769 = vmatpush1.bf16.msra.mxu0 %v7434
    %7770 = vmatprep.subr.bf16.mxu0 %v7439
    %7771 = vmatpush1.bf16.msra.mxu0 %v7438
    %7772 = vmatprep.subr.bf16.mxu0 %v7443
    %7773 = vmatpush1.bf16.msra.mxu0 %v7442
    %7774 = vmatprep.subr.bf16.mxu0 %v7447
    %7775 = vmatpush1.bf16.msra.mxu0 %v7446
    %7776 = vmatprep.subr.bf16.mxu0 %v7451
    %7777 = vmatpush1.bf16.msra.mxu0 %v7450
    %7778 = vmatprep.subr.bf16.mxu0 %v7455
    %7779 = vmatpush1.bf16.msra.mxu0 %v7454
    %7780 = vmatprep.subr.bf16.mxu0 %v7459
    %7781 = vmatpush1.bf16.msra.mxu0 %v7458
    %7782 = vmatprep.subr.bf16.mxu0 %v7463
    %7783 = vmatpush1.bf16.msra.mxu0 %v7462
    %7784 = vmatprep.subr.bf16.mxu0 %v7467
    %7785 = vmatpush1.bf16.msra.mxu0 %v7466
    %7786 = vmatprep.subr.bf16.mxu0 %v7471
    %7787 = vmatpush1.bf16.msra.mxu0 %v7470
    %7788 = vmatprep.subr.bf16.mxu0 %v7475
    %7789 = vmatpush1.bf16.msra.mxu0 %v7474
    %7790 = vmatprep.subr.bf16.mxu0 %v7479
    %7791 = vmatpush1.bf16.msra.mxu0 %v7478
    %7792 = vmatprep.subr.bf16.mxu0 %v7483
    %7793 = vmatpush1.bf16.msra.mxu0 %v7482
    %7794 = vmatprep.subr.bf16.mxu0 %v7487
    %7795 = vmatpush1.bf16.msra.mxu0 %v7486
    %7796 = vmatprep.subr.bf16.mxu0 %v7491
    %7797 = vmatpush1.bf16.msra.mxu0 %v7490
    %7798 = vmatprep.mubr.bf16.mxu0 %v6891
    %7799 = vmatmul.mubr.bf16.gmra.mrb[0].mxu0 %v6890
    %v7800 = vpop.f32.mrb[0].mxu0
    %v7801 = vadd.f32 %v7035, %v7800
    %v7802 = vpop.f32.mrb[0].mxu0
    %v7803 = vadd.f32 %v7039, %v7802
    %v7804 = vpop.f32.mrb[0].mxu0
    %v7805 = vpop.f32.mrb[0].mxu0
    %7806 = vdwg.mxu0
    %7807 = vmatprep.subr.bf16.mxu0 %v7495
    %7808 = vmatpush1.bf16.msra.mxu0 %v7494
    %7809 = vmatprep.subr.bf16.mxu0 %v7499
    %7810 = vmatpush1.bf16.msra.mxu0 %v7498
    %7811 = vmatprep.subr.bf16.mxu0 %v7503
    %7812 = vmatpush1.bf16.msra.mxu0 %v7502
    %7813 = vmatprep.subr.bf16.mxu0 %v7507
    %7814 = vmatpush1.bf16.msra.mxu0 %v7506
    %7815 = vmatprep.subr.bf16.mxu0 %v7511
    %7816 = vmatpush1.bf16.msra.mxu0 %v7510
    %7817 = vmatprep.subr.bf16.mxu0 %v7515
    %7818 = vmatpush1.bf16.msra.mxu0 %v7514
    %7819 = vmatprep.subr.bf16.mxu0 %v7519
    %7820 = vmatpush1.bf16.msra.mxu0 %v7518
    %7821 = vmatprep.subr.bf16.mxu0 %v7523
    %7822 = vmatpush1.bf16.msra.mxu0 %v7522
    %7823 = vmatprep.subr.bf16.mxu0 %v7527
    %7824 = vmatpush1.bf16.msra.mxu0 %v7526
    %7825 = vmatprep.subr.bf16.mxu0 %v7531
    %7826 = vmatpush1.bf16.msra.mxu0 %v7530
    %7827 = vmatprep.subr.bf16.mxu0 %v7535
    %7828 = vmatpush1.bf16.msra.mxu0 %v7534
    %7829 = vmatprep.subr.bf16.mxu0 %v7539
    %7830 = vmatpush1.bf16.msra.mxu0 %v7538
    %7831 = vmatprep.subr.bf16.mxu0 %v7543
    %7832 = vmatpush1.bf16.msra.mxu0 %v7542
    %7833 = vmatprep.subr.bf16.mxu0 %v7547
    %7834 = vmatpush1.bf16.msra.mxu0 %v7546
    %7835 = vmatprep.subr.bf16.mxu0 %v7551
    %7836 = vmatpush1.bf16.msra.mxu0 %v7550
    %7837 = vmatprep.subr.bf16.mxu0 %v7555
    %7838 = vmatpush1.bf16.msra.mxu0 %v7554
    %7839 = vmatprep.mubr.bf16.mxu0 %v6893
    %7840 = vmatmul.mubr.bf16.gmra.mrb[0].mxu0 %v6892
    %v7841 = vpop.f32.mrb[0].mxu0
    %v7842 = vadd.f32 %v7801, %v7841
    %v7843 = vpop.f32.mrb[0].mxu0
    %v7844 = vadd.f32 %v7803, %v7843
    %v7845 = vpop.f32.mrb[0].mxu0
    %v7846 = vpop.f32.mrb[0].mxu0
    %7847 = vdwg.mxu0
    %v7848 = vmax.f32 %v7760, 0.0
    %v7849 = vmax.f32 %v7762, 0.0
    %v7850 = vmax.f32 %v7842, 0.0
    %v7851 = vmax.f32 %v7844, 0.0
    %v7852 = vpack.c.bf16 %v7848, %v7848
    %v7853 = vpack.c.bf16 %v7849, %v7849
    %v7854 = vpack.c.bf16 %v7850, %v7850
    %v7855 = vpack.c.bf16 %v7851, %v7851
    %v7856 = vld [vmem:[#allocation12] sm:$0xff]
    %v7857 = vld [vmem:[#allocation12 + $0x8] sm:$0xff]
    %v7858 = vld [vmem:[#allocation12 + $0x10] sm:$0xff]
    %v7859 = vld [vmem:[#allocation12 + $0x18] sm:$0xff]
    %v7860 = vld [vmem:[#allocation12 + $0x20] sm:$0xff]
    %v7861 = vld [vmem:[#allocation12 + $0x28] sm:$0xff]
    %v7862 = vld [vmem:[#allocation12 + $0x30] sm:$0xff]
    %v7863 = vld [vmem:[#allocation12 + $0x38] sm:$0xff]
    %v7864 = vld [vmem:[#allocation12 + $0x40] sm:$0xff]
    %v7865 = vld [vmem:[#allocation12 + $0x48] sm:$0xff]
    %v7866 = vld [vmem:[#allocation12 + $0x50] sm:$0xff]
    %v7867 = vld [vmem:[#allocation12 + $0x58] sm:$0xff]
    %v7868 = vld [vmem:[#allocation12 + $0x60] sm:$0xff]
    %v7869 = vld [vmem:[#allocation12 + $0x68] sm:$0xff]
    %v7870 = vld [vmem:[#allocation12 + $0x70] sm:$0xff]
    %v7871 = vld [vmem:[#allocation12 + $0x78] sm:$0xff]
    %v7872 = vld [vmem:[#allocation12 + $0x80] sm:$0xff]
    %v7873 = vld [vmem:[#allocation12 + $0x88] sm:$0xff]
    %v7874 = vld [vmem:[#allocation12 + $0x90] sm:$0xff]
    %v7875 = vld [vmem:[#allocation12 + $0x98] sm:$0xff]
    %v7876 = vld [vmem:[#allocation12 + $0xa0] sm:$0xff]
    %v7877 = vld [vmem:[#allocation12 + $0xa8] sm:$0xff]
    %v7878 = vld [vmem:[#allocation12 + $0xb0] sm:$0xff]
    %v7879 = vld [vmem:[#allocation12 + $0xb8] sm:$0xff]
    %v7880 = vld [vmem:[#allocation12 + $0xc0] sm:$0xff]
    %v7881 = vld [vmem:[#allocation12 + $0xc8] sm:$0xff]
    %v7882 = vld [vmem:[#allocation12 + $0xd0] sm:$0xff]
    %v7883 = vld [vmem:[#allocation12 + $0xd8] sm:$0xff]
    %v7884 = vld [vmem:[#allocation12 + $0xe0] sm:$0xff]
    %v7885 = vld [vmem:[#allocation12 + $0xe8] sm:$0xff]
    %v7886 = vld [vmem:[#allocation12 + $0xf0] sm:$0xff]
    %v7887 = vld [vmem:[#allocation12 + $0xf8] sm:$0xff]
    %v7888 = vld [vmem:[#allocation12 + $0x100] sm:$0xff]
    %v7889 = vld [vmem:[#allocation12 + $0x108] sm:$0xff]
    %v7890 = vld [vmem:[#allocation12 + $0x110] sm:$0xff]
    %v7891 = vld [vmem:[#allocation12 + $0x118] sm:$0xff]
    %v7892 = vld [vmem:[#allocation12 + $0x120] sm:$0xff]
    %v7893 = vld [vmem:[#allocation12 + $0x128] sm:$0xff]
    %v7894 = vld [vmem:[#allocation12 + $0x130] sm:$0xff]
    %v7895 = vld [vmem:[#allocation12 + $0x138] sm:$0xff]
    %v7896 = vld [vmem:[#allocation12 + $0x140] sm:$0xff]
    %v7897 = vld [vmem:[#allocation12 + $0x148] sm:$0xff]
    %v7898 = vld [vmem:[#allocation12 + $0x150] sm:$0xff]
    %v7899 = vld [vmem:[#allocation12 + $0x158] sm:$0xff]
    %v7900 = vld [vmem:[#allocation12 + $0x160] sm:$0xff]
    %v7901 = vld [vmem:[#allocation12 + $0x168] sm:$0xff]
    %v7902 = vld [vmem:[#allocation12 + $0x170] sm:$0xff]
    %v7903 = vld [vmem:[#allocation12 + $0x178] sm:$0xff]
    %v7904 = vld [vmem:[#allocation12 + $0x180] sm:$0xff]
    %v7905 = vld [vmem:[#allocation12 + $0x188] sm:$0xff]
    %v7906 = vld [vmem:[#allocation12 + $0x190] sm:$0xff]
    %v7907 = vld [vmem:[#allocation12 + $0x198] sm:$0xff]
    %v7908 = vld [vmem:[#allocation12 + $0x1a0] sm:$0xff]
    %v7909 = vld [vmem:[#allocation12 + $0x1a8] sm:$0xff]
    %v7910 = vld [vmem:[#allocation12 + $0x1b0] sm:$0xff]
    %v7911 = vld [vmem:[#allocation12 + $0x1b8] sm:$0xff]
    %v7912 = vld [vmem:[#allocation12 + $0x1c0] sm:$0xff]
    %v7913 = vld [vmem:[#allocation12 + $0x1c8] sm:$0xff]
    %v7914 = vld [vmem:[#allocation12 + $0x1d0] sm:$0xff]
    %v7915 = vld [vmem:[#allocation12 + $0x1d8] sm:$0xff]
    %v7916 = vld [vmem:[#allocation12 + $0x1e0] sm:$0xff]
    %v7917 = vld [vmem:[#allocation12 + $0x1e8] sm:$0xff]
    %v7918 = vld [vmem:[#allocation12 + $0x1f0] sm:$0xff]
    %v7919 = vld [vmem:[#allocation12 + $0x1f8] sm:$0xff]
    %v7920 = vld [vmem:[#allocation12 + $0x200] sm:$0xff]
    %v7921 = vld [vmem:[#allocation12 + $0x208] sm:$0xff]
    %v7922 = vld [vmem:[#allocation12 + $0x210] sm:$0xff]
    %v7923 = vld [vmem:[#allocation12 + $0x218] sm:$0xff]
    %v7924 = vld [vmem:[#allocation12 + $0x220] sm:$0xff]
    %v7925 = vld [vmem:[#allocation12 + $0x228] sm:$0xff]
    %v7926 = vld [vmem:[#allocation12 + $0x230] sm:$0xff]
    %v7927 = vld [vmem:[#allocation12 + $0x238] sm:$0xff]
    %v7928 = vld [vmem:[#allocation12 + $0x240] sm:$0xff]
    %v7929 = vld [vmem:[#allocation12 + $0x248] sm:$0xff]
    %v7930 = vld [vmem:[#allocation12 + $0x250] sm:$0xff]
    %v7931 = vld [vmem:[#allocation12 + $0x258] sm:$0xff]
    %v7932 = vld [vmem:[#allocation12 + $0x260] sm:$0xff]
    %v7933 = vld [vmem:[#allocation12 + $0x268] sm:$0xff]
    %v7934 = vld [vmem:[#allocation12 + $0x270] sm:$0xff]
    %v7935 = vld [vmem:[#allocation12 + $0x278] sm:$0xff]
    %v7936 = vld [vmem:[#allocation12 + $0x280] sm:$0xff]
    %v7937 = vld [vmem:[#allocation12 + $0x288] sm:$0xff]
    %v7938 = vld [vmem:[#allocation12 + $0x290] sm:$0xff]
    %v7939 = vld [vmem:[#allocation12 + $0x298] sm:$0xff]
    %v7940 = vld [vmem:[#allocation12 + $0x2a0] sm:$0xff]
    %v7941 = vld [vmem:[#allocation12 + $0x2a8] sm:$0xff]
    %v7942 = vld [vmem:[#allocation12 + $0x2b0] sm:$0xff]
    %v7943 = vld [vmem:[#allocation12 + $0x2b8] sm:$0xff]
    %v7944 = vld [vmem:[#allocation12 + $0x2c0] sm:$0xff]
    %v7945 = vld [vmem:[#allocation12 + $0x2c8] sm:$0xff]
    %v7946 = vld [vmem:[#allocation12 + $0x2d0] sm:$0xff]
    %v7947 = vld [vmem:[#allocation12 + $0x2d8] sm:$0xff]
    %v7948 = vld [vmem:[#allocation12 + $0x2e0] sm:$0xff]
    %v7949 = vld [vmem:[#allocation12 + $0x2e8] sm:$0xff]
    %v7950 = vld [vmem:[#allocation12 + $0x2f0] sm:$0xff]
    %v7951 = vld [vmem:[#allocation12 + $0x2f8] sm:$0xff]
    %v7952 = vld [vmem:[#allocation12 + $0x300] sm:$0xff]
    %v7953 = vld [vmem:[#allocation12 + $0x308] sm:$0xff]
    %v7954 = vld [vmem:[#allocation12 + $0x310] sm:$0xff]
    %v7955 = vld [vmem:[#allocation12 + $0x318] sm:$0xff]
    %v7956 = vld [vmem:[#allocation12 + $0x320] sm:$0xff]
    %v7957 = vld [vmem:[#allocation12 + $0x328] sm:$0xff]
    %v7958 = vld [vmem:[#allocation12 + $0x330] sm:$0xff]
    %v7959 = vld [vmem:[#allocation12 + $0x338] sm:$0xff]
    %v7960 = vld [vmem:[#allocation12 + $0x340] sm:$0xff]
    %v7961 = vld [vmem:[#allocation12 + $0x348] sm:$0xff]
    %v7962 = vld [vmem:[#allocation12 + $0x350] sm:$0xff]
    %v7963 = vld [vmem:[#allocation12 + $0x358] sm:$0xff]
    %v7964 = vld [vmem:[#allocation12 + $0x360] sm:$0xff]
    %v7965 = vld [vmem:[#allocation12 + $0x368] sm:$0xff]
    %v7966 = vld [vmem:[#allocation12 + $0x370] sm:$0xff]
    %v7967 = vld [vmem:[#allocation12 + $0x378] sm:$0xff]
    %v7968 = vld [vmem:[#allocation12 + $0x380] sm:$0xff]
    %v7969 = vld [vmem:[#allocation12 + $0x388] sm:$0xff]
    %v7970 = vld [vmem:[#allocation12 + $0x390] sm:$0xff]
    %v7971 = vld [vmem:[#allocation12 + $0x398] sm:$0xff]
    %v7972 = vld [vmem:[#allocation12 + $0x3a0] sm:$0xff]
    %v7973 = vld [vmem:[#allocation12 + $0x3a8] sm:$0xff]
    %v7974 = vld [vmem:[#allocation12 + $0x3b0] sm:$0xff]
    %v7975 = vld [vmem:[#allocation12 + $0x3b8] sm:$0xff]
    %v7976 = vld [vmem:[#allocation12 + $0x3c0] sm:$0xff]
    %v7977 = vld [vmem:[#allocation12 + $0x3c8] sm:$0xff]
    %v7978 = vld [vmem:[#allocation12 + $0x3d0] sm:$0xff]
    %v7979 = vld [vmem:[#allocation12 + $0x3d8] sm:$0xff]
    %v7980 = vld [vmem:[#allocation12 + $0x3e0] sm:$0xff]
    %v7981 = vld [vmem:[#allocation12 + $0x3e8] sm:$0xff]
    %v7982 = vld [vmem:[#allocation12 + $0x3f0] sm:$0xff]
    %v7983 = vld [vmem:[#allocation12 + $0x3f8] sm:$0xff]
    %v7984 = vld [vmem:[#allocation12 + $0x400] sm:$0xff]
    %v7985 = vld [vmem:[#allocation12 + $0x408] sm:$0xff]
    %v7986 = vld [vmem:[#allocation12 + $0x410] sm:$0xff]
    %v7987 = vld [vmem:[#allocation12 + $0x418] sm:$0xff]
    %v7988 = vld [vmem:[#allocation12 + $0x420] sm:$0xff]
    %v7989 = vld [vmem:[#allocation12 + $0x428] sm:$0xff]
    %v7990 = vld [vmem:[#allocation12 + $0x430] sm:$0xff]
    %v7991 = vld [vmem:[#allocation12 + $0x438] sm:$0xff]
    %v7992 = vld [vmem:[#allocation12 + $0x440] sm:$0xff]
    %v7993 = vld [vmem:[#allocation12 + $0x448] sm:$0xff]
    %v7994 = vld [vmem:[#allocation12 + $0x450] sm:$0xff]
    %v7995 = vld [vmem:[#allocation12 + $0x458] sm:$0xff]
    %v7996 = vld [vmem:[#allocation12 + $0x460] sm:$0xff]
    %v7997 = vld [vmem:[#allocation12 + $0x468] sm:$0xff]
    %v7998 = vld [vmem:[#allocation12 + $0x470] sm:$0xff]
    %v7999 = vld [vmem:[#allocation12 + $0x478] sm:$0xff]
    %v8000 = vld [vmem:[#allocation12 + $0x480] sm:$0xff]
    %v8001 = vld [vmem:[#allocation12 + $0x488] sm:$0xff]
    %v8002 = vld [vmem:[#allocation12 + $0x490] sm:$0xff]
    %v8003 = vld [vmem:[#allocation12 + $0x498] sm:$0xff]
    %v8004 = vld [vmem:[#allocation12 + $0x4a0] sm:$0xff]
    %v8005 = vld [vmem:[#allocation12 + $0x4a8] sm:$0xff]
    %v8006 = vld [vmem:[#allocation12 + $0x4b0] sm:$0xff]
    %v8007 = vld [vmem:[#allocation12 + $0x4b8] sm:$0xff]
    %v8008 = vld [vmem:[#allocation12 + $0x4c0] sm:$0xff]
    %v8009 = vld [vmem:[#allocation12 + $0x4c8] sm:$0xff]
    %v8010 = vld [vmem:[#allocation12 + $0x4d0] sm:$0xff]
    %v8011 = vld [vmem:[#allocation12 + $0x4d8] sm:$0xff]
    %v8012 = vld [vmem:[#allocation12 + $0x4e0] sm:$0xff]
    %v8013 = vld [vmem:[#allocation12 + $0x4e8] sm:$0xff]
    %v8014 = vld [vmem:[#allocation12 + $0x4f0] sm:$0xff]
    %v8015 = vld [vmem:[#allocation12 + $0x4f8] sm:$0xff]
    %v8016 = vld [vmem:[#allocation12 + $0x500] sm:$0xff]
    %v8017 = vld [vmem:[#allocation12 + $0x508] sm:$0xff]
    %v8018 = vld [vmem:[#allocation12 + $0x510] sm:$0xff]
    %v8019 = vld [vmem:[#allocation12 + $0x518] sm:$0xff]
    %v8020 = vld [vmem:[#allocation12 + $0x520] sm:$0xff]
    %v8021 = vld [vmem:[#allocation12 + $0x528] sm:$0xff]
    %v8022 = vld [vmem:[#allocation12 + $0x530] sm:$0xff]
    %v8023 = vld [vmem:[#allocation12 + $0x538] sm:$0xff]
    %v8024 = vld [vmem:[#allocation12 + $0x540] sm:$0xff]
    %v8025 = vld [vmem:[#allocation12 + $0x548] sm:$0xff]
    %v8026 = vld [vmem:[#allocation12 + $0x550] sm:$0xff]
    %v8027 = vld [vmem:[#allocation12 + $0x558] sm:$0xff]
    %v8028 = vld [vmem:[#allocation12 + $0x560] sm:$0xff]
    %v8029 = vld [vmem:[#allocation12 + $0x568] sm:$0xff]
    %v8030 = vld [vmem:[#allocation12 + $0x570] sm:$0xff]
    %v8031 = vld [vmem:[#allocation12 + $0x578] sm:$0xff]
    %v8032 = vld [vmem:[#allocation12 + $0x580] sm:$0xff]
    %v8033 = vld [vmem:[#allocation12 + $0x588] sm:$0xff]
    %v8034 = vld [vmem:[#allocation12 + $0x590] sm:$0xff]
    %v8035 = vld [vmem:[#allocation12 + $0x598] sm:$0xff]
    %v8036 = vld [vmem:[#allocation12 + $0x5a0] sm:$0xff]
    %v8037 = vld [vmem:[#allocation12 + $0x5a8] sm:$0xff]
    %v8038 = vld [vmem:[#allocation12 + $0x5b0] sm:$0xff]
    %v8039 = vld [vmem:[#allocation12 + $0x5b8] sm:$0xff]
    %v8040 = vld [vmem:[#allocation12 + $0x5c0] sm:$0xff]
    %v8041 = vld [vmem:[#allocation12 + $0x5c8] sm:$0xff]
    %v8042 = vld [vmem:[#allocation12 + $0x5d0] sm:$0xff]
    %v8043 = vld [vmem:[#allocation12 + $0x5d8] sm:$0xff]
    %v8044 = vld [vmem:[#allocation12 + $0x5e0] sm:$0xff]
    %v8045 = vld [vmem:[#allocation12 + $0x5e8] sm:$0xff]
    %v8046 = vld [vmem:[#allocation12 + $0x5f0] sm:$0xff]
    %v8047 = vld [vmem:[#allocation12 + $0x5f8] sm:$0xff]
    %v8048 = vld [vmem:[#allocation12 + $0x600] sm:$0xff]
    %v8049 = vld [vmem:[#allocation12 + $0x608] sm:$0xff]
    %v8050 = vld [vmem:[#allocation12 + $0x610] sm:$0xff]
    %v8051 = vld [vmem:[#allocation12 + $0x618] sm:$0xff]
    %v8052 = vld [vmem:[#allocation12 + $0x620] sm:$0xff]
    %v8053 = vld [vmem:[#allocation12 + $0x628] sm:$0xff]
    %v8054 = vld [vmem:[#allocation12 + $0x630] sm:$0xff]
    %v8055 = vld [vmem:[#allocation12 + $0x638] sm:$0xff]
    %v8056 = vld [vmem:[#allocation12 + $0x640] sm:$0xff]
    %v8057 = vld [vmem:[#allocation12 + $0x648] sm:$0xff]
    %v8058 = vld [vmem:[#allocation12 + $0x650] sm:$0xff]
    %v8059 = vld [vmem:[#allocation12 + $0x658] sm:$0xff]
    %v8060 = vld [vmem:[#allocation12 + $0x660] sm:$0xff]
    %v8061 = vld [vmem:[#allocation12 + $0x668] sm:$0xff]
    %v8062 = vld [vmem:[#allocation12 + $0x670] sm:$0xff]
    %v8063 = vld [vmem:[#allocation12 + $0x678] sm:$0xff]
    %v8064 = vld [vmem:[#allocation12 + $0x680] sm:$0xff]
    %v8065 = vld [vmem:[#allocation12 + $0x688] sm:$0xff]
    %v8066 = vld [vmem:[#allocation12 + $0x690] sm:$0xff]
    %v8067 = vld [vmem:[#allocation12 + $0x698] sm:$0xff]
    %v8068 = vld [vmem:[#allocation12 + $0x6a0] sm:$0xff]
    %v8069 = vld [vmem:[#allocation12 + $0x6a8] sm:$0xff]
    %v8070 = vld [vmem:[#allocation12 + $0x6b0] sm:$0xff]
    %v8071 = vld [vmem:[#allocation12 + $0x6b8] sm:$0xff]
    %v8072 = vld [vmem:[#allocation12 + $0x6c0] sm:$0xff]
    %v8073 = vld [vmem:[#allocation12 + $0x6c8] sm:$0xff]
    %v8074 = vld [vmem:[#allocation12 + $0x6d0] sm:$0xff]
    %v8075 = vld [vmem:[#allocation12 + $0x6d8] sm:$0xff]
    %v8076 = vld [vmem:[#allocation12 + $0x6e0] sm:$0xff]
    %v8077 = vld [vmem:[#allocation12 + $0x6e8] sm:$0xff]
    %v8078 = vld [vmem:[#allocation12 + $0x6f0] sm:$0xff]
    %v8079 = vld [vmem:[#allocation12 + $0x6f8] sm:$0xff]
    %v8080 = vld [vmem:[#allocation12 + $0x700] sm:$0xff]
    %v8081 = vld [vmem:[#allocation12 + $0x708] sm:$0xff]
    %v8082 = vld [vmem:[#allocation12 + $0x710] sm:$0xff]
    %v8083 = vld [vmem:[#allocation12 + $0x718] sm:$0xff]
    %v8084 = vld [vmem:[#allocation12 + $0x720] sm:$0xff]
    %v8085 = vld [vmem:[#allocation12 + $0x728] sm:$0xff]
    %v8086 = vld [vmem:[#allocation12 + $0x730] sm:$0xff]
    %v8087 = vld [vmem:[#allocation12 + $0x738] sm:$0xff]
    %v8088 = vld [vmem:[#allocation12 + $0x740] sm:$0xff]
    %v8089 = vld [vmem:[#allocation12 + $0x748] sm:$0xff]
    %v8090 = vld [vmem:[#allocation12 + $0x750] sm:$0xff]
    %v8091 = vld [vmem:[#allocation12 + $0x758] sm:$0xff]
    %v8092 = vld [vmem:[#allocation12 + $0x760] sm:$0xff]
    %v8093 = vld [vmem:[#allocation12 + $0x768] sm:$0xff]
    %v8094 = vld [vmem:[#allocation12 + $0x770] sm:$0xff]
    %v8095 = vld [vmem:[#allocation12 + $0x778] sm:$0xff]
    %v8096 = vld [vmem:[#allocation12 + $0x780] sm:$0xff]
    %v8097 = vld [vmem:[#allocation12 + $0x788] sm:$0xff]
    %v8098 = vld [vmem:[#allocation12 + $0x790] sm:$0xff]
    %v8099 = vld [vmem:[#allocation12 + $0x798] sm:$0xff]
    %v8100 = vld [vmem:[#allocation12 + $0x7a0] sm:$0xff]
    %v8101 = vld [vmem:[#allocation12 + $0x7a8] sm:$0xff]
    %v8102 = vld [vmem:[#allocation12 + $0x7b0] sm:$0xff]
    %v8103 = vld [vmem:[#allocation12 + $0x7b8] sm:$0xff]
    %v8104 = vld [vmem:[#allocation12 + $0x7c0] sm:$0xff]
    %v8105 = vld [vmem:[#allocation12 + $0x7c8] sm:$0xff]
    %v8106 = vld [vmem:[#allocation12 + $0x7d0] sm:$0xff]
    %v8107 = vld [vmem:[#allocation12 + $0x7d8] sm:$0xff]
    %v8108 = vld [vmem:[#allocation12 + $0x7e0] sm:$0xff]
    %v8109 = vld [vmem:[#allocation12 + $0x7e8] sm:$0xff]
    %v8110 = vld [vmem:[#allocation12 + $0x7f0] sm:$0xff]
    %v8111 = vld [vmem:[#allocation12 + $0x7f8] sm:$0xff]
    %v8112 = vld [vmem:[#allocation12 + $0x800] sm:$0xff]
    %v8113 = vld [vmem:[#allocation12 + $0x808] sm:$0xff]
    %v8114 = vld [vmem:[#allocation12 + $0x810] sm:$0xff]
    %v8115 = vld [vmem:[#allocation12 + $0x818] sm:$0xff]
    %v8116 = vld [vmem:[#allocation12 + $0x820] sm:$0xff]
    %v8117 = vld [vmem:[#allocation12 + $0x828] sm:$0xff]
    %v8118 = vld [vmem:[#allocation12 + $0x830] sm:$0xff]
    %v8119 = vld [vmem:[#allocation12 + $0x838] sm:$0xff]
    %v8120 = vld [vmem:[#allocation12 + $0x840] sm:$0xff]
    %v8121 = vld [vmem:[#allocation12 + $0x848] sm:$0xff]
    %v8122 = vld [vmem:[#allocation12 + $0x850] sm:$0xff]
    %v8123 = vld [vmem:[#allocation12 + $0x858] sm:$0xff]
    %v8124 = vld [vmem:[#allocation12 + $0x860] sm:$0xff]
    %v8125 = vld [vmem:[#allocation12 + $0x868] sm:$0xff]
    %v8126 = vld [vmem:[#allocation12 + $0x870] sm:$0xff]
    %v8127 = vld [vmem:[#allocation12 + $0x878] sm:$0xff]
    %v8128 = vld [vmem:[#allocation12 + $0x880] sm:$0xff]
    %v8129 = vld [vmem:[#allocation12 + $0x888] sm:$0xff]
    %v8130 = vld [vmem:[#allocation12 + $0x890] sm:$0xff]
    %v8131 = vld [vmem:[#allocation12 + $0x898] sm:$0xff]
    %v8132 = vld [vmem:[#allocation12 + $0x8a0] sm:$0xff]
    %v8133 = vld [vmem:[#allocation12 + $0x8a8] sm:$0xff]
    %v8134 = vld [vmem:[#allocation12 + $0x8b0] sm:$0xff]
    %v8135 = vld [vmem:[#allocation12 + $0x8b8] sm:$0xff]
    %v8136 = vld [vmem:[#allocation12 + $0x8c0] sm:$0xff]
    %v8137 = vld [vmem:[#allocation12 + $0x8c8] sm:$0xff]
    %v8138 = vld [vmem:[#allocation12 + $0x8d0] sm:$0xff]
    %v8139 = vld [vmem:[#allocation12 + $0x8d8] sm:$0xff]
    %v8140 = vld [vmem:[#allocation12 + $0x8e0] sm:$0xff]
    %v8141 = vld [vmem:[#allocation12 + $0x8e8] sm:$0xff]
    %v8142 = vld [vmem:[#allocation12 + $0x8f0] sm:$0xff]
    %v8143 = vld [vmem:[#allocation12 + $0x8f8] sm:$0xff]
    %v8144 = vld [vmem:[#allocation12 + $0x900] sm:$0xff]
    %v8145 = vld [vmem:[#allocation12 + $0x908] sm:$0xff]
    %v8146 = vld [vmem:[#allocation12 + $0x910] sm:$0xff]
    %v8147 = vld [vmem:[#allocation12 + $0x918] sm:$0xff]
    %v8148 = vld [vmem:[#allocation12 + $0x920] sm:$0xff]
    %v8149 = vld [vmem:[#allocation12 + $0x928] sm:$0xff]
    %v8150 = vld [vmem:[#allocation12 + $0x930] sm:$0xff]
    %v8151 = vld [vmem:[#allocation12 + $0x938] sm:$0xff]
    %v8152 = vld [vmem:[#allocation12 + $0x940] sm:$0xff]
    %v8153 = vld [vmem:[#allocation12 + $0x948] sm:$0xff]
    %v8154 = vld [vmem:[#allocation12 + $0x950] sm:$0xff]
    %v8155 = vld [vmem:[#allocation12 + $0x958] sm:$0xff]
    %v8156 = vld [vmem:[#allocation12 + $0x960] sm:$0xff]
    %v8157 = vld [vmem:[#allocation12 + $0x968] sm:$0xff]
    %v8158 = vld [vmem:[#allocation12 + $0x970] sm:$0xff]
    %v8159 = vld [vmem:[#allocation12 + $0x978] sm:$0xff]
    %v8160 = vld [vmem:[#allocation12 + $0x980] sm:$0xff]
    %v8161 = vld [vmem:[#allocation12 + $0x988] sm:$0xff]
    %v8162 = vld [vmem:[#allocation12 + $0x990] sm:$0xff]
    %v8163 = vld [vmem:[#allocation12 + $0x998] sm:$0xff]
    %v8164 = vld [vmem:[#allocation12 + $0x9a0] sm:$0xff]
    %v8165 = vld [vmem:[#allocation12 + $0x9a8] sm:$0xff]
    %v8166 = vld [vmem:[#allocation12 + $0x9b0] sm:$0xff]
    %v8167 = vld [vmem:[#allocation12 + $0x9b8] sm:$0xff]
    %v8168 = vld [vmem:[#allocation12 + $0x9c0] sm:$0xff]
    %v8169 = vld [vmem:[#allocation12 + $0x9c8] sm:$0xff]
    %v8170 = vld [vmem:[#allocation12 + $0x9d0] sm:$0xff]
    %v8171 = vld [vmem:[#allocation12 + $0x9d8] sm:$0xff]
    %v8172 = vld [vmem:[#allocation12 + $0x9e0] sm:$0xff]
    %v8173 = vld [vmem:[#allocation12 + $0x9e8] sm:$0xff]
    %v8174 = vld [vmem:[#allocation12 + $0x9f0] sm:$0xff]
    %v8175 = vld [vmem:[#allocation12 + $0x9f8] sm:$0xff]
    %v8176 = vld [vmem:[#allocation12 + $0xa00] sm:$0xff]
    %v8177 = vld [vmem:[#allocation12 + $0xa08] sm:$0xff]
    %v8178 = vld [vmem:[#allocation12 + $0xa10] sm:$0xff]
    %v8179 = vld [vmem:[#allocation12 + $0xa18] sm:$0xff]
    %v8180 = vld [vmem:[#allocation12 + $0xa20] sm:$0xff]
    %v8181 = vld [vmem:[#allocation12 + $0xa28] sm:$0xff]
    %v8182 = vld [vmem:[#allocation12 + $0xa30] sm:$0xff]
    %v8183 = vld [vmem:[#allocation12 + $0xa38] sm:$0xff]
    %v8184 = vld [vmem:[#allocation12 + $0xa40] sm:$0xff]
    %v8185 = vld [vmem:[#allocation12 + $0xa48] sm:$0xff]
    %v8186 = vld [vmem:[#allocation12 + $0xa50] sm:$0xff]
    %v8187 = vld [vmem:[#allocation12 + $0xa58] sm:$0xff]
    %v8188 = vld [vmem:[#allocation12 + $0xa60] sm:$0xff]
    %v8189 = vld [vmem:[#allocation12 + $0xa68] sm:$0xff]
    %v8190 = vld [vmem:[#allocation12 + $0xa70] sm:$0xff]
    %v8191 = vld [vmem:[#allocation12 + $0xa78] sm:$0xff]
    %v8192 = vld [vmem:[#allocation12 + $0xa80] sm:$0xff]
    %v8193 = vld [vmem:[#allocation12 + $0xa88] sm:$0xff]
    %v8194 = vld [vmem:[#allocation12 + $0xa90] sm:$0xff]
    %v8195 = vld [vmem:[#allocation12 + $0xa98] sm:$0xff]
    %v8196 = vld [vmem:[#allocation12 + $0xaa0] sm:$0xff]
    %v8197 = vld [vmem:[#allocation12 + $0xaa8] sm:$0xff]
    %v8198 = vld [vmem:[#allocation12 + $0xab0] sm:$0xff]
    %v8199 = vld [vmem:[#allocation12 + $0xab8] sm:$0xff]
    %v8200 = vld [vmem:[#allocation12 + $0xac0] sm:$0xff]
    %v8201 = vld [vmem:[#allocation12 + $0xac8] sm:$0xff]
    %v8202 = vld [vmem:[#allocation12 + $0xad0] sm:$0xff]
    %v8203 = vld [vmem:[#allocation12 + $0xad8] sm:$0xff]
    %v8204 = vld [vmem:[#allocation12 + $0xae0] sm:$0xff]
    %v8205 = vld [vmem:[#allocation12 + $0xae8] sm:$0xff]
    %v8206 = vld [vmem:[#allocation12 + $0xaf0] sm:$0xff]
    %v8207 = vld [vmem:[#allocation12 + $0xaf8] sm:$0xff]
    %v8208 = vld [vmem:[#allocation12 + $0xb00] sm:$0xff]
    %v8209 = vld [vmem:[#allocation12 + $0xb08] sm:$0xff]
    %v8210 = vld [vmem:[#allocation12 + $0xb10] sm:$0xff]
    %v8211 = vld [vmem:[#allocation12 + $0xb18] sm:$0xff]
    %v8212 = vld [vmem:[#allocation12 + $0xb20] sm:$0xff]
    %v8213 = vld [vmem:[#allocation12 + $0xb28] sm:$0xff]
    %v8214 = vld [vmem:[#allocation12 + $0xb30] sm:$0xff]
    %v8215 = vld [vmem:[#allocation12 + $0xb38] sm:$0xff]
    %v8216 = vld [vmem:[#allocation12 + $0xb40] sm:$0xff]
    %v8217 = vld [vmem:[#allocation12 + $0xb48] sm:$0xff]
    %v8218 = vld [vmem:[#allocation12 + $0xb50] sm:$0xff]
    %v8219 = vld [vmem:[#allocation12 + $0xb58] sm:$0xff]
    %v8220 = vld [vmem:[#allocation12 + $0xb60] sm:$0xff]
    %v8221 = vld [vmem:[#allocation12 + $0xb68] sm:$0xff]
    %v8222 = vld [vmem:[#allocation12 + $0xb70] sm:$0xff]
    %v8223 = vld [vmem:[#allocation12 + $0xb78] sm:$0xff]
    %v8224 = vld [vmem:[#allocation12 + $0xb80] sm:$0xff]
    %v8225 = vld [vmem:[#allocation12 + $0xb88] sm:$0xff]
    %v8226 = vld [vmem:[#allocation12 + $0xb90] sm:$0xff]
    %v8227 = vld [vmem:[#allocation12 + $0xb98] sm:$0xff]
    %v8228 = vld [vmem:[#allocation12 + $0xba0] sm:$0xff]
    %v8229 = vld [vmem:[#allocation12 + $0xba8] sm:$0xff]
    %v8230 = vld [vmem:[#allocation12 + $0xbb0] sm:$0xff]
    %v8231 = vld [vmem:[#allocation12 + $0xbb8] sm:$0xff]
    %v8232 = vld [vmem:[#allocation12 + $0xbc0] sm:$0xff]
    %v8233 = vld [vmem:[#allocation12 + $0xbc8] sm:$0xff]
    %v8234 = vld [vmem:[#allocation12 + $0xbd0] sm:$0xff]
    %v8235 = vld [vmem:[#allocation12 + $0xbd8] sm:$0xff]
    %v8236 = vld [vmem:[#allocation12 + $0xbe0] sm:$0xff]
    %v8237 = vld [vmem:[#allocation12 + $0xbe8] sm:$0xff]
    %v8238 = vld [vmem:[#allocation12 + $0xbf0] sm:$0xff]
    %v8239 = vld [vmem:[#allocation12 + $0xbf8] sm:$0xff]
    %v8240 = vld [vmem:[#allocation12 + $0xc00] sm:$0xff]
    %v8241 = vld [vmem:[#allocation12 + $0xc08] sm:$0xff]
    %v8242 = vld [vmem:[#allocation12 + $0xc10] sm:$0xff]
    %v8243 = vld [vmem:[#allocation12 + $0xc18] sm:$0xff]
    %v8244 = vld [vmem:[#allocation12 + $0xc20] sm:$0xff]
    %v8245 = vld [vmem:[#allocation12 + $0xc28] sm:$0xff]
    %v8246 = vld [vmem:[#allocation12 + $0xc30] sm:$0xff]
    %v8247 = vld [vmem:[#allocation12 + $0xc38] sm:$0xff]
    %v8248 = vld [vmem:[#allocation12 + $0xc40] sm:$0xff]
    %v8249 = vld [vmem:[#allocation12 + $0xc48] sm:$0xff]
    %v8250 = vld [vmem:[#allocation12 + $0xc50] sm:$0xff]
    %v8251 = vld [vmem:[#allocation12 + $0xc58] sm:$0xff]
    %v8252 = vld [vmem:[#allocation12 + $0xc60] sm:$0xff]
    %v8253 = vld [vmem:[#allocation12 + $0xc68] sm:$0xff]
    %v8254 = vld [vmem:[#allocation12 + $0xc70] sm:$0xff]
    %v8255 = vld [vmem:[#allocation12 + $0xc78] sm:$0xff]
    %v8256 = vld [vmem:[#allocation12 + $0xc80] sm:$0xff]
    %v8257 = vld [vmem:[#allocation12 + $0xc88] sm:$0xff]
    %v8258 = vld [vmem:[#allocation12 + $0xc90] sm:$0xff]
    %v8259 = vld [vmem:[#allocation12 + $0xc98] sm:$0xff]
    %v8260 = vld [vmem:[#allocation12 + $0xca0] sm:$0xff]
    %v8261 = vld [vmem:[#allocation12 + $0xca8] sm:$0xff]
    %v8262 = vld [vmem:[#allocation12 + $0xcb0] sm:$0xff]
    %v8263 = vld [vmem:[#allocation12 + $0xcb8] sm:$0xff]
    %v8264 = vld [vmem:[#allocation12 + $0xcc0] sm:$0xff]
    %v8265 = vld [vmem:[#allocation12 + $0xcc8] sm:$0xff]
    %v8266 = vld [vmem:[#allocation12 + $0xcd0] sm:$0xff]
    %v8267 = vld [vmem:[#allocation12 + $0xcd8] sm:$0xff]
    %v8268 = vld [vmem:[#allocation12 + $0xce0] sm:$0xff]
    %v8269 = vld [vmem:[#allocation12 + $0xce8] sm:$0xff]
    %v8270 = vld [vmem:[#allocation12 + $0xcf0] sm:$0xff]
    %v8271 = vld [vmem:[#allocation12 + $0xcf8] sm:$0xff]
    %v8272 = vld [vmem:[#allocation12 + $0xd00] sm:$0xff]
    %v8273 = vld [vmem:[#allocation12 + $0xd08] sm:$0xff]
    %v8274 = vld [vmem:[#allocation12 + $0xd10] sm:$0xff]
    %v8275 = vld [vmem:[#allocation12 + $0xd18] sm:$0xff]
    %v8276 = vld [vmem:[#allocation12 + $0xd20] sm:$0xff]
    %v8277 = vld [vmem:[#allocation12 + $0xd28] sm:$0xff]
    %v8278 = vld [vmem:[#allocation12 + $0xd30] sm:$0xff]
    %v8279 = vld [vmem:[#allocation12 + $0xd38] sm:$0xff]
    %v8280 = vld [vmem:[#allocation12 + $0xd40] sm:$0xff]
    %v8281 = vld [vmem:[#allocation12 + $0xd48] sm:$0xff]
    %v8282 = vld [vmem:[#allocation12 + $0xd50] sm:$0xff]
    %v8283 = vld [vmem:[#allocation12 + $0xd58] sm:$0xff]
    %v8284 = vld [vmem:[#allocation12 + $0xd60] sm:$0xff]
    %v8285 = vld [vmem:[#allocation12 + $0xd68] sm:$0xff]
    %v8286 = vld [vmem:[#allocation12 + $0xd70] sm:$0xff]
    %v8287 = vld [vmem:[#allocation12 + $0xd78] sm:$0xff]
    %v8288 = vld [vmem:[#allocation12 + $0xd80] sm:$0xff]
    %v8289 = vld [vmem:[#allocation12 + $0xd88] sm:$0xff]
    %v8290 = vld [vmem:[#allocation12 + $0xd90] sm:$0xff]
    %v8291 = vld [vmem:[#allocation12 + $0xd98] sm:$0xff]
    %v8292 = vld [vmem:[#allocation12 + $0xda0] sm:$0xff]
    %v8293 = vld [vmem:[#allocation12 + $0xda8] sm:$0xff]
    %v8294 = vld [vmem:[#allocation12 + $0xdb0] sm:$0xff]
    %v8295 = vld [vmem:[#allocation12 + $0xdb8] sm:$0xff]
    %v8296 = vld [vmem:[#allocation12 + $0xdc0] sm:$0xff]
    %v8297 = vld [vmem:[#allocation12 + $0xdc8] sm:$0xff]
    %v8298 = vld [vmem:[#allocation12 + $0xdd0] sm:$0xff]
    %v8299 = vld [vmem:[#allocation12 + $0xdd8] sm:$0xff]
    %v8300 = vld [vmem:[#allocation12 + $0xde0] sm:$0xff]
    %v8301 = vld [vmem:[#allocation12 + $0xde8] sm:$0xff]
    %v8302 = vld [vmem:[#allocation12 + $0xdf0] sm:$0xff]
    %v8303 = vld [vmem:[#allocation12 + $0xdf8] sm:$0xff]
    %v8304 = vld [vmem:[#allocation12 + $0xe00] sm:$0xff]
    %v8305 = vld [vmem:[#allocation12 + $0xe08] sm:$0xff]
    %v8306 = vld [vmem:[#allocation12 + $0xe10] sm:$0xff]
    %v8307 = vld [vmem:[#allocation12 + $0xe18] sm:$0xff]
    %v8308 = vld [vmem:[#allocation12 + $0xe20] sm:$0xff]
    %v8309 = vld [vmem:[#allocation12 + $0xe28] sm:$0xff]
    %v8310 = vld [vmem:[#allocation12 + $0xe30] sm:$0xff]
    %v8311 = vld [vmem:[#allocation12 + $0xe38] sm:$0xff]
    %v8312 = vld [vmem:[#allocation12 + $0xe40] sm:$0xff]
    %v8313 = vld [vmem:[#allocation12 + $0xe48] sm:$0xff]
    %v8314 = vld [vmem:[#allocation12 + $0xe50] sm:$0xff]
    %v8315 = vld [vmem:[#allocation12 + $0xe58] sm:$0xff]
    %v8316 = vld [vmem:[#allocation12 + $0xe60] sm:$0xff]
    %v8317 = vld [vmem:[#allocation12 + $0xe68] sm:$0xff]
    %v8318 = vld [vmem:[#allocation12 + $0xe70] sm:$0xff]
    %v8319 = vld [vmem:[#allocation12 + $0xe78] sm:$0xff]
    %v8320 = vld [vmem:[#allocation12 + $0xe80] sm:$0xff]
    %v8321 = vld [vmem:[#allocation12 + $0xe88] sm:$0xff]
    %v8322 = vld [vmem:[#allocation12 + $0xe90] sm:$0xff]
    %v8323 = vld [vmem:[#allocation12 + $0xe98] sm:$0xff]
    %v8324 = vld [vmem:[#allocation12 + $0xea0] sm:$0xff]
    %v8325 = vld [vmem:[#allocation12 + $0xea8] sm:$0xff]
    %v8326 = vld [vmem:[#allocation12 + $0xeb0] sm:$0xff]
    %v8327 = vld [vmem:[#allocation12 + $0xeb8] sm:$0xff]
    %v8328 = vld [vmem:[#allocation12 + $0xec0] sm:$0xff]
    %v8329 = vld [vmem:[#allocation12 + $0xec8] sm:$0xff]
    %v8330 = vld [vmem:[#allocation12 + $0xed0] sm:$0xff]
    %v8331 = vld [vmem:[#allocation12 + $0xed8] sm:$0xff]
    %v8332 = vld [vmem:[#allocation12 + $0xee0] sm:$0xff]
    %v8333 = vld [vmem:[#allocation12 + $0xee8] sm:$0xff]
    %v8334 = vld [vmem:[#allocation12 + $0xef0] sm:$0xff]
    %v8335 = vld [vmem:[#allocation12 + $0xef8] sm:$0xff]
    %v8336 = vld [vmem:[#allocation12 + $0xf00] sm:$0xff]
    %v8337 = vld [vmem:[#allocation12 + $0xf08] sm:$0xff]
    %v8338 = vld [vmem:[#allocation12 + $0xf10] sm:$0xff]
    %v8339 = vld [vmem:[#allocation12 + $0xf18] sm:$0xff]
    %v8340 = vld [vmem:[#allocation12 + $0xf20] sm:$0xff]
    %v8341 = vld [vmem:[#allocation12 + $0xf28] sm:$0xff]
    %v8342 = vld [vmem:[#allocation12 + $0xf30] sm:$0xff]
    %v8343 = vld [vmem:[#allocation12 + $0xf38] sm:$0xff]
    %v8344 = vld [vmem:[#allocation12 + $0xf40] sm:$0xff]
    %v8345 = vld [vmem:[#allocation12 + $0xf48] sm:$0xff]
    %v8346 = vld [vmem:[#allocation12 + $0xf50] sm:$0xff]
    %v8347 = vld [vmem:[#allocation12 + $0xf58] sm:$0xff]
    %v8348 = vld [vmem:[#allocation12 + $0xf60] sm:$0xff]
    %v8349 = vld [vmem:[#allocation12 + $0xf68] sm:$0xff]
    %v8350 = vld [vmem:[#allocation12 + $0xf70] sm:$0xff]
    %v8351 = vld [vmem:[#allocation12 + $0xf78] sm:$0xff]
    %v8352 = vld [vmem:[#allocation12 + $0xf80] sm:$0xff]
    %v8353 = vld [vmem:[#allocation12 + $0xf88] sm:$0xff]
    %v8354 = vld [vmem:[#allocation12 + $0xf90] sm:$0xff]
    %v8355 = vld [vmem:[#allocation12 + $0xf98] sm:$0xff]
    %v8356 = vld [vmem:[#allocation12 + $0xfa0] sm:$0xff]
    %v8357 = vld [vmem:[#allocation12 + $0xfa8] sm:$0xff]
    %v8358 = vld [vmem:[#allocation12 + $0xfb0] sm:$0xff]
    %v8359 = vld [vmem:[#allocation12 + $0xfb8] sm:$0xff]
    %v8360 = vld [vmem:[#allocation12 + $0xfc0] sm:$0xff]
    %v8361 = vld [vmem:[#allocation12 + $0xfc8] sm:$0xff]
    %v8362 = vld [vmem:[#allocation12 + $0xfd0] sm:$0xff]
    %v8363 = vld [vmem:[#allocation12 + $0xfd8] sm:$0xff]
    %v8364 = vld [vmem:[#allocation12 + $0xfe0] sm:$0xff]
    %v8365 = vld [vmem:[#allocation12 + $0xfe8] sm:$0xff]
    %v8366 = vld [vmem:[#allocation12 + $0xff0] sm:$0xff]
    %v8367 = vld [vmem:[#allocation12 + $0xff8] sm:$0xff]
    %v8368 = vld [vmem:[#allocation12 + $0x1000] sm:$0xff]
    %v8369 = vld [vmem:[#allocation12 + $0x1008] sm:$0xff]
    %v8370 = vld [vmem:[#allocation12 + $0x1010] sm:$0xff]
    %v8371 = vld [vmem:[#allocation12 + $0x1018] sm:$0xff]
    %v8372 = vld [vmem:[#allocation12 + $0x1020] sm:$0xff]
    %v8373 = vld [vmem:[#allocation12 + $0x1028] sm:$0xff]
    %v8374 = vld [vmem:[#allocation12 + $0x1030] sm:$0xff]
    %v8375 = vld [vmem:[#allocation12 + $0x1038] sm:$0xff]
    %v8376 = vld [vmem:[#allocation12 + $0x1040] sm:$0xff]
    %v8377 = vld [vmem:[#allocation12 + $0x1048] sm:$0xff]
    %v8378 = vld [vmem:[#allocation12 + $0x1050] sm:$0xff]
    %v8379 = vld [vmem:[#allocation12 + $0x1058] sm:$0xff]
    %v8380 = vld [vmem:[#allocation12 + $0x1060] sm:$0xff]
    %v8381 = vld [vmem:[#allocation12 + $0x1068] sm:$0xff]
    %v8382 = vld [vmem:[#allocation12 + $0x1070] sm:$0xff]
    %v8383 = vld [vmem:[#allocation12 + $0x1078] sm:$0xff]
    %v8384 = vld [vmem:[#allocation12 + $0x1080] sm:$0xff]
    %v8385 = vld [vmem:[#allocation12 + $0x1088] sm:$0xff]
    %v8386 = vld [vmem:[#allocation12 + $0x1090] sm:$0xff]
    %v8387 = vld [vmem:[#allocation12 + $0x1098] sm:$0xff]
    %v8388 = vld [vmem:[#allocation12 + $0x10a0] sm:$0xff]
    %v8389 = vld [vmem:[#allocation12 + $0x10a8] sm:$0xff]
    %v8390 = vld [vmem:[#allocation12 + $0x10b0] sm:$0xff]
    %v8391 = vld [vmem:[#allocation12 + $0x10b8] sm:$0xff]
    %v8392 = vld [vmem:[#allocation12 + $0x10c0] sm:$0xff]
    %v8393 = vld [vmem:[#allocation12 + $0x10c8] sm:$0xff]
    %v8394 = vld [vmem:[#allocation12 + $0x10d0] sm:$0xff]
    %v8395 = vld [vmem:[#allocation12 + $0x10d8] sm:$0xff]
    %v8396 = vld [vmem:[#allocation12 + $0x10e0] sm:$0xff]
    %v8397 = vld [vmem:[#allocation12 + $0x10e8] sm:$0xff]
    %v8398 = vld [vmem:[#allocation12 + $0x10f0] sm:$0xff]
    %v8399 = vld [vmem:[#allocation12 + $0x10f8] sm:$0xff]
    %v8400 = vld [vmem:[#allocation12 + $0x1100] sm:$0xff]
    %v8401 = vld [vmem:[#allocation12 + $0x1108] sm:$0xff]
    %v8402 = vld [vmem:[#allocation12 + $0x1110] sm:$0xff]
    %v8403 = vld [vmem:[#allocation12 + $0x1118] sm:$0xff]
    %v8404 = vld [vmem:[#allocation12 + $0x1120] sm:$0xff]
    %v8405 = vld [vmem:[#allocation12 + $0x1128] sm:$0xff]
    %v8406 = vld [vmem:[#allocation12 + $0x1130] sm:$0xff]
    %v8407 = vld [vmem:[#allocation12 + $0x1138] sm:$0xff]
    %v8408 = vld [vmem:[#allocation12 + $0x1140] sm:$0xff]
    %v8409 = vld [vmem:[#allocation12 + $0x1148] sm:$0xff]
    %v8410 = vld [vmem:[#allocation12 + $0x1150] sm:$0xff]
    %v8411 = vld [vmem:[#allocation12 + $0x1158] sm:$0xff]
    %v8412 = vld [vmem:[#allocation12 + $0x1160] sm:$0xff]
    %v8413 = vld [vmem:[#allocation12 + $0x1168] sm:$0xff]
    %v8414 = vld [vmem:[#allocation12 + $0x1170] sm:$0xff]
    %v8415 = vld [vmem:[#allocation12 + $0x1178] sm:$0xff]
    %v8416 = vld [vmem:[#allocation12 + $0x1180] sm:$0xff]
    %v8417 = vld [vmem:[#allocation12 + $0x1188] sm:$0xff]
    %v8418 = vld [vmem:[#allocation12 + $0x1190] sm:$0xff]
    %v8419 = vld [vmem:[#allocation12 + $0x1198] sm:$0xff]
    %v8420 = vld [vmem:[#allocation12 + $0x11a0] sm:$0xff]
    %v8421 = vld [vmem:[#allocation12 + $0x11a8] sm:$0xff]
    %v8422 = vld [vmem:[#allocation12 + $0x11b0] sm:$0xff]
    %v8423 = vld [vmem:[#allocation12 + $0x11b8] sm:$0xff]
    %v8424 = vld [vmem:[#allocation12 + $0x11c0] sm:$0xff]
    %v8425 = vld [vmem:[#allocation12 + $0x11c8] sm:$0xff]
    %v8426 = vld [vmem:[#allocation12 + $0x11d0] sm:$0xff]
    %v8427 = vld [vmem:[#allocation12 + $0x11d8] sm:$0xff]
    %v8428 = vld [vmem:[#allocation12 + $0x11e0] sm:$0xff]
    %v8429 = vld [vmem:[#allocation12 + $0x11e8] sm:$0xff]
    %v8430 = vld [vmem:[#allocation12 + $0x11f0] sm:$0xff]
    %v8431 = vld [vmem:[#allocation12 + $0x11f8] sm:$0xff]
    %v8432 = vld [vmem:[#allocation12 + $0x1200] sm:$0xff]
    %v8433 = vld [vmem:[#allocation12 + $0x1208] sm:$0xff]
    %v8434 = vld [vmem:[#allocation12 + $0x1210] sm:$0xff]
    %v8435 = vld [vmem:[#allocation12 + $0x1218] sm:$0xff]
    %v8436 = vld [vmem:[#allocation12 + $0x1220] sm:$0xff]
    %v8437 = vld [vmem:[#allocation12 + $0x1228] sm:$0xff]
    %v8438 = vld [vmem:[#allocation12 + $0x1230] sm:$0xff]
    %v8439 = vld [vmem:[#allocation12 + $0x1238] sm:$0xff]
    %v8440 = vld [vmem:[#allocation12 + $0x1240] sm:$0xff]
    %v8441 = vld [vmem:[#allocation12 + $0x1248] sm:$0xff]
    %v8442 = vld [vmem:[#allocation12 + $0x1250] sm:$0xff]
    %v8443 = vld [vmem:[#allocation12 + $0x1258] sm:$0xff]
    %v8444 = vld [vmem:[#allocation12 + $0x1260] sm:$0xff]
    %v8445 = vld [vmem:[#allocation12 + $0x1268] sm:$0xff]
    %v8446 = vld [vmem:[#allocation12 + $0x1270] sm:$0xff]
    %v8447 = vld [vmem:[#allocation12 + $0x1278] sm:$0xff]
    %v8448 = vld [vmem:[#allocation12 + $0x1280] sm:$0xff]
    %v8449 = vld [vmem:[#allocation12 + $0x1288] sm:$0xff]
    %v8450 = vld [vmem:[#allocation12 + $0x1290] sm:$0xff]
    %v8451 = vld [vmem:[#allocation12 + $0x1298] sm:$0xff]
    %v8452 = vld [vmem:[#allocation12 + $0x12a0] sm:$0xff]
    %v8453 = vld [vmem:[#allocation12 + $0x12a8] sm:$0xff]
    %v8454 = vld [vmem:[#allocation12 + $0x12b0] sm:$0xff]
    %v8455 = vld [vmem:[#allocation12 + $0x12b8] sm:$0xff]
    %v8456 = vld [vmem:[#allocation12 + $0x12c0] sm:$0xff]
    %v8457 = vld [vmem:[#allocation12 + $0x12c8] sm:$0xff]
    %v8458 = vld [vmem:[#allocation12 + $0x12d0] sm:$0xff]
    %v8459 = vld [vmem:[#allocation12 + $0x12d8] sm:$0xff]
    %v8460 = vld [vmem:[#allocation12 + $0x12e0] sm:$0xff]
    %v8461 = vld [vmem:[#allocation12 + $0x12e8] sm:$0xff]
    %v8462 = vld [vmem:[#allocation12 + $0x12f0] sm:$0xff]
    %v8463 = vld [vmem:[#allocation12 + $0x12f8] sm:$0xff]
    %v8464 = vld [vmem:[#allocation12 + $0x1300] sm:$0xff]
    %v8465 = vld [vmem:[#allocation12 + $0x1308] sm:$0xff]
    %v8466 = vld [vmem:[#allocation12 + $0x1310] sm:$0xff]
    %v8467 = vld [vmem:[#allocation12 + $0x1318] sm:$0xff]
    %v8468 = vld [vmem:[#allocation12 + $0x1320] sm:$0xff]
    %v8469 = vld [vmem:[#allocation12 + $0x1328] sm:$0xff]
    %v8470 = vld [vmem:[#allocation12 + $0x1330] sm:$0xff]
    %v8471 = vld [vmem:[#allocation12 + $0x1338] sm:$0xff]
    %v8472 = vld [vmem:[#allocation12 + $0x1340] sm:$0xff]
    %v8473 = vld [vmem:[#allocation12 + $0x1348] sm:$0xff]
    %v8474 = vld [vmem:[#allocation12 + $0x1350] sm:$0xff]
    %v8475 = vld [vmem:[#allocation12 + $0x1358] sm:$0xff]
    %v8476 = vld [vmem:[#allocation12 + $0x1360] sm:$0xff]
    %v8477 = vld [vmem:[#allocation12 + $0x1368] sm:$0xff]
    %v8478 = vld [vmem:[#allocation12 + $0x1370] sm:$0xff]
    %v8479 = vld [vmem:[#allocation12 + $0x1378] sm:$0xff]
    %v8480 = vld [vmem:[#allocation12 + $0x1380] sm:$0xff]
    %v8481 = vld [vmem:[#allocation12 + $0x1388] sm:$0xff]
    %v8482 = vld [vmem:[#allocation12 + $0x1390] sm:$0xff]
    %v8483 = vld [vmem:[#allocation12 + $0x1398] sm:$0xff]
    %v8484 = vld [vmem:[#allocation12 + $0x13a0] sm:$0xff]
    %v8485 = vld [vmem:[#allocation12 + $0x13a8] sm:$0xff]
    %v8486 = vld [vmem:[#allocation12 + $0x13b0] sm:$0xff]
    %v8487 = vld [vmem:[#allocation12 + $0x13b8] sm:$0xff]
    %v8488 = vld [vmem:[#allocation12 + $0x13c0] sm:$0xff]
    %v8489 = vld [vmem:[#allocation12 + $0x13c8] sm:$0xff]
    %v8490 = vld [vmem:[#allocation12 + $0x13d0] sm:$0xff]
    %v8491 = vld [vmem:[#allocation12 + $0x13d8] sm:$0xff]
    %v8492 = vld [vmem:[#allocation12 + $0x13e0] sm:$0xff]
    %v8493 = vld [vmem:[#allocation12 + $0x13e8] sm:$0xff]
    %v8494 = vld [vmem:[#allocation12 + $0x13f0] sm:$0xff]
    %v8495 = vld [vmem:[#allocation12 + $0x13f8] sm:$0xff]
    %v8496 = vld [vmem:[#allocation12 + $0x1400] sm:$0xff]
    %v8497 = vld [vmem:[#allocation12 + $0x1408] sm:$0xff]
    %v8498 = vld [vmem:[#allocation12 + $0x1410] sm:$0xff]
    %v8499 = vld [vmem:[#allocation12 + $0x1418] sm:$0xff]
    %v8500 = vld [vmem:[#allocation12 + $0x1420] sm:$0xff]
    %v8501 = vld [vmem:[#allocation12 + $0x1428] sm:$0xff]
    %v8502 = vld [vmem:[#allocation12 + $0x1430] sm:$0xff]
    %v8503 = vld [vmem:[#allocation12 + $0x1438] sm:$0xff]
    %v8504 = vld [vmem:[#allocation12 + $0x1440] sm:$0xff]
    %v8505 = vld [vmem:[#allocation12 + $0x1448] sm:$0xff]
    %v8506 = vld [vmem:[#allocation12 + $0x1450] sm:$0xff]
    %v8507 = vld [vmem:[#allocation12 + $0x1458] sm:$0xff]
    %v8508 = vld [vmem:[#allocation12 + $0x1460] sm:$0xff]
    %v8509 = vld [vmem:[#allocation12 + $0x1468] sm:$0xff]
    %v8510 = vld [vmem:[#allocation12 + $0x1470] sm:$0xff]
    %v8511 = vld [vmem:[#allocation12 + $0x1478] sm:$0xff]
    %v8512 = vld [vmem:[#allocation12 + $0x1480] sm:$0xff]
    %v8513 = vld [vmem:[#allocation12 + $0x1488] sm:$0xff]
    %v8514 = vld [vmem:[#allocation12 + $0x1490] sm:$0xff]
    %v8515 = vld [vmem:[#allocation12 + $0x1498] sm:$0xff]
    %v8516 = vld [vmem:[#allocation12 + $0x14a0] sm:$0xff]
    %v8517 = vld [vmem:[#allocation12 + $0x14a8] sm:$0xff]
    %v8518 = vld [vmem:[#allocation12 + $0x14b0] sm:$0xff]
    %v8519 = vld [vmem:[#allocation12 + $0x14b8] sm:$0xff]
    %v8520 = vld [vmem:[#allocation12 + $0x14c0] sm:$0xff]
    %v8521 = vld [vmem:[#allocation12 + $0x14c8] sm:$0xff]
    %v8522 = vld [vmem:[#allocation12 + $0x14d0] sm:$0xff]
    %v8523 = vld [vmem:[#allocation12 + $0x14d8] sm:$0xff]
    %v8524 = vld [vmem:[#allocation12 + $0x14e0] sm:$0xff]
    %v8525 = vld [vmem:[#allocation12 + $0x14e8] sm:$0xff]
    %v8526 = vld [vmem:[#allocation12 + $0x14f0] sm:$0xff]
    %v8527 = vld [vmem:[#allocation12 + $0x14f8] sm:$0xff]
    %v8528 = vld [vmem:[#allocation12 + $0x1500] sm:$0xff]
    %v8529 = vld [vmem:[#allocation12 + $0x1508] sm:$0xff]
    %v8530 = vld [vmem:[#allocation12 + $0x1510] sm:$0xff]
    %v8531 = vld [vmem:[#allocation12 + $0x1518] sm:$0xff]
    %v8532 = vld [vmem:[#allocation12 + $0x1520] sm:$0xff]
    %v8533 = vld [vmem:[#allocation12 + $0x1528] sm:$0xff]
    %v8534 = vld [vmem:[#allocation12 + $0x1530] sm:$0xff]
    %v8535 = vld [vmem:[#allocation12 + $0x1538] sm:$0xff]
    %v8536 = vld [vmem:[#allocation12 + $0x1540] sm:$0xff]
    %v8537 = vld [vmem:[#allocation12 + $0x1548] sm:$0xff]
    %v8538 = vld [vmem:[#allocation12 + $0x1550] sm:$0xff]
    %v8539 = vld [vmem:[#allocation12 + $0x1558] sm:$0xff]
    %v8540 = vld [vmem:[#allocation12 + $0x1560] sm:$0xff]
    %v8541 = vld [vmem:[#allocation12 + $0x1568] sm:$0xff]
    %v8542 = vld [vmem:[#allocation12 + $0x1570] sm:$0xff]
    %v8543 = vld [vmem:[#allocation12 + $0x1578] sm:$0xff]
    %v8544 = vld [vmem:[#allocation12 + $0x1580] sm:$0xff]
    %v8545 = vld [vmem:[#allocation12 + $0x1588] sm:$0xff]
    %v8546 = vld [vmem:[#allocation12 + $0x1590] sm:$0xff]
    %v8547 = vld [vmem:[#allocation12 + $0x1598] sm:$0xff]
    %v8548 = vld [vmem:[#allocation12 + $0x15a0] sm:$0xff]
    %v8549 = vld [vmem:[#allocation12 + $0x15a8] sm:$0xff]
    %v8550 = vld [vmem:[#allocation12 + $0x15b0] sm:$0xff]
    %v8551 = vld [vmem:[#allocation12 + $0x15b8] sm:$0xff]
    %v8552 = vld [vmem:[#allocation12 + $0x15c0] sm:$0xff]
    %v8553 = vld [vmem:[#allocation12 + $0x15c8] sm:$0xff]
    %v8554 = vld [vmem:[#allocation12 + $0x15d0] sm:$0xff]
    %v8555 = vld [vmem:[#allocation12 + $0x15d8] sm:$0xff]
    %v8556 = vld [vmem:[#allocation12 + $0x15e0] sm:$0xff]
    %v8557 = vld [vmem:[#allocation12 + $0x15e8] sm:$0xff]
    %v8558 = vld [vmem:[#allocation12 + $0x15f0] sm:$0xff]
    %v8559 = vld [vmem:[#allocation12 + $0x15f8] sm:$0xff]
    %v8560 = vld [vmem:[#allocation12 + $0x1600] sm:$0xff]
    %v8561 = vld [vmem:[#allocation12 + $0x1608] sm:$0xff]
    %v8562 = vld [vmem:[#allocation12 + $0x1610] sm:$0xff]
    %v8563 = vld [vmem:[#allocation12 + $0x1618] sm:$0xff]
    %v8564 = vld [vmem:[#allocation12 + $0x1620] sm:$0xff]
    %v8565 = vld [vmem:[#allocation12 + $0x1628] sm:$0xff]
    %v8566 = vld [vmem:[#allocation12 + $0x1630] sm:$0xff]
    %v8567 = vld [vmem:[#allocation12 + $0x1638] sm:$0xff]
    %v8568 = vld [vmem:[#allocation12 + $0x1640] sm:$0xff]
    %v8569 = vld [vmem:[#allocation12 + $0x1648] sm:$0xff]
    %v8570 = vld [vmem:[#allocation12 + $0x1650] sm:$0xff]
    %v8571 = vld [vmem:[#allocation12 + $0x1658] sm:$0xff]
    %v8572 = vld [vmem:[#allocation12 + $0x1660] sm:$0xff]
    %v8573 = vld [vmem:[#allocation12 + $0x1668] sm:$0xff]
    %v8574 = vld [vmem:[#allocation12 + $0x1670] sm:$0xff]
    %v8575 = vld [vmem:[#allocation12 + $0x1678] sm:$0xff]
    %v8576 = vld [vmem:[#allocation12 + $0x1680] sm:$0xff]
    %v8577 = vld [vmem:[#allocation12 + $0x1688] sm:$0xff]
    %v8578 = vld [vmem:[#allocation12 + $0x1690] sm:$0xff]
    %v8579 = vld [vmem:[#allocation12 + $0x1698] sm:$0xff]
    %v8580 = vld [vmem:[#allocation12 + $0x16a0] sm:$0xff]
    %v8581 = vld [vmem:[#allocation12 + $0x16a8] sm:$0xff]
    %v8582 = vld [vmem:[#allocation12 + $0x16b0] sm:$0xff]
    %v8583 = vld [vmem:[#allocation12 + $0x16b8] sm:$0xff]
    %v8584 = vld [vmem:[#allocation12 + $0x16c0] sm:$0xff]
    %v8585 = vld [vmem:[#allocation12 + $0x16c8] sm:$0xff]
    %v8586 = vld [vmem:[#allocation12 + $0x16d0] sm:$0xff]
    %v8587 = vld [vmem:[#allocation12 + $0x16d8] sm:$0xff]
    %v8588 = vld [vmem:[#allocation12 + $0x16e0] sm:$0xff]
    %v8589 = vld [vmem:[#allocation12 + $0x16e8] sm:$0xff]
    %v8590 = vld [vmem:[#allocation12 + $0x16f0] sm:$0xff]
    %v8591 = vld [vmem:[#allocation12 + $0x16f8] sm:$0xff]
    %v8592 = vld [vmem:[#allocation12 + $0x1700] sm:$0xff]
    %v8593 = vld [vmem:[#allocation12 + $0x1708] sm:$0xff]
    %v8594 = vld [vmem:[#allocation12 + $0x1710] sm:$0xff]
    %v8595 = vld [vmem:[#allocation12 + $0x1718] sm:$0xff]
    %v8596 = vld [vmem:[#allocation12 + $0x1720] sm:$0xff]
    %v8597 = vld [vmem:[#allocation12 + $0x1728] sm:$0xff]
    %v8598 = vld [vmem:[#allocation12 + $0x1730] sm:$0xff]
    %v8599 = vld [vmem:[#allocation12 + $0x1738] sm:$0xff]
    %v8600 = vld [vmem:[#allocation12 + $0x1740] sm:$0xff]
    %v8601 = vld [vmem:[#allocation12 + $0x1748] sm:$0xff]
    %v8602 = vld [vmem:[#allocation12 + $0x1750] sm:$0xff]
    %v8603 = vld [vmem:[#allocation12 + $0x1758] sm:$0xff]
    %v8604 = vld [vmem:[#allocation12 + $0x1760] sm:$0xff]
    %v8605 = vld [vmem:[#allocation12 + $0x1768] sm:$0xff]
    %v8606 = vld [vmem:[#allocation12 + $0x1770] sm:$0xff]
    %v8607 = vld [vmem:[#allocation12 + $0x1778] sm:$0xff]
    %v8608 = vld [vmem:[#allocation12 + $0x1780] sm:$0xff]
    %v8609 = vld [vmem:[#allocation12 + $0x1788] sm:$0xff]
    %v8610 = vld [vmem:[#allocation12 + $0x1790] sm:$0xff]
    %v8611 = vld [vmem:[#allocation12 + $0x1798] sm:$0xff]
    %v8612 = vld [vmem:[#allocation12 + $0x17a0] sm:$0xff]
    %v8613 = vld [vmem:[#allocation12 + $0x17a8] sm:$0xff]
    %v8614 = vld [vmem:[#allocation12 + $0x17b0] sm:$0xff]
    %v8615 = vld [vmem:[#allocation12 + $0x17b8] sm:$0xff]
    %v8616 = vld [vmem:[#allocation12 + $0x17c0] sm:$0xff]
    %v8617 = vld [vmem:[#allocation12 + $0x17c8] sm:$0xff]
    %v8618 = vld [vmem:[#allocation12 + $0x17d0] sm:$0xff]
    %v8619 = vld [vmem:[#allocation12 + $0x17d8] sm:$0xff]
    %v8620 = vld [vmem:[#allocation12 + $0x17e0] sm:$0xff]
    %v8621 = vld [vmem:[#allocation12 + $0x17e8] sm:$0xff]
    %v8622 = vld [vmem:[#allocation12 + $0x17f0] sm:$0xff]
    %v8623 = vld [vmem:[#allocation12 + $0x17f8] sm:$0xff]
    %v8624 = vld [vmem:[#allocation13] sm:$0xff]
    %v8625 = vld [vmem:[#allocation13 + $0x8] sm:$0xff]
    %v8626 = vld [vmem:[#allocation13 + $0x10] sm:$0xff]
    %v8630 = vlaneseq
    %v8631 = vshrl.u32 %v8630, 7
    %v8632 = vsub.s32 0, %v8631
    %v8633 = vrot.slane %v8624, %v8632
    %v8634 = vlaneseq
    %v8635 = vshrl.u32 %v8634, 7
    %v8636 = vsub.s32 1, %v8635
    %v8637 = vrot.slane %v8624, %v8636
    %v8638 = vlaneseq
    %v8639 = vshrl.u32 %v8638, 7
    %v8640 = vsub.s32 2, %v8639
    %v8641 = vrot.slane %v8624, %v8640
    %v8642 = vlaneseq
    %v8643 = vshrl.u32 %v8642, 7
    %v8644 = vsub.s32 3, %v8643
    %v8645 = vrot.slane %v8624, %v8644
    %v8646 = vlaneseq
    %v8647 = vshrl.u32 %v8646, 7
    %v8648 = vsub.s32 4, %v8647
    %v8649 = vrot.slane %v8624, %v8648
    %v8650 = vlaneseq
    %v8651 = vshrl.u32 %v8650, 7
    %v8652 = vsub.s32 5, %v8651
    %v8653 = vrot.slane %v8624, %v8652
    %v8654 = vlaneseq
    %v8655 = vshrl.u32 %v8654, 7
    %v8656 = vsub.s32 6, %v8655
    %v8657 = vrot.slane %v8624, %v8656
    %v8658 = vlaneseq
    %v8659 = vshrl.u32 %v8658, 7
    %v8660 = vsub.s32 7, %v8659
    %v8661 = vrot.slane %v8624, %v8660
    %v8662 = vlaneseq
    %v8663 = vshrl.u32 %v8662, 7
    %v8664 = vsub.s32 0, %v8663
    %v8665 = vrot.slane %v8625, %v8664
    %v8666 = vlaneseq
    %v8667 = vshrl.u32 %v8666, 7
    %v8668 = vsub.s32 1, %v8667
    %v8669 = vrot.slane %v8625, %v8668
    %v8670 = vlaneseq
    %v8671 = vshrl.u32 %v8670, 7
    %v8672 = vsub.s32 2, %v8671
    %v8673 = vrot.slane %v8625, %v8672
    %v8674 = vlaneseq
    %v8675 = vshrl.u32 %v8674, 7
    %v8676 = vsub.s32 3, %v8675
    %v8677 = vrot.slane %v8625, %v8676
    %v8678 = vlaneseq
    %v8679 = vshrl.u32 %v8678, 7
    %v8680 = vsub.s32 4, %v8679
    %v8681 = vrot.slane %v8625, %v8680
    %v8682 = vlaneseq
    %v8683 = vshrl.u32 %v8682, 7
    %v8684 = vsub.s32 5, %v8683
    %v8685 = vrot.slane %v8625, %v8684
    %v8686 = vlaneseq
    %v8687 = vshrl.u32 %v8686, 7
    %v8688 = vsub.s32 6, %v8687
    %v8689 = vrot.slane %v8625, %v8688
    %v8690 = vlaneseq
    %v8691 = vshrl.u32 %v8690, 7
    %v8692 = vsub.s32 7, %v8691
    %v8693 = vrot.slane %v8625, %v8692
    %v8694 = vlaneseq
    %v8695 = vshrl.u32 %v8694, 7
    %v8696 = vsub.s32 0, %v8695
    %v8697 = vrot.slane %v8626, %v8696
    %v8698 = vlaneseq
    %v8699 = vshrl.u32 %v8698, 7
    %v8700 = vsub.s32 1, %v8699
    %v8701 = vrot.slane %v8626, %v8700
    %v8702 = vlaneseq
    %v8703 = vshrl.u32 %v8702, 7
    %v8704 = vsub.s32 2, %v8703
    %v8705 = vrot.slane %v8626, %v8704
    %v8706 = vlaneseq
    %v8707 = vshrl.u32 %v8706, 7
    %v8708 = vsub.s32 3, %v8707
    %v8709 = vrot.slane %v8626, %v8708
    %v8710 = vlaneseq
    %v8711 = vshrl.u32 %v8710, 7
    %v8712 = vsub.s32 4, %v8711
    %v8713 = vrot.slane %v8626, %v8712
    %v8714 = vlaneseq
    %v8715 = vshrl.u32 %v8714, 7
    %v8716 = vsub.s32 5, %v8715
    %v8717 = vrot.slane %v8626, %v8716
    %v8718 = vlaneseq
    %v8719 = vshrl.u32 %v8718, 7
    %v8720 = vsub.s32 6, %v8719
    %v8721 = vrot.slane %v8626, %v8720
    %v8722 = vlaneseq
    %v8723 = vshrl.u32 %v8722, 7
    %v8724 = vsub.s32 7, %v8723
    %v8725 = vrot.slane %v8626, %v8724
    %v9518 = vunpack.c.l.b16 %v7856
    %v9519 = vunpack.c.h.b16 %v7856
    %v9520 = vunpack.c.l.b16 %v7857
    %v9521 = vunpack.c.h.b16 %v7857
    %v9522 = vunpack.c.l.b16 %v7858
    %v9523 = vunpack.c.h.b16 %v7858
    %v9524 = vunpack.c.l.b16 %v7859
    %v9525 = vunpack.c.h.b16 %v7859
    %v9526 = vunpack.c.l.b16 %v7860
    %v9527 = vunpack.c.h.b16 %v7860
    %v9528 = vunpack.c.l.b16 %v7861
    %v9529 = vunpack.c.h.b16 %v7861
    %v9530 = vunpack.c.l.b16 %v7862
    %v9531 = vunpack.c.h.b16 %v7862
    %v9532 = vunpack.c.l.b16 %v7863
    %v9533 = vunpack.c.h.b16 %v7863
    %v9534 = vunpack.c.l.b16 %v7864
    %v9535 = vunpack.c.h.b16 %v7864
    %v9536 = vunpack.c.l.b16 %v7865
    %v9537 = vunpack.c.h.b16 %v7865
    %v9538 = vunpack.c.l.b16 %v7866
    %v9539 = vunpack.c.h.b16 %v7866
    %v9540 = vunpack.c.l.b16 %v7867
    %v9541 = vunpack.c.h.b16 %v7867
    %v9542 = vunpack.c.l.b16 %v7868
    %v9543 = vunpack.c.h.b16 %v7868
    %v9544 = vunpack.c.l.b16 %v7869
    %v9545 = vunpack.c.h.b16 %v7869
    %v9546 = vunpack.c.l.b16 %v7870
    %v9547 = vunpack.c.h.b16 %v7870
    %v9548 = vunpack.c.l.b16 %v7871
    %v9549 = vunpack.c.h.b16 %v7871
    %v9550 = vunpack.c.l.b16 %v7872
    %v9551 = vunpack.c.h.b16 %v7872
    %v9552 = vunpack.c.l.b16 %v7873
    %v9553 = vunpack.c.h.b16 %v7873
    %v9554 = vunpack.c.l.b16 %v7874
    %v9555 = vunpack.c.h.b16 %v7874
    %v9556 = vunpack.c.l.b16 %v7875
    %v9557 = vunpack.c.h.b16 %v7875
    %v9558 = vunpack.c.l.b16 %v7876
    %v9559 = vunpack.c.h.b16 %v7876
    %v9560 = vunpack.c.l.b16 %v7877
    %v9561 = vunpack.c.h.b16 %v7877
    %v9562 = vunpack.c.l.b16 %v7878
    %v9563 = vunpack.c.h.b16 %v7878
    %v9564 = vunpack.c.l.b16 %v7879
    %v9565 = vunpack.c.h.b16 %v7879
    %v9566 = vunpack.c.l.b16 %v7880
    %v9567 = vunpack.c.h.b16 %v7880
    %v9568 = vunpack.c.l.b16 %v7881
    %v9569 = vunpack.c.h.b16 %v7881
    %v9570 = vunpack.c.l.b16 %v7882
    %v9571 = vunpack.c.h.b16 %v7882
    %v9572 = vunpack.c.l.b16 %v7883
    %v9573 = vunpack.c.h.b16 %v7883
    %v9574 = vunpack.c.l.b16 %v7884
    %v9575 = vunpack.c.h.b16 %v7884
    %v9576 = vunpack.c.l.b16 %v7885
    %v9577 = vunpack.c.h.b16 %v7885
    %v9578 = vunpack.c.l.b16 %v7886
    %v9579 = vunpack.c.h.b16 %v7886
    %v9580 = vunpack.c.l.b16 %v7887
    %v9581 = vunpack.c.h.b16 %v7887
    %v9582 = vunpack.c.l.b16 %v7888
    %v9583 = vunpack.c.h.b16 %v7888
    %v9584 = vunpack.c.l.b16 %v7889
    %v9585 = vunpack.c.h.b16 %v7889
    %v9586 = vunpack.c.l.b16 %v7890
    %v9587 = vunpack.c.h.b16 %v7890
    %v9588 = vunpack.c.l.b16 %v7891
    %v9589 = vunpack.c.h.b16 %v7891
    %v9590 = vunpack.c.l.b16 %v7892
    %v9591 = vunpack.c.h.b16 %v7892
    %v9592 = vunpack.c.l.b16 %v7893
    %v9593 = vunpack.c.h.b16 %v7893
    %v9594 = vunpack.c.l.b16 %v7894
    %v9595 = vunpack.c.h.b16 %v7894
    %v9596 = vunpack.c.l.b16 %v7895
    %v9597 = vunpack.c.h.b16 %v7895
    %v9598 = vunpack.c.l.b16 %v7896
    %v9599 = vunpack.c.h.b16 %v7896
    %v9600 = vunpack.c.l.b16 %v7897
    %v9601 = vunpack.c.h.b16 %v7897
    %v9602 = vunpack.c.l.b16 %v7898
    %v9603 = vunpack.c.h.b16 %v7898
    %v9604 = vunpack.c.l.b16 %v7899
    %v9605 = vunpack.c.h.b16 %v7899
    %v9606 = vunpack.c.l.b16 %v7900
    %v9607 = vunpack.c.h.b16 %v7900
    %v9608 = vunpack.c.l.b16 %v7901
    %v9609 = vunpack.c.h.b16 %v7901
    %v9610 = vunpack.c.l.b16 %v7902
    %v9611 = vunpack.c.h.b16 %v7902
    %v9612 = vunpack.c.l.b16 %v7903
    %v9613 = vunpack.c.h.b16 %v7903
    %v9614 = vunpack.c.l.b16 %v7904
    %v9615 = vunpack.c.h.b16 %v7904
    %v9616 = vunpack.c.l.b16 %v7905
    %v9617 = vunpack.c.h.b16 %v7905
    %v9618 = vunpack.c.l.b16 %v7906
    %v9619 = vunpack.c.h.b16 %v7906
    %v9620 = vunpack.c.l.b16 %v7907
    %v9621 = vunpack.c.h.b16 %v7907
    %v9622 = vunpack.c.l.b16 %v7908
    %v9623 = vunpack.c.h.b16 %v7908
    %v9624 = vunpack.c.l.b16 %v7909
    %v9625 = vunpack.c.h.b16 %v7909
    %v9626 = vunpack.c.l.b16 %v7910
    %v9627 = vunpack.c.h.b16 %v7910
    %v9628 = vunpack.c.l.b16 %v7911
    %v9629 = vunpack.c.h.b16 %v7911
    %v9630 = vunpack.c.l.b16 %v7912
    %v9631 = vunpack.c.h.b16 %v7912
    %v9632 = vunpack.c.l.b16 %v7913
    %v9633 = vunpack.c.h.b16 %v7913
    %v9634 = vunpack.c.l.b16 %v7914
    %v9635 = vunpack.c.h.b16 %v7914
    %v9636 = vunpack.c.l.b16 %v7915
    %v9637 = vunpack.c.h.b16 %v7915
    %v9638 = vunpack.c.l.b16 %v7916
    %v9639 = vunpack.c.h.b16 %v7916
    %v9640 = vunpack.c.l.b16 %v7917
    %v9641 = vunpack.c.h.b16 %v7917
    %v9642 = vunpack.c.l.b16 %v7918
    %v9643 = vunpack.c.h.b16 %v7918
    %v9644 = vunpack.c.l.b16 %v7919
    %v9645 = vunpack.c.h.b16 %v7919
    %v9646 = vunpack.c.l.b16 %v7920
    %v9647 = vunpack.c.h.b16 %v7920
    %v9648 = vunpack.c.l.b16 %v7921
    %v9649 = vunpack.c.h.b16 %v7921
    %v9650 = vunpack.c.l.b16 %v7922
    %v9651 = vunpack.c.h.b16 %v7922
    %v9652 = vunpack.c.l.b16 %v7923
    %v9653 = vunpack.c.h.b16 %v7923
    %v9654 = vunpack.c.l.b16 %v7924
    %v9655 = vunpack.c.h.b16 %v7924
    %v9656 = vunpack.c.l.b16 %v7925
    %v9657 = vunpack.c.h.b16 %v7925
    %v9658 = vunpack.c.l.b16 %v7926
    %v9659 = vunpack.c.h.b16 %v7926
    %v9660 = vunpack.c.l.b16 %v7927
    %v9661 = vunpack.c.h.b16 %v7927
    %v9662 = vunpack.c.l.b16 %v7928
    %v9663 = vunpack.c.h.b16 %v7928
    %v9664 = vunpack.c.l.b16 %v7929
    %v9665 = vunpack.c.h.b16 %v7929
    %v9666 = vunpack.c.l.b16 %v7930
    %v9667 = vunpack.c.h.b16 %v7930
    %v9668 = vunpack.c.l.b16 %v7931
    %v9669 = vunpack.c.h.b16 %v7931
    %v9670 = vunpack.c.l.b16 %v7932
    %v9671 = vunpack.c.h.b16 %v7932
    %v9672 = vunpack.c.l.b16 %v7933
    %v9673 = vunpack.c.h.b16 %v7933
    %v9674 = vunpack.c.l.b16 %v7934
    %v9675 = vunpack.c.h.b16 %v7934
    %v9676 = vunpack.c.l.b16 %v7935
    %v9677 = vunpack.c.h.b16 %v7935
    %v9678 = vunpack.c.l.b16 %v7936
    %v9679 = vunpack.c.h.b16 %v7936
    %v9680 = vunpack.c.l.b16 %v7937
    %v9681 = vunpack.c.h.b16 %v7937
    %v9682 = vunpack.c.l.b16 %v7938
    %v9683 = vunpack.c.h.b16 %v7938
    %v9684 = vunpack.c.l.b16 %v7939
    %v9685 = vunpack.c.h.b16 %v7939
    %v9686 = vunpack.c.l.b16 %v7940
    %v9687 = vunpack.c.h.b16 %v7940
    %v9688 = vunpack.c.l.b16 %v7941
    %v9689 = vunpack.c.h.b16 %v7941
    %v9690 = vunpack.c.l.b16 %v7942
    %v9691 = vunpack.c.h.b16 %v7942
    %v9692 = vunpack.c.l.b16 %v7943
    %v9693 = vunpack.c.h.b16 %v7943
    %v9694 = vunpack.c.l.b16 %v7944
    %v9695 = vunpack.c.h.b16 %v7944
    %v9696 = vunpack.c.l.b16 %v7945
    %v9697 = vunpack.c.h.b16 %v7945
    %v9698 = vunpack.c.l.b16 %v7946
    %v9699 = vunpack.c.h.b16 %v7946
    %v9700 = vunpack.c.l.b16 %v7947
    %v9701 = vunpack.c.h.b16 %v7947
    %v9702 = vunpack.c.l.b16 %v7948
    %v9703 = vunpack.c.h.b16 %v7948
    %v9704 = vunpack.c.l.b16 %v7949
    %v9705 = vunpack.c.h.b16 %v7949
    %v9706 = vunpack.c.l.b16 %v7950
    %v9707 = vunpack.c.h.b16 %v7950
    %v9708 = vunpack.c.l.b16 %v7951
    %v9709 = vunpack.c.h.b16 %v7951
    %v9710 = vunpack.c.l.b16 %v7952
    %v9711 = vunpack.c.h.b16 %v7952
    %v9712 = vunpack.c.l.b16 %v7953
    %v9713 = vunpack.c.h.b16 %v7953
    %v9714 = vunpack.c.l.b16 %v7954
    %v9715 = vunpack.c.h.b16 %v7954
    %v9716 = vunpack.c.l.b16 %v7955
    %v9717 = vunpack.c.h.b16 %v7955
    %v9718 = vunpack.c.l.b16 %v7956
    %v9719 = vunpack.c.h.b16 %v7956
    %v9720 = vunpack.c.l.b16 %v7957
    %v9721 = vunpack.c.h.b16 %v7957
    %v9722 = vunpack.c.l.b16 %v7958
    %v9723 = vunpack.c.h.b16 %v7958
    %v9724 = vunpack.c.l.b16 %v7959
    %v9725 = vunpack.c.h.b16 %v7959
    %v9726 = vunpack.c.l.b16 %v7960
    %v9727 = vunpack.c.h.b16 %v7960
    %v9728 = vunpack.c.l.b16 %v7961
    %v9729 = vunpack.c.h.b16 %v7961
    %v9730 = vunpack.c.l.b16 %v7962
    %v9731 = vunpack.c.h.b16 %v7962
    %v9732 = vunpack.c.l.b16 %v7963
    %v9733 = vunpack.c.h.b16 %v7963
    %v9734 = vunpack.c.l.b16 %v7964
    %v9735 = vunpack.c.h.b16 %v7964
    %v9736 = vunpack.c.l.b16 %v7965
    %v9737 = vunpack.c.h.b16 %v7965
    %v9738 = vunpack.c.l.b16 %v7966
    %v9739 = vunpack.c.h.b16 %v7966
    %v9740 = vunpack.c.l.b16 %v7967
    %v9741 = vunpack.c.h.b16 %v7967
    %v9742 = vunpack.c.l.b16 %v7968
    %v9743 = vunpack.c.h.b16 %v7968
    %v9744 = vunpack.c.l.b16 %v7969
    %v9745 = vunpack.c.h.b16 %v7969
    %v9746 = vunpack.c.l.b16 %v7970
    %v9747 = vunpack.c.h.b16 %v7970
    %v9748 = vunpack.c.l.b16 %v7971
    %v9749 = vunpack.c.h.b16 %v7971
    %v9750 = vunpack.c.l.b16 %v7972
    %v9751 = vunpack.c.h.b16 %v7972
    %v9752 = vunpack.c.l.b16 %v7973
    %v9753 = vunpack.c.h.b16 %v7973
    %v9754 = vunpack.c.l.b16 %v7974
    %v9755 = vunpack.c.h.b16 %v7974
    %v9756 = vunpack.c.l.b16 %v7975
    %v9757 = vunpack.c.h.b16 %v7975
    %v9758 = vunpack.c.l.b16 %v7976
    %v9759 = vunpack.c.h.b16 %v7976
    %v9760 = vunpack.c.l.b16 %v7977
    %v9761 = vunpack.c.h.b16 %v7977
    %v9762 = vunpack.c.l.b16 %v7978
    %v9763 = vunpack.c.h.b16 %v7978
    %v9764 = vunpack.c.l.b16 %v7979
    %v9765 = vunpack.c.h.b16 %v7979
    %v9766 = vunpack.c.l.b16 %v7980
    %v9767 = vunpack.c.h.b16 %v7980
    %v9768 = vunpack.c.l.b16 %v7981
    %v9769 = vunpack.c.h.b16 %v7981
    %v9770 = vunpack.c.l.b16 %v7982
    %v9771 = vunpack.c.h.b16 %v7982
    %v9772 = vunpack.c.l.b16 %v7983
    %v9773 = vunpack.c.h.b16 %v7983
    %v9774 = vunpack.c.l.b16 %v7984
    %v9775 = vunpack.c.h.b16 %v7984
    %v9776 = vunpack.c.l.b16 %v7985
    %v9777 = vunpack.c.h.b16 %v7985
    %v9778 = vunpack.c.l.b16 %v7986
    %v9779 = vunpack.c.h.b16 %v7986
    %v9780 = vunpack.c.l.b16 %v7987
    %v9781 = vunpack.c.h.b16 %v7987
    %v9782 = vunpack.c.l.b16 %v7988
    %v9783 = vunpack.c.h.b16 %v7988
    %v9784 = vunpack.c.l.b16 %v7989
    %v9785 = vunpack.c.h.b16 %v7989
    %v9786 = vunpack.c.l.b16 %v7990
    %v9787 = vunpack.c.h.b16 %v7990
    %v9788 = vunpack.c.l.b16 %v7991
    %v9789 = vunpack.c.h.b16 %v7991
    %v9790 = vunpack.c.l.b16 %v7992
    %v9791 = vunpack.c.h.b16 %v7992
    %v9792 = vunpack.c.l.b16 %v7993
    %v9793 = vunpack.c.h.b16 %v7993
    %v9794 = vunpack.c.l.b16 %v7994
    %v9795 = vunpack.c.h.b16 %v7994
    %v9796 = vunpack.c.l.b16 %v7995
    %v9797 = vunpack.c.h.b16 %v7995
    %v9798 = vunpack.c.l.b16 %v7996
    %v9799 = vunpack.c.h.b16 %v7996
    %v9800 = vunpack.c.l.b16 %v7997
    %v9801 = vunpack.c.h.b16 %v7997
    %v9802 = vunpack.c.l.b16 %v7998
    %v9803 = vunpack.c.h.b16 %v7998
    %v9804 = vunpack.c.l.b16 %v7999
    %v9805 = vunpack.c.h.b16 %v7999
    %v9806 = vunpack.c.l.b16 %v8000
    %v9807 = vunpack.c.h.b16 %v8000
    %v9808 = vunpack.c.l.b16 %v8001
    %v9809 = vunpack.c.h.b16 %v8001
    %v9810 = vunpack.c.l.b16 %v8002
    %v9811 = vunpack.c.h.b16 %v8002
    %v9812 = vunpack.c.l.b16 %v8003
    %v9813 = vunpack.c.h.b16 %v8003
    %v9814 = vunpack.c.l.b16 %v8004
    %v9815 = vunpack.c.h.b16 %v8004
    %v9816 = vunpack.c.l.b16 %v8005
    %v9817 = vunpack.c.h.b16 %v8005
    %v9818 = vunpack.c.l.b16 %v8006
    %v9819 = vunpack.c.h.b16 %v8006
    %v9820 = vunpack.c.l.b16 %v8007
    %v9821 = vunpack.c.h.b16 %v8007
    %v9822 = vunpack.c.l.b16 %v8008
    %v9823 = vunpack.c.h.b16 %v8008
    %v9824 = vunpack.c.l.b16 %v8009
    %v9825 = vunpack.c.h.b16 %v8009
    %v9826 = vunpack.c.l.b16 %v8010
    %v9827 = vunpack.c.h.b16 %v8010
    %v9828 = vunpack.c.l.b16 %v8011
    %v9829 = vunpack.c.h.b16 %v8011
    %v9830 = vunpack.c.l.b16 %v8012
    %v9831 = vunpack.c.h.b16 %v8012
    %v9832 = vunpack.c.l.b16 %v8013
    %v9833 = vunpack.c.h.b16 %v8013
    %v9834 = vunpack.c.l.b16 %v8014
    %v9835 = vunpack.c.h.b16 %v8014
    %v9836 = vunpack.c.l.b16 %v8015
    %v9837 = vunpack.c.h.b16 %v8015
    %v9838 = vunpack.c.l.b16 %v8016
    %v9839 = vunpack.c.h.b16 %v8016
    %v9840 = vunpack.c.l.b16 %v8017
    %v9841 = vunpack.c.h.b16 %v8017
    %v9842 = vunpack.c.l.b16 %v8018
    %v9843 = vunpack.c.h.b16 %v8018
    %v9844 = vunpack.c.l.b16 %v8019
    %v9845 = vunpack.c.h.b16 %v8019
    %v9846 = vunpack.c.l.b16 %v8020
    %v9847 = vunpack.c.h.b16 %v8020
    %v9848 = vunpack.c.l.b16 %v8021
    %v9849 = vunpack.c.h.b16 %v8021
    %v9850 = vunpack.c.l.b16 %v8022
    %v9851 = vunpack.c.h.b16 %v8022
    %v9852 = vunpack.c.l.b16 %v8023
    %v9853 = vunpack.c.h.b16 %v8023
    %v9854 = vunpack.c.l.b16 %v8024
    %v9855 = vunpack.c.h.b16 %v8024
    %v9856 = vunpack.c.l.b16 %v8025
    %v9857 = vunpack.c.h.b16 %v8025
    %v9858 = vunpack.c.l.b16 %v8026
    %v9859 = vunpack.c.h.b16 %v8026
    %v9860 = vunpack.c.l.b16 %v8027
    %v9861 = vunpack.c.h.b16 %v8027
    %v9862 = vunpack.c.l.b16 %v8028
    %v9863 = vunpack.c.h.b16 %v8028
    %v9864 = vunpack.c.l.b16 %v8029
    %v9865 = vunpack.c.h.b16 %v8029
    %v9866 = vunpack.c.l.b16 %v8030
    %v9867 = vunpack.c.h.b16 %v8030
    %v9868 = vunpack.c.l.b16 %v8031
    %v9869 = vunpack.c.h.b16 %v8031
    %v9870 = vunpack.c.l.b16 %v8032
    %v9871 = vunpack.c.h.b16 %v8032
    %v9872 = vunpack.c.l.b16 %v8033
    %v9873 = vunpack.c.h.b16 %v8033
    %v9874 = vunpack.c.l.b16 %v8034
    %v9875 = vunpack.c.h.b16 %v8034
    %v9876 = vunpack.c.l.b16 %v8035
    %v9877 = vunpack.c.h.b16 %v8035
    %v9878 = vunpack.c.l.b16 %v8036
    %v9879 = vunpack.c.h.b16 %v8036
    %v9880 = vunpack.c.l.b16 %v8037
    %v9881 = vunpack.c.h.b16 %v8037
    %v9882 = vunpack.c.l.b16 %v8038
    %v9883 = vunpack.c.h.b16 %v8038
    %v9884 = vunpack.c.l.b16 %v8039
    %v9885 = vunpack.c.h.b16 %v8039
    %v9886 = vunpack.c.l.b16 %v8040
    %v9887 = vunpack.c.h.b16 %v8040
    %v9888 = vunpack.c.l.b16 %v8041
    %v9889 = vunpack.c.h.b16 %v8041
    %v9890 = vunpack.c.l.b16 %v8042
    %v9891 = vunpack.c.h.b16 %v8042
    %v9892 = vunpack.c.l.b16 %v8043
    %v9893 = vunpack.c.h.b16 %v8043
    %v9894 = vunpack.c.l.b16 %v8044
    %v9895 = vunpack.c.h.b16 %v8044
    %v9896 = vunpack.c.l.b16 %v8045
    %v9897 = vunpack.c.h.b16 %v8045
    %v9898 = vunpack.c.l.b16 %v8046
    %v9899 = vunpack.c.h.b16 %v8046
    %v9900 = vunpack.c.l.b16 %v8047
    %v9901 = vunpack.c.h.b16 %v8047
    %v9902 = vunpack.c.l.b16 %v8048
    %v9903 = vunpack.c.h.b16 %v8048
    %v9904 = vunpack.c.l.b16 %v8049
    %v9905 = vunpack.c.h.b16 %v8049
    %v9906 = vunpack.c.l.b16 %v8050
    %v9907 = vunpack.c.h.b16 %v8050
    %v9908 = vunpack.c.l.b16 %v8051
    %v9909 = vunpack.c.h.b16 %v8051
    %v9910 = vunpack.c.l.b16 %v8052
    %v9911 = vunpack.c.h.b16 %v8052
    %v9912 = vunpack.c.l.b16 %v8053
    %v9913 = vunpack.c.h.b16 %v8053
    %v9914 = vunpack.c.l.b16 %v8054
    %v9915 = vunpack.c.h.b16 %v8054
    %v9916 = vunpack.c.l.b16 %v8055
    %v9917 = vunpack.c.h.b16 %v8055
    %v9918 = vunpack.c.l.b16 %v8056
    %v9919 = vunpack.c.h.b16 %v8056
    %v9920 = vunpack.c.l.b16 %v8057
    %v9921 = vunpack.c.h.b16 %v8057
    %v9922 = vunpack.c.l.b16 %v8058
    %v9923 = vunpack.c.h.b16 %v8058
    %v9924 = vunpack.c.l.b16 %v8059
    %v9925 = vunpack.c.h.b16 %v8059
    %v9926 = vunpack.c.l.b16 %v8060
    %v9927 = vunpack.c.h.b16 %v8060
    %v9928 = vunpack.c.l.b16 %v8061
    %v9929 = vunpack.c.h.b16 %v8061
    %v9930 = vunpack.c.l.b16 %v8062
    %v9931 = vunpack.c.h.b16 %v8062
    %v9932 = vunpack.c.l.b16 %v8063
    %v9933 = vunpack.c.h.b16 %v8063
    %v9934 = vunpack.c.l.b16 %v8064
    %v9935 = vunpack.c.h.b16 %v8064
    %v9936 = vunpack.c.l.b16 %v8065
    %v9937 = vunpack.c.h.b16 %v8065
    %v9938 = vunpack.c.l.b16 %v8066
    %v9939 = vunpack.c.h.b16 %v8066
    %v9940 = vunpack.c.l.b16 %v8067
    %v9941 = vunpack.c.h.b16 %v8067
    %v9942 = vunpack.c.l.b16 %v8068
    %v9943 = vunpack.c.h.b16 %v8068
    %v9944 = vunpack.c.l.b16 %v8069
    %v9945 = vunpack.c.h.b16 %v8069
    %v9946 = vunpack.c.l.b16 %v8070
    %v9947 = vunpack.c.h.b16 %v8070
    %v9948 = vunpack.c.l.b16 %v8071
    %v9949 = vunpack.c.h.b16 %v8071
    %v9950 = vunpack.c.l.b16 %v8072
    %v9951 = vunpack.c.h.b16 %v8072
    %v9952 = vunpack.c.l.b16 %v8073
    %v9953 = vunpack.c.h.b16 %v8073
    %v9954 = vunpack.c.l.b16 %v8074
    %v9955 = vunpack.c.h.b16 %v8074
    %v9956 = vunpack.c.l.b16 %v8075
    %v9957 = vunpack.c.h.b16 %v8075
    %v9958 = vunpack.c.l.b16 %v8076
    %v9959 = vunpack.c.h.b16 %v8076
    %v9960 = vunpack.c.l.b16 %v8077
    %v9961 = vunpack.c.h.b16 %v8077
    %v9962 = vunpack.c.l.b16 %v8078
    %v9963 = vunpack.c.h.b16 %v8078
    %v9964 = vunpack.c.l.b16 %v8079
    %v9965 = vunpack.c.h.b16 %v8079
    %v9966 = vunpack.c.l.b16 %v8080
    %v9967 = vunpack.c.h.b16 %v8080
    %v9968 = vunpack.c.l.b16 %v8081
    %v9969 = vunpack.c.h.b16 %v8081
    %v9970 = vunpack.c.l.b16 %v8082
    %v9971 = vunpack.c.h.b16 %v8082
    %v9972 = vunpack.c.l.b16 %v8083
    %v9973 = vunpack.c.h.b16 %v8083
    %v9974 = vunpack.c.l.b16 %v8084
    %v9975 = vunpack.c.h.b16 %v8084
    %v9976 = vunpack.c.l.b16 %v8085
    %v9977 = vunpack.c.h.b16 %v8085
    %v9978 = vunpack.c.l.b16 %v8086
    %v9979 = vunpack.c.h.b16 %v8086
    %v9980 = vunpack.c.l.b16 %v8087
    %v9981 = vunpack.c.h.b16 %v8087
    %v9982 = vunpack.c.l.b16 %v8088
    %v9983 = vunpack.c.h.b16 %v8088
    %v9984 = vunpack.c.l.b16 %v8089
    %v9985 = vunpack.c.h.b16 %v8089
    %v9986 = vunpack.c.l.b16 %v8090
    %v9987 = vunpack.c.h.b16 %v8090
    %v9988 = vunpack.c.l.b16 %v8091
    %v9989 = vunpack.c.h.b16 %v8091
    %v9990 = vunpack.c.l.b16 %v8092
    %v9991 = vunpack.c.h.b16 %v8092
    %v9992 = vunpack.c.l.b16 %v8093
    %v9993 = vunpack.c.h.b16 %v8093
    %v9994 = vunpack.c.l.b16 %v8094
    %v9995 = vunpack.c.h.b16 %v8094
    %v9996 = vunpack.c.l.b16 %v8095
    %v9997 = vunpack.c.h.b16 %v8095
    %v9998 = vunpack.c.l.b16 %v8096
    %v9999 = vunpack.c.h.b16 %v8096
    %v10000 = vunpack.c.l.b16 %v8097
    %v10001 = vunpack.c.h.b16 %v8097
    %v10002 = vunpack.c.l.b16 %v8098
    %v10003 = vunpack.c.h.b16 %v8098
    %v10004 = vunpack.c.l.b16 %v8099
    %v10005 = vunpack.c.h.b16 %v8099
    %v10006 = vunpack.c.l.b16 %v8100
    %v10007 = vunpack.c.h.b16 %v8100
    %v10008 = vunpack.c.l.b16 %v8101
    %v10009 = vunpack.c.h.b16 %v8101
    %v10010 = vunpack.c.l.b16 %v8102
    %v10011 = vunpack.c.h.b16 %v8102
    %v10012 = vunpack.c.l.b16 %v8103
    %v10013 = vunpack.c.h.b16 %v8103
    %v10014 = vunpack.c.l.b16 %v8104
    %v10015 = vunpack.c.h.b16 %v8104
    %v10016 = vunpack.c.l.b16 %v8105
    %v10017 = vunpack.c.h.b16 %v8105
    %v10018 = vunpack.c.l.b16 %v8106
    %v10019 = vunpack.c.h.b16 %v8106
    %v10020 = vunpack.c.l.b16 %v8107
    %v10021 = vunpack.c.h.b16 %v8107
    %v10022 = vunpack.c.l.b16 %v8108
    %v10023 = vunpack.c.h.b16 %v8108
    %v10024 = vunpack.c.l.b16 %v8109
    %v10025 = vunpack.c.h.b16 %v8109
    %v10026 = vunpack.c.l.b16 %v8110
    %v10027 = vunpack.c.h.b16 %v8110
    %v10028 = vunpack.c.l.b16 %v8111
    %v10029 = vunpack.c.h.b16 %v8111
    %v10030 = vunpack.c.l.b16 %v8112
    %v10031 = vunpack.c.h.b16 %v8112
    %v10032 = vunpack.c.l.b16 %v8113
    %v10033 = vunpack.c.h.b16 %v8113
    %v10034 = vunpack.c.l.b16 %v8114
    %v10035 = vunpack.c.h.b16 %v8114
    %v10036 = vunpack.c.l.b16 %v8115
    %v10037 = vunpack.c.h.b16 %v8115
    %v10038 = vunpack.c.l.b16 %v8116
    %v10039 = vunpack.c.h.b16 %v8116
    %v10040 = vunpack.c.l.b16 %v8117
    %v10041 = vunpack.c.h.b16 %v8117
    %v10042 = vunpack.c.l.b16 %v8118
    %v10043 = vunpack.c.h.b16 %v8118
    %v10044 = vunpack.c.l.b16 %v8119
    %v10045 = vunpack.c.h.b16 %v8119
    %v10046 = vunpack.c.l.b16 %v8120
    %v10047 = vunpack.c.h.b16 %v8120
    %v10048 = vunpack.c.l.b16 %v8121
    %v10049 = vunpack.c.h.b16 %v8121
    %v10050 = vunpack.c.l.b16 %v8122
    %v10051 = vunpack.c.h.b16 %v8122
    %v10052 = vunpack.c.l.b16 %v8123
    %v10053 = vunpack.c.h.b16 %v8123
    %v10054 = vunpack.c.l.b16 %v8124
    %v10055 = vunpack.c.h.b16 %v8124
    %v10056 = vunpack.c.l.b16 %v8125
    %v10057 = vunpack.c.h.b16 %v8125
    %v10058 = vunpack.c.l.b16 %v8126
    %v10059 = vunpack.c.h.b16 %v8126
    %v10060 = vunpack.c.l.b16 %v8127
    %v10061 = vunpack.c.h.b16 %v8127
    %v10062 = vunpack.c.l.b16 %v8128
    %v10063 = vunpack.c.h.b16 %v8128
    %v10064 = vunpack.c.l.b16 %v8129
    %v10065 = vunpack.c.h.b16 %v8129
    %v10066 = vunpack.c.l.b16 %v8130
    %v10067 = vunpack.c.h.b16 %v8130
    %v10068 = vunpack.c.l.b16 %v8131
    %v10069 = vunpack.c.h.b16 %v8131
    %v10070 = vunpack.c.l.b16 %v8132
    %v10071 = vunpack.c.h.b16 %v8132
    %v10072 = vunpack.c.l.b16 %v8133
    %v10073 = vunpack.c.h.b16 %v8133
    %v10074 = vunpack.c.l.b16 %v8134
    %v10075 = vunpack.c.h.b16 %v8134
    %v10076 = vunpack.c.l.b16 %v8135
    %v10077 = vunpack.c.h.b16 %v8135
    %v10078 = vunpack.c.l.b16 %v8136
    %v10079 = vunpack.c.h.b16 %v8136
    %v10080 = vunpack.c.l.b16 %v8137
    %v10081 = vunpack.c.h.b16 %v8137
    %v10082 = vunpack.c.l.b16 %v8138
    %v10083 = vunpack.c.h.b16 %v8138
    %v10084 = vunpack.c.l.b16 %v8139
    %v10085 = vunpack.c.h.b16 %v8139
    %v10086 = vunpack.c.l.b16 %v8140
    %v10087 = vunpack.c.h.b16 %v8140
    %v10088 = vunpack.c.l.b16 %v8141
    %v10089 = vunpack.c.h.b16 %v8141
    %v10090 = vunpack.c.l.b16 %v8142
    %v10091 = vunpack.c.h.b16 %v8142
    %v10092 = vunpack.c.l.b16 %v8143
    %v10093 = vunpack.c.h.b16 %v8143
    %v10094 = vunpack.c.l.b16 %v8144
    %v10095 = vunpack.c.h.b16 %v8144
    %v10096 = vunpack.c.l.b16 %v8145
    %v10097 = vunpack.c.h.b16 %v8145
    %v10098 = vunpack.c.l.b16 %v8146
    %v10099 = vunpack.c.h.b16 %v8146
    %v10100 = vunpack.c.l.b16 %v8147
    %v10101 = vunpack.c.h.b16 %v8147
    %v10102 = vunpack.c.l.b16 %v8148
    %v10103 = vunpack.c.h.b16 %v8148
    %v10104 = vunpack.c.l.b16 %v8149
    %v10105 = vunpack.c.h.b16 %v8149
    %v10106 = vunpack.c.l.b16 %v8150
    %v10107 = vunpack.c.h.b16 %v8150
    %v10108 = vunpack.c.l.b16 %v8151
    %v10109 = vunpack.c.h.b16 %v8151
    %v10110 = vunpack.c.l.b16 %v8152
    %v10111 = vunpack.c.h.b16 %v8152
    %v10112 = vunpack.c.l.b16 %v8153
    %v10113 = vunpack.c.h.b16 %v8153
    %v10114 = vunpack.c.l.b16 %v8154
    %v10115 = vunpack.c.h.b16 %v8154
    %v10116 = vunpack.c.l.b16 %v8155
    %v10117 = vunpack.c.h.b16 %v8155
    %v10118 = vunpack.c.l.b16 %v8156
    %v10119 = vunpack.c.h.b16 %v8156
    %v10120 = vunpack.c.l.b16 %v8157
    %v10121 = vunpack.c.h.b16 %v8157
    %v10122 = vunpack.c.l.b16 %v8158
    %v10123 = vunpack.c.h.b16 %v8158
    %v10124 = vunpack.c.l.b16 %v8159
    %v10125 = vunpack.c.h.b16 %v8159
    %v10126 = vunpack.c.l.b16 %v8160
    %v10127 = vunpack.c.h.b16 %v8160
    %v10128 = vunpack.c.l.b16 %v8161
    %v10129 = vunpack.c.h.b16 %v8161
    %v10130 = vunpack.c.l.b16 %v8162
    %v10131 = vunpack.c.h.b16 %v8162
    %v10132 = vunpack.c.l.b16 %v8163
    %v10133 = vunpack.c.h.b16 %v8163
    %v10134 = vunpack.c.l.b16 %v8164
    %v10135 = vunpack.c.h.b16 %v8164
    %v10136 = vunpack.c.l.b16 %v8165
    %v10137 = vunpack.c.h.b16 %v8165
    %v10138 = vunpack.c.l.b16 %v8166
    %v10139 = vunpack.c.h.b16 %v8166
    %v10140 = vunpack.c.l.b16 %v8167
    %v10141 = vunpack.c.h.b16 %v8167
    %v10142 = vunpack.c.l.b16 %v8168
    %v10143 = vunpack.c.h.b16 %v8168
    %v10144 = vunpack.c.l.b16 %v8169
    %v10145 = vunpack.c.h.b16 %v8169
    %v10146 = vunpack.c.l.b16 %v8170
    %v10147 = vunpack.c.h.b16 %v8170
    %v10148 = vunpack.c.l.b16 %v8171
    %v10149 = vunpack.c.h.b16 %v8171
    %v10150 = vunpack.c.l.b16 %v8172
    %v10151 = vunpack.c.h.b16 %v8172
    %v10152 = vunpack.c.l.b16 %v8173
    %v10153 = vunpack.c.h.b16 %v8173
    %v10154 = vunpack.c.l.b16 %v8174
    %v10155 = vunpack.c.h.b16 %v8174
    %v10156 = vunpack.c.l.b16 %v8175
    %v10157 = vunpack.c.h.b16 %v8175
    %v10158 = vunpack.c.l.b16 %v8176
    %v10159 = vunpack.c.h.b16 %v8176
    %v10160 = vunpack.c.l.b16 %v8177
    %v10161 = vunpack.c.h.b16 %v8177
    %v10162 = vunpack.c.l.b16 %v8178
    %v10163 = vunpack.c.h.b16 %v8178
    %v10164 = vunpack.c.l.b16 %v8179
    %v10165 = vunpack.c.h.b16 %v8179
    %v10166 = vunpack.c.l.b16 %v8180
    %v10167 = vunpack.c.h.b16 %v8180
    %v10168 = vunpack.c.l.b16 %v8181
    %v10169 = vunpack.c.h.b16 %v8181
    %v10170 = vunpack.c.l.b16 %v8182
    %v10171 = vunpack.c.h.b16 %v8182
    %v10172 = vunpack.c.l.b16 %v8183
    %v10173 = vunpack.c.h.b16 %v8183
    %v10174 = vunpack.c.l.b16 %v8184
    %v10175 = vunpack.c.h.b16 %v8184
    %v10176 = vunpack.c.l.b16 %v8185
    %v10177 = vunpack.c.h.b16 %v8185
    %v10178 = vunpack.c.l.b16 %v8186
    %v10179 = vunpack.c.h.b16 %v8186
    %v10180 = vunpack.c.l.b16 %v8187
    %v10181 = vunpack.c.h.b16 %v8187
    %v10182 = vunpack.c.l.b16 %v8188
    %v10183 = vunpack.c.h.b16 %v8188
    %v10184 = vunpack.c.l.b16 %v8189
    %v10185 = vunpack.c.h.b16 %v8189
    %v10186 = vunpack.c.l.b16 %v8190
    %v10187 = vunpack.c.h.b16 %v8190
    %v10188 = vunpack.c.l.b16 %v8191
    %v10189 = vunpack.c.h.b16 %v8191
    %v10190 = vunpack.c.l.b16 %v8192
    %v10191 = vunpack.c.h.b16 %v8192
    %v10192 = vunpack.c.l.b16 %v8193
    %v10193 = vunpack.c.h.b16 %v8193
    %v10194 = vunpack.c.l.b16 %v8194
    %v10195 = vunpack.c.h.b16 %v8194
    %v10196 = vunpack.c.l.b16 %v8195
    %v10197 = vunpack.c.h.b16 %v8195
    %v10198 = vunpack.c.l.b16 %v8196
    %v10199 = vunpack.c.h.b16 %v8196
    %v10200 = vunpack.c.l.b16 %v8197
    %v10201 = vunpack.c.h.b16 %v8197
    %v10202 = vunpack.c.l.b16 %v8198
    %v10203 = vunpack.c.h.b16 %v8198
    %v10204 = vunpack.c.l.b16 %v8199
    %v10205 = vunpack.c.h.b16 %v8199
    %v10206 = vunpack.c.l.b16 %v8200
    %v10207 = vunpack.c.h.b16 %v8200
    %v10208 = vunpack.c.l.b16 %v8201
    %v10209 = vunpack.c.h.b16 %v8201
    %v10210 = vunpack.c.l.b16 %v8202
    %v10211 = vunpack.c.h.b16 %v8202
    %v10212 = vunpack.c.l.b16 %v8203
    %v10213 = vunpack.c.h.b16 %v8203
    %v10214 = vunpack.c.l.b16 %v8204
    %v10215 = vunpack.c.h.b16 %v8204
    %v10216 = vunpack.c.l.b16 %v8205
    %v10217 = vunpack.c.h.b16 %v8205
    %v10218 = vunpack.c.l.b16 %v8206
    %v10219 = vunpack.c.h.b16 %v8206
    %v10220 = vunpack.c.l.b16 %v8207
    %v10221 = vunpack.c.h.b16 %v8207
    %v10222 = vunpack.c.l.b16 %v8208
    %v10223 = vunpack.c.h.b16 %v8208
    %v10224 = vunpack.c.l.b16 %v8209
    %v10225 = vunpack.c.h.b16 %v8209
    %v10226 = vunpack.c.l.b16 %v8210
    %v10227 = vunpack.c.h.b16 %v8210
    %v10228 = vunpack.c.l.b16 %v8211
    %v10229 = vunpack.c.h.b16 %v8211
    %v10230 = vunpack.c.l.b16 %v8212
    %v10231 = vunpack.c.h.b16 %v8212
    %v10232 = vunpack.c.l.b16 %v8213
    %v10233 = vunpack.c.h.b16 %v8213
    %v10234 = vunpack.c.l.b16 %v8214
    %v10235 = vunpack.c.h.b16 %v8214
    %v10236 = vunpack.c.l.b16 %v8215
    %v10237 = vunpack.c.h.b16 %v8215
    %v10238 = vunpack.c.l.b16 %v8216
    %v10239 = vunpack.c.h.b16 %v8216
    %v10240 = vunpack.c.l.b16 %v8217
    %v10241 = vunpack.c.h.b16 %v8217
    %v10242 = vunpack.c.l.b16 %v8218
    %v10243 = vunpack.c.h.b16 %v8218
    %v10244 = vunpack.c.l.b16 %v8219
    %v10245 = vunpack.c.h.b16 %v8219
    %v10246 = vunpack.c.l.b16 %v8220
    %v10247 = vunpack.c.h.b16 %v8220
    %v10248 = vunpack.c.l.b16 %v8221
    %v10249 = vunpack.c.h.b16 %v8221
    %v10250 = vunpack.c.l.b16 %v8222
    %v10251 = vunpack.c.h.b16 %v8222
    %v10252 = vunpack.c.l.b16 %v8223
    %v10253 = vunpack.c.h.b16 %v8223
    %v10254 = vunpack.c.l.b16 %v8224
    %v10255 = vunpack.c.h.b16 %v8224
    %v10256 = vunpack.c.l.b16 %v8225
    %v10257 = vunpack.c.h.b16 %v8225
    %v10258 = vunpack.c.l.b16 %v8226
    %v10259 = vunpack.c.h.b16 %v8226
    %v10260 = vunpack.c.l.b16 %v8227
    %v10261 = vunpack.c.h.b16 %v8227
    %v10262 = vunpack.c.l.b16 %v8228
    %v10263 = vunpack.c.h.b16 %v8228
    %v10264 = vunpack.c.l.b16 %v8229
    %v10265 = vunpack.c.h.b16 %v8229
    %v10266 = vunpack.c.l.b16 %v8230
    %v10267 = vunpack.c.h.b16 %v8230
    %v10268 = vunpack.c.l.b16 %v8231
    %v10269 = vunpack.c.h.b16 %v8231
    %v10270 = vunpack.c.l.b16 %v8232
    %v10271 = vunpack.c.h.b16 %v8232
    %v10272 = vunpack.c.l.b16 %v8233
    %v10273 = vunpack.c.h.b16 %v8233
    %v10274 = vunpack.c.l.b16 %v8234
    %v10275 = vunpack.c.h.b16 %v8234
    %v10276 = vunpack.c.l.b16 %v8235
    %v10277 = vunpack.c.h.b16 %v8235
    %v10278 = vunpack.c.l.b16 %v8236
    %v10279 = vunpack.c.h.b16 %v8236
    %v10280 = vunpack.c.l.b16 %v8237
    %v10281 = vunpack.c.h.b16 %v8237
    %v10282 = vunpack.c.l.b16 %v8238
    %v10283 = vunpack.c.h.b16 %v8238
    %v10284 = vunpack.c.l.b16 %v8239
    %v10285 = vunpack.c.h.b16 %v8239
    %v10286 = vunpack.c.l.b16 %v8240
    %v10287 = vunpack.c.h.b16 %v8240
    %v10288 = vunpack.c.l.b16 %v8241
    %v10289 = vunpack.c.h.b16 %v8241
    %v10290 = vunpack.c.l.b16 %v8242
    %v10291 = vunpack.c.h.b16 %v8242
    %v10292 = vunpack.c.l.b16 %v8243
    %v10293 = vunpack.c.h.b16 %v8243
    %v10294 = vunpack.c.l.b16 %v8244
    %v10295 = vunpack.c.h.b16 %v8244
    %v10296 = vunpack.c.l.b16 %v8245
    %v10297 = vunpack.c.h.b16 %v8245
    %v10298 = vunpack.c.l.b16 %v8246
    %v10299 = vunpack.c.h.b16 %v8246
    %v10300 = vunpack.c.l.b16 %v8247
    %v10301 = vunpack.c.h.b16 %v8247
    %v10302 = vunpack.c.l.b16 %v8248
    %v10303 = vunpack.c.h.b16 %v8248
    %v10304 = vunpack.c.l.b16 %v8249
    %v10305 = vunpack.c.h.b16 %v8249
    %v10306 = vunpack.c.l.b16 %v8250
    %v10307 = vunpack.c.h.b16 %v8250
    %v10308 = vunpack.c.l.b16 %v8251
    %v10309 = vunpack.c.h.b16 %v8251
    %v10310 = vunpack.c.l.b16 %v8252
    %v10311 = vunpack.c.h.b16 %v8252
    %v10312 = vunpack.c.l.b16 %v8253
    %v10313 = vunpack.c.h.b16 %v8253
    %v10314 = vunpack.c.l.b16 %v8254
    %v10315 = vunpack.c.h.b16 %v8254
    %v10316 = vunpack.c.l.b16 %v8255
    %v10317 = vunpack.c.h.b16 %v8255
    %v10318 = vunpack.c.l.b16 %v8256
    %v10319 = vunpack.c.h.b16 %v8256
    %v10320 = vunpack.c.l.b16 %v8257
    %v10321 = vunpack.c.h.b16 %v8257
    %v10322 = vunpack.c.l.b16 %v8258
    %v10323 = vunpack.c.h.b16 %v8258
    %v10324 = vunpack.c.l.b16 %v8259
    %v10325 = vunpack.c.h.b16 %v8259
    %v10326 = vunpack.c.l.b16 %v8260
    %v10327 = vunpack.c.h.b16 %v8260
    %v10328 = vunpack.c.l.b16 %v8261
    %v10329 = vunpack.c.h.b16 %v8261
    %v10330 = vunpack.c.l.b16 %v8262
    %v10331 = vunpack.c.h.b16 %v8262
    %v10332 = vunpack.c.l.b16 %v8263
    %v10333 = vunpack.c.h.b16 %v8263
    %v10334 = vunpack.c.l.b16 %v8264
    %v10335 = vunpack.c.h.b16 %v8264
    %v10336 = vunpack.c.l.b16 %v8265
    %v10337 = vunpack.c.h.b16 %v8265
    %v10338 = vunpack.c.l.b16 %v8266
    %v10339 = vunpack.c.h.b16 %v8266
    %v10340 = vunpack.c.l.b16 %v8267
    %v10341 = vunpack.c.h.b16 %v8267
    %v10342 = vunpack.c.l.b16 %v8268
    %v10343 = vunpack.c.h.b16 %v8268
    %v10344 = vunpack.c.l.b16 %v8269
    %v10345 = vunpack.c.h.b16 %v8269
    %v10346 = vunpack.c.l.b16 %v8270
    %v10347 = vunpack.c.h.b16 %v8270
    %v10348 = vunpack.c.l.b16 %v8271
    %v10349 = vunpack.c.h.b16 %v8271
    %v10350 = vunpack.c.l.b16 %v8272
    %v10351 = vunpack.c.h.b16 %v8272
    %v10352 = vunpack.c.l.b16 %v8273
    %v10353 = vunpack.c.h.b16 %v8273
    %v10354 = vunpack.c.l.b16 %v8274
    %v10355 = vunpack.c.h.b16 %v8274
    %v10356 = vunpack.c.l.b16 %v8275
    %v10357 = vunpack.c.h.b16 %v8275
    %v10358 = vunpack.c.l.b16 %v8276
    %v10359 = vunpack.c.h.b16 %v8276
    %v10360 = vunpack.c.l.b16 %v8277
    %v10361 = vunpack.c.h.b16 %v8277
    %v10362 = vunpack.c.l.b16 %v8278
    %v10363 = vunpack.c.h.b16 %v8278
    %v10364 = vunpack.c.l.b16 %v8279
    %v10365 = vunpack.c.h.b16 %v8279
    %v10366 = vunpack.c.l.b16 %v8280
    %v10367 = vunpack.c.h.b16 %v8280
    %v10368 = vunpack.c.l.b16 %v8281
    %v10369 = vunpack.c.h.b16 %v8281
    %v10370 = vunpack.c.l.b16 %v8282
    %v10371 = vunpack.c.h.b16 %v8282
    %v10372 = vunpack.c.l.b16 %v8283
    %v10373 = vunpack.c.h.b16 %v8283
    %v10374 = vunpack.c.l.b16 %v8284
    %v10375 = vunpack.c.h.b16 %v8284
    %v10376 = vunpack.c.l.b16 %v8285
    %v10377 = vunpack.c.h.b16 %v8285
    %v10378 = vunpack.c.l.b16 %v8286
    %v10379 = vunpack.c.h.b16 %v8286
    %v10380 = vunpack.c.l.b16 %v8287
    %v10381 = vunpack.c.h.b16 %v8287
    %v10382 = vunpack.c.l.b16 %v8288
    %v10383 = vunpack.c.h.b16 %v8288
    %v10384 = vunpack.c.l.b16 %v8289
    %v10385 = vunpack.c.h.b16 %v8289
    %v10386 = vunpack.c.l.b16 %v8290
    %v10387 = vunpack.c.h.b16 %v8290
    %v10388 = vunpack.c.l.b16 %v8291
    %v10389 = vunpack.c.h.b16 %v8291
    %v10390 = vunpack.c.l.b16 %v8292
    %v10391 = vunpack.c.h.b16 %v8292
    %v10392 = vunpack.c.l.b16 %v8293
    %v10393 = vunpack.c.h.b16 %v8293
    %v10394 = vunpack.c.l.b16 %v8294
    %v10395 = vunpack.c.h.b16 %v8294
    %v10396 = vunpack.c.l.b16 %v8295
    %v10397 = vunpack.c.h.b16 %v8295
    %v10398 = vunpack.c.l.b16 %v8296
    %v10399 = vunpack.c.h.b16 %v8296
    %v10400 = vunpack.c.l.b16 %v8297
    %v10401 = vunpack.c.h.b16 %v8297
    %v10402 = vunpack.c.l.b16 %v8298
    %v10403 = vunpack.c.h.b16 %v8298
    %v10404 = vunpack.c.l.b16 %v8299
    %v10405 = vunpack.c.h.b16 %v8299
    %v10406 = vunpack.c.l.b16 %v8300
    %v10407 = vunpack.c.h.b16 %v8300
    %v10408 = vunpack.c.l.b16 %v8301
    %v10409 = vunpack.c.h.b16 %v8301
    %v10410 = vunpack.c.l.b16 %v8302
    %v10411 = vunpack.c.h.b16 %v8302
    %v10412 = vunpack.c.l.b16 %v8303
    %v10413 = vunpack.c.h.b16 %v8303
    %v10414 = vunpack.c.l.b16 %v8304
    %v10415 = vunpack.c.h.b16 %v8304
    %v10416 = vunpack.c.l.b16 %v8305
    %v10417 = vunpack.c.h.b16 %v8305
    %v10418 = vunpack.c.l.b16 %v8306
    %v10419 = vunpack.c.h.b16 %v8306
    %v10420 = vunpack.c.l.b16 %v8307
    %v10421 = vunpack.c.h.b16 %v8307
    %v10422 = vunpack.c.l.b16 %v8308
    %v10423 = vunpack.c.h.b16 %v8308
    %v10424 = vunpack.c.l.b16 %v8309
    %v10425 = vunpack.c.h.b16 %v8309
    %v10426 = vunpack.c.l.b16 %v8310
    %v10427 = vunpack.c.h.b16 %v8310
    %v10428 = vunpack.c.l.b16 %v8311
    %v10429 = vunpack.c.h.b16 %v8311
    %v10430 = vunpack.c.l.b16 %v8312
    %v10431 = vunpack.c.h.b16 %v8312
    %v10432 = vunpack.c.l.b16 %v8313
    %v10433 = vunpack.c.h.b16 %v8313
    %v10434 = vunpack.c.l.b16 %v8314
    %v10435 = vunpack.c.h.b16 %v8314
    %v10436 = vunpack.c.l.b16 %v8315
    %v10437 = vunpack.c.h.b16 %v8315
    %v10438 = vunpack.c.l.b16 %v8316
    %v10439 = vunpack.c.h.b16 %v8316
    %v10440 = vunpack.c.l.b16 %v8317
    %v10441 = vunpack.c.h.b16 %v8317
    %v10442 = vunpack.c.l.b16 %v8318
    %v10443 = vunpack.c.h.b16 %v8318
    %v10444 = vunpack.c.l.b16 %v8319
    %v10445 = vunpack.c.h.b16 %v8319
    %v10446 = vunpack.c.l.b16 %v8320
    %v10447 = vunpack.c.h.b16 %v8320
    %v10448 = vunpack.c.l.b16 %v8321
    %v10449 = vunpack.c.h.b16 %v8321
    %v10450 = vunpack.c.l.b16 %v8322
    %v10451 = vunpack.c.h.b16 %v8322
    %v10452 = vunpack.c.l.b16 %v8323
    %v10453 = vunpack.c.h.b16 %v8323
    %v10454 = vunpack.c.l.b16 %v8324
    %v10455 = vunpack.c.h.b16 %v8324
    %v10456 = vunpack.c.l.b16 %v8325
    %v10457 = vunpack.c.h.b16 %v8325
    %v10458 = vunpack.c.l.b16 %v8326
    %v10459 = vunpack.c.h.b16 %v8326
    %v10460 = vunpack.c.l.b16 %v8327
    %v10461 = vunpack.c.h.b16 %v8327
    %v10462 = vunpack.c.l.b16 %v8328
    %v10463 = vunpack.c.h.b16 %v8328
    %v10464 = vunpack.c.l.b16 %v8329
    %v10465 = vunpack.c.h.b16 %v8329
    %v10466 = vunpack.c.l.b16 %v8330
    %v10467 = vunpack.c.h.b16 %v8330
    %v10468 = vunpack.c.l.b16 %v8331
    %v10469 = vunpack.c.h.b16 %v8331
    %v10470 = vunpack.c.l.b16 %v8332
    %v10471 = vunpack.c.h.b16 %v8332
    %v10472 = vunpack.c.l.b16 %v8333
    %v10473 = vunpack.c.h.b16 %v8333
    %v10474 = vunpack.c.l.b16 %v8334
    %v10475 = vunpack.c.h.b16 %v8334
    %v10476 = vunpack.c.l.b16 %v8335
    %v10477 = vunpack.c.h.b16 %v8335
    %v10478 = vunpack.c.l.b16 %v8336
    %v10479 = vunpack.c.h.b16 %v8336
    %v10480 = vunpack.c.l.b16 %v8337
    %v10481 = vunpack.c.h.b16 %v8337
    %v10482 = vunpack.c.l.b16 %v8338
    %v10483 = vunpack.c.h.b16 %v8338
    %v10484 = vunpack.c.l.b16 %v8339
    %v10485 = vunpack.c.h.b16 %v8339
    %v10486 = vunpack.c.l.b16 %v8340
    %v10487 = vunpack.c.h.b16 %v8340
    %v10488 = vunpack.c.l.b16 %v8341
    %v10489 = vunpack.c.h.b16 %v8341
    %v10490 = vunpack.c.l.b16 %v8342
    %v10491 = vunpack.c.h.b16 %v8342
    %v10492 = vunpack.c.l.b16 %v8343
    %v10493 = vunpack.c.h.b16 %v8343
    %v10494 = vunpack.c.l.b16 %v8344
    %v10495 = vunpack.c.h.b16 %v8344
    %v10496 = vunpack.c.l.b16 %v8345
    %v10497 = vunpack.c.h.b16 %v8345
    %v10498 = vunpack.c.l.b16 %v8346
    %v10499 = vunpack.c.h.b16 %v8346
    %v10500 = vunpack.c.l.b16 %v8347
    %v10501 = vunpack.c.h.b16 %v8347
    %v10502 = vunpack.c.l.b16 %v8348
    %v10503 = vunpack.c.h.b16 %v8348
    %v10504 = vunpack.c.l.b16 %v8349
    %v10505 = vunpack.c.h.b16 %v8349
    %v10506 = vunpack.c.l.b16 %v8350
    %v10507 = vunpack.c.h.b16 %v8350
    %v10508 = vunpack.c.l.b16 %v8351
    %v10509 = vunpack.c.h.b16 %v8351
    %v10510 = vunpack.c.l.b16 %v8352
    %v10511 = vunpack.c.h.b16 %v8352
    %v10512 = vunpack.c.l.b16 %v8353
    %v10513 = vunpack.c.h.b16 %v8353
    %v10514 = vunpack.c.l.b16 %v8354
    %v10515 = vunpack.c.h.b16 %v8354
    %v10516 = vunpack.c.l.b16 %v8355
    %v10517 = vunpack.c.h.b16 %v8355
    %v10518 = vunpack.c.l.b16 %v8356
    %v10519 = vunpack.c.h.b16 %v8356
    %v10520 = vunpack.c.l.b16 %v8357
    %v10521 = vunpack.c.h.b16 %v8357
    %v10522 = vunpack.c.l.b16 %v8358
    %v10523 = vunpack.c.h.b16 %v8358
    %v10524 = vunpack.c.l.b16 %v8359
    %v10525 = vunpack.c.h.b16 %v8359
    %v10526 = vunpack.c.l.b16 %v8360
    %v10527 = vunpack.c.h.b16 %v8360
    %v10528 = vunpack.c.l.b16 %v8361
    %v10529 = vunpack.c.h.b16 %v8361
    %v10530 = vunpack.c.l.b16 %v8362
    %v10531 = vunpack.c.h.b16 %v8362
    %v10532 = vunpack.c.l.b16 %v8363
    %v10533 = vunpack.c.h.b16 %v8363
    %v10534 = vunpack.c.l.b16 %v8364
    %v10535 = vunpack.c.h.b16 %v8364
    %v10536 = vunpack.c.l.b16 %v8365
    %v10537 = vunpack.c.h.b16 %v8365
    %v10538 = vunpack.c.l.b16 %v8366
    %v10539 = vunpack.c.h.b16 %v8366
    %v10540 = vunpack.c.l.b16 %v8367
    %v10541 = vunpack.c.h.b16 %v8367
    %v10542 = vunpack.c.l.b16 %v8368
    %v10543 = vunpack.c.h.b16 %v8368
    %v10544 = vunpack.c.l.b16 %v8369
    %v10545 = vunpack.c.h.b16 %v8369
    %v10546 = vunpack.c.l.b16 %v8370
    %v10547 = vunpack.c.h.b16 %v8370
    %v10548 = vunpack.c.l.b16 %v8371
    %v10549 = vunpack.c.h.b16 %v8371
    %v10550 = vunpack.c.l.b16 %v8372
    %v10551 = vunpack.c.h.b16 %v8372
    %v10552 = vunpack.c.l.b16 %v8373
    %v10553 = vunpack.c.h.b16 %v8373
    %v10554 = vunpack.c.l.b16 %v8374
    %v10555 = vunpack.c.h.b16 %v8374
    %v10556 = vunpack.c.l.b16 %v8375
    %v10557 = vunpack.c.h.b16 %v8375
    %v10558 = vunpack.c.l.b16 %v8376
    %v10559 = vunpack.c.h.b16 %v8376
    %v10560 = vunpack.c.l.b16 %v8377
    %v10561 = vunpack.c.h.b16 %v8377
    %v10562 = vunpack.c.l.b16 %v8378
    %v10563 = vunpack.c.h.b16 %v8378
    %v10564 = vunpack.c.l.b16 %v8379
    %v10565 = vunpack.c.h.b16 %v8379
    %v10566 = vunpack.c.l.b16 %v8380
    %v10567 = vunpack.c.h.b16 %v8380
    %v10568 = vunpack.c.l.b16 %v8381
    %v10569 = vunpack.c.h.b16 %v8381
    %v10570 = vunpack.c.l.b16 %v8382
    %v10571 = vunpack.c.h.b16 %v8382
    %v10572 = vunpack.c.l.b16 %v8383
    %v10573 = vunpack.c.h.b16 %v8383
    %v10574 = vunpack.c.l.b16 %v8384
    %v10575 = vunpack.c.h.b16 %v8384
    %v10576 = vunpack.c.l.b16 %v8385
    %v10577 = vunpack.c.h.b16 %v8385
    %v10578 = vunpack.c.l.b16 %v8386
    %v10579 = vunpack.c.h.b16 %v8386
    %v10580 = vunpack.c.l.b16 %v8387
    %v10581 = vunpack.c.h.b16 %v8387
    %v10582 = vunpack.c.l.b16 %v8388
    %v10583 = vunpack.c.h.b16 %v8388
    %v10584 = vunpack.c.l.b16 %v8389
    %v10585 = vunpack.c.h.b16 %v8389
    %v10586 = vunpack.c.l.b16 %v8390
    %v10587 = vunpack.c.h.b16 %v8390
    %v10588 = vunpack.c.l.b16 %v8391
    %v10589 = vunpack.c.h.b16 %v8391
    %v10590 = vunpack.c.l.b16 %v8392
    %v10591 = vunpack.c.h.b16 %v8392
    %v10592 = vunpack.c.l.b16 %v8393
    %v10593 = vunpack.c.h.b16 %v8393
    %v10594 = vunpack.c.l.b16 %v8394
    %v10595 = vunpack.c.h.b16 %v8394
    %v10596 = vunpack.c.l.b16 %v8395
    %v10597 = vunpack.c.h.b16 %v8395
    %v10598 = vunpack.c.l.b16 %v8396
    %v10599 = vunpack.c.h.b16 %v8396
    %v10600 = vunpack.c.l.b16 %v8397
    %v10601 = vunpack.c.h.b16 %v8397
    %v10602 = vunpack.c.l.b16 %v8398
    %v10603 = vunpack.c.h.b16 %v8398
    %v10604 = vunpack.c.l.b16 %v8399
    %v10605 = vunpack.c.h.b16 %v8399
    %v10606 = vunpack.c.l.b16 %v8400
    %v10607 = vunpack.c.h.b16 %v8400
    %v10608 = vunpack.c.l.b16 %v8401
    %v10609 = vunpack.c.h.b16 %v8401
    %v10610 = vunpack.c.l.b16 %v8402
    %v10611 = vunpack.c.h.b16 %v8402
    %v10612 = vunpack.c.l.b16 %v8403
    %v10613 = vunpack.c.h.b16 %v8403
    %v10614 = vunpack.c.l.b16 %v8404
    %v10615 = vunpack.c.h.b16 %v8404
    %v10616 = vunpack.c.l.b16 %v8405
    %v10617 = vunpack.c.h.b16 %v8405
    %v10618 = vunpack.c.l.b16 %v8406
    %v10619 = vunpack.c.h.b16 %v8406
    %v10620 = vunpack.c.l.b16 %v8407
    %v10621 = vunpack.c.h.b16 %v8407
    %v10622 = vunpack.c.l.b16 %v8408
    %v10623 = vunpack.c.h.b16 %v8408
    %v10624 = vunpack.c.l.b16 %v8409
    %v10625 = vunpack.c.h.b16 %v8409
    %v10626 = vunpack.c.l.b16 %v8410
    %v10627 = vunpack.c.h.b16 %v8410
    %v10628 = vunpack.c.l.b16 %v8411
    %v10629 = vunpack.c.h.b16 %v8411
    %v10630 = vunpack.c.l.b16 %v8412
    %v10631 = vunpack.c.h.b16 %v8412
    %v10632 = vunpack.c.l.b16 %v8413
    %v10633 = vunpack.c.h.b16 %v8413
    %v10634 = vunpack.c.l.b16 %v8414
    %v10635 = vunpack.c.h.b16 %v8414
    %v10636 = vunpack.c.l.b16 %v8415
    %v10637 = vunpack.c.h.b16 %v8415
    %v10638 = vunpack.c.l.b16 %v8416
    %v10639 = vunpack.c.h.b16 %v8416
    %v10640 = vunpack.c.l.b16 %v8417
    %v10641 = vunpack.c.h.b16 %v8417
    %v10642 = vunpack.c.l.b16 %v8418
    %v10643 = vunpack.c.h.b16 %v8418
    %v10644 = vunpack.c.l.b16 %v8419
    %v10645 = vunpack.c.h.b16 %v8419
    %v10646 = vunpack.c.l.b16 %v8420
    %v10647 = vunpack.c.h.b16 %v8420
    %v10648 = vunpack.c.l.b16 %v8421
    %v10649 = vunpack.c.h.b16 %v8421
    %v10650 = vunpack.c.l.b16 %v8422
    %v10651 = vunpack.c.h.b16 %v8422
    %v10652 = vunpack.c.l.b16 %v8423
    %v10653 = vunpack.c.h.b16 %v8423
    %v10654 = vunpack.c.l.b16 %v8424
    %v10655 = vunpack.c.h.b16 %v8424
    %v10656 = vunpack.c.l.b16 %v8425
    %v10657 = vunpack.c.h.b16 %v8425
    %v10658 = vunpack.c.l.b16 %v8426
    %v10659 = vunpack.c.h.b16 %v8426
    %v10660 = vunpack.c.l.b16 %v8427
    %v10661 = vunpack.c.h.b16 %v8427
    %v10662 = vunpack.c.l.b16 %v8428
    %v10663 = vunpack.c.h.b16 %v8428
    %v10664 = vunpack.c.l.b16 %v8429
    %v10665 = vunpack.c.h.b16 %v8429
    %v10666 = vunpack.c.l.b16 %v8430
    %v10667 = vunpack.c.h.b16 %v8430
    %v10668 = vunpack.c.l.b16 %v8431
    %v10669 = vunpack.c.h.b16 %v8431
    %v10670 = vunpack.c.l.b16 %v8432
    %v10671 = vunpack.c.h.b16 %v8432
    %v10672 = vunpack.c.l.b16 %v8433
    %v10673 = vunpack.c.h.b16 %v8433
    %v10674 = vunpack.c.l.b16 %v8434
    %v10675 = vunpack.c.h.b16 %v8434
    %v10676 = vunpack.c.l.b16 %v8435
    %v10677 = vunpack.c.h.b16 %v8435
    %v10678 = vunpack.c.l.b16 %v8436
    %v10679 = vunpack.c.h.b16 %v8436
    %v10680 = vunpack.c.l.b16 %v8437
    %v10681 = vunpack.c.h.b16 %v8437
    %v10682 = vunpack.c.l.b16 %v8438
    %v10683 = vunpack.c.h.b16 %v8438
    %v10684 = vunpack.c.l.b16 %v8439
    %v10685 = vunpack.c.h.b16 %v8439
    %v10686 = vunpack.c.l.b16 %v8440
    %v10687 = vunpack.c.h.b16 %v8440
    %v10688 = vunpack.c.l.b16 %v8441
    %v10689 = vunpack.c.h.b16 %v8441
    %v10690 = vunpack.c.l.b16 %v8442
    %v10691 = vunpack.c.h.b16 %v8442
    %v10692 = vunpack.c.l.b16 %v8443
    %v10693 = vunpack.c.h.b16 %v8443
    %v10694 = vunpack.c.l.b16 %v8444
    %v10695 = vunpack.c.h.b16 %v8444
    %v10696 = vunpack.c.l.b16 %v8445
    %v10697 = vunpack.c.h.b16 %v8445
    %v10698 = vunpack.c.l.b16 %v8446
    %v10699 = vunpack.c.h.b16 %v8446
    %v10700 = vunpack.c.l.b16 %v8447
    %v10701 = vunpack.c.h.b16 %v8447
    %v10702 = vunpack.c.l.b16 %v8448
    %v10703 = vunpack.c.h.b16 %v8448
    %v10704 = vunpack.c.l.b16 %v8449
    %v10705 = vunpack.c.h.b16 %v8449
    %v10706 = vunpack.c.l.b16 %v8450
    %v10707 = vunpack.c.h.b16 %v8450
    %v10708 = vunpack.c.l.b16 %v8451
    %v10709 = vunpack.c.h.b16 %v8451
    %v10710 = vunpack.c.l.b16 %v8452
    %v10711 = vunpack.c.h.b16 %v8452
    %v10712 = vunpack.c.l.b16 %v8453
    %v10713 = vunpack.c.h.b16 %v8453
    %v10714 = vunpack.c.l.b16 %v8454
    %v10715 = vunpack.c.h.b16 %v8454
    %v10716 = vunpack.c.l.b16 %v8455
    %v10717 = vunpack.c.h.b16 %v8455
    %v10718 = vunpack.c.l.b16 %v8456
    %v10719 = vunpack.c.h.b16 %v8456
    %v10720 = vunpack.c.l.b16 %v8457
    %v10721 = vunpack.c.h.b16 %v8457
    %v10722 = vunpack.c.l.b16 %v8458
    %v10723 = vunpack.c.h.b16 %v8458
    %v10724 = vunpack.c.l.b16 %v8459
    %v10725 = vunpack.c.h.b16 %v8459
    %v10726 = vunpack.c.l.b16 %v8460
    %v10727 = vunpack.c.h.b16 %v8460
    %v10728 = vunpack.c.l.b16 %v8461
    %v10729 = vunpack.c.h.b16 %v8461
    %v10730 = vunpack.c.l.b16 %v8462
    %v10731 = vunpack.c.h.b16 %v8462
    %v10732 = vunpack.c.l.b16 %v8463
    %v10733 = vunpack.c.h.b16 %v8463
    %v10734 = vunpack.c.l.b16 %v8464
    %v10735 = vunpack.c.h.b16 %v8464
    %v10736 = vunpack.c.l.b16 %v8465
    %v10737 = vunpack.c.h.b16 %v8465
    %v10738 = vunpack.c.l.b16 %v8466
    %v10739 = vunpack.c.h.b16 %v8466
    %v10740 = vunpack.c.l.b16 %v8467
    %v10741 = vunpack.c.h.b16 %v8467
    %v10742 = vunpack.c.l.b16 %v8468
    %v10743 = vunpack.c.h.b16 %v8468
    %v10744 = vunpack.c.l.b16 %v8469
    %v10745 = vunpack.c.h.b16 %v8469
    %v10746 = vunpack.c.l.b16 %v8470
    %v10747 = vunpack.c.h.b16 %v8470
    %v10748 = vunpack.c.l.b16 %v8471
    %v10749 = vunpack.c.h.b16 %v8471
    %v10750 = vunpack.c.l.b16 %v8472
    %v10751 = vunpack.c.h.b16 %v8472
    %v10752 = vunpack.c.l.b16 %v8473
    %v10753 = vunpack.c.h.b16 %v8473
    %v10754 = vunpack.c.l.b16 %v8474
    %v10755 = vunpack.c.h.b16 %v8474
    %v10756 = vunpack.c.l.b16 %v8475
    %v10757 = vunpack.c.h.b16 %v8475
    %v10758 = vunpack.c.l.b16 %v8476
    %v10759 = vunpack.c.h.b16 %v8476
    %v10760 = vunpack.c.l.b16 %v8477
    %v10761 = vunpack.c.h.b16 %v8477
    %v10762 = vunpack.c.l.b16 %v8478
    %v10763 = vunpack.c.h.b16 %v8478
    %v10764 = vunpack.c.l.b16 %v8479
    %v10765 = vunpack.c.h.b16 %v8479
    %v10766 = vunpack.c.l.b16 %v8480
    %v10767 = vunpack.c.h.b16 %v8480
    %v10768 = vunpack.c.l.b16 %v8481
    %v10769 = vunpack.c.h.b16 %v8481
    %v10770 = vunpack.c.l.b16 %v8482
    %v10771 = vunpack.c.h.b16 %v8482
    %v10772 = vunpack.c.l.b16 %v8483
    %v10773 = vunpack.c.h.b16 %v8483
    %v10774 = vunpack.c.l.b16 %v8484
    %v10775 = vunpack.c.h.b16 %v8484
    %v10776 = vunpack.c.l.b16 %v8485
    %v10777 = vunpack.c.h.b16 %v8485
    %v10778 = vunpack.c.l.b16 %v8486
    %v10779 = vunpack.c.h.b16 %v8486
    %v10780 = vunpack.c.l.b16 %v8487
    %v10781 = vunpack.c.h.b16 %v8487
    %v10782 = vunpack.c.l.b16 %v8488
    %v10783 = vunpack.c.h.b16 %v8488
    %v10784 = vunpack.c.l.b16 %v8489
    %v10785 = vunpack.c.h.b16 %v8489
    %v10786 = vunpack.c.l.b16 %v8490
    %v10787 = vunpack.c.h.b16 %v8490
    %v10788 = vunpack.c.l.b16 %v8491
    %v10789 = vunpack.c.h.b16 %v8491
    %v10790 = vunpack.c.l.b16 %v8492
    %v10791 = vunpack.c.h.b16 %v8492
    %v10792 = vunpack.c.l.b16 %v8493
    %v10793 = vunpack.c.h.b16 %v8493
    %v10794 = vunpack.c.l.b16 %v8494
    %v10795 = vunpack.c.h.b16 %v8494
    %v10796 = vunpack.c.l.b16 %v8495
    %v10797 = vunpack.c.h.b16 %v8495
    %v10798 = vunpack.c.l.b16 %v8496
    %v10799 = vunpack.c.h.b16 %v8496
    %v10800 = vunpack.c.l.b16 %v8497
    %v10801 = vunpack.c.h.b16 %v8497
    %v10802 = vunpack.c.l.b16 %v8498
    %v10803 = vunpack.c.h.b16 %v8498
    %v10804 = vunpack.c.l.b16 %v8499
    %v10805 = vunpack.c.h.b16 %v8499
    %v10806 = vunpack.c.l.b16 %v8500
    %v10807 = vunpack.c.h.b16 %v8500
    %v10808 = vunpack.c.l.b16 %v8501
    %v10809 = vunpack.c.h.b16 %v8501
    %v10810 = vunpack.c.l.b16 %v8502
    %v10811 = vunpack.c.h.b16 %v8502
    %v10812 = vunpack.c.l.b16 %v8503
    %v10813 = vunpack.c.h.b16 %v8503
    %v10814 = vunpack.c.l.b16 %v8504
    %v10815 = vunpack.c.h.b16 %v8504
    %v10816 = vunpack.c.l.b16 %v8505
    %v10817 = vunpack.c.h.b16 %v8505
    %v10818 = vunpack.c.l.b16 %v8506
    %v10819 = vunpack.c.h.b16 %v8506
    %v10820 = vunpack.c.l.b16 %v8507
    %v10821 = vunpack.c.h.b16 %v8507
    %v10822 = vunpack.c.l.b16 %v8508
    %v10823 = vunpack.c.h.b16 %v8508
    %v10824 = vunpack.c.l.b16 %v8509
    %v10825 = vunpack.c.h.b16 %v8509
    %v10826 = vunpack.c.l.b16 %v8510
    %v10827 = vunpack.c.h.b16 %v8510
    %v10828 = vunpack.c.l.b16 %v8511
    %v10829 = vunpack.c.h.b16 %v8511
    %v10830 = vunpack.c.l.b16 %v8512
    %v10831 = vunpack.c.h.b16 %v8512
    %v10832 = vunpack.c.l.b16 %v8513
    %v10833 = vunpack.c.h.b16 %v8513
    %v10834 = vunpack.c.l.b16 %v8514
    %v10835 = vunpack.c.h.b16 %v8514
    %v10836 = vunpack.c.l.b16 %v8515
    %v10837 = vunpack.c.h.b16 %v8515
    %v10838 = vunpack.c.l.b16 %v8516
    %v10839 = vunpack.c.h.b16 %v8516
    %v10840 = vunpack.c.l.b16 %v8517
    %v10841 = vunpack.c.h.b16 %v8517
    %v10842 = vunpack.c.l.b16 %v8518
    %v10843 = vunpack.c.h.b16 %v8518
    %v10844 = vunpack.c.l.b16 %v8519
    %v10845 = vunpack.c.h.b16 %v8519
    %v10846 = vunpack.c.l.b16 %v8520
    %v10847 = vunpack.c.h.b16 %v8520
    %v10848 = vunpack.c.l.b16 %v8521
    %v10849 = vunpack.c.h.b16 %v8521
    %v10850 = vunpack.c.l.b16 %v8522
    %v10851 = vunpack.c.h.b16 %v8522
    %v10852 = vunpack.c.l.b16 %v8523
    %v10853 = vunpack.c.h.b16 %v8523
    %v10854 = vunpack.c.l.b16 %v8524
    %v10855 = vunpack.c.h.b16 %v8524
    %v10856 = vunpack.c.l.b16 %v8525
    %v10857 = vunpack.c.h.b16 %v8525
    %v10858 = vunpack.c.l.b16 %v8526
    %v10859 = vunpack.c.h.b16 %v8526
    %v10860 = vunpack.c.l.b16 %v8527
    %v10861 = vunpack.c.h.b16 %v8527
    %v10862 = vunpack.c.l.b16 %v8528
    %v10863 = vunpack.c.h.b16 %v8528
    %v10864 = vunpack.c.l.b16 %v8529
    %v10865 = vunpack.c.h.b16 %v8529
    %v10866 = vunpack.c.l.b16 %v8530
    %v10867 = vunpack.c.h.b16 %v8530
    %v10868 = vunpack.c.l.b16 %v8531
    %v10869 = vunpack.c.h.b16 %v8531
    %v10870 = vunpack.c.l.b16 %v8532
    %v10871 = vunpack.c.h.b16 %v8532
    %v10872 = vunpack.c.l.b16 %v8533
    %v10873 = vunpack.c.h.b16 %v8533
    %v10874 = vunpack.c.l.b16 %v8534
    %v10875 = vunpack.c.h.b16 %v8534
    %v10876 = vunpack.c.l.b16 %v8535
    %v10877 = vunpack.c.h.b16 %v8535
    %v10878 = vunpack.c.l.b16 %v8536
    %v10879 = vunpack.c.h.b16 %v8536
    %v10880 = vunpack.c.l.b16 %v8537
    %v10881 = vunpack.c.h.b16 %v8537
    %v10882 = vunpack.c.l.b16 %v8538
    %v10883 = vunpack.c.h.b16 %v8538
    %v10884 = vunpack.c.l.b16 %v8539
    %v10885 = vunpack.c.h.b16 %v8539
    %v10886 = vunpack.c.l.b16 %v8540
    %v10887 = vunpack.c.h.b16 %v8540
    %v10888 = vunpack.c.l.b16 %v8541
    %v10889 = vunpack.c.h.b16 %v8541
    %v10890 = vunpack.c.l.b16 %v8542
    %v10891 = vunpack.c.h.b16 %v8542
    %v10892 = vunpack.c.l.b16 %v8543
    %v10893 = vunpack.c.h.b16 %v8543
    %v10894 = vunpack.c.l.b16 %v8544
    %v10895 = vunpack.c.h.b16 %v8544
    %v10896 = vunpack.c.l.b16 %v8545
    %v10897 = vunpack.c.h.b16 %v8545
    %v10898 = vunpack.c.l.b16 %v8546
    %v10899 = vunpack.c.h.b16 %v8546
    %v10900 = vunpack.c.l.b16 %v8547
    %v10901 = vunpack.c.h.b16 %v8547
    %v10902 = vunpack.c.l.b16 %v8548
    %v10903 = vunpack.c.h.b16 %v8548
    %v10904 = vunpack.c.l.b16 %v8549
    %v10905 = vunpack.c.h.b16 %v8549
    %v10906 = vunpack.c.l.b16 %v8550
    %v10907 = vunpack.c.h.b16 %v8550
    %v10908 = vunpack.c.l.b16 %v8551
    %v10909 = vunpack.c.h.b16 %v8551
    %v10910 = vunpack.c.l.b16 %v8552
    %v10911 = vunpack.c.h.b16 %v8552
    %v10912 = vunpack.c.l.b16 %v8553
    %v10913 = vunpack.c.h.b16 %v8553
    %v10914 = vunpack.c.l.b16 %v8554
    %v10915 = vunpack.c.h.b16 %v8554
    %v10916 = vunpack.c.l.b16 %v8555
    %v10917 = vunpack.c.h.b16 %v8555
    %v10918 = vunpack.c.l.b16 %v8556
    %v10919 = vunpack.c.h.b16 %v8556
    %v10920 = vunpack.c.l.b16 %v8557
    %v10921 = vunpack.c.h.b16 %v8557
    %v10922 = vunpack.c.l.b16 %v8558
    %v10923 = vunpack.c.h.b16 %v8558
    %v10924 = vunpack.c.l.b16 %v8559
    %v10925 = vunpack.c.h.b16 %v8559
    %v10926 = vunpack.c.l.b16 %v8560
    %v10927 = vunpack.c.h.b16 %v8560
    %v10928 = vunpack.c.l.b16 %v8561
    %v10929 = vunpack.c.h.b16 %v8561
    %v10930 = vunpack.c.l.b16 %v8562
    %v10931 = vunpack.c.h.b16 %v8562
    %v10932 = vunpack.c.l.b16 %v8563
    %v10933 = vunpack.c.h.b16 %v8563
    %v10934 = vunpack.c.l.b16 %v8564
    %v10935 = vunpack.c.h.b16 %v8564
    %v10936 = vunpack.c.l.b16 %v8565
    %v10937 = vunpack.c.h.b16 %v8565
    %v10938 = vunpack.c.l.b16 %v8566
    %v10939 = vunpack.c.h.b16 %v8566
    %v10940 = vunpack.c.l.b16 %v8567
    %v10941 = vunpack.c.h.b16 %v8567
    %v10942 = vunpack.c.l.b16 %v8568
    %v10943 = vunpack.c.h.b16 %v8568
    %v10944 = vunpack.c.l.b16 %v8569
    %v10945 = vunpack.c.h.b16 %v8569
    %v10946 = vunpack.c.l.b16 %v8570
    %v10947 = vunpack.c.h.b16 %v8570
    %v10948 = vunpack.c.l.b16 %v8571
    %v10949 = vunpack.c.h.b16 %v8571
    %v10950 = vunpack.c.l.b16 %v8572
    %v10951 = vunpack.c.h.b16 %v8572
    %v10952 = vunpack.c.l.b16 %v8573
    %v10953 = vunpack.c.h.b16 %v8573
    %v10954 = vunpack.c.l.b16 %v8574
    %v10955 = vunpack.c.h.b16 %v8574
    %v10956 = vunpack.c.l.b16 %v8575
    %v10957 = vunpack.c.h.b16 %v8575
    %v10958 = vunpack.c.l.b16 %v8576
    %v10959 = vunpack.c.h.b16 %v8576
    %v10960 = vunpack.c.l.b16 %v8577
    %v10961 = vunpack.c.h.b16 %v8577
    %v10962 = vunpack.c.l.b16 %v8578
    %v10963 = vunpack.c.h.b16 %v8578
    %v10964 = vunpack.c.l.b16 %v8579
    %v10965 = vunpack.c.h.b16 %v8579
    %v10966 = vunpack.c.l.b16 %v8580
    %v10967 = vunpack.c.h.b16 %v8580
    %v10968 = vunpack.c.l.b16 %v8581
    %v10969 = vunpack.c.h.b16 %v8581
    %v10970 = vunpack.c.l.b16 %v8582
    %v10971 = vunpack.c.h.b16 %v8582
    %v10972 = vunpack.c.l.b16 %v8583
    %v10973 = vunpack.c.h.b16 %v8583
    %v10974 = vunpack.c.l.b16 %v8584
    %v10975 = vunpack.c.h.b16 %v8584
    %v10976 = vunpack.c.l.b16 %v8585
    %v10977 = vunpack.c.h.b16 %v8585
    %v10978 = vunpack.c.l.b16 %v8586
    %v10979 = vunpack.c.h.b16 %v8586
    %v10980 = vunpack.c.l.b16 %v8587
    %v10981 = vunpack.c.h.b16 %v8587
    %v10982 = vunpack.c.l.b16 %v8588
    %v10983 = vunpack.c.h.b16 %v8588
    %v10984 = vunpack.c.l.b16 %v8589
    %v10985 = vunpack.c.h.b16 %v8589
    %v10986 = vunpack.c.l.b16 %v8590
    %v10987 = vunpack.c.h.b16 %v8590
    %v10988 = vunpack.c.l.b16 %v8591
    %v10989 = vunpack.c.h.b16 %v8591
    %v10990 = vunpack.c.l.b16 %v8592
    %v10991 = vunpack.c.h.b16 %v8592
    %v10992 = vunpack.c.l.b16 %v8593
    %v10993 = vunpack.c.h.b16 %v8593
    %v10994 = vunpack.c.l.b16 %v8594
    %v10995 = vunpack.c.h.b16 %v8594
    %v10996 = vunpack.c.l.b16 %v8595
    %v10997 = vunpack.c.h.b16 %v8595
    %v10998 = vunpack.c.l.b16 %v8596
    %v10999 = vunpack.c.h.b16 %v8596
    %v11000 = vunpack.c.l.b16 %v8597
    %v11001 = vunpack.c.h.b16 %v8597
    %v11002 = vunpack.c.l.b16 %v8598
    %v11003 = vunpack.c.h.b16 %v8598
    %v11004 = vunpack.c.l.b16 %v8599
    %v11005 = vunpack.c.h.b16 %v8599
    %v11006 = vunpack.c.l.b16 %v8600
    %v11007 = vunpack.c.h.b16 %v8600
    %v11008 = vunpack.c.l.b16 %v8601
    %v11009 = vunpack.c.h.b16 %v8601
    %v11010 = vunpack.c.l.b16 %v8602
    %v11011 = vunpack.c.h.b16 %v8602
    %v11012 = vunpack.c.l.b16 %v8603
    %v11013 = vunpack.c.h.b16 %v8603
    %v11014 = vunpack.c.l.b16 %v8604
    %v11015 = vunpack.c.h.b16 %v8604
    %v11016 = vunpack.c.l.b16 %v8605
    %v11017 = vunpack.c.h.b16 %v8605
    %v11018 = vunpack.c.l.b16 %v8606
    %v11019 = vunpack.c.h.b16 %v8606
    %v11020 = vunpack.c.l.b16 %v8607
    %v11021 = vunpack.c.h.b16 %v8607
    %v11022 = vunpack.c.l.b16 %v8608
    %v11023 = vunpack.c.h.b16 %v8608
    %v11024 = vunpack.c.l.b16 %v8609
    %v11025 = vunpack.c.h.b16 %v8609
    %v11026 = vunpack.c.l.b16 %v8610
    %v11027 = vunpack.c.h.b16 %v8610
    %v11028 = vunpack.c.l.b16 %v8611
    %v11029 = vunpack.c.h.b16 %v8611
    %v11030 = vunpack.c.l.b16 %v8612
    %v11031 = vunpack.c.h.b16 %v8612
    %v11032 = vunpack.c.l.b16 %v8613
    %v11033 = vunpack.c.h.b16 %v8613
    %v11034 = vunpack.c.l.b16 %v8614
    %v11035 = vunpack.c.h.b16 %v8614
    %v11036 = vunpack.c.l.b16 %v8615
    %v11037 = vunpack.c.h.b16 %v8615
    %v11038 = vunpack.c.l.b16 %v8616
    %v11039 = vunpack.c.h.b16 %v8616
    %v11040 = vunpack.c.l.b16 %v8617
    %v11041 = vunpack.c.h.b16 %v8617
    %v11042 = vunpack.c.l.b16 %v8618
    %v11043 = vunpack.c.h.b16 %v8618
    %v11044 = vunpack.c.l.b16 %v8619
    %v11045 = vunpack.c.h.b16 %v8619
    %v11046 = vunpack.c.l.b16 %v8620
    %v11047 = vunpack.c.h.b16 %v8620
    %v11048 = vunpack.c.l.b16 %v8621
    %v11049 = vunpack.c.h.b16 %v8621
    %v11050 = vunpack.c.l.b16 %v8622
    %v11051 = vunpack.c.h.b16 %v8622
    %v11052 = vunpack.c.l.b16 %v8623
    %v11053 = vunpack.c.h.b16 %v8623
    %v11054 = vpack.c.b16 %v9542, %v9518
    %v11055 = vpack.c.b16 %v9543, %v9519
    %v11056 = vpack.c.b16 %v9544, %v9520
    %v11057 = vpack.c.b16 %v9545, %v9521
    %v11058 = vpack.c.b16 %v9546, %v9522
    %v11059 = vpack.c.b16 %v9547, %v9523
    %v11060 = vpack.c.b16 %v9548, %v9524
    %v11061 = vpack.c.b16 %v9549, %v9525
    %v11062 = vpack.c.b16 %v9550, %v9526
    %v11063 = vpack.c.b16 %v9551, %v9527
    %v11064 = vpack.c.b16 %v9552, %v9528
    %v11065 = vpack.c.b16 %v9553, %v9529
    %v11066 = vpack.c.b16 %v9554, %v9530
    %v11067 = vpack.c.b16 %v9555, %v9531
    %v11068 = vpack.c.b16 %v9556, %v9532
    %v11069 = vpack.c.b16 %v9557, %v9533
    %v11070 = vpack.c.b16 %v9558, %v9534
    %v11071 = vpack.c.b16 %v9559, %v9535
    %v11072 = vpack.c.b16 %v9560, %v9536
    %v11073 = vpack.c.b16 %v9561, %v9537
    %v11074 = vpack.c.b16 %v9562, %v9538
    %v11075 = vpack.c.b16 %v9563, %v9539
    %v11076 = vpack.c.b16 %v9564, %v9540
    %v11077 = vpack.c.b16 %v9565, %v9541
    %v11078 = vpack.c.b16 %v9590, %v9566
    %v11079 = vpack.c.b16 %v9591, %v9567
    %v11080 = vpack.c.b16 %v9592, %v9568
    %v11081 = vpack.c.b16 %v9593, %v9569
    %v11082 = vpack.c.b16 %v9594, %v9570
    %v11083 = vpack.c.b16 %v9595, %v9571
    %v11084 = vpack.c.b16 %v9596, %v9572
    %v11085 = vpack.c.b16 %v9597, %v9573
    %v11086 = vpack.c.b16 %v9598, %v9574
    %v11087 = vpack.c.b16 %v9599, %v9575
    %v11088 = vpack.c.b16 %v9600, %v9576
    %v11089 = vpack.c.b16 %v9601, %v9577
    %v11090 = vpack.c.b16 %v9602, %v9578
    %v11091 = vpack.c.b16 %v9603, %v9579
    %v11092 = vpack.c.b16 %v9604, %v9580
    %v11093 = vpack.c.b16 %v9605, %v9581
    %v11094 = vpack.c.b16 %v9606, %v9582
    %v11095 = vpack.c.b16 %v9607, %v9583
    %v11096 = vpack.c.b16 %v9608, %v9584
    %v11097 = vpack.c.b16 %v9609, %v9585
    %v11098 = vpack.c.b16 %v9610, %v9586
    %v11099 = vpack.c.b16 %v9611, %v9587
    %v11100 = vpack.c.b16 %v9612, %v9588
    %v11101 = vpack.c.b16 %v9613, %v9589
    %v11102 = vpack.c.b16 %v9638, %v9614
    %v11103 = vpack.c.b16 %v9639, %v9615
    %v11104 = vpack.c.b16 %v9640, %v9616
    %v11105 = vpack.c.b16 %v9641, %v9617
    %v11106 = vpack.c.b16 %v9642, %v9618
    %v11107 = vpack.c.b16 %v9643, %v9619
    %v11108 = vpack.c.b16 %v9644, %v9620
    %v11109 = vpack.c.b16 %v9645, %v9621
    %v11110 = vpack.c.b16 %v9646, %v9622
    %v11111 = vpack.c.b16 %v9647, %v9623
    %v11112 = vpack.c.b16 %v9648, %v9624
    %v11113 = vpack.c.b16 %v9649, %v9625
    %v11114 = vpack.c.b16 %v9650, %v9626
    %v11115 = vpack.c.b16 %v9651, %v9627
    %v11116 = vpack.c.b16 %v9652, %v9628
    %v11117 = vpack.c.b16 %v9653, %v9629
    %v11118 = vpack.c.b16 %v9654, %v9630
    %v11119 = vpack.c.b16 %v9655, %v9631
    %v11120 = vpack.c.b16 %v9656, %v9632
    %v11121 = vpack.c.b16 %v9657, %v9633
    %v11122 = vpack.c.b16 %v9658, %v9634
    %v11123 = vpack.c.b16 %v9659, %v9635
    %v11124 = vpack.c.b16 %v9660, %v9636
    %v11125 = vpack.c.b16 %v9661, %v9637
    %v11126 = vpack.c.b16 %v9686, %v9662
    %v11127 = vpack.c.b16 %v9687, %v9663
    %v11128 = vpack.c.b16 %v9688, %v9664
    %v11129 = vpack.c.b16 %v9689, %v9665
    %v11130 = vpack.c.b16 %v9690, %v9666
    %v11131 = vpack.c.b16 %v9691, %v9667
    %v11132 = vpack.c.b16 %v9692, %v9668
    %v11133 = vpack.c.b16 %v9693, %v9669
    %v11134 = vpack.c.b16 %v9694, %v9670
    %v11135 = vpack.c.b16 %v9695, %v9671
    %v11136 = vpack.c.b16 %v9696, %v9672
    %v11137 = vpack.c.b16 %v9697, %v9673
    %v11138 = vpack.c.b16 %v9698, %v9674
    %v11139 = vpack.c.b16 %v9699, %v9675
    %v11140 = vpack.c.b16 %v9700, %v9676
    %v11141 = vpack.c.b16 %v9701, %v9677
    %v11142 = vpack.c.b16 %v9702, %v9678
    %v11143 = vpack.c.b16 %v9703, %v9679
    %v11144 = vpack.c.b16 %v9704, %v9680
    %v11145 = vpack.c.b16 %v9705, %v9681
    %v11146 = vpack.c.b16 %v9706, %v9682
    %v11147 = vpack.c.b16 %v9707, %v9683
    %v11148 = vpack.c.b16 %v9708, %v9684
    %v11149 = vpack.c.b16 %v9709, %v9685
    %v11150 = vpack.c.b16 %v9734, %v9710
    %v11151 = vpack.c.b16 %v9735, %v9711
    %v11152 = vpack.c.b16 %v9736, %v9712
    %v11153 = vpack.c.b16 %v9737, %v9713
    %v11154 = vpack.c.b16 %v9738, %v9714
    %v11155 = vpack.c.b16 %v9739, %v9715
    %v11156 = vpack.c.b16 %v9740, %v9716
    %v11157 = vpack.c.b16 %v9741, %v9717
    %v11158 = vpack.c.b16 %v9742, %v9718
    %v11159 = vpack.c.b16 %v9743, %v9719
    %v11160 = vpack.c.b16 %v9744, %v9720
    %v11161 = vpack.c.b16 %v9745, %v9721
    %v11162 = vpack.c.b16 %v9746, %v9722
    %v11163 = vpack.c.b16 %v9747, %v9723
    %v11164 = vpack.c.b16 %v9748, %v9724
    %v11165 = vpack.c.b16 %v9749, %v9725
    %v11166 = vpack.c.b16 %v9750, %v9726
    %v11167 = vpack.c.b16 %v9751, %v9727
    %v11168 = vpack.c.b16 %v9752, %v9728
    %v11169 = vpack.c.b16 %v9753, %v9729
    %v11170 = vpack.c.b16 %v9754, %v9730
    %v11171 = vpack.c.b16 %v9755, %v9731
    %v11172 = vpack.c.b16 %v9756, %v9732
    %v11173 = vpack.c.b16 %v9757, %v9733
    %v11174 = vpack.c.b16 %v9782, %v9758
    %v11175 = vpack.c.b16 %v9783, %v9759
    %v11176 = vpack.c.b16 %v9784, %v9760
    %v11177 = vpack.c.b16 %v9785, %v9761
    %v11178 = vpack.c.b16 %v9786, %v9762
    %v11179 = vpack.c.b16 %v9787, %v9763
    %v11180 = vpack.c.b16 %v9788, %v9764
    %v11181 = vpack.c.b16 %v9789, %v9765
    %v11182 = vpack.c.b16 %v9790, %v9766
    %v11183 = vpack.c.b16 %v9791, %v9767
    %v11184 = vpack.c.b16 %v9792, %v9768
    %v11185 = vpack.c.b16 %v9793, %v9769
    %v11186 = vpack.c.b16 %v9794, %v9770
    %v11187 = vpack.c.b16 %v9795, %v9771
    %v11188 = vpack.c.b16 %v9796, %v9772
    %v11189 = vpack.c.b16 %v9797, %v9773
    %v11190 = vpack.c.b16 %v9798, %v9774
    %v11191 = vpack.c.b16 %v9799, %v9775
    %v11192 = vpack.c.b16 %v9800, %v9776
    %v11193 = vpack.c.b16 %v9801, %v9777
    %v11194 = vpack.c.b16 %v9802, %v9778
    %v11195 = vpack.c.b16 %v9803, %v9779
    %v11196 = vpack.c.b16 %v9804, %v9780
    %v11197 = vpack.c.b16 %v9805, %v9781
    %v11198 = vpack.c.b16 %v9830, %v9806
    %v11199 = vpack.c.b16 %v9831, %v9807
    %v11200 = vpack.c.b16 %v9832, %v9808
    %v11201 = vpack.c.b16 %v9833, %v9809
    %v11202 = vpack.c.b16 %v9834, %v9810
    %v11203 = vpack.c.b16 %v9835, %v9811
    %v11204 = vpack.c.b16 %v9836, %v9812
    %v11205 = vpack.c.b16 %v9837, %v9813
    %v11206 = vpack.c.b16 %v9838, %v9814
    %v11207 = vpack.c.b16 %v9839, %v9815
    %v11208 = vpack.c.b16 %v9840, %v9816
    %v11209 = vpack.c.b16 %v9841, %v9817
    %v11210 = vpack.c.b16 %v9842, %v9818
    %v11211 = vpack.c.b16 %v9843, %v9819
    %v11212 = vpack.c.b16 %v9844, %v9820
    %v11213 = vpack.c.b16 %v9845, %v9821
    %v11214 = vpack.c.b16 %v9846, %v9822
    %v11215 = vpack.c.b16 %v9847, %v9823
    %v11216 = vpack.c.b16 %v9848, %v9824
    %v11217 = vpack.c.b16 %v9849, %v9825
    %v11218 = vpack.c.b16 %v9850, %v9826
    %v11219 = vpack.c.b16 %v9851, %v9827
    %v11220 = vpack.c.b16 %v9852, %v9828
    %v11221 = vpack.c.b16 %v9853, %v9829
    %v11222 = vpack.c.b16 %v9878, %v9854
    %v11223 = vpack.c.b16 %v9879, %v9855
    %v11224 = vpack.c.b16 %v9880, %v9856
    %v11225 = vpack.c.b16 %v9881, %v9857
    %v11226 = vpack.c.b16 %v9882, %v9858
    %v11227 = vpack.c.b16 %v9883, %v9859
    %v11228 = vpack.c.b16 %v9884, %v9860
    %v11229 = vpack.c.b16 %v9885, %v9861
    %v11230 = vpack.c.b16 %v9886, %v9862
    %v11231 = vpack.c.b16 %v9887, %v9863
    %v11232 = vpack.c.b16 %v9888, %v9864
    %v11233 = vpack.c.b16 %v9889, %v9865
    %v11234 = vpack.c.b16 %v9890, %v9866
    %v11235 = vpack.c.b16 %v9891, %v9867
    %v11236 = vpack.c.b16 %v9892, %v9868
    %v11237 = vpack.c.b16 %v9893, %v9869
    %v11238 = vpack.c.b16 %v9894, %v9870
    %v11239 = vpack.c.b16 %v9895, %v9871
    %v11240 = vpack.c.b16 %v9896, %v9872
    %v11241 = vpack.c.b16 %v9897, %v9873
    %v11242 = vpack.c.b16 %v9898, %v9874
    %v11243 = vpack.c.b16 %v9899, %v9875
    %v11244 = vpack.c.b16 %v9900, %v9876
    %v11245 = vpack.c.b16 %v9901, %v9877
    %v11246 = vpack.c.b16 %v9926, %v9902
    %v11247 = vpack.c.b16 %v9927, %v9903
    %v11248 = vpack.c.b16 %v9928, %v9904
    %v11249 = vpack.c.b16 %v9929, %v9905
    %v11250 = vpack.c.b16 %v9930, %v9906
    %v11251 = vpack.c.b16 %v9931, %v9907
    %v11252 = vpack.c.b16 %v9932, %v9908
    %v11253 = vpack.c.b16 %v9933, %v9909
    %v11254 = vpack.c.b16 %v9934, %v9910
    %v11255 = vpack.c.b16 %v9935, %v9911
    %v11256 = vpack.c.b16 %v9936, %v9912
    %v11257 = vpack.c.b16 %v9937, %v9913
    %v11258 = vpack.c.b16 %v9938, %v9914
    %v11259 = vpack.c.b16 %v9939, %v9915
    %v11260 = vpack.c.b16 %v9940, %v9916
    %v11261 = vpack.c.b16 %v9941, %v9917
    %v11262 = vpack.c.b16 %v9942, %v9918
    %v11263 = vpack.c.b16 %v9943, %v9919
    %v11264 = vpack.c.b16 %v9944, %v9920
    %v11265 = vpack.c.b16 %v9945, %v9921
    %v11266 = vpack.c.b16 %v9946, %v9922
    %v11267 = vpack.c.b16 %v9947, %v9923
    %v11268 = vpack.c.b16 %v9948, %v9924
    %v11269 = vpack.c.b16 %v9949, %v9925
    %v11270 = vpack.c.b16 %v9974, %v9950
    %v11271 = vpack.c.b16 %v9975, %v9951
    %v11272 = vpack.c.b16 %v9976, %v9952
    %v11273 = vpack.c.b16 %v9977, %v9953
    %v11274 = vpack.c.b16 %v9978, %v9954
    %v11275 = vpack.c.b16 %v9979, %v9955
    %v11276 = vpack.c.b16 %v9980, %v9956
    %v11277 = vpack.c.b16 %v9981, %v9957
    %v11278 = vpack.c.b16 %v9982, %v9958
    %v11279 = vpack.c.b16 %v9983, %v9959
    %v11280 = vpack.c.b16 %v9984, %v9960
    %v11281 = vpack.c.b16 %v9985, %v9961
    %v11282 = vpack.c.b16 %v9986, %v9962
    %v11283 = vpack.c.b16 %v9987, %v9963
    %v11284 = vpack.c.b16 %v9988, %v9964
    %v11285 = vpack.c.b16 %v9989, %v9965
    %v11286 = vpack.c.b16 %v9990, %v9966
    %v11287 = vpack.c.b16 %v9991, %v9967
    %v11288 = vpack.c.b16 %v9992, %v9968
    %v11289 = vpack.c.b16 %v9993, %v9969
    %v11290 = vpack.c.b16 %v9994, %v9970
    %v11291 = vpack.c.b16 %v9995, %v9971
    %v11292 = vpack.c.b16 %v9996, %v9972
    %v11293 = vpack.c.b16 %v9997, %v9973
    %v11294 = vpack.c.b16 %v10022, %v9998
    %v11295 = vpack.c.b16 %v10023, %v9999
    %v11296 = vpack.c.b16 %v10024, %v10000
    %v11297 = vpack.c.b16 %v10025, %v10001
    %v11298 = vpack.c.b16 %v10026, %v10002
    %v11299 = vpack.c.b16 %v10027, %v10003
    %v11300 = vpack.c.b16 %v10028, %v10004
    %v11301 = vpack.c.b16 %v10029, %v10005
    %v11302 = vpack.c.b16 %v10030, %v10006
    %v11303 = vpack.c.b16 %v10031, %v10007
    %v11304 = vpack.c.b16 %v10032, %v10008
    %v11305 = vpack.c.b16 %v10033, %v10009
    %v11306 = vpack.c.b16 %v10034, %v10010
    %v11307 = vpack.c.b16 %v10035, %v10011
    %v11308 = vpack.c.b16 %v10036, %v10012
    %v11309 = vpack.c.b16 %v10037, %v10013
    %v11310 = vpack.c.b16 %v10038, %v10014
    %v11311 = vpack.c.b16 %v10039, %v10015
    %v11312 = vpack.c.b16 %v10040, %v10016
    %v11313 = vpack.c.b16 %v10041, %v10017
    %v11314 = vpack.c.b16 %v10042, %v10018
    %v11315 = vpack.c.b16 %v10043, %v10019
    %v11316 = vpack.c.b16 %v10044, %v10020
    %v11317 = vpack.c.b16 %v10045, %v10021
    %v11318 = vpack.c.b16 %v10070, %v10046
    %v11319 = vpack.c.b16 %v10071, %v10047
    %v11320 = vpack.c.b16 %v10072, %v10048
    %v11321 = vpack.c.b16 %v10073, %v10049
    %v11322 = vpack.c.b16 %v10074, %v10050
    %v11323 = vpack.c.b16 %v10075, %v10051
    %v11324 = vpack.c.b16 %v10076, %v10052
    %v11325 = vpack.c.b16 %v10077, %v10053
    %v11326 = vpack.c.b16 %v10078, %v10054
    %v11327 = vpack.c.b16 %v10079, %v10055
    %v11328 = vpack.c.b16 %v10080, %v10056
    %v11329 = vpack.c.b16 %v10081, %v10057
    %v11330 = vpack.c.b16 %v10082, %v10058
    %v11331 = vpack.c.b16 %v10083, %v10059
    %v11332 = vpack.c.b16 %v10084, %v10060
    %v11333 = vpack.c.b16 %v10085, %v10061
    %v11334 = vpack.c.b16 %v10086, %v10062
    %v11335 = vpack.c.b16 %v10087, %v10063
    %v11336 = vpack.c.b16 %v10088, %v10064
    %v11337 = vpack.c.b16 %v10089, %v10065
    %v11338 = vpack.c.b16 %v10090, %v10066
    %v11339 = vpack.c.b16 %v10091, %v10067
    %v11340 = vpack.c.b16 %v10092, %v10068
    %v11341 = vpack.c.b16 %v10093, %v10069
    %v11342 = vpack.c.b16 %v10118, %v10094
    %v11343 = vpack.c.b16 %v10119, %v10095
    %v11344 = vpack.c.b16 %v10120, %v10096
    %v11345 = vpack.c.b16 %v10121, %v10097
    %v11346 = vpack.c.b16 %v10122, %v10098
    %v11347 = vpack.c.b16 %v10123, %v10099
    %v11348 = vpack.c.b16 %v10124, %v10100
    %v11349 = vpack.c.b16 %v10125, %v10101
    %v11350 = vpack.c.b16 %v10126, %v10102
    %v11351 = vpack.c.b16 %v10127, %v10103
    %v11352 = vpack.c.b16 %v10128, %v10104
    %v11353 = vpack.c.b16 %v10129, %v10105
    %v11354 = vpack.c.b16 %v10130, %v10106
    %v11355 = vpack.c.b16 %v10131, %v10107
    %v11356 = vpack.c.b16 %v10132, %v10108
    %v11357 = vpack.c.b16 %v10133, %v10109
    %v11358 = vpack.c.b16 %v10134, %v10110
    %v11359 = vpack.c.b16 %v10135, %v10111
    %v11360 = vpack.c.b16 %v10136, %v10112
    %v11361 = vpack.c.b16 %v10137, %v10113
    %v11362 = vpack.c.b16 %v10138, %v10114
    %v11363 = vpack.c.b16 %v10139, %v10115
    %v11364 = vpack.c.b16 %v10140, %v10116
    %v11365 = vpack.c.b16 %v10141, %v10117
    %v11366 = vpack.c.b16 %v10166, %v10142
    %v11367 = vpack.c.b16 %v10167, %v10143
    %v11368 = vpack.c.b16 %v10168, %v10144
    %v11369 = vpack.c.b16 %v10169, %v10145
    %v11370 = vpack.c.b16 %v10170, %v10146
    %v11371 = vpack.c.b16 %v10171, %v10147
    %v11372 = vpack.c.b16 %v10172, %v10148
    %v11373 = vpack.c.b16 %v10173, %v10149
    %v11374 = vpack.c.b16 %v10174, %v10150
    %v11375 = vpack.c.b16 %v10175, %v10151
    %v11376 = vpack.c.b16 %v10176, %v10152
    %v11377 = vpack.c.b16 %v10177, %v10153
    %v11378 = vpack.c.b16 %v10178, %v10154
    %v11379 = vpack.c.b16 %v10179, %v10155
    %v11380 = vpack.c.b16 %v10180, %v10156
    %v11381 = vpack.c.b16 %v10181, %v10157
    %v11382 = vpack.c.b16 %v10182, %v10158
    %v11383 = vpack.c.b16 %v10183, %v10159
    %v11384 = vpack.c.b16 %v10184, %v10160
    %v11385 = vpack.c.b16 %v10185, %v10161
    %v11386 = vpack.c.b16 %v10186, %v10162
    %v11387 = vpack.c.b16 %v10187, %v10163
    %v11388 = vpack.c.b16 %v10188, %v10164
    %v11389 = vpack.c.b16 %v10189, %v10165
    %v11390 = vpack.c.b16 %v10214, %v10190
    %v11391 = vpack.c.b16 %v10215, %v10191
    %v11392 = vpack.c.b16 %v10216, %v10192
    %v11393 = vpack.c.b16 %v10217, %v10193
    %v11394 = vpack.c.b16 %v10218, %v10194
    %v11395 = vpack.c.b16 %v10219, %v10195
    %v11396 = vpack.c.b16 %v10220, %v10196
    %v11397 = vpack.c.b16 %v10221, %v10197
    %v11398 = vpack.c.b16 %v10222, %v10198
    %v11399 = vpack.c.b16 %v10223, %v10199
    %v11400 = vpack.c.b16 %v10224, %v10200
    %v11401 = vpack.c.b16 %v10225, %v10201
    %v11402 = vpack.c.b16 %v10226, %v10202
    %v11403 = vpack.c.b16 %v10227, %v10203
    %v11404 = vpack.c.b16 %v10228, %v10204
    %v11405 = vpack.c.b16 %v10229, %v10205
    %v11406 = vpack.c.b16 %v10230, %v10206
    %v11407 = vpack.c.b16 %v10231, %v10207
    %v11408 = vpack.c.b16 %v10232, %v10208
    %v11409 = vpack.c.b16 %v10233, %v10209
    %v11410 = vpack.c.b16 %v10234, %v10210
    %v11411 = vpack.c.b16 %v10235, %v10211
    %v11412 = vpack.c.b16 %v10236, %v10212
    %v11413 = vpack.c.b16 %v10237, %v10213
    %v11414 = vpack.c.b16 %v10262, %v10238
    %v11415 = vpack.c.b16 %v10263, %v10239
    %v11416 = vpack.c.b16 %v10264, %v10240
    %v11417 = vpack.c.b16 %v10265, %v10241
    %v11418 = vpack.c.b16 %v10266, %v10242
    %v11419 = vpack.c.b16 %v10267, %v10243
    %v11420 = vpack.c.b16 %v10268, %v10244
    %v11421 = vpack.c.b16 %v10269, %v10245
    %v11422 = vpack.c.b16 %v10270, %v10246
    %v11423 = vpack.c.b16 %v10271, %v10247
    %v11424 = vpack.c.b16 %v10272, %v10248
    %v11425 = vpack.c.b16 %v10273, %v10249
    %v11426 = vpack.c.b16 %v10274, %v10250
    %v11427 = vpack.c.b16 %v10275, %v10251
    %v11428 = vpack.c.b16 %v10276, %v10252
    %v11429 = vpack.c.b16 %v10277, %v10253
    %v11430 = vpack.c.b16 %v10278, %v10254
    %v11431 = vpack.c.b16 %v10279, %v10255
    %v11432 = vpack.c.b16 %v10280, %v10256
    %v11433 = vpack.c.b16 %v10281, %v10257
    %v11434 = vpack.c.b16 %v10282, %v10258
    %v11435 = vpack.c.b16 %v10283, %v10259
    %v11436 = vpack.c.b16 %v10284, %v10260
    %v11437 = vpack.c.b16 %v10285, %v10261
    %v11438 = vpack.c.b16 %v10310, %v10286
    %v11439 = vpack.c.b16 %v10311, %v10287
    %v11440 = vpack.c.b16 %v10312, %v10288
    %v11441 = vpack.c.b16 %v10313, %v10289
    %v11442 = vpack.c.b16 %v10314, %v10290
    %v11443 = vpack.c.b16 %v10315, %v10291
    %v11444 = vpack.c.b16 %v10316, %v10292
    %v11445 = vpack.c.b16 %v10317, %v10293
    %v11446 = vpack.c.b16 %v10318, %v10294
    %v11447 = vpack.c.b16 %v10319, %v10295
    %v11448 = vpack.c.b16 %v10320, %v10296
    %v11449 = vpack.c.b16 %v10321, %v10297
    %v11450 = vpack.c.b16 %v10322, %v10298
    %v11451 = vpack.c.b16 %v10323, %v10299
    %v11452 = vpack.c.b16 %v10324, %v10300
    %v11453 = vpack.c.b16 %v10325, %v10301
    %v11454 = vpack.c.b16 %v10326, %v10302
    %v11455 = vpack.c.b16 %v10327, %v10303
    %v11456 = vpack.c.b16 %v10328, %v10304
    %v11457 = vpack.c.b16 %v10329, %v10305
    %v11458 = vpack.c.b16 %v10330, %v10306
    %v11459 = vpack.c.b16 %v10331, %v10307
    %v11460 = vpack.c.b16 %v10332, %v10308
    %v11461 = vpack.c.b16 %v10333, %v10309
    %v11462 = vpack.c.b16 %v10358, %v10334
    %v11463 = vpack.c.b16 %v10359, %v10335
    %v11464 = vpack.c.b16 %v10360, %v10336
    %v11465 = vpack.c.b16 %v10361, %v10337
    %v11466 = vpack.c.b16 %v10362, %v10338
    %v11467 = vpack.c.b16 %v10363, %v10339
    %v11468 = vpack.c.b16 %v10364, %v10340
    %v11469 = vpack.c.b16 %v10365, %v10341
    %v11470 = vpack.c.b16 %v10366, %v10342
    %v11471 = vpack.c.b16 %v10367, %v10343
    %v11472 = vpack.c.b16 %v10368, %v10344
    %v11473 = vpack.c.b16 %v10369, %v10345
    %v11474 = vpack.c.b16 %v10370, %v10346
    %v11475 = vpack.c.b16 %v10371, %v10347
    %v11476 = vpack.c.b16 %v10372, %v10348
    %v11477 = vpack.c.b16 %v10373, %v10349
    %v11478 = vpack.c.b16 %v10374, %v10350
    %v11479 = vpack.c.b16 %v10375, %v10351
    %v11480 = vpack.c.b16 %v10376, %v10352
    %v11481 = vpack.c.b16 %v10377, %v10353
    %v11482 = vpack.c.b16 %v10378, %v10354
    %v11483 = vpack.c.b16 %v10379, %v10355
    %v11484 = vpack.c.b16 %v10380, %v10356
    %v11485 = vpack.c.b16 %v10381, %v10357
    %v11486 = vpack.c.b16 %v10406, %v10382
    %v11487 = vpack.c.b16 %v10407, %v10383
    %v11488 = vpack.c.b16 %v10408, %v10384
    %v11489 = vpack.c.b16 %v10409, %v10385
    %v11490 = vpack.c.b16 %v10410, %v10386
    %v11491 = vpack.c.b16 %v10411, %v10387
    %v11492 = vpack.c.b16 %v10412, %v10388
    %v11493 = vpack.c.b16 %v10413, %v10389
    %v11494 = vpack.c.b16 %v10414, %v10390
    %v11495 = vpack.c.b16 %v10415, %v10391
    %v11496 = vpack.c.b16 %v10416, %v10392
    %v11497 = vpack.c.b16 %v10417, %v10393
    %v11498 = vpack.c.b16 %v10418, %v10394
    %v11499 = vpack.c.b16 %v10419, %v10395
    %v11500 = vpack.c.b16 %v10420, %v10396
    %v11501 = vpack.c.b16 %v10421, %v10397
    %v11502 = vpack.c.b16 %v10422, %v10398
    %v11503 = vpack.c.b16 %v10423, %v10399
    %v11504 = vpack.c.b16 %v10424, %v10400
    %v11505 = vpack.c.b16 %v10425, %v10401
    %v11506 = vpack.c.b16 %v10426, %v10402
    %v11507 = vpack.c.b16 %v10427, %v10403
    %v11508 = vpack.c.b16 %v10428, %v10404
    %v11509 = vpack.c.b16 %v10429, %v10405
    %v11510 = vpack.c.b16 %v10454, %v10430
    %v11511 = vpack.c.b16 %v10455, %v10431
    %v11512 = vpack.c.b16 %v10456, %v10432
    %v11513 = vpack.c.b16 %v10457, %v10433
    %v11514 = vpack.c.b16 %v10458, %v10434
    %v11515 = vpack.c.b16 %v10459, %v10435
    %v11516 = vpack.c.b16 %v10460, %v10436
    %v11517 = vpack.c.b16 %v10461, %v10437
    %v11518 = vpack.c.b16 %v10462, %v10438
    %v11519 = vpack.c.b16 %v10463, %v10439
    %v11520 = vpack.c.b16 %v10464, %v10440
    %v11521 = vpack.c.b16 %v10465, %v10441
    %v11522 = vpack.c.b16 %v10466, %v10442
    %v11523 = vpack.c.b16 %v10467, %v10443
    %v11524 = vpack.c.b16 %v10468, %v10444
    %v11525 = vpack.c.b16 %v10469, %v10445
    %v11526 = vpack.c.b16 %v10470, %v10446
    %v11527 = vpack.c.b16 %v10471, %v10447
    %v11528 = vpack.c.b16 %v10472, %v10448
    %v11529 = vpack.c.b16 %v10473, %v10449
    %v11530 = vpack.c.b16 %v10474, %v10450
    %v11531 = vpack.c.b16 %v10475, %v10451
    %v11532 = vpack.c.b16 %v10476, %v10452
    %v11533 = vpack.c.b16 %v10477, %v10453
    %v11534 = vpack.c.b16 %v10502, %v10478
    %v11535 = vpack.c.b16 %v10503, %v10479
    %v11536 = vpack.c.b16 %v10504, %v10480
    %v11537 = vpack.c.b16 %v10505, %v10481
    %v11538 = vpack.c.b16 %v10506, %v10482
    %v11539 = vpack.c.b16 %v10507, %v10483
    %v11540 = vpack.c.b16 %v10508, %v10484
    %v11541 = vpack.c.b16 %v10509, %v10485
    %v11542 = vpack.c.b16 %v10510, %v10486
    %v11543 = vpack.c.b16 %v10511, %v10487
    %v11544 = vpack.c.b16 %v10512, %v10488
    %v11545 = vpack.c.b16 %v10513, %v10489
    %v11546 = vpack.c.b16 %v10514, %v10490
    %v11547 = vpack.c.b16 %v10515, %v10491
    %v11548 = vpack.c.b16 %v10516, %v10492
    %v11549 = vpack.c.b16 %v10517, %v10493
    %v11550 = vpack.c.b16 %v10518, %v10494
    %v11551 = vpack.c.b16 %v10519, %v10495
    %v11552 = vpack.c.b16 %v10520, %v10496
    %v11553 = vpack.c.b16 %v10521, %v10497
    %v11554 = vpack.c.b16 %v10522, %v10498
    %v11555 = vpack.c.b16 %v10523, %v10499
    %v11556 = vpack.c.b16 %v10524, %v10500
    %v11557 = vpack.c.b16 %v10525, %v10501
    %v11558 = vpack.c.b16 %v10550, %v10526
    %v11559 = vpack.c.b16 %v10551, %v10527
    %v11560 = vpack.c.b16 %v10552, %v10528
    %v11561 = vpack.c.b16 %v10553, %v10529
    %v11562 = vpack.c.b16 %v10554, %v10530
    %v11563 = vpack.c.b16 %v10555, %v10531
    %v11564 = vpack.c.b16 %v10556, %v10532
    %v11565 = vpack.c.b16 %v10557, %v10533
    %v11566 = vpack.c.b16 %v10558, %v10534
    %v11567 = vpack.c.b16 %v10559, %v10535
    %v11568 = vpack.c.b16 %v10560, %v10536
    %v11569 = vpack.c.b16 %v10561, %v10537
    %v11570 = vpack.c.b16 %v10562, %v10538
    %v11571 = vpack.c.b16 %v10563, %v10539
    %v11572 = vpack.c.b16 %v10564, %v10540
    %v11573 = vpack.c.b16 %v10565, %v10541
    %v11574 = vpack.c.b16 %v10566, %v10542
    %v11575 = vpack.c.b16 %v10567, %v10543
    %v11576 = vpack.c.b16 %v10568, %v10544
    %v11577 = vpack.c.b16 %v10569, %v10545
    %v11578 = vpack.c.b16 %v10570, %v10546
    %v11579 = vpack.c.b16 %v10571, %v10547
    %v11580 = vpack.c.b16 %v10572, %v10548
    %v11581 = vpack.c.b16 %v10573, %v10549
    %v11582 = vpack.c.b16 %v10598, %v10574
    %v11583 = vpack.c.b16 %v10599, %v10575
    %v11584 = vpack.c.b16 %v10600, %v10576
    %v11585 = vpack.c.b16 %v10601, %v10577
    %v11586 = vpack.c.b16 %v10602, %v10578
    %v11587 = vpack.c.b16 %v10603, %v10579
    %v11588 = vpack.c.b16 %v10604, %v10580
    %v11589 = vpack.c.b16 %v10605, %v10581
    %v11590 = vpack.c.b16 %v10606, %v10582
    %v11591 = vpack.c.b16 %v10607, %v10583
    %v11592 = vpack.c.b16 %v10608, %v10584
    %v11593 = vpack.c.b16 %v10609, %v10585
    %v11594 = vpack.c.b16 %v10610, %v10586
    %v11595 = vpack.c.b16 %v10611, %v10587
    %v11596 = vpack.c.b16 %v10612, %v10588
    %v11597 = vpack.c.b16 %v10613, %v10589
    %v11598 = vpack.c.b16 %v10614, %v10590
    %v11599 = vpack.c.b16 %v10615, %v10591
    %v11600 = vpack.c.b16 %v10616, %v10592
    %v11601 = vpack.c.b16 %v10617, %v10593
    %v11602 = vpack.c.b16 %v10618, %v10594
    %v11603 = vpack.c.b16 %v10619, %v10595
    %v11604 = vpack.c.b16 %v10620, %v10596
    %v11605 = vpack.c.b16 %v10621, %v10597
    %v11606 = vpack.c.b16 %v10646, %v10622
    %v11607 = vpack.c.b16 %v10647, %v10623
    %v11608 = vpack.c.b16 %v10648, %v10624
    %v11609 = vpack.c.b16 %v10649, %v10625
    %v11610 = vpack.c.b16 %v10650, %v10626
    %v11611 = vpack.c.b16 %v10651, %v10627
    %v11612 = vpack.c.b16 %v10652, %v10628
    %v11613 = vpack.c.b16 %v10653, %v10629
    %v11614 = vpack.c.b16 %v10654, %v10630
    %v11615 = vpack.c.b16 %v10655, %v10631
    %v11616 = vpack.c.b16 %v10656, %v10632
    %v11617 = vpack.c.b16 %v10657, %v10633
    %v11618 = vpack.c.b16 %v10658, %v10634
    %v11619 = vpack.c.b16 %v10659, %v10635
    %v11620 = vpack.c.b16 %v10660, %v10636
    %v11621 = vpack.c.b16 %v10661, %v10637
    %v11622 = vpack.c.b16 %v10662, %v10638
    %v11623 = vpack.c.b16 %v10663, %v10639
    %v11624 = vpack.c.b16 %v10664, %v10640
    %v11625 = vpack.c.b16 %v10665, %v10641
    %v11626 = vpack.c.b16 %v10666, %v10642
    %v11627 = vpack.c.b16 %v10667, %v10643
    %v11628 = vpack.c.b16 %v10668, %v10644
    %v11629 = vpack.c.b16 %v10669, %v10645
    %v11630 = vpack.c.b16 %v10694, %v10670
    %v11631 = vpack.c.b16 %v10695, %v10671
    %v11632 = vpack.c.b16 %v10696, %v10672
    %v11633 = vpack.c.b16 %v10697, %v10673
    %v11634 = vpack.c.b16 %v10698, %v10674
    %v11635 = vpack.c.b16 %v10699, %v10675
    %v11636 = vpack.c.b16 %v10700, %v10676
    %v11637 = vpack.c.b16 %v10701, %v10677
    %v11638 = vpack.c.b16 %v10702, %v10678
    %v11639 = vpack.c.b16 %v10703, %v10679
    %v11640 = vpack.c.b16 %v10704, %v10680
    %v11641 = vpack.c.b16 %v10705, %v10681
    %v11642 = vpack.c.b16 %v10706, %v10682
    %v11643 = vpack.c.b16 %v10707, %v10683
    %v11644 = vpack.c.b16 %v10708, %v10684
    %v11645 = vpack.c.b16 %v10709, %v10685
    %v11646 = vpack.c.b16 %v10710, %v10686
    %v11647 = vpack.c.b16 %v10711, %v10687
    %v11648 = vpack.c.b16 %v10712, %v10688
    %v11649 = vpack.c.b16 %v10713, %v10689
    %v11650 = vpack.c.b16 %v10714, %v10690
    %v11651 = vpack.c.b16 %v10715, %v10691
    %v11652 = vpack.c.b16 %v10716, %v10692
    %v11653 = vpack.c.b16 %v10717, %v10693
    %v11654 = vpack.c.b16 %v10742, %v10718
    %v11655 = vpack.c.b16 %v10743, %v10719
    %v11656 = vpack.c.b16 %v10744, %v10720
    %v11657 = vpack.c.b16 %v10745, %v10721
    %v11658 = vpack.c.b16 %v10746, %v10722
    %v11659 = vpack.c.b16 %v10747, %v10723
    %v11660 = vpack.c.b16 %v10748, %v10724
    %v11661 = vpack.c.b16 %v10749, %v10725
    %v11662 = vpack.c.b16 %v10750, %v10726
    %v11663 = vpack.c.b16 %v10751, %v10727
    %v11664 = vpack.c.b16 %v10752, %v10728
    %v11665 = vpack.c.b16 %v10753, %v10729
    %v11666 = vpack.c.b16 %v10754, %v10730
    %v11667 = vpack.c.b16 %v10755, %v10731
    %v11668 = vpack.c.b16 %v10756, %v10732
    %v11669 = vpack.c.b16 %v10757, %v10733
    %v11670 = vpack.c.b16 %v10758, %v10734
    %v11671 = vpack.c.b16 %v10759, %v10735
    %v11672 = vpack.c.b16 %v10760, %v10736
    %v11673 = vpack.c.b16 %v10761, %v10737
    %v11674 = vpack.c.b16 %v10762, %v10738
    %v11675 = vpack.c.b16 %v10763, %v10739
    %v11676 = vpack.c.b16 %v10764, %v10740
    %v11677 = vpack.c.b16 %v10765, %v10741
    %v11678 = vpack.c.b16 %v10790, %v10766
    %v11679 = vpack.c.b16 %v10791, %v10767
    %v11680 = vpack.c.b16 %v10792, %v10768
    %v11681 = vpack.c.b16 %v10793, %v10769
    %v11682 = vpack.c.b16 %v10794, %v10770
    %v11683 = vpack.c.b16 %v10795, %v10771
    %v11684 = vpack.c.b16 %v10796, %v10772
    %v11685 = vpack.c.b16 %v10797, %v10773
    %v11686 = vpack.c.b16 %v10798, %v10774
    %v11687 = vpack.c.b16 %v10799, %v10775
    %v11688 = vpack.c.b16 %v10800, %v10776
    %v11689 = vpack.c.b16 %v10801, %v10777
    %v11690 = vpack.c.b16 %v10802, %v10778
    %v11691 = vpack.c.b16 %v10803, %v10779
    %v11692 = vpack.c.b16 %v10804, %v10780
    %v11693 = vpack.c.b16 %v10805, %v10781
    %v11694 = vpack.c.b16 %v10806, %v10782
    %v11695 = vpack.c.b16 %v10807, %v10783
    %v11696 = vpack.c.b16 %v10808, %v10784
    %v11697 = vpack.c.b16 %v10809, %v10785
    %v11698 = vpack.c.b16 %v10810, %v10786
    %v11699 = vpack.c.b16 %v10811, %v10787
    %v11700 = vpack.c.b16 %v10812, %v10788
    %v11701 = vpack.c.b16 %v10813, %v10789
    %v11702 = vpack.c.b16 %v10838, %v10814
    %v11703 = vpack.c.b16 %v10839, %v10815
    %v11704 = vpack.c.b16 %v10840, %v10816
    %v11705 = vpack.c.b16 %v10841, %v10817
    %v11706 = vpack.c.b16 %v10842, %v10818
    %v11707 = vpack.c.b16 %v10843, %v10819
    %v11708 = vpack.c.b16 %v10844, %v10820
    %v11709 = vpack.c.b16 %v10845, %v10821
    %v11710 = vpack.c.b16 %v10846, %v10822
    %v11711 = vpack.c.b16 %v10847, %v10823
    %v11712 = vpack.c.b16 %v10848, %v10824
    %v11713 = vpack.c.b16 %v10849, %v10825
    %v11714 = vpack.c.b16 %v10850, %v10826
    %v11715 = vpack.c.b16 %v10851, %v10827
    %v11716 = vpack.c.b16 %v10852, %v10828
    %v11717 = vpack.c.b16 %v10853, %v10829
    %v11718 = vpack.c.b16 %v10854, %v10830
    %v11719 = vpack.c.b16 %v10855, %v10831
    %v11720 = vpack.c.b16 %v10856, %v10832
    %v11721 = vpack.c.b16 %v10857, %v10833
    %v11722 = vpack.c.b16 %v10858, %v10834
    %v11723 = vpack.c.b16 %v10859, %v10835
    %v11724 = vpack.c.b16 %v10860, %v10836
    %v11725 = vpack.c.b16 %v10861, %v10837
    %v11726 = vpack.c.b16 %v10886, %v10862
    %v11727 = vpack.c.b16 %v10887, %v10863
    %v11728 = vpack.c.b16 %v10888, %v10864
    %v11729 = vpack.c.b16 %v10889, %v10865
    %v11730 = vpack.c.b16 %v10890, %v10866
    %v11731 = vpack.c.b16 %v10891, %v10867
    %v11732 = vpack.c.b16 %v10892, %v10868
    %v11733 = vpack.c.b16 %v10893, %v10869
    %v11734 = vpack.c.b16 %v10894, %v10870
    %v11735 = vpack.c.b16 %v10895, %v10871
    %v11736 = vpack.c.b16 %v10896, %v10872
    %v11737 = vpack.c.b16 %v10897, %v10873
    %v11738 = vpack.c.b16 %v10898, %v10874
    %v11739 = vpack.c.b16 %v10899, %v10875
    %v11740 = vpack.c.b16 %v10900, %v10876
    %v11741 = vpack.c.b16 %v10901, %v10877
    %v11742 = vpack.c.b16 %v10902, %v10878
    %v11743 = vpack.c.b16 %v10903, %v10879
    %v11744 = vpack.c.b16 %v10904, %v10880
    %v11745 = vpack.c.b16 %v10905, %v10881
    %v11746 = vpack.c.b16 %v10906, %v10882
    %v11747 = vpack.c.b16 %v10907, %v10883
    %v11748 = vpack.c.b16 %v10908, %v10884
    %v11749 = vpack.c.b16 %v10909, %v10885
    %v11750 = vpack.c.b16 %v10934, %v10910
    %v11751 = vpack.c.b16 %v10935, %v10911
    %v11752 = vpack.c.b16 %v10936, %v10912
    %v11753 = vpack.c.b16 %v10937, %v10913
    %v11754 = vpack.c.b16 %v10938, %v10914
    %v11755 = vpack.c.b16 %v10939, %v10915
    %v11756 = vpack.c.b16 %v10940, %v10916
    %v11757 = vpack.c.b16 %v10941, %v10917
    %v11758 = vpack.c.b16 %v10942, %v10918
    %v11759 = vpack.c.b16 %v10943, %v10919
    %v11760 = vpack.c.b16 %v10944, %v10920
    %v11761 = vpack.c.b16 %v10945, %v10921
    %v11762 = vpack.c.b16 %v10946, %v10922
    %v11763 = vpack.c.b16 %v10947, %v10923
    %v11764 = vpack.c.b16 %v10948, %v10924
    %v11765 = vpack.c.b16 %v10949, %v10925
    %v11766 = vpack.c.b16 %v10950, %v10926
    %v11767 = vpack.c.b16 %v10951, %v10927
    %v11768 = vpack.c.b16 %v10952, %v10928
    %v11769 = vpack.c.b16 %v10953, %v10929
    %v11770 = vpack.c.b16 %v10954, %v10930
    %v11771 = vpack.c.b16 %v10955, %v10931
    %v11772 = vpack.c.b16 %v10956, %v10932
    %v11773 = vpack.c.b16 %v10957, %v10933
    %v11774 = vpack.c.b16 %v10982, %v10958
    %v11775 = vpack.c.b16 %v10983, %v10959
    %v11776 = vpack.c.b16 %v10984, %v10960
    %v11777 = vpack.c.b16 %v10985, %v10961
    %v11778 = vpack.c.b16 %v10986, %v10962
    %v11779 = vpack.c.b16 %v10987, %v10963
    %v11780 = vpack.c.b16 %v10988, %v10964
    %v11781 = vpack.c.b16 %v10989, %v10965
    %v11782 = vpack.c.b16 %v10990, %v10966
    %v11783 = vpack.c.b16 %v10991, %v10967
    %v11784 = vpack.c.b16 %v10992, %v10968
    %v11785 = vpack.c.b16 %v10993, %v10969
    %v11786 = vpack.c.b16 %v10994, %v10970
    %v11787 = vpack.c.b16 %v10995, %v10971
    %v11788 = vpack.c.b16 %v10996, %v10972
    %v11789 = vpack.c.b16 %v10997, %v10973
    %v11790 = vpack.c.b16 %v10998, %v10974
    %v11791 = vpack.c.b16 %v10999, %v10975
    %v11792 = vpack.c.b16 %v11000, %v10976
    %v11793 = vpack.c.b16 %v11001, %v10977
    %v11794 = vpack.c.b16 %v11002, %v10978
    %v11795 = vpack.c.b16 %v11003, %v10979
    %v11796 = vpack.c.b16 %v11004, %v10980
    %v11797 = vpack.c.b16 %v11005, %v10981
    %v11798 = vpack.c.b16 %v11030, %v11006
    %v11799 = vpack.c.b16 %v11031, %v11007
    %v11800 = vpack.c.b16 %v11032, %v11008
    %v11801 = vpack.c.b16 %v11033, %v11009
    %v11802 = vpack.c.b16 %v11034, %v11010
    %v11803 = vpack.c.b16 %v11035, %v11011
    %v11804 = vpack.c.b16 %v11036, %v11012
    %v11805 = vpack.c.b16 %v11037, %v11013
    %v11806 = vpack.c.b16 %v11038, %v11014
    %v11807 = vpack.c.b16 %v11039, %v11015
    %v11808 = vpack.c.b16 %v11040, %v11016
    %v11809 = vpack.c.b16 %v11041, %v11017
    %v11810 = vpack.c.b16 %v11042, %v11018
    %v11811 = vpack.c.b16 %v11043, %v11019
    %v11812 = vpack.c.b16 %v11044, %v11020
    %v11813 = vpack.c.b16 %v11045, %v11021
    %v11814 = vpack.c.b16 %v11046, %v11022
    %v11815 = vpack.c.b16 %v11047, %v11023
    %v11816 = vpack.c.b16 %v11048, %v11024
    %v11817 = vpack.c.b16 %v11049, %v11025
    %v11818 = vpack.c.b16 %v11050, %v11026
    %v11819 = vpack.c.b16 %v11051, %v11027
    %v11820 = vpack.c.b16 %v11052, %v11028
    %v11821 = vpack.c.b16 %v11053, %v11029
    %12590 = vmatprep.subr.bf16.mxu0 %v11055
    %12591 = vmatpush1.bf16.msra.mxu0 %v11054
    %12592 = vmatprep.subr.bf16.mxu0 %v11079
    %12593 = vmatpush1.bf16.msra.mxu0 %v11078
    %12594 = vmatprep.subr.bf16.mxu0 %v11103
    %12595 = vmatpush1.bf16.msra.mxu0 %v11102
    %12596 = vmatprep.subr.bf16.mxu0 %v11127
    %12597 = vmatpush1.bf16.msra.mxu0 %v11126
    %12598 = vmatprep.subr.bf16.mxu0 %v11151
    %12599 = vmatpush1.bf16.msra.mxu0 %v11150
    %12600 = vmatprep.subr.bf16.mxu0 %v11175
    %12601 = vmatpush1.bf16.msra.mxu0 %v11174
    %12602 = vmatprep.subr.bf16.mxu0 %v11199
    %12603 = vmatpush1.bf16.msra.mxu0 %v11198
    %12604 = vmatprep.subr.bf16.mxu0 %v11223
    %12605 = vmatpush1.bf16.msra.mxu0 %v11222
    %12606 = vmatprep.subr.bf16.mxu0 %v11247
    %12607 = vmatpush1.bf16.msra.mxu0 %v11246
    %12608 = vmatprep.subr.bf16.mxu0 %v11271
    %12609 = vmatpush1.bf16.msra.mxu0 %v11270
    %12610 = vmatprep.subr.bf16.mxu0 %v11295
    %12611 = vmatpush1.bf16.msra.mxu0 %v11294
    %12612 = vmatprep.subr.bf16.mxu0 %v11319
    %12613 = vmatpush1.bf16.msra.mxu0 %v11318
    %12614 = vmatprep.subr.bf16.mxu0 %v11343
    %12615 = vmatpush1.bf16.msra.mxu0 %v11342
    %12616 = vmatprep.subr.bf16.mxu0 %v11367
    %12617 = vmatpush1.bf16.msra.mxu0 %v11366
    %12618 = vmatprep.subr.bf16.mxu0 %v11391
    %12619 = vmatpush1.bf16.msra.mxu0 %v11390
    %12620 = vmatprep.subr.bf16.mxu0 %v11415
    %12621 = vmatpush1.bf16.msra.mxu0 %v11414
    %12622 = vmatprep.mubr.bf16.mxu0 %v7853
    %12623 = vmatmul.mubr.bf16.gmra.mrb[0].mxu0 %v7852
    %v12624 = vpop.f32.mrb[0].mxu0
    %v12625 = vadd.f32 %v8633, %v12624
    %v12626 = vpop.f32.mrb[0].mxu0
    %v12627 = vadd.f32 %v8637, %v12626
    %v12628 = vpop.f32.mrb[0].mxu0
    %v12629 = vpop.f32.mrb[0].mxu0
    %12630 = vdwg.mxu0
    %12631 = vmatprep.subr.bf16.mxu0 %v11439
    %12632 = vmatpush1.bf16.msra.mxu0 %v11438
    %12633 = vmatprep.subr.bf16.mxu0 %v11463
    %12634 = vmatpush1.bf16.msra.mxu0 %v11462
    %12635 = vmatprep.subr.bf16.mxu0 %v11487
    %12636 = vmatpush1.bf16.msra.mxu0 %v11486
    %12637 = vmatprep.subr.bf16.mxu0 %v11511
    %12638 = vmatpush1.bf16.msra.mxu0 %v11510
    %12639 = vmatprep.subr.bf16.mxu0 %v11535
    %12640 = vmatpush1.bf16.msra.mxu0 %v11534
    %12641 = vmatprep.subr.bf16.mxu0 %v11559
    %12642 = vmatpush1.bf16.msra.mxu0 %v11558
    %12643 = vmatprep.subr.bf16.mxu0 %v11583
    %12644 = vmatpush1.bf16.msra.mxu0 %v11582
    %12645 = vmatprep.subr.bf16.mxu0 %v11607
    %12646 = vmatpush1.bf16.msra.mxu0 %v11606
    %12647 = vmatprep.subr.bf16.mxu0 %v11631
    %12648 = vmatpush1.bf16.msra.mxu0 %v11630
    %12649 = vmatprep.subr.bf16.mxu0 %v11655
    %12650 = vmatpush1.bf16.msra.mxu0 %v11654
    %12651 = vmatprep.subr.bf16.mxu0 %v11679
    %12652 = vmatpush1.bf16.msra.mxu0 %v11678
    %12653 = vmatprep.subr.bf16.mxu0 %v11703
    %12654 = vmatpush1.bf16.msra.mxu0 %v11702
    %12655 = vmatprep.subr.bf16.mxu0 %v11727
    %12656 = vmatpush1.bf16.msra.mxu0 %v11726
    %12657 = vmatprep.subr.bf16.mxu0 %v11751
    %12658 = vmatpush1.bf16.msra.mxu0 %v11750
    %12659 = vmatprep.subr.bf16.mxu0 %v11775
    %12660 = vmatpush1.bf16.msra.mxu0 %v11774
    %12661 = vmatprep.subr.bf16.mxu0 %v11799
    %12662 = vmatpush1.bf16.msra.mxu0 %v11798
    %12663 = vmatprep.mubr.bf16.mxu0 %v7855
    %12664 = vmatmul.mubr.bf16.gmra.mrb[0].mxu0 %v7854
    %v12665 = vpop.f32.mrb[0].mxu0
    %v12666 = vadd.f32 %v12625, %v12665
    %v12667 = vpop.f32.mrb[0].mxu0
    %v12668 = vadd.f32 %v12627, %v12667
    %v12669 = vpop.f32.mrb[0].mxu0
    %v12670 = vpop.f32.mrb[0].mxu0
    %12671 = vdwg.mxu0
    %12672 = vmatprep.subr.bf16.mxu0 %v11057
    %12673 = vmatpush1.bf16.msra.mxu0 %v11056
    %12674 = vmatprep.subr.bf16.mxu0 %v11081
    %12675 = vmatpush1.bf16.msra.mxu0 %v11080
    %12676 = vmatprep.subr.bf16.mxu0 %v11105
    %12677 = vmatpush1.bf16.msra.mxu0 %v11104
    %12678 = vmatprep.subr.bf16.mxu0 %v11129
    %12679 = vmatpush1.bf16.msra.mxu0 %v11128
    %12680 = vmatprep.subr.bf16.mxu0 %v11153
    %12681 = vmatpush1.bf16.msra.mxu0 %v11152
    %12682 = vmatprep.subr.bf16.mxu0 %v11177
    %12683 = vmatpush1.bf16.msra.mxu0 %v11176
    %12684 = vmatprep.subr.bf16.mxu0 %v11201
    %12685 = vmatpush1.bf16.msra.mxu0 %v11200
    %12686 = vmatprep.subr.bf16.mxu0 %v11225
    %12687 = vmatpush1.bf16.msra.mxu0 %v11224
    %12688 = vmatprep.subr.bf16.mxu0 %v11249
    %12689 = vmatpush1.bf16.msra.mxu0 %v11248
    %12690 = vmatprep.subr.bf16.mxu0 %v11273
    %12691 = vmatpush1.bf16.msra.mxu0 %v11272
    %12692 = vmatprep.subr.bf16.mxu0 %v11297
    %12693 = vmatpush1.bf16.msra.mxu0 %v11296
    %12694 = vmatprep.subr.bf16.mxu0 %v11321
    %12695 = vmatpush1.bf16.msra.mxu0 %v11320
    %12696 = vmatprep.subr.bf16.mxu0 %v11345
    %12697 = vmatpush1.bf16.msra.mxu0 %v11344
    %12698 = vmatprep.subr.bf16.mxu0 %v11369
    %12699 = vmatpush1.bf16.msra.mxu0 %v11368
    %12700 = vmatprep.subr.bf16.mxu0 %v11393
    %12701 = vmatpush1.bf16.msra.mxu0 %v11392
    %12702 = vmatprep.subr.bf16.mxu0 %v11417
    %12703 = vmatpush1.bf16.msra.mxu0 %v11416
    %12704 = vmatprep.mubr.bf16.mxu0 %v7853
    %12705 = vmatmul.mubr.bf16.gmra.mrb[0].mxu0 %v7852
    %v12706 = vpop.f32.mrb[0].mxu0
    %v12707 = vadd.f32 %v8641, %v12706
    %v12708 = vpop.f32.mrb[0].mxu0
    %v12709 = vadd.f32 %v8645, %v12708
    %v12710 = vpop.f32.mrb[0].mxu0
    %v12711 = vpop.f32.mrb[0].mxu0
    %12712 = vdwg.mxu0
    %12713 = vmatprep.subr.bf16.mxu0 %v11441
    %12714 = vmatpush1.bf16.msra.mxu0 %v11440
    %12715 = vmatprep.subr.bf16.mxu0 %v11465
    %12716 = vmatpush1.bf16.msra.mxu0 %v11464
    %12717 = vmatprep.subr.bf16.mxu0 %v11489
    %12718 = vmatpush1.bf16.msra.mxu0 %v11488
    %12719 = vmatprep.subr.bf16.mxu0 %v11513
    %12720 = vmatpush1.bf16.msra.mxu0 %v11512
    %12721 = vmatprep.subr.bf16.mxu0 %v11537
    %12722 = vmatpush1.bf16.msra.mxu0 %v11536
    %12723 = vmatprep.subr.bf16.mxu0 %v11561
    %12724 = vmatpush1.bf16.msra.mxu0 %v11560
    %12725 = vmatprep.subr.bf16.mxu0 %v11585
    %12726 = vmatpush1.bf16.msra.mxu0 %v11584
    %12727 = vmatprep.subr.bf16.mxu0 %v11609
    %12728 = vmatpush1.bf16.msra.mxu0 %v11608
    %12729 = vmatprep.subr.bf16.mxu0 %v11633
    %12730 = vmatpush1.bf16.msra.mxu0 %v11632
    %12731 = vmatprep.subr.bf16.mxu0 %v11657
    %12732 = vmatpush1.bf16.msra.mxu0 %v11656
    %12733 = vmatprep.subr.bf16.mxu0 %v11681
    %12734 = vmatpush1.bf16.msra.mxu0 %v11680
    %12735 = vmatprep.subr.bf16.mxu0 %v11705
    %12736 = vmatpush1.bf16.msra.mxu0 %v11704
    %12737 = vmatprep.subr.bf16.mxu0 %v11729
    %12738 = vmatpush1.bf16.msra.mxu0 %v11728
    %12739 = vmatprep.subr.bf16.mxu0 %v11753
    %12740 = vmatpush1.bf16.msra.mxu0 %v11752
    %12741 = vmatprep.subr.bf16.mxu0 %v11777
    %12742 = vmatpush1.bf16.msra.mxu0 %v11776
    %12743 = vmatprep.subr.bf16.mxu0 %v11801
    %12744 = vmatpush1.bf16.msra.mxu0 %v11800
    %12745 = vmatprep.mubr.bf16.mxu0 %v7855
    %12746 = vmatmul.mubr.bf16.gmra.mrb[0].mxu0 %v7854
    %v12747 = vpop.f32.mrb[0].mxu0
    %v12748 = vadd.f32 %v12707, %v12747
    %v12749 = vpop.f32.mrb[0].mxu0
    %v12750 = vadd.f32 %v12709, %v12749
    %v12751 = vpop.f32.mrb[0].mxu0
    %v12752 = vpop.f32.mrb[0].mxu0
    %12753 = vdwg.mxu0
    %12754 = vmatprep.subr.bf16.mxu0 %v11059
    %12755 = vmatpush1.bf16.msra.mxu0 %v11058
    %12756 = vmatprep.subr.bf16.mxu0 %v11083
    %12757 = vmatpush1.bf16.msra.mxu0 %v11082
    %12758 = vmatprep.subr.bf16.mxu0 %v11107
    %12759 = vmatpush1.bf16.msra.mxu0 %v11106
    %12760 = vmatprep.subr.bf16.mxu0 %v11131
    %12761 = vmatpush1.bf16.msra.mxu0 %v11130
    %12762 = vmatprep.subr.bf16.mxu0 %v11155
    %12763 = vmatpush1.bf16.msra.mxu0 %v11154
    %12764 = vmatprep.subr.bf16.mxu0 %v11179
    %12765 = vmatpush1.bf16.msra.mxu0 %v11178
    %12766 = vmatprep.subr.bf16.mxu0 %v11203
    %12767 = vmatpush1.bf16.msra.mxu0 %v11202
    %12768 = vmatprep.subr.bf16.mxu0 %v11227
    %12769 = vmatpush1.bf16.msra.mxu0 %v11226
    %12770 = vmatprep.subr.bf16.mxu0 %v11251
    %12771 = vmatpush1.bf16.msra.mxu0 %v11250
    %12772 = vmatprep.subr.bf16.mxu0 %v11275
    %12773 = vmatpush1.bf16.msra.mxu0 %v11274
    %12774 = vmatprep.subr.bf16.mxu0 %v11299
    %12775 = vmatpush1.bf16.msra.mxu0 %v11298
    %12776 = vmatprep.subr.bf16.mxu0 %v11323
    %12777 = vmatpush1.bf16.msra.mxu0 %v11322
    %12778 = vmatprep.subr.bf16.mxu0 %v11347
    %12779 = vmatpush1.bf16.msra.mxu0 %v11346
    %12780 = vmatprep.subr.bf16.mxu0 %v11371
    %12781 = vmatpush1.bf16.msra.mxu0 %v11370
    %12782 = vmatprep.subr.bf16.mxu0 %v11395
    %12783 = vmatpush1.bf16.msra.mxu0 %v11394
    %12784 = vmatprep.subr.bf16.mxu0 %v11419
    %12785 = vmatpush1.bf16.msra.mxu0 %v11418
    %12786 = vmatprep.mubr.bf16.mxu0 %v7853
    %12787 = vmatmul.mubr.bf16.gmra.mrb[0].mxu0 %v7852
    %v12788 = vpop.f32.mrb[0].mxu0
    %v12789 = vadd.f32 %v8649, %v12788
    %v12790 = vpop.f32.mrb[0].mxu0
    %v12791 = vadd.f32 %v8653, %v12790
    %v12792 = vpop.f32.mrb[0].mxu0
    %v12793 = vpop.f32.mrb[0].mxu0
    %12794 = vdwg.mxu0
    %12795 = vmatprep.subr.bf16.mxu0 %v11443
    %12796 = vmatpush1.bf16.msra.mxu0 %v11442
    %12797 = vmatprep.subr.bf16.mxu0 %v11467
    %12798 = vmatpush1.bf16.msra.mxu0 %v11466
    %12799 = vmatprep.subr.bf16.mxu0 %v11491
    %12800 = vmatpush1.bf16.msra.mxu0 %v11490
    %12801 = vmatprep.subr.bf16.mxu0 %v11515
    %12802 = vmatpush1.bf16.msra.mxu0 %v11514
    %12803 = vmatprep.subr.bf16.mxu0 %v11539
    %12804 = vmatpush1.bf16.msra.mxu0 %v11538
    %12805 = vmatprep.subr.bf16.mxu0 %v11563
    %12806 = vmatpush1.bf16.msra.mxu0 %v11562
    %12807 = vmatprep.subr.bf16.mxu0 %v11587
    %12808 = vmatpush1.bf16.msra.mxu0 %v11586
    %12809 = vmatprep.subr.bf16.mxu0 %v11611
    %12810 = vmatpush1.bf16.msra.mxu0 %v11610
    %12811 = vmatprep.subr.bf16.mxu0 %v11635
    %12812 = vmatpush1.bf16.msra.mxu0 %v11634
    %12813 = vmatprep.subr.bf16.mxu0 %v11659
    %12814 = vmatpush1.bf16.msra.mxu0 %v11658
    %12815 = vmatprep.subr.bf16.mxu0 %v11683
    %12816 = vmatpush1.bf16.msra.mxu0 %v11682
    %12817 = vmatprep.subr.bf16.mxu0 %v11707
    %12818 = vmatpush1.bf16.msra.mxu0 %v11706
    %12819 = vmatprep.subr.bf16.mxu0 %v11731
    %12820 = vmatpush1.bf16.msra.mxu0 %v11730
    %12821 = vmatprep.subr.bf16.mxu0 %v11755
    %12822 = vmatpush1.bf16.msra.mxu0 %v11754
    %12823 = vmatprep.subr.bf16.mxu0 %v11779
    %12824 = vmatpush1.bf16.msra.mxu0 %v11778
    %12825 = vmatprep.subr.bf16.mxu0 %v11803
    %12826 = vmatpush1.bf16.msra.mxu0 %v11802
    %12827 = vmatprep.mubr.bf16.mxu0 %v7855
    %12828 = vmatmul.mubr.bf16.gmra.mrb[0].mxu0 %v7854
    %v12829 = vpop.f32.mrb[0].mxu0
    %v12830 = vadd.f32 %v12789, %v12829
    %v12831 = vpop.f32.mrb[0].mxu0
    %v12832 = vadd.f32 %v12791, %v12831
    %v12833 = vpop.f32.mrb[0].mxu0
    %v12834 = vpop.f32.mrb[0].mxu0
    %12835 = vdwg.mxu0
    %12836 = vmatprep.subr.bf16.mxu0 %v11061
    %12837 = vmatpush1.bf16.msra.mxu0 %v11060
    %12838 = vmatprep.subr.bf16.mxu0 %v11085
    %12839 = vmatpush1.bf16.msra.mxu0 %v11084
    %12840 = vmatprep.subr.bf16.mxu0 %v11109
    %12841 = vmatpush1.bf16.msra.mxu0 %v11108
    %12842 = vmatprep.subr.bf16.mxu0 %v11133
    %12843 = vmatpush1.bf16.msra.mxu0 %v11132
    %12844 = vmatprep.subr.bf16.mxu0 %v11157
    %12845 = vmatpush1.bf16.msra.mxu0 %v11156
    %12846 = vmatprep.subr.bf16.mxu0 %v11181
    %12847 = vmatpush1.bf16.msra.mxu0 %v11180
    %12848 = vmatprep.subr.bf16.mxu0 %v11205
    %12849 = vmatpush1.bf16.msra.mxu0 %v11204
    %12850 = vmatprep.subr.bf16.mxu0 %v11229
    %12851 = vmatpush1.bf16.msra.mxu0 %v11228
    %12852 = vmatprep.subr.bf16.mxu0 %v11253
    %12853 = vmatpush1.bf16.msra.mxu0 %v11252
    %12854 = vmatprep.subr.bf16.mxu0 %v11277
    %12855 = vmatpush1.bf16.msra.mxu0 %v11276
    %12856 = vmatprep.subr.bf16.mxu0 %v11301
    %12857 = vmatpush1.bf16.msra.mxu0 %v11300
    %12858 = vmatprep.subr.bf16.mxu0 %v11325
    %12859 = vmatpush1.bf16.msra.mxu0 %v11324
    %12860 = vmatprep.subr.bf16.mxu0 %v11349
    %12861 = vmatpush1.bf16.msra.mxu0 %v11348
    %12862 = vmatprep.subr.bf16.mxu0 %v11373
    %12863 = vmatpush1.bf16.msra.mxu0 %v11372
    %12864 = vmatprep.subr.bf16.mxu0 %v11397
    %12865 = vmatpush1.bf16.msra.mxu0 %v11396
    %12866 = vmatprep.subr.bf16.mxu0 %v11421
    %12867 = vmatpush1.bf16.msra.mxu0 %v11420
    %12868 = vmatprep.mubr.bf16.mxu0 %v7853
    %12869 = vmatmul.mubr.bf16.gmra.mrb[0].mxu0 %v7852
    %v12870 = vpop.f32.mrb[0].mxu0
    %v12871 = vadd.f32 %v8657, %v12870
    %v12872 = vpop.f32.mrb[0].mxu0
    %v12873 = vadd.f32 %v8661, %v12872
    %v12874 = vpop.f32.mrb[0].mxu0
    %v12875 = vpop.f32.mrb[0].mxu0
    %12876 = vdwg.mxu0
    %12877 = vmatprep.subr.bf16.mxu0 %v11445
    %12878 = vmatpush1.bf16.msra.mxu0 %v11444
    %12879 = vmatprep.subr.bf16.mxu0 %v11469
    %12880 = vmatpush1.bf16.msra.mxu0 %v11468
    %12881 = vmatprep.subr.bf16.mxu0 %v11493
    %12882 = vmatpush1.bf16.msra.mxu0 %v11492
    %12883 = vmatprep.subr.bf16.mxu0 %v11517
    %12884 = vmatpush1.bf16.msra.mxu0 %v11516
    %12885 = vmatprep.subr.bf16.mxu0 %v11541
    %12886 = vmatpush1.bf16.msra.mxu0 %v11540
    %12887 = vmatprep.subr.bf16.mxu0 %v11565
    %12888 = vmatpush1.bf16.msra.mxu0 %v11564
    %12889 = vmatprep.subr.bf16.mxu0 %v11589
    %12890 = vmatpush1.bf16.msra.mxu0 %v11588
    %12891 = vmatprep.subr.bf16.mxu0 %v11613
    %12892 = vmatpush1.bf16.msra.mxu0 %v11612
    %12893 = vmatprep.subr.bf16.mxu0 %v11637
    %12894 = vmatpush1.bf16.msra.mxu0 %v11636
    %12895 = vmatprep.subr.bf16.mxu0 %v11661
    %12896 = vmatpush1.bf16.msra.mxu0 %v11660
    %12897 = vmatprep.subr.bf16.mxu0 %v11685
    %12898 = vmatpush1.bf16.msra.mxu0 %v11684
    %12899 = vmatprep.subr.bf16.mxu0 %v11709
    %12900 = vmatpush1.bf16.msra.mxu0 %v11708
    %12901 = vmatprep.subr.bf16.mxu0 %v11733
    %12902 = vmatpush1.bf16.msra.mxu0 %v11732
    %12903 = vmatprep.subr.bf16.mxu0 %v11757
    %12904 = vmatpush1.bf16.msra.mxu0 %v11756
    %12905 = vmatprep.subr.bf16.mxu0 %v11781
    %12906 = vmatpush1.bf16.msra.mxu0 %v11780
    %12907 = vmatprep.subr.bf16.mxu0 %v11805
    %12908 = vmatpush1.bf16.msra.mxu0 %v11804
    %12909 = vmatprep.mubr.bf16.mxu0 %v7855
    %12910 = vmatmul.mubr.bf16.gmra.mrb[0].mxu0 %v7854
    %v12911 = vpop.f32.mrb[0].mxu0
    %v12912 = vadd.f32 %v12871, %v12911
    %v12913 = vpop.f32.mrb[0].mxu0
    %v12914 = vadd.f32 %v12873, %v12913
    %v12915 = vpop.f32.mrb[0].mxu0
    %v12916 = vpop.f32.mrb[0].mxu0
    %12917 = vdwg.mxu0
    %12918 = vmatprep.subr.bf16.mxu0 %v11063
    %12919 = vmatpush1.bf16.msra.mxu0 %v11062
    %12920 = vmatprep.subr.bf16.mxu0 %v11087
    %12921 = vmatpush1.bf16.msra.mxu0 %v11086
    %12922 = vmatprep.subr.bf16.mxu0 %v11111
    %12923 = vmatpush1.bf16.msra.mxu0 %v11110
    %12924 = vmatprep.subr.bf16.mxu0 %v11135
    %12925 = vmatpush1.bf16.msra.mxu0 %v11134
    %12926 = vmatprep.subr.bf16.mxu0 %v11159
    %12927 = vmatpush1.bf16.msra.mxu0 %v11158
    %12928 = vmatprep.subr.bf16.mxu0 %v11183
    %12929 = vmatpush1.bf16.msra.mxu0 %v11182
    %12930 = vmatprep.subr.bf16.mxu0 %v11207
    %12931 = vmatpush1.bf16.msra.mxu0 %v11206
    %12932 = vmatprep.subr.bf16.mxu0 %v11231
    %12933 = vmatpush1.bf16.msra.mxu0 %v11230
    %12934 = vmatprep.subr.bf16.mxu0 %v11255
    %12935 = vmatpush1.bf16.msra.mxu0 %v11254
    %12936 = vmatprep.subr.bf16.mxu0 %v11279
    %12937 = vmatpush1.bf16.msra.mxu0 %v11278
    %12938 = vmatprep.subr.bf16.mxu0 %v11303
    %12939 = vmatpush1.bf16.msra.mxu0 %v11302
    %12940 = vmatprep.subr.bf16.mxu0 %v11327
    %12941 = vmatpush1.bf16.msra.mxu0 %v11326
    %12942 = vmatprep.subr.bf16.mxu0 %v11351
    %12943 = vmatpush1.bf16.msra.mxu0 %v11350
    %12944 = vmatprep.subr.bf16.mxu0 %v11375
    %12945 = vmatpush1.bf16.msra.mxu0 %v11374
    %12946 = vmatprep.subr.bf16.mxu0 %v11399
    %12947 = vmatpush1.bf16.msra.mxu0 %v11398
    %12948 = vmatprep.subr.bf16.mxu0 %v11423
    %12949 = vmatpush1.bf16.msra.mxu0 %v11422
    %12950 = vmatprep.mubr.bf16.mxu0 %v7853
    %12951 = vmatmul.mubr.bf16.gmra.mrb[0].mxu0 %v7852
    %v12952 = vpop.f32.mrb[0].mxu0
    %v12953 = vadd.f32 %v8665, %v12952
    %v12954 = vpop.f32.mrb[0].mxu0
    %v12955 = vadd.f32 %v8669, %v12954
    %v12956 = vpop.f32.mrb[0].mxu0
    %v12957 = vpop.f32.mrb[0].mxu0
    %12958 = vdwg.mxu0
    %12959 = vmatprep.subr.bf16.mxu0 %v11447
    %12960 = vmatpush1.bf16.msra.mxu0 %v11446
    %12961 = vmatprep.subr.bf16.mxu0 %v11471
    %12962 = vmatpush1.bf16.msra.mxu0 %v11470
    %12963 = vmatprep.subr.bf16.mxu0 %v11495
    %12964 = vmatpush1.bf16.msra.mxu0 %v11494
    %12965 = vmatprep.subr.bf16.mxu0 %v11519
    %12966 = vmatpush1.bf16.msra.mxu0 %v11518
    %12967 = vmatprep.subr.bf16.mxu0 %v11543
    %12968 = vmatpush1.bf16.msra.mxu0 %v11542
    %12969 = vmatprep.subr.bf16.mxu0 %v11567
    %12970 = vmatpush1.bf16.msra.mxu0 %v11566
    %12971 = vmatprep.subr.bf16.mxu0 %v11591
    %12972 = vmatpush1.bf16.msra.mxu0 %v11590
    %12973 = vmatprep.subr.bf16.mxu0 %v11615
    %12974 = vmatpush1.bf16.msra.mxu0 %v11614
    %12975 = vmatprep.subr.bf16.mxu0 %v11639
    %12976 = vmatpush1.bf16.msra.mxu0 %v11638
    %12977 = vmatprep.subr.bf16.mxu0 %v11663
    %12978 = vmatpush1.bf16.msra.mxu0 %v11662
    %12979 = vmatprep.subr.bf16.mxu0 %v11687
    %12980 = vmatpush1.bf16.msra.mxu0 %v11686
    %12981 = vmatprep.subr.bf16.mxu0 %v11711
    %12982 = vmatpush1.bf16.msra.mxu0 %v11710
    %12983 = vmatprep.subr.bf16.mxu0 %v11735
    %12984 = vmatpush1.bf16.msra.mxu0 %v11734
    %12985 = vmatprep.subr.bf16.mxu0 %v11759
    %12986 = vmatpush1.bf16.msra.mxu0 %v11758
    %12987 = vmatprep.subr.bf16.mxu0 %v11783
    %12988 = vmatpush1.bf16.msra.mxu0 %v11782
    %12989 = vmatprep.subr.bf16.mxu0 %v11807
    %12990 = vmatpush1.bf16.msra.mxu0 %v11806
    %12991 = vmatprep.mubr.bf16.mxu0 %v7855
    %12992 = vmatmul.mubr.bf16.gmra.mrb[0].mxu0 %v7854
    %v12993 = vpop.f32.mrb[0].mxu0
    %v12994 = vadd.f32 %v12953, %v12993
    %v12995 = vpop.f32.mrb[0].mxu0
    %v12996 = vadd.f32 %v12955, %v12995
    %v12997 = vpop.f32.mrb[0].mxu0
    %v12998 = vpop.f32.mrb[0].mxu0
    %12999 = vdwg.mxu0
    %13000 = vmatprep.subr.bf16.mxu0 %v11065
    %13001 = vmatpush1.bf16.msra.mxu0 %v11064
    %13002 = vmatprep.subr.bf16.mxu0 %v11089
    %13003 = vmatpush1.bf16.msra.mxu0 %v11088
    %13004 = vmatprep.subr.bf16.mxu0 %v11113
    %13005 = vmatpush1.bf16.msra.mxu0 %v11112
    %13006 = vmatprep.subr.bf16.mxu0 %v11137
    %13007 = vmatpush1.bf16.msra.mxu0 %v11136
    %13008 = vmatprep.subr.bf16.mxu0 %v11161
    %13009 = vmatpush1.bf16.msra.mxu0 %v11160
    %13010 = vmatprep.subr.bf16.mxu0 %v11185
    %13011 = vmatpush1.bf16.msra.mxu0 %v11184
    %13012 = vmatprep.subr.bf16.mxu0 %v11209
    %13013 = vmatpush1.bf16.msra.mxu0 %v11208
    %13014 = vmatprep.subr.bf16.mxu0 %v11233
    %13015 = vmatpush1.bf16.msra.mxu0 %v11232
    %13016 = vmatprep.subr.bf16.mxu0 %v11257
    %13017 = vmatpush1.bf16.msra.mxu0 %v11256
    %13018 = vmatprep.subr.bf16.mxu0 %v11281
    %13019 = vmatpush1.bf16.msra.mxu0 %v11280
    %13020 = vmatprep.subr.bf16.mxu0 %v11305
    %13021 = vmatpush1.bf16.msra.mxu0 %v11304
    %13022 = vmatprep.subr.bf16.mxu0 %v11329
    %13023 = vmatpush1.bf16.msra.mxu0 %v11328
    %13024 = vmatprep.subr.bf16.mxu0 %v11353
    %13025 = vmatpush1.bf16.msra.mxu0 %v11352
    %13026 = vmatprep.subr.bf16.mxu0 %v11377
    %13027 = vmatpush1.bf16.msra.mxu0 %v11376
    %13028 = vmatprep.subr.bf16.mxu0 %v11401
    %13029 = vmatpush1.bf16.msra.mxu0 %v11400
    %13030 = vmatprep.subr.bf16.mxu0 %v11425
    %13031 = vmatpush1.bf16.msra.mxu0 %v11424
    %13032 = vmatprep.mubr.bf16.mxu0 %v7853
    %13033 = vmatmul.mubr.bf16.gmra.mrb[0].mxu0 %v7852
    %v13034 = vpop.f32.mrb[0].mxu0
    %v13035 = vadd.f32 %v8673, %v13034
    %v13036 = vpop.f32.mrb[0].mxu0
    %v13037 = vadd.f32 %v8677, %v13036
    %v13038 = vpop.f32.mrb[0].mxu0
    %v13039 = vpop.f32.mrb[0].mxu0
    %13040 = vdwg.mxu0
    %13041 = vmatprep.subr.bf16.mxu0 %v11449
    %13042 = vmatpush1.bf16.msra.mxu0 %v11448
    %13043 = vmatprep.subr.bf16.mxu0 %v11473
    %13044 = vmatpush1.bf16.msra.mxu0 %v11472
    %13045 = vmatprep.subr.bf16.mxu0 %v11497
    %13046 = vmatpush1.bf16.msra.mxu0 %v11496
    %13047 = vmatprep.subr.bf16.mxu0 %v11521
    %13048 = vmatpush1.bf16.msra.mxu0 %v11520
    %13049 = vmatprep.subr.bf16.mxu0 %v11545
    %13050 = vmatpush1.bf16.msra.mxu0 %v11544
    %13051 = vmatprep.subr.bf16.mxu0 %v11569
    %13052 = vmatpush1.bf16.msra.mxu0 %v11568
    %13053 = vmatprep.subr.bf16.mxu0 %v11593
    %13054 = vmatpush1.bf16.msra.mxu0 %v11592
    %13055 = vmatprep.subr.bf16.mxu0 %v11617
    %13056 = vmatpush1.bf16.msra.mxu0 %v11616
    %13057 = vmatprep.subr.bf16.mxu0 %v11641
    %13058 = vmatpush1.bf16.msra.mxu0 %v11640
    %13059 = vmatprep.subr.bf16.mxu0 %v11665
    %13060 = vmatpush1.bf16.msra.mxu0 %v11664
    %13061 = vmatprep.subr.bf16.mxu0 %v11689
    %13062 = vmatpush1.bf16.msra.mxu0 %v11688
    %13063 = vmatprep.subr.bf16.mxu0 %v11713
    %13064 = vmatpush1.bf16.msra.mxu0 %v11712
    %13065 = vmatprep.subr.bf16.mxu0 %v11737
    %13066 = vmatpush1.bf16.msra.mxu0 %v11736
    %13067 = vmatprep.subr.bf16.mxu0 %v11761
    %13068 = vmatpush1.bf16.msra.mxu0 %v11760
    %13069 = vmatprep.subr.bf16.mxu0 %v11785
    %13070 = vmatpush1.bf16.msra.mxu0 %v11784
    %13071 = vmatprep.subr.bf16.mxu0 %v11809
    %13072 = vmatpush1.bf16.msra.mxu0 %v11808
    %13073 = vmatprep.mubr.bf16.mxu0 %v7855
    %13074 = vmatmul.mubr.bf16.gmra.mrb[0].mxu0 %v7854
    %v13075 = vpop.f32.mrb[0].mxu0
    %v13076 = vadd.f32 %v13035, %v13075
    %v13077 = vpop.f32.mrb[0].mxu0
    %v13078 = vadd.f32 %v13037, %v13077
    %v13079 = vpop.f32.mrb[0].mxu0
    %v13080 = vpop.f32.mrb[0].mxu0
    %13081 = vdwg.mxu0
    %13082 = vmatprep.subr.bf16.mxu0 %v11067
    %13083 = vmatpush1.bf16.msra.mxu0 %v11066
    %13084 = vmatprep.subr.bf16.mxu0 %v11091
    %13085 = vmatpush1.bf16.msra.mxu0 %v11090
    %13086 = vmatprep.subr.bf16.mxu0 %v11115
    %13087 = vmatpush1.bf16.msra.mxu0 %v11114
    %13088 = vmatprep.subr.bf16.mxu0 %v11139
    %13089 = vmatpush1.bf16.msra.mxu0 %v11138
    %13090 = vmatprep.subr.bf16.mxu0 %v11163
    %13091 = vmatpush1.bf16.msra.mxu0 %v11162
    %13092 = vmatprep.subr.bf16.mxu0 %v11187
    %13093 = vmatpush1.bf16.msra.mxu0 %v11186
    %13094 = vmatprep.subr.bf16.mxu0 %v11211
    %13095 = vmatpush1.bf16.msra.mxu0 %v11210
    %13096 = vmatprep.subr.bf16.mxu0 %v11235
    %13097 = vmatpush1.bf16.msra.mxu0 %v11234
    %13098 = vmatprep.subr.bf16.mxu0 %v11259
    %13099 = vmatpush1.bf16.msra.mxu0 %v11258
    %13100 = vmatprep.subr.bf16.mxu0 %v11283
    %13101 = vmatpush1.bf16.msra.mxu0 %v11282
    %13102 = vmatprep.subr.bf16.mxu0 %v11307
    %13103 = vmatpush1.bf16.msra.mxu0 %v11306
    %13104 = vmatprep.subr.bf16.mxu0 %v11331
    %13105 = vmatpush1.bf16.msra.mxu0 %v11330
    %13106 = vmatprep.subr.bf16.mxu0 %v11355
    %13107 = vmatpush1.bf16.msra.mxu0 %v11354
    %13108 = vmatprep.subr.bf16.mxu0 %v11379
    %13109 = vmatpush1.bf16.msra.mxu0 %v11378
    %13110 = vmatprep.subr.bf16.mxu0 %v11403
    %13111 = vmatpush1.bf16.msra.mxu0 %v11402
    %13112 = vmatprep.subr.bf16.mxu0 %v11427
    %13113 = vmatpush1.bf16.msra.mxu0 %v11426
    %13114 = vmatprep.mubr.bf16.mxu0 %v7853
    %13115 = vmatmul.mubr.bf16.gmra.mrb[0].mxu0 %v7852
    %v13116 = vpop.f32.mrb[0].mxu0
    %v13117 = vadd.f32 %v8681, %v13116
    %v13118 = vpop.f32.mrb[0].mxu0
    %v13119 = vadd.f32 %v8685, %v13118
    %v13120 = vpop.f32.mrb[0].mxu0
    %v13121 = vpop.f32.mrb[0].mxu0
    %13122 = vdwg.mxu0
    %13123 = vmatprep.subr.bf16.mxu0 %v11451
    %13124 = vmatpush1.bf16.msra.mxu0 %v11450
    %13125 = vmatprep.subr.bf16.mxu0 %v11475
    %13126 = vmatpush1.bf16.msra.mxu0 %v11474
    %13127 = vmatprep.subr.bf16.mxu0 %v11499
    %13128 = vmatpush1.bf16.msra.mxu0 %v11498
    %13129 = vmatprep.subr.bf16.mxu0 %v11523
    %13130 = vmatpush1.bf16.msra.mxu0 %v11522
    %13131 = vmatprep.subr.bf16.mxu0 %v11547
    %13132 = vmatpush1.bf16.msra.mxu0 %v11546
    %13133 = vmatprep.subr.bf16.mxu0 %v11571
    %13134 = vmatpush1.bf16.msra.mxu0 %v11570
    %13135 = vmatprep.subr.bf16.mxu0 %v11595
    %13136 = vmatpush1.bf16.msra.mxu0 %v11594
    %13137 = vmatprep.subr.bf16.mxu0 %v11619
    %13138 = vmatpush1.bf16.msra.mxu0 %v11618
    %13139 = vmatprep.subr.bf16.mxu0 %v11643
    %13140 = vmatpush1.bf16.msra.mxu0 %v11642
    %13141 = vmatprep.subr.bf16.mxu0 %v11667
    %13142 = vmatpush1.bf16.msra.mxu0 %v11666
    %13143 = vmatprep.subr.bf16.mxu0 %v11691
    %13144 = vmatpush1.bf16.msra.mxu0 %v11690
    %13145 = vmatprep.subr.bf16.mxu0 %v11715
    %13146 = vmatpush1.bf16.msra.mxu0 %v11714
    %13147 = vmatprep.subr.bf16.mxu0 %v11739
    %13148 = vmatpush1.bf16.msra.mxu0 %v11738
    %13149 = vmatprep.subr.bf16.mxu0 %v11763
    %13150 = vmatpush1.bf16.msra.mxu0 %v11762
    %13151 = vmatprep.subr.bf16.mxu0 %v11787
    %13152 = vmatpush1.bf16.msra.mxu0 %v11786
    %13153 = vmatprep.subr.bf16.mxu0 %v11811
    %13154 = vmatpush1.bf16.msra.mxu0 %v11810
    %13155 = vmatprep.mubr.bf16.mxu0 %v7855
    %13156 = vmatmul.mubr.bf16.gmra.mrb[0].mxu0 %v7854
    %v13157 = vpop.f32.mrb[0].mxu0
    %v13158 = vadd.f32 %v13117, %v13157
    %v13159 = vpop.f32.mrb[0].mxu0
    %v13160 = vadd.f32 %v13119, %v13159
    %v13161 = vpop.f32.mrb[0].mxu0
    %v13162 = vpop.f32.mrb[0].mxu0
    %13163 = vdwg.mxu0
    %13164 = vmatprep.subr.bf16.mxu0 %v11069
    %13165 = vmatpush1.bf16.msra.mxu0 %v11068
    %13166 = vmatprep.subr.bf16.mxu0 %v11093
    %13167 = vmatpush1.bf16.msra.mxu0 %v11092
    %13168 = vmatprep.subr.bf16.mxu0 %v11117
    %13169 = vmatpush1.bf16.msra.mxu0 %v11116
    %13170 = vmatprep.subr.bf16.mxu0 %v11141
    %13171 = vmatpush1.bf16.msra.mxu0 %v11140
    %13172 = vmatprep.subr.bf16.mxu0 %v11165
    %13173 = vmatpush1.bf16.msra.mxu0 %v11164
    %13174 = vmatprep.subr.bf16.mxu0 %v11189
    %13175 = vmatpush1.bf16.msra.mxu0 %v11188
    %13176 = vmatprep.subr.bf16.mxu0 %v11213
    %13177 = vmatpush1.bf16.msra.mxu0 %v11212
    %13178 = vmatprep.subr.bf16.mxu0 %v11237
    %13179 = vmatpush1.bf16.msra.mxu0 %v11236
    %13180 = vmatprep.subr.bf16.mxu0 %v11261
    %13181 = vmatpush1.bf16.msra.mxu0 %v11260
    %13182 = vmatprep.subr.bf16.mxu0 %v11285
    %13183 = vmatpush1.bf16.msra.mxu0 %v11284
    %13184 = vmatprep.subr.bf16.mxu0 %v11309
    %13185 = vmatpush1.bf16.msra.mxu0 %v11308
    %13186 = vmatprep.subr.bf16.mxu0 %v11333
    %13187 = vmatpush1.bf16.msra.mxu0 %v11332
    %13188 = vmatprep.subr.bf16.mxu0 %v11357
    %13189 = vmatpush1.bf16.msra.mxu0 %v11356
    %13190 = vmatprep.subr.bf16.mxu0 %v11381
    %13191 = vmatpush1.bf16.msra.mxu0 %v11380
    %13192 = vmatprep.subr.bf16.mxu0 %v11405
    %13193 = vmatpush1.bf16.msra.mxu0 %v11404
    %13194 = vmatprep.subr.bf16.mxu0 %v11429
    %13195 = vmatpush1.bf16.msra.mxu0 %v11428
    %13196 = vmatprep.mubr.bf16.mxu0 %v7853
    %13197 = vmatmul.mubr.bf16.gmra.mrb[0].mxu0 %v7852
    %v13198 = vpop.f32.mrb[0].mxu0
    %v13199 = vadd.f32 %v8689, %v13198
    %v13200 = vpop.f32.mrb[0].mxu0
    %v13201 = vadd.f32 %v8693, %v13200
    %v13202 = vpop.f32.mrb[0].mxu0
    %v13203 = vpop.f32.mrb[0].mxu0
    %13204 = vdwg.mxu0
    %13205 = vmatprep.subr.bf16.mxu0 %v11453
    %13206 = vmatpush1.bf16.msra.mxu0 %v11452
    %13207 = vmatprep.subr.bf16.mxu0 %v11477
    %13208 = vmatpush1.bf16.msra.mxu0 %v11476
    %13209 = vmatprep.subr.bf16.mxu0 %v11501
    %13210 = vmatpush1.bf16.msra.mxu0 %v11500
    %13211 = vmatprep.subr.bf16.mxu0 %v11525
    %13212 = vmatpush1.bf16.msra.mxu0 %v11524
    %13213 = vmatprep.subr.bf16.mxu0 %v11549
    %13214 = vmatpush1.bf16.msra.mxu0 %v11548
    %13215 = vmatprep.subr.bf16.mxu0 %v11573
    %13216 = vmatpush1.bf16.msra.mxu0 %v11572
    %13217 = vmatprep.subr.bf16.mxu0 %v11597
    %13218 = vmatpush1.bf16.msra.mxu0 %v11596
    %13219 = vmatprep.subr.bf16.mxu0 %v11621
    %13220 = vmatpush1.bf16.msra.mxu0 %v11620
    %13221 = vmatprep.subr.bf16.mxu0 %v11645
    %13222 = vmatpush1.bf16.msra.mxu0 %v11644
    %13223 = vmatprep.subr.bf16.mxu0 %v11669
    %13224 = vmatpush1.bf16.msra.mxu0 %v11668
    %13225 = vmatprep.subr.bf16.mxu0 %v11693
    %13226 = vmatpush1.bf16.msra.mxu0 %v11692
    %13227 = vmatprep.subr.bf16.mxu0 %v11717
    %13228 = vmatpush1.bf16.msra.mxu0 %v11716
    %13229 = vmatprep.subr.bf16.mxu0 %v11741
    %13230 = vmatpush1.bf16.msra.mxu0 %v11740
    %13231 = vmatprep.subr.bf16.mxu0 %v11765
    %13232 = vmatpush1.bf16.msra.mxu0 %v11764
    %13233 = vmatprep.subr.bf16.mxu0 %v11789
    %13234 = vmatpush1.bf16.msra.mxu0 %v11788
    %13235 = vmatprep.subr.bf16.mxu0 %v11813
    %13236 = vmatpush1.bf16.msra.mxu0 %v11812
    %13237 = vmatprep.mubr.bf16.mxu0 %v7855
    %13238 = vmatmul.mubr.bf16.gmra.mrb[0].mxu0 %v7854
    %v13239 = vpop.f32.mrb[0].mxu0
    %v13240 = vadd.f32 %v13199, %v13239
    %v13241 = vpop.f32.mrb[0].mxu0
    %v13242 = vadd.f32 %v13201, %v13241
    %v13243 = vpop.f32.mrb[0].mxu0
    %v13244 = vpop.f32.mrb[0].mxu0
    %13245 = vdwg.mxu0
    %13246 = vmatprep.subr.bf16.mxu0 %v11071
    %13247 = vmatpush1.bf16.msra.mxu0 %v11070
    %13248 = vmatprep.subr.bf16.mxu0 %v11095
    %13249 = vmatpush1.bf16.msra.mxu0 %v11094
    %13250 = vmatprep.subr.bf16.mxu0 %v11119
    %13251 = vmatpush1.bf16.msra.mxu0 %v11118
    %13252 = vmatprep.subr.bf16.mxu0 %v11143
    %13253 = vmatpush1.bf16.msra.mxu0 %v11142
    %13254 = vmatprep.subr.bf16.mxu0 %v11167
    %13255 = vmatpush1.bf16.msra.mxu0 %v11166
    %13256 = vmatprep.subr.bf16.mxu0 %v11191
    %13257 = vmatpush1.bf16.msra.mxu0 %v11190
    %13258 = vmatprep.subr.bf16.mxu0 %v11215
    %13259 = vmatpush1.bf16.msra.mxu0 %v11214
    %13260 = vmatprep.subr.bf16.mxu0 %v11239
    %13261 = vmatpush1.bf16.msra.mxu0 %v11238
    %13262 = vmatprep.subr.bf16.mxu0 %v11263
    %13263 = vmatpush1.bf16.msra.mxu0 %v11262
    %13264 = vmatprep.subr.bf16.mxu0 %v11287
    %13265 = vmatpush1.bf16.msra.mxu0 %v11286
    %13266 = vmatprep.subr.bf16.mxu0 %v11311
    %13267 = vmatpush1.bf16.msra.mxu0 %v11310
    %13268 = vmatprep.subr.bf16.mxu0 %v11335
    %13269 = vmatpush1.bf16.msra.mxu0 %v11334
    %13270 = vmatprep.subr.bf16.mxu0 %v11359
    %13271 = vmatpush1.bf16.msra.mxu0 %v11358
    %13272 = vmatprep.subr.bf16.mxu0 %v11383
    %13273 = vmatpush1.bf16.msra.mxu0 %v11382
    %13274 = vmatprep.subr.bf16.mxu0 %v11407
    %13275 = vmatpush1.bf16.msra.mxu0 %v11406
    %13276 = vmatprep.subr.bf16.mxu0 %v11431
    %13277 = vmatpush1.bf16.msra.mxu0 %v11430
    %13278 = vmatprep.mubr.bf16.mxu0 %v7853
    %13279 = vmatmul.mubr.bf16.gmra.mrb[0].mxu0 %v7852
    %v13280 = vpop.f32.mrb[0].mxu0
    %v13281 = vadd.f32 %v8697, %v13280
    %v13282 = vpop.f32.mrb[0].mxu0
    %v13283 = vadd.f32 %v8701, %v13282
    %v13284 = vpop.f32.mrb[0].mxu0
    %v13285 = vpop.f32.mrb[0].mxu0
    %13286 = vdwg.mxu0
    %13287 = vmatprep.subr.bf16.mxu0 %v11455
    %13288 = vmatpush1.bf16.msra.mxu0 %v11454
    %13289 = vmatprep.subr.bf16.mxu0 %v11479
    %13290 = vmatpush1.bf16.msra.mxu0 %v11478
    %13291 = vmatprep.subr.bf16.mxu0 %v11503
    %13292 = vmatpush1.bf16.msra.mxu0 %v11502
    %13293 = vmatprep.subr.bf16.mxu0 %v11527
    %13294 = vmatpush1.bf16.msra.mxu0 %v11526
    %13295 = vmatprep.subr.bf16.mxu0 %v11551
    %13296 = vmatpush1.bf16.msra.mxu0 %v11550
    %13297 = vmatprep.subr.bf16.mxu0 %v11575
    %13298 = vmatpush1.bf16.msra.mxu0 %v11574
    %13299 = vmatprep.subr.bf16.mxu0 %v11599
    %13300 = vmatpush1.bf16.msra.mxu0 %v11598
    %13301 = vmatprep.subr.bf16.mxu0 %v11623
    %13302 = vmatpush1.bf16.msra.mxu0 %v11622
    %13303 = vmatprep.subr.bf16.mxu0 %v11647
    %13304 = vmatpush1.bf16.msra.mxu0 %v11646
    %13305 = vmatprep.subr.bf16.mxu0 %v11671
    %13306 = vmatpush1.bf16.msra.mxu0 %v11670
    %13307 = vmatprep.subr.bf16.mxu0 %v11695
    %13308 = vmatpush1.bf16.msra.mxu0 %v11694
    %13309 = vmatprep.subr.bf16.mxu0 %v11719
    %13310 = vmatpush1.bf16.msra.mxu0 %v11718
    %13311 = vmatprep.subr.bf16.mxu0 %v11743
    %13312 = vmatpush1.bf16.msra.mxu0 %v11742
    %13313 = vmatprep.subr.bf16.mxu0 %v11767
    %13314 = vmatpush1.bf16.msra.mxu0 %v11766
    %13315 = vmatprep.subr.bf16.mxu0 %v11791
    %13316 = vmatpush1.bf16.msra.mxu0 %v11790
    %13317 = vmatprep.subr.bf16.mxu0 %v11815
    %13318 = vmatpush1.bf16.msra.mxu0 %v11814
    %13319 = vmatprep.mubr.bf16.mxu0 %v7855
    %13320 = vmatmul.mubr.bf16.gmra.mrb[0].mxu0 %v7854
    %v13321 = vpop.f32.mrb[0].mxu0
    %v13322 = vadd.f32 %v13281, %v13321
    %v13323 = vpop.f32.mrb[0].mxu0
    %v13324 = vadd.f32 %v13283, %v13323
    %v13325 = vpop.f32.mrb[0].mxu0
    %v13326 = vpop.f32.mrb[0].mxu0
    %13327 = vdwg.mxu0
    %13328 = vmatprep.subr.bf16.mxu0 %v11073
    %13329 = vmatpush1.bf16.msra.mxu0 %v11072
    %13330 = vmatprep.subr.bf16.mxu0 %v11097
    %13331 = vmatpush1.bf16.msra.mxu0 %v11096
    %13332 = vmatprep.subr.bf16.mxu0 %v11121
    %13333 = vmatpush1.bf16.msra.mxu0 %v11120
    %13334 = vmatprep.subr.bf16.mxu0 %v11145
    %13335 = vmatpush1.bf16.msra.mxu0 %v11144
    %13336 = vmatprep.subr.bf16.mxu0 %v11169
    %13337 = vmatpush1.bf16.msra.mxu0 %v11168
    %13338 = vmatprep.subr.bf16.mxu0 %v11193
    %13339 = vmatpush1.bf16.msra.mxu0 %v11192
    %13340 = vmatprep.subr.bf16.mxu0 %v11217
    %13341 = vmatpush1.bf16.msra.mxu0 %v11216
    %13342 = vmatprep.subr.bf16.mxu0 %v11241
    %13343 = vmatpush1.bf16.msra.mxu0 %v11240
    %13344 = vmatprep.subr.bf16.mxu0 %v11265
    %13345 = vmatpush1.bf16.msra.mxu0 %v11264
    %13346 = vmatprep.subr.bf16.mxu0 %v11289
    %13347 = vmatpush1.bf16.msra.mxu0 %v11288
    %13348 = vmatprep.subr.bf16.mxu0 %v11313
    %13349 = vmatpush1.bf16.msra.mxu0 %v11312
    %13350 = vmatprep.subr.bf16.mxu0 %v11337
    %13351 = vmatpush1.bf16.msra.mxu0 %v11336
    %13352 = vmatprep.subr.bf16.mxu0 %v11361
    %13353 = vmatpush1.bf16.msra.mxu0 %v11360
    %13354 = vmatprep.subr.bf16.mxu0 %v11385
    %13355 = vmatpush1.bf16.msra.mxu0 %v11384
    %13356 = vmatprep.subr.bf16.mxu0 %v11409
    %13357 = vmatpush1.bf16.msra.mxu0 %v11408
    %13358 = vmatprep.subr.bf16.mxu0 %v11433
    %13359 = vmatpush1.bf16.msra.mxu0 %v11432
    %13360 = vmatprep.mubr.bf16.mxu0 %v7853
    %13361 = vmatmul.mubr.bf16.gmra.mrb[0].mxu0 %v7852
    %v13362 = vpop.f32.mrb[0].mxu0
    %v13363 = vadd.f32 %v8705, %v13362
    %v13364 = vpop.f32.mrb[0].mxu0
    %v13365 = vadd.f32 %v8709, %v13364
    %v13366 = vpop.f32.mrb[0].mxu0
    %v13367 = vpop.f32.mrb[0].mxu0
    %13368 = vdwg.mxu0
    %13369 = vmatprep.subr.bf16.mxu0 %v11457
    %13370 = vmatpush1.bf16.msra.mxu0 %v11456
    %13371 = vmatprep.subr.bf16.mxu0 %v11481
    %13372 = vmatpush1.bf16.msra.mxu0 %v11480
    %13373 = vmatprep.subr.bf16.mxu0 %v11505
    %13374 = vmatpush1.bf16.msra.mxu0 %v11504
    %13375 = vmatprep.subr.bf16.mxu0 %v11529
    %13376 = vmatpush1.bf16.msra.mxu0 %v11528
    %13377 = vmatprep.subr.bf16.mxu0 %v11553
    %13378 = vmatpush1.bf16.msra.mxu0 %v11552
    %13379 = vmatprep.subr.bf16.mxu0 %v11577
    %13380 = vmatpush1.bf16.msra.mxu0 %v11576
    %13381 = vmatprep.subr.bf16.mxu0 %v11601
    %13382 = vmatpush1.bf16.msra.mxu0 %v11600
    %13383 = vmatprep.subr.bf16.mxu0 %v11625
    %13384 = vmatpush1.bf16.msra.mxu0 %v11624
    %13385 = vmatprep.subr.bf16.mxu0 %v11649
    %13386 = vmatpush1.bf16.msra.mxu0 %v11648
    %13387 = vmatprep.subr.bf16.mxu0 %v11673
    %13388 = vmatpush1.bf16.msra.mxu0 %v11672
    %13389 = vmatprep.subr.bf16.mxu0 %v11697
    %13390 = vmatpush1.bf16.msra.mxu0 %v11696
    %13391 = vmatprep.subr.bf16.mxu0 %v11721
    %13392 = vmatpush1.bf16.msra.mxu0 %v11720
    %13393 = vmatprep.subr.bf16.mxu0 %v11745
    %13394 = vmatpush1.bf16.msra.mxu0 %v11744
    %13395 = vmatprep.subr.bf16.mxu0 %v11769
    %13396 = vmatpush1.bf16.msra.mxu0 %v11768
    %13397 = vmatprep.subr.bf16.mxu0 %v11793
    %13398 = vmatpush1.bf16.msra.mxu0 %v11792
    %13399 = vmatprep.subr.bf16.mxu0 %v11817
    %13400 = vmatpush1.bf16.msra.mxu0 %v11816
    %13401 = vmatprep.mubr.bf16.mxu0 %v7855
    %13402 = vmatmul.mubr.bf16.gmra.mrb[0].mxu0 %v7854
    %v13403 = vpop.f32.mrb[0].mxu0
    %v13404 = vadd.f32 %v13363, %v13403
    %v13405 = vpop.f32.mrb[0].mxu0
    %v13406 = vadd.f32 %v13365, %v13405
    %v13407 = vpop.f32.mrb[0].mxu0
    %v13408 = vpop.f32.mrb[0].mxu0
    %13409 = vdwg.mxu0
    %13410 = vmatprep.subr.bf16.mxu0 %v11075
    %13411 = vmatpush1.bf16.msra.mxu0 %v11074
    %13412 = vmatprep.subr.bf16.mxu0 %v11099
    %13413 = vmatpush1.bf16.msra.mxu0 %v11098
    %13414 = vmatprep.subr.bf16.mxu0 %v11123
    %13415 = vmatpush1.bf16.msra.mxu0 %v11122
    %13416 = vmatprep.subr.bf16.mxu0 %v11147
    %13417 = vmatpush1.bf16.msra.mxu0 %v11146
    %13418 = vmatprep.subr.bf16.mxu0 %v11171
    %13419 = vmatpush1.bf16.msra.mxu0 %v11170
    %13420 = vmatprep.subr.bf16.mxu0 %v11195
    %13421 = vmatpush1.bf16.msra.mxu0 %v11194
    %13422 = vmatprep.subr.bf16.mxu0 %v11219
    %13423 = vmatpush1.bf16.msra.mxu0 %v11218
    %13424 = vmatprep.subr.bf16.mxu0 %v11243
    %13425 = vmatpush1.bf16.msra.mxu0 %v11242
    %13426 = vmatprep.subr.bf16.mxu0 %v11267
    %13427 = vmatpush1.bf16.msra.mxu0 %v11266
    %13428 = vmatprep.subr.bf16.mxu0 %v11291
    %13429 = vmatpush1.bf16.msra.mxu0 %v11290
    %13430 = vmatprep.subr.bf16.mxu0 %v11315
    %13431 = vmatpush1.bf16.msra.mxu0 %v11314
    %13432 = vmatprep.subr.bf16.mxu0 %v11339
    %13433 = vmatpush1.bf16.msra.mxu0 %v11338
    %13434 = vmatprep.subr.bf16.mxu0 %v11363
    %13435 = vmatpush1.bf16.msra.mxu0 %v11362
    %13436 = vmatprep.subr.bf16.mxu0 %v11387
    %13437 = vmatpush1.bf16.msra.mxu0 %v11386
    %13438 = vmatprep.subr.bf16.mxu0 %v11411
    %13439 = vmatpush1.bf16.msra.mxu0 %v11410
    %13440 = vmatprep.subr.bf16.mxu0 %v11435
    %13441 = vmatpush1.bf16.msra.mxu0 %v11434
    %13442 = vmatprep.mubr.bf16.mxu0 %v7853
    %13443 = vmatmul.mubr.bf16.gmra.mrb[0].mxu0 %v7852
    %v13444 = vpop.f32.mrb[0].mxu0
    %v13445 = vadd.f32 %v8713, %v13444
    %v13446 = vpop.f32.mrb[0].mxu0
    %v13447 = vadd.f32 %v8717, %v13446
    %v13448 = vpop.f32.mrb[0].mxu0
    %v13449 = vpop.f32.mrb[0].mxu0
    %13450 = vdwg.mxu0
    %13451 = vmatprep.subr.bf16.mxu0 %v11459
    %13452 = vmatpush1.bf16.msra.mxu0 %v11458
    %13453 = vmatprep.subr.bf16.mxu0 %v11483
    %13454 = vmatpush1.bf16.msra.mxu0 %v11482
    %13455 = vmatprep.subr.bf16.mxu0 %v11507
    %13456 = vmatpush1.bf16.msra.mxu0 %v11506
    %13457 = vmatprep.subr.bf16.mxu0 %v11531
    %13458 = vmatpush1.bf16.msra.mxu0 %v11530
    %13459 = vmatprep.subr.bf16.mxu0 %v11555
    %13460 = vmatpush1.bf16.msra.mxu0 %v11554
    %13461 = vmatprep.subr.bf16.mxu0 %v11579
    %13462 = vmatpush1.bf16.msra.mxu0 %v11578
    %13463 = vmatprep.subr.bf16.mxu0 %v11603
    %13464 = vmatpush1.bf16.msra.mxu0 %v11602
    %13465 = vmatprep.subr.bf16.mxu0 %v11627
    %13466 = vmatpush1.bf16.msra.mxu0 %v11626
    %13467 = vmatprep.subr.bf16.mxu0 %v11651
    %13468 = vmatpush1.bf16.msra.mxu0 %v11650
    %13469 = vmatprep.subr.bf16.mxu0 %v11675
    %13470 = vmatpush1.bf16.msra.mxu0 %v11674
    %13471 = vmatprep.subr.bf16.mxu0 %v11699
    %13472 = vmatpush1.bf16.msra.mxu0 %v11698
    %13473 = vmatprep.subr.bf16.mxu0 %v11723
    %13474 = vmatpush1.bf16.msra.mxu0 %v11722
    %13475 = vmatprep.subr.bf16.mxu0 %v11747
    %13476 = vmatpush1.bf16.msra.mxu0 %v11746
    %13477 = vmatprep.subr.bf16.mxu0 %v11771
    %13478 = vmatpush1.bf16.msra.mxu0 %v11770
    %13479 = vmatprep.subr.bf16.mxu0 %v11795
    %13480 = vmatpush1.bf16.msra.mxu0 %v11794
    %13481 = vmatprep.subr.bf16.mxu0 %v11819
    %13482 = vmatpush1.bf16.msra.mxu0 %v11818
    %13483 = vmatprep.mubr.bf16.mxu0 %v7855
    %13484 = vmatmul.mubr.bf16.gmra.mrb[0].mxu0 %v7854
    %v13485 = vpop.f32.mrb[0].mxu0
    %v13486 = vadd.f32 %v13445, %v13485
    %v13487 = vpop.f32.mrb[0].mxu0
    %v13488 = vadd.f32 %v13447, %v13487
    %v13489 = vpop.f32.mrb[0].mxu0
    %v13490 = vpop.f32.mrb[0].mxu0
    %13491 = vdwg.mxu0
    %13492 = vmatprep.subr.bf16.mxu0 %v11077
    %13493 = vmatpush1.bf16.msra.mxu0 %v11076
    %13494 = vmatprep.subr.bf16.mxu0 %v11101
    %13495 = vmatpush1.bf16.msra.mxu0 %v11100
    %13496 = vmatprep.subr.bf16.mxu0 %v11125
    %13497 = vmatpush1.bf16.msra.mxu0 %v11124
    %13498 = vmatprep.subr.bf16.mxu0 %v11149
    %13499 = vmatpush1.bf16.msra.mxu0 %v11148
    %13500 = vmatprep.subr.bf16.mxu0 %v11173
    %13501 = vmatpush1.bf16.msra.mxu0 %v11172
    %13502 = vmatprep.subr.bf16.mxu0 %v11197
    %13503 = vmatpush1.bf16.msra.mxu0 %v11196
    %13504 = vmatprep.subr.bf16.mxu0 %v11221
    %13505 = vmatpush1.bf16.msra.mxu0 %v11220
    %13506 = vmatprep.subr.bf16.mxu0 %v11245
    %13507 = vmatpush1.bf16.msra.mxu0 %v11244
    %13508 = vmatprep.subr.bf16.mxu0 %v11269
    %13509 = vmatpush1.bf16.msra.mxu0 %v11268
    %13510 = vmatprep.subr.bf16.mxu0 %v11293
    %13511 = vmatpush1.bf16.msra.mxu0 %v11292
    %13512 = vmatprep.subr.bf16.mxu0 %v11317
    %13513 = vmatpush1.bf16.msra.mxu0 %v11316
    %13514 = vmatprep.subr.bf16.mxu0 %v11341
    %13515 = vmatpush1.bf16.msra.mxu0 %v11340
    %13516 = vmatprep.subr.bf16.mxu0 %v11365
    %13517 = vmatpush1.bf16.msra.mxu0 %v11364
    %13518 = vmatprep.subr.bf16.mxu0 %v11389
    %13519 = vmatpush1.bf16.msra.mxu0 %v11388
    %13520 = vmatprep.subr.bf16.mxu0 %v11413
    %13521 = vmatpush1.bf16.msra.mxu0 %v11412
    %13522 = vmatprep.subr.bf16.mxu0 %v11437
    %13523 = vmatpush1.bf16.msra.mxu0 %v11436
    %13524 = vmatprep.mubr.bf16.mxu0 %v7853
    %13525 = vmatmul.mubr.bf16.gmra.mrb[0].mxu0 %v7852
    %v13526 = vpop.f32.mrb[0].mxu0
    %v13527 = vadd.f32 %v8721, %v13526
    %v13528 = vpop.f32.mrb[0].mxu0
    %v13529 = vadd.f32 %v8725, %v13528
    %v13530 = vpop.f32.mrb[0].mxu0
    %v13531 = vpop.f32.mrb[0].mxu0
    %13532 = vdwg.mxu0
    %13533 = vmatprep.subr.bf16.mxu0 %v11461
    %13534 = vmatpush1.bf16.msra.mxu0 %v11460
    %13535 = vmatprep.subr.bf16.mxu0 %v11485
    %13536 = vmatpush1.bf16.msra.mxu0 %v11484
    %13537 = vmatprep.subr.bf16.mxu0 %v11509
    %13538 = vmatpush1.bf16.msra.mxu0 %v11508
    %13539 = vmatprep.subr.bf16.mxu0 %v11533
    %13540 = vmatpush1.bf16.msra.mxu0 %v11532
    %13541 = vmatprep.subr.bf16.mxu0 %v11557
    %13542 = vmatpush1.bf16.msra.mxu0 %v11556
    %13543 = vmatprep.subr.bf16.mxu0 %v11581
    %13544 = vmatpush1.bf16.msra.mxu0 %v11580
    %13545 = vmatprep.subr.bf16.mxu0 %v11605
    %13546 = vmatpush1.bf16.msra.mxu0 %v11604
    %13547 = vmatprep.subr.bf16.mxu0 %v11629
    %13548 = vmatpush1.bf16.msra.mxu0 %v11628
    %13549 = vmatprep.subr.bf16.mxu0 %v11653
    %13550 = vmatpush1.bf16.msra.mxu0 %v11652
    %13551 = vmatprep.subr.bf16.mxu0 %v11677
    %13552 = vmatpush1.bf16.msra.mxu0 %v11676
    %13553 = vmatprep.subr.bf16.mxu0 %v11701
    %13554 = vmatpush1.bf16.msra.mxu0 %v11700
    %13555 = vmatprep.subr.bf16.mxu0 %v11725
    %13556 = vmatpush1.bf16.msra.mxu0 %v11724
    %13557 = vmatprep.subr.bf16.mxu0 %v11749
    %13558 = vmatpush1.bf16.msra.mxu0 %v11748
    %13559 = vmatprep.subr.bf16.mxu0 %v11773
    %13560 = vmatpush1.bf16.msra.mxu0 %v11772
    %13561 = vmatprep.subr.bf16.mxu0 %v11797
    %13562 = vmatpush1.bf16.msra.mxu0 %v11796
    %13563 = vmatprep.subr.bf16.mxu0 %v11821
    %13564 = vmatpush1.bf16.msra.mxu0 %v11820
    %13565 = vmatprep.mubr.bf16.mxu0 %v7855
    %13566 = vmatmul.mubr.bf16.gmra.mrb[0].mxu0 %v7854
    %v13567 = vpop.f32.mrb[0].mxu0
    %v13568 = vadd.f32 %v13527, %v13567
    %v13569 = vpop.f32.mrb[0].mxu0
    %v13570 = vadd.f32 %v13529, %v13569
    %v13571 = vpop.f32.mrb[0].mxu0
    %v13572 = vpop.f32.mrb[0].mxu0
    %13573 = vdwg.mxu0
    %v13574 = vxor.u32 %v12666, 2147483648
    %v13575 = vxor.u32 %v12668, 2147483648
    %v13576 = vxor.u32 %v12748, 2147483648
    %v13577 = vxor.u32 %v12750, 2147483648
    %v13578 = vxor.u32 %v12830, 2147483648
    %v13579 = vxor.u32 %v12832, 2147483648
    %v13580 = vxor.u32 %v12912, 2147483648
    %v13581 = vxor.u32 %v12914, 2147483648
    %v13582 = vxor.u32 %v12994, 2147483648
    %v13583 = vxor.u32 %v12996, 2147483648
    %v13584 = vxor.u32 %v13076, 2147483648
    %v13585 = vxor.u32 %v13078, 2147483648
    %v13586 = vxor.u32 %v13158, 2147483648
    %v13587 = vxor.u32 %v13160, 2147483648
    %v13588 = vxor.u32 %v13240, 2147483648
    %v13589 = vxor.u32 %v13242, 2147483648
    %v13590 = vxor.u32 %v13322, 2147483648
    %v13591 = vxor.u32 %v13324, 2147483648
    %v13592 = vxor.u32 %v13404, 2147483648
    %v13593 = vxor.u32 %v13406, 2147483648
    %v13594 = vxor.u32 %v13486, 2147483648
    %v13595 = vxor.u32 %v13488, 2147483648
    %v13596 = vxor.u32 %v13568, 2147483648
    %v13597 = vxor.u32 %v13570, 2147483648
    %v13598 = vmul.f32 %v13574, 1.442695
    %v13599 = vpow.pop %v13598
    %v13600 = vmul.f32 %v13575, 1.442695
    %v13601 = vpow.pop %v13600
    %v13602 = vmul.f32 %v13576, 1.442695
    %v13603 = vpow.pop %v13602
    %v13604 = vmul.f32 %v13577, 1.442695
    %v13605 = vpow.pop %v13604
    %v13606 = vmul.f32 %v13578, 1.442695
    %v13607 = vpow.pop %v13606
    %v13608 = vmul.f32 %v13579, 1.442695
    %v13609 = vpow.pop %v13608
    %v13610 = vmul.f32 %v13580, 1.442695
    %v13611 = vpow.pop %v13610
    %v13612 = vmul.f32 %v13581, 1.442695
    %v13613 = vpow.pop %v13612
    %v13614 = vmul.f32 %v13582, 1.442695
    %v13615 = vpow.pop %v13614
    %v13616 = vmul.f32 %v13583, 1.442695
    %v13617 = vpow.pop %v13616
    %v13618 = vmul.f32 %v13584, 1.442695
    %v13619 = vpow.pop %v13618
    %v13620 = vmul.f32 %v13585, 1.442695
    %v13621 = vpow.pop %v13620
    %v13622 = vmul.f32 %v13586, 1.442695
    %v13623 = vpow.pop %v13622
    %v13624 = vmul.f32 %v13587, 1.442695
    %v13625 = vpow.pop %v13624
    %v13626 = vmul.f32 %v13588, 1.442695
    %v13627 = vpow.pop %v13626
    %v13628 = vmul.f32 %v13589, 1.442695
    %v13629 = vpow.pop %v13628
    %v13630 = vmul.f32 %v13590, 1.442695
    %v13631 = vpow.pop %v13630
    %v13632 = vmul.f32 %v13591, 1.442695
    %v13633 = vpow.pop %v13632
    %v13634 = vmul.f32 %v13592, 1.442695
    %v13635 = vpow.pop %v13634
    %v13636 = vmul.f32 %v13593, 1.442695
    %v13637 = vpow.pop %v13636
    %v13638 = vmul.f32 %v13594, 1.442695
    %v13639 = vpow.pop %v13638
    %v13640 = vmul.f32 %v13595, 1.442695
    %v13641 = vpow.pop %v13640
    %v13642 = vmul.f32 %v13596, 1.442695
    %v13643 = vpow.pop %v13642
    %v13644 = vmul.f32 %v13597, 1.442695
    %v13645 = vpow.pop %v13644
    %v13646 = vadd.f32 %v13599, 1.0
    %v13647 = vadd.f32 %v13601, 1.0
    %v13648 = vadd.f32 %v13603, 1.0
    %v13649 = vadd.f32 %v13605, 1.0
    %v13650 = vadd.f32 %v13607, 1.0
    %v13651 = vadd.f32 %v13609, 1.0
    %v13652 = vadd.f32 %v13611, 1.0
    %v13653 = vadd.f32 %v13613, 1.0
    %v13654 = vadd.f32 %v13615, 1.0
    %v13655 = vadd.f32 %v13617, 1.0
    %v13656 = vadd.f32 %v13619, 1.0
    %v13657 = vadd.f32 %v13621, 1.0
    %v13658 = vadd.f32 %v13623, 1.0
    %v13659 = vadd.f32 %v13625, 1.0
    %v13660 = vadd.f32 %v13627, 1.0
    %v13661 = vadd.f32 %v13629, 1.0
    %v13662 = vadd.f32 %v13631, 1.0
    %v13663 = vadd.f32 %v13633, 1.0
    %v13664 = vadd.f32 %v13635, 1.0
    %v13665 = vadd.f32 %v13637, 1.0
    %v13666 = vadd.f32 %v13639, 1.0
    %v13667 = vadd.f32 %v13641, 1.0
    %v13668 = vadd.f32 %v13643, 1.0
    %v13669 = vadd.f32 %v13645, 1.0
    %v13670 = vrcp.pop %v13646
    %v13671 = vmul.f32 1.0, %v13670
    %v13672 = vrcp.pop %v13647
    %v13673 = vmul.f32 1.0, %v13672
    %v13674 = vrcp.pop %v13648
    %v13675 = vmul.f32 1.0, %v13674
    %v13676 = vrcp.pop %v13649
    %v13677 = vmul.f32 1.0, %v13676
    %v13678 = vrcp.pop %v13650
    %v13679 = vmul.f32 1.0, %v13678
    %v13680 = vrcp.pop %v13651
    %v13681 = vmul.f32 1.0, %v13680
    %v13682 = vrcp.pop %v13652
    %v13683 = vmul.f32 1.0, %v13682
    %v13684 = vrcp.pop %v13653
    %v13685 = vmul.f32 1.0, %v13684
    %v13686 = vrcp.pop %v13654
    %v13687 = vmul.f32 1.0, %v13686
    %v13688 = vrcp.pop %v13655
    %v13689 = vmul.f32 1.0, %v13688
    %v13690 = vrcp.pop %v13656
    %v13691 = vmul.f32 1.0, %v13690
    %v13692 = vrcp.pop %v13657
    %v13693 = vmul.f32 1.0, %v13692
    %v13694 = vrcp.pop %v13658
    %v13695 = vmul.f32 1.0, %v13694
    %v13696 = vrcp.pop %v13659
    %v13697 = vmul.f32 1.0, %v13696
    %v13698 = vrcp.pop %v13660
    %v13699 = vmul.f32 1.0, %v13698
    %v13700 = vrcp.pop %v13661
    %v13701 = vmul.f32 1.0, %v13700
    %v13702 = vrcp.pop %v13662
    %v13703 = vmul.f32 1.0, %v13702
    %v13704 = vrcp.pop %v13663
    %v13705 = vmul.f32 1.0, %v13704
    %v13706 = vrcp.pop %v13664
    %v13707 = vmul.f32 1.0, %v13706
    %v13708 = vrcp.pop %v13665
    %v13709 = vmul.f32 1.0, %v13708
    %v13710 = vrcp.pop %v13666
    %v13711 = vmul.f32 1.0, %v13710
    %v13712 = vrcp.pop %v13667
    %v13713 = vmul.f32 1.0, %v13712
    %v13714 = vrcp.pop %v13668
    %v13715 = vmul.f32 1.0, %v13714
    %v13716 = vrcp.pop %v13669
    %v13717 = vmul.f32 1.0, %v13716
    %v13742 = vcombine.low %v13671, %v13673
    %v13743 = vcombine.low %v13675, %v13677
    %v13745 = vunpack.c.l.s4 1983009808
    %v13746 = vunpack.c.0.s8 %v13745
    %v13747 = vlaneseq
    %v13748 = vshrl.u32 %v13747, 7
    %v13749 = vsub.s32 %v13746, %v13748
    %v13750 = vrot.slane %v13742, %v13749
    %v13752 = vunpack.c.l.s4 1983009808
    %v13753 = vunpack.c.0.s8 %v13752
    %v13754 = vlaneseq
    %v13755 = vshrl.u32 %v13754, 7
    %v13756 = vsub.s32 %v13753, %v13755
    %v13757 = vrot.slane %v13743, %v13756
    %v13758 = vcombine.low %v13750, %v13757
    %v13759 = vcombine.low %v13679, %v13681
    %v13760 = vcombine.low %v13683, %v13685
    %v13762 = vunpack.c.l.s4 1983009808
    %v13763 = vunpack.c.0.s8 %v13762
    %v13764 = vlaneseq
    %v13765 = vshrl.u32 %v13764, 7
    %v13766 = vsub.s32 %v13763, %v13765
    %v13767 = vrot.slane %v13759, %v13766
    %v13769 = vunpack.c.l.s4 1983009808
    %v13770 = vunpack.c.0.s8 %v13769
    %v13771 = vlaneseq
    %v13772 = vshrl.u32 %v13771, 7
    %v13773 = vsub.s32 %v13770, %v13772
    %v13774 = vrot.slane %v13760, %v13773
    %v13775 = vcombine.low %v13767, %v13774
    %v13776 = vcombine.low %v13687, %v13689
    %v13777 = vcombine.low %v13691, %v13693
    %v13779 = vunpack.c.l.s4 1983009808
    %v13780 = vunpack.c.0.s8 %v13779
    %v13781 = vlaneseq
    %v13782 = vshrl.u32 %v13781, 7
    %v13783 = vsub.s32 %v13780, %v13782
    %v13784 = vrot.slane %v13776, %v13783
    %v13786 = vunpack.c.l.s4 1983009808
    %v13787 = vunpack.c.0.s8 %v13786
    %v13788 = vlaneseq
    %v13789 = vshrl.u32 %v13788, 7
    %v13790 = vsub.s32 %v13787, %v13789
    %v13791 = vrot.slane %v13777, %v13790
    %v13792 = vcombine.low %v13784, %v13791
    %v13793 = vcombine.low %v13695, %v13697
    %v13794 = vcombine.low %v13699, %v13701
    %v13796 = vunpack.c.l.s4 1983009808
    %v13797 = vunpack.c.0.s8 %v13796
    %v13798 = vlaneseq
    %v13799 = vshrl.u32 %v13798, 7
    %v13800 = vsub.s32 %v13797, %v13799
    %v13801 = vrot.slane %v13793, %v13800
    %v13803 = vunpack.c.l.s4 1983009808
    %v13804 = vunpack.c.0.s8 %v13803
    %v13805 = vlaneseq
    %v13806 = vshrl.u32 %v13805, 7
    %v13807 = vsub.s32 %v13804, %v13806
    %v13808 = vrot.slane %v13794, %v13807
    %v13809 = vcombine.low %v13801, %v13808
    %v13810 = vcombine.low %v13703, %v13705
    %v13811 = vcombine.low %v13707, %v13709
    %v13813 = vunpack.c.l.s4 1983009808
    %v13814 = vunpack.c.0.s8 %v13813
    %v13815 = vlaneseq
    %v13816 = vshrl.u32 %v13815, 7
    %v13817 = vsub.s32 %v13814, %v13816
    %v13818 = vrot.slane %v13810, %v13817
    %v13820 = vunpack.c.l.s4 1983009808
    %v13821 = vunpack.c.0.s8 %v13820
    %v13822 = vlaneseq
    %v13823 = vshrl.u32 %v13822, 7
    %v13824 = vsub.s32 %v13821, %v13823
    %v13825 = vrot.slane %v13811, %v13824
    %v13826 = vcombine.low %v13818, %v13825
    %v13827 = vcombine.low %v13711, %v13713
    %v13828 = vcombine.low %v13715, %v13717
    %v13830 = vunpack.c.l.s4 1983009808
    %v13831 = vunpack.c.0.s8 %v13830
    %v13832 = vlaneseq
    %v13833 = vshrl.u32 %v13832, 7
    %v13834 = vsub.s32 %v13831, %v13833
    %v13835 = vrot.slane %v13827, %v13834
    %v13837 = vunpack.c.l.s4 1983009808
    %v13838 = vunpack.c.0.s8 %v13837
    %v13839 = vlaneseq
    %v13840 = vshrl.u32 %v13839, 7
    %v13841 = vsub.s32 %v13838, %v13840
    %v13842 = vrot.slane %v13828, %v13841
    %v13843 = vcombine.low %v13835, %v13842
    %13850 = vst [vmem:[%s9] sm:$0xff] %v13758
    %13851 = vst [vmem:[%s9 + $0x8] sm:$0xff] %v13775
    %13852 = vst [vmem:[%s9 + $0x10] sm:$0xff] %v13792
    %13853 = vst [vmem:[%s9 + $0x18] sm:$0xff] %v13809
    %13854 = vst [vmem:[%s9 + $0x20] sm:$0xff] %v13826
    %13855 = vst [vmem:[%s9 + $0x28] sm:$0xff] %v13843
    // Predicated region
    $region70: #{conv_autoencoder_forward.1} parent=1 // pred_check
      _
    $region71: #{conv_autoencoder_forward.1} parent=1 // pred_check_branch
      %13857 = sbr.rel (0) target = $region73
    $region72: #{conv_autoencoder_forward.1} parent=1 // pred_region
      _
    $region73: #{conv_autoencoder_forward.1} parent=1 // pred_fallthru
      _
    // Predicated region
    $region74: #{conv_autoencoder_forward.1} parent=1 // pred_check
      _
    $region75: #{conv_autoencoder_forward.1} parent=1 // pred_check_branch
      %13859 = sbr.rel (0) target = $region77
    $region76: #{conv_autoencoder_forward.1} parent=1 // pred_region
      _
    $region77: #{conv_autoencoder_forward.1} parent=1 // pred_fallthru
      _
    %13860 = vsyncpa [#allocation3], 1
    %13861 = vsyncpa [#allocation5], 1
    %13862 = vsyncpa [#allocation8], 1
    %13863 = vsyncpa [#allocation11], 1
    %13864 = vsyncpa [#allocation14], 1

</llo_original>
